<compile_context>
chip_gen: v5e
topology: v5e:2x2
jax: 0.10.0
libtpu: 0.0.40
codegen_flags: <defaults>
</compile_context>

<pallas_src>
import functools

import jax
import jax.numpy as jnp
from jax.experimental import pallas as pl
from jax.experimental.pallas import tpu as pltpu

CP = 128  # per-branch padded output-channel (lane) width; Cout <= 64 always.


def _round_up(x, m):
    return (x + m - 1) // m * m


def _pick_tm(M):
    """Row tile: multiple of 8, capped at 256, >=2 M tiles when possible (v7x)."""
    return max(8, min(256, _round_up((M + 1) // 2, 8)))


# ----------------------------------------------------------------------------
# Kernel 1: fused quadratic conv.
#   rg = patches @ [wr | wg] + [br | bg]          (one MXU dot, N = 256)
#   q  = (patches*patches) @ wb                    (second dot, N = 128)
#   y  = bn_scale * (r*g + q) + bn_bias            (alpha pre-folded for conv2)
#   y  = relu(y + shortcut)   /   relu(y)
# ----------------------------------------------------------------------------
def _qconv_kernel(*refs, cp, n_out, has_shortcut):
    if has_shortcut:
        a_ref, wrg_ref, wb_ref, brg_ref, s_ref, c_ref, sh_ref, o_ref = refs
    else:
        a_ref, wrg_ref, wb_ref, brg_ref, s_ref, c_ref, o_ref = refs
        sh_ref = None

    a = a_ref[...]                                           # (tm, Kp) bf16
    rg = jnp.dot(a, wrg_ref[...],
                 preferred_element_type=jnp.float32) + brg_ref[...]
    q = jnp.dot(a * a, wb_ref[...],                          # im2col(x*x) == patches**2
                preferred_element_type=jnp.float32)
    y = rg[:, :cp] * rg[:, cp:] + q                          # quadratic neuron
    y = y * s_ref[...] + c_ref[...]                          # folded BN (x alpha)
    y = y[:, :n_out]
    if has_shortcut:
        y = y + sh_ref[...]                                  # ReZero residual
    o_ref[...] = jnp.maximum(y, 0.0)


# ----------------------------------------------------------------------------
# Kernel 2: plain conv + folded BN + ReLU (network stem).
# ----------------------------------------------------------------------------
def _conv_bn_kernel(a_ref, w_ref, s_ref, c_ref, o_ref, *, n_out):
    y = jnp.dot(a_ref[...], w_ref[...], preferred_element_type=jnp.float32)
    y = y * s_ref[...] + c_ref[...]
    o_ref[...] = jnp.maximum(y[:, :n_out], 0.0)


# ----------------------------------------------------------------------------
# Kernel 3: global average pool fused with the final linear layer.
# ----------------------------------------------------------------------------
def _pool_linear_kernel(x_ref, w_ref, b_ref, o_ref, *, num_classes):
    x = x_ref[...]                                           # (B, H*W, C) f32
    hw = x.shape[1]
    pooled = jnp.sum(x, axis=1) * (1.0 / hw)                 # (B, C)
    B = pooled.shape[0]
    if B % 8 != 0:                                           # pad rows for the MXU
        pooled = jnp.concatenate(
            [pooled, jnp.zeros((8 - B % 8, pooled.shape[1]), pooled.dtype)], axis=0)
    logits = jnp.dot(pooled, w_ref[...],
                     preferred_element_type=jnp.float32) + b_ref[...]
    o_ref[...] = logits[:B, :num_classes]


# ----------------------------------------------------------------------------
# Glue: im2col for 3x3 / pad=1 convs (pure layout plumbing, fused by XLA).
# ----------------------------------------------------------------------------
def _im2col(x, stride):
    B, H, W, C = x.shape
    xp = jnp.pad(x, ((0, 0), (1, 1), (1, 1), (0, 0)))
    Ho = (H + 2 - 3) // stride + 1
    Wo = (W + 2 - 3) // stride + 1
    cols = []
    for kh in range(3):
        for kw in range(3):
            cols.append(xp[:, kh:kh + stride * (Ho - 1) + 1:stride,
                           kw:kw + stride * (Wo - 1) + 1:stride, :])
    patches = jnp.concatenate(cols, axis=-1)                 # (B, Ho, Wo, 9*C)
    return patches.reshape(B * Ho * Wo, 9 * C), (B, Ho, Wo)


# ----------------------------------------------------------------------------
# Pallas-call wrappers.
# ----------------------------------------------------------------------------
def _qconv_call(x, stride, prm, shortcut=None):
    patches, (B, Ho, Wo) = _im2col(x, stride)
    M, K = patches.shape
    Kp, n_out = prm["kp"], prm["cout"]
    tm = _pick_tm(M)
    Mp = _round_up(M, tm)
    a = jnp.pad(patches, ((0, Mp - M), (0, Kp - K))).astype(jnp.bfloat16)

    has_sc = shortcut is not None
    in_specs = [
        pl.BlockSpec((tm, Kp), lambda i: (i, 0)),            # patches (bf16)
        pl.BlockSpec((Kp, 2 * CP), lambda i: (0, 0)),        # [wr | wg]
        pl.BlockSpec((Kp, CP), lambda i: (0, 0)),            # wb
        pl.BlockSpec((1, 2 * CP), lambda i: (0, 0)),         # [br | bg]
        pl.BlockSpec((1, CP), lambda i: (0, 0)),             # bn scale (x alpha)
        pl.BlockSpec((1, CP), lambda i: (0, 0)),             # bn bias  (x alpha)
    ]
    args = [a, prm["wrg"], prm["wb"], prm["brg"], prm["scale"], prm["bias"]]
    if has_sc:
        sc = shortcut.reshape(M, n_out).astype(jnp.float32)
        sc = jnp.pad(sc, ((0, Mp - M), (0, 0)))
        in_specs.append(pl.BlockSpec((tm, n_out), lambda i: (i, 0)))
        args.append(sc)

    out = pl.pallas_call(
        functools.partial(_qconv_kernel, cp=CP, n_out=n_out, has_shortcut=has_sc),
        out_shape=jax.ShapeDtypeStruct((Mp, n_out), jnp.float32),
        grid_spec=pltpu.PrefetchScalarGridSpec(
            num_scalar_prefetch=0,
            grid=(Mp // tm,),
            in_specs=in_specs,
            out_specs=pl.BlockSpec((tm, n_out), lambda i: (i, 0)),
        ),
        compiler_params=pltpu.CompilerParams(dimension_semantics=("parallel",)),
    )(*args)
    return out[:M].reshape(B, Ho, Wo, n_out)


def _stem_call(x, prm):
    patches, (B, Ho, Wo) = _im2col(x, 1)
    M, K = patches.shape
    Kp, n_out = prm["kp"], prm["cout"]
    tm = _pick_tm(M)
    Mp = _round_up(M, tm)
    a = jnp.pad(patches, ((0, Mp - M), (0, Kp - K))).astype(jnp.bfloat16)

    out = pl.pallas_call(
        functools.partial(_conv_bn_kernel, n_out=n_out),
        out_shape=jax.ShapeDtypeStruct((Mp, n_out), jnp.float32),
        grid_spec=pltpu.PrefetchScalarGridSpec(
            num_scalar_prefetch=0,
            grid=(Mp // tm,),
            in_specs=[
                pl.BlockSpec((tm, Kp), lambda i: (i, 0)),
                pl.BlockSpec((Kp, CP), lambda i: (0, 0)),
                pl.BlockSpec((1, CP), lambda i: (0, 0)),
                pl.BlockSpec((1, CP), lambda i: (0, 0)),
            ],
            out_specs=pl.BlockSpec((tm, n_out), lambda i: (i, 0)),
        ),
        compiler_params=pltpu.CompilerParams(dimension_semantics=("parallel",)),
    )(a, prm["w"], prm["scale"], prm["bias"])
    return out[:M].reshape(B, Ho, Wo, n_out)


def _pool_linear(x_bhwc, w, b, num_classes):
    B, H, W, C = x_bhwc.shape
    return pl.pallas_call(
        functools.partial(_pool_linear_kernel, num_classes=num_classes),
        out_shape=jax.ShapeDtypeStruct((B, num_classes), jnp.float32),
    )(x_bhwc.reshape(B, H * W, C), w, b)


# ----------------------------------------------------------------------------
# Deterministic parameter init (synthetic — no checkpoint), pre-folded & padded.
# ----------------------------------------------------------------------------
def _bn_init(key, c):
    k1, k2, k3 = jax.random.split(key, 3)
    return {"gamma": 1.0 + 0.1 * jax.random.normal(k1, (c,), jnp.float32),
            "beta": 0.1 * jax.random.normal(k2, (c,), jnp.float32),
            "mean": 0.1 * jax.random.normal(k3, (c,), jnp.float32),
            "var": jnp.ones((c,), jnp.float32)}


def _bn_fold(bn, eps=1e-5):
    scale = bn["gamma"] / jnp.sqrt(bn["var"] + eps)
    bias = bn["beta"] - bn["mean"] * scale
    return scale, bias


def _pad_w(w, kp, cp=CP):
    K, C = w.shape
    return jnp.pad(w, ((0, kp - K), (0, cp - C)))


def _pad_row(v, cp=CP):
    return jnp.pad(v.reshape(1, -1), ((0, 0), (0, cp - v.shape[0])))


def _make_qconv_params(key, cin, cout, alpha=None):
    K = 9 * cin
    Kp = _round_up(K, 128)
    ks = jax.random.split(key, 6)
    # (Cout, Cin, kh, kw) -> transpose(2, 3, 1, 0) -> reshape == rows (kh, kw, cin)
    wr = 0.1 * jax.random.normal(ks[0], (K, cout), jnp.float32)
    br = 0.1 * jax.random.normal(ks[1], (cout,), jnp.float32)
    wg = 0.1 * jax.random.normal(ks[2], (K, cout), jnp.float32)
    bg = 1.0 + 0.1 * jax.random.normal(ks[3], (cout,), jnp.float32)
    wb = 0.1 * jax.random.normal(ks[4], (K, cout), jnp.float32)
    bn = _bn_init(ks[5], cout)
    s, c = _bn_fold(bn)
    if alpha is not None:                       # fold ReZero alpha into BN2
        s, c = alpha * s, alpha * c
    return {
        "wrg": jnp.concatenate([_pad_w(wr, Kp), _pad_w(wg, Kp)],
                               axis=1).astype(jnp.bfloat16),
        "wb": _pad_w(wb, Kp).astype(jnp.bfloat16),
        "brg": jnp.concatenate([_pad_row(br), _pad_row(bg)], axis=1),
        "scale": _pad_row(s),
        "bias": _pad_row(c),
        "kp": Kp, "cout": cout,
    }


def _make_stem_params(key, cin, cout):
    K = 9 * cin
    Kp = _round_up(K, 128)
    k1, k2 = jax.random.split(key)
    w = 0.1 * jax.random.normal(k1, (K, cout), jnp.float32)
    s, c = _bn_fold(_bn_init(k2, cout))
    return {"w": _pad_w(w, Kp).astype(jnp.bfloat16),
            "scale": _pad_row(s), "bias": _pad_row(c),
            "kp": Kp, "cout": cout}


def init_qresnet(key, num_blocks=(1, 1, 1), num_classes=10):
    keys = jax.random.split(key, 4)
    params = {"stem": _make_stem_params(keys[0], 3, 16)}
    blocks = []
    in_planes = 16
    bkeys = jax.random.split(keys[1], sum(num_blocks))
    bi = 0
    for planes, nb, stride0 in zip((16, 32, 64), num_blocks, (1, 2, 2)):
        for s in [stride0] + [1] * (nb - 1):
            bk = jax.random.split(bkeys[bi], 2)
            alpha = jnp.float32(0.1)            # ReZero residual weight
            blocks.append({
                "conv1": _make_qconv_params(bk[0], in_planes, planes),
                "conv2": _make_qconv_params(bk[1], planes, planes, alpha=alpha),
                "stride": s, "in_planes": in_planes, "planes": planes,
            })
            in_planes = planes
            bi += 1
    params["blocks"] = blocks
    lw = 0.1 * jax.random.normal(keys[2], (64, num_classes), jnp.float32)
    lb = 0.1 * jax.random.normal(keys[3], (num_classes,), jnp.float32)
    params["linear_w"] = jnp.pad(lw, ((0, 0), (0, CP - num_classes)))
    params["linear_b"] = _pad_row(lb)
    params["num_classes"] = num_classes
    return params


# ----------------------------------------------------------------------------
# Forward pass.
# ----------------------------------------------------------------------------
def block_forward(x, blk):
    stride, in_planes, planes = blk["stride"], blk["in_planes"], blk["planes"]
    out = _qconv_call(x, stride, blk["conv1"])                # relu(bn1(qconv1))
    if stride != 1 or in_planes != planes:
        # TODO(synk): the quadratic BasicBlock class is not shipped with the
        # reference snippet; using the CIFAR-ResNet "option A" shortcut
        # (subsample + zero-pad channels).
        sc = x[:, ::stride, ::stride, :]
        pad = (planes - in_planes) // 2
        sc = jnp.pad(sc, ((0, 0), (0, 0), (0, 0), (pad, pad)))
    else:
        sc = x
    # relu(shortcut + alpha*bn2(qconv2(out))) — shortcut+alpha fused in epilogue
    return _qconv_call(out, 1, blk["conv2"], shortcut=sc)


def qresnet_forward(x_nchw, params):
    x = jnp.transpose(x_nchw, (0, 2, 3, 1)).astype(jnp.float32)   # NCHW -> NHWC
    out = _stem_call(x, params["stem"])                           # conv1+bn1+relu
    for blk in params["blocks"]:
        out = block_forward(out, blk)
    return _pool_linear(out, params["linear_w"], params["linear_b"],
                        params["num_classes"])                    # avgpool+linear


if __name__ == "__main__":
    key = jax.random.PRNGKey(0)
    pkey, xkey = jax.random.split(key)
    params = init_qresnet(pkey, num_blocks=(1, 1, 1), num_classes=10)
    x = jax.random.normal(xkey, (2, 3, 16, 16), jnp.float32)      # NCHW input
    fwd = jax.jit(lambda inp: qresnet_forward(inp, params))
    out = jax.block_until_ready(fwd(x))
    assert out.shape == (2, 10), out.shape
    assert bool(jnp.all(jnp.isfinite(out)))
    print("KERNEL_OK")
</pallas_src>

<mosaic_0001>
module attributes {stable_mosaic.version = 11 : i64} {
  func.func @_conv_bn_kernel(%arg0: i32, %arg1: memref<256x128xbf16, #tpu.memory_space<vmem>>, %arg2: memref<128x128xbf16, #tpu.memory_space<vmem>>, %arg3: memref<1x128xf32, #tpu.memory_space<vmem>>, %arg4: memref<1x128xf32, #tpu.memory_space<vmem>>, %arg5: memref<256x16xf32, #tpu.memory_space<vmem>>) attributes {dimension_semantics = [#tpu.dimension_semantics<parallel>], iteration_bounds = array<i64: 2>, scalar_prefetch = 0 : i64, scratch_operands = 0 : i64, tpu.core_type = #tpu.core_type<tc>, window_params = [{transform_indices = @transform_0, window_bounds = array<i64: 256, 128>}, {pipeline_mode = #tpu.pipeline_mode<synchronous>, transform_indices = @transform_1, window_bounds = array<i64: 128, 128>}, {pipeline_mode = #tpu.pipeline_mode<synchronous>, transform_indices = @transform_2, window_bounds = array<i64: 1, 128>}, {pipeline_mode = #tpu.pipeline_mode<synchronous>, transform_indices = @transform_3, window_bounds = array<i64: 1, 128>}, {transform_indices = @transform_4, window_bounds = array<i64: 256, 16>}]} {
    %c0 = arith.constant 0 : index
    %c0_0 = arith.constant 0 : index
    %0 = vector.load %arg1[%c0, %c0_0] : memref<256x128xbf16, #tpu.memory_space<vmem>>, vector<256x128xbf16>
    %c0_1 = arith.constant 0 : index
    %c0_2 = arith.constant 0 : index
    %1 = vector.load %arg2[%c0_1, %c0_2] : memref<128x128xbf16, #tpu.memory_space<vmem>>, vector<128x128xbf16>
    %cst = arith.constant dense<0.000000e+00> : vector<256x128xf32>
    %2 = tpu.matmul %0, %1, %cst {dimension_numbers = #tpu.dot_dimension_numbers<[1], [0], [0], [1], [0, 0, 1, 1], [], []>} : vector<256x128xbf16>, vector<128x128xbf16>, vector<256x128xf32> -> vector<256x128xf32>
    %c0_3 = arith.constant 0 : index
    %c0_4 = arith.constant 0 : index
    %3 = vector.load %arg3[%c0_3, %c0_4] : memref<1x128xf32, #tpu.memory_space<vmem>>, vector<1x128xf32>
    %4 = vector.broadcast %3 : vector<1x128xf32> to vector<256x128xf32>
    %5 = arith.mulf %2, %4 : vector<256x128xf32>
    %c0_5 = arith.constant 0 : index
    %c0_6 = arith.constant 0 : index
    %6 = vector.load %arg4[%c0_5, %c0_6] : memref<1x128xf32, #tpu.memory_space<vmem>>, vector<1x128xf32>
    %7 = vector.broadcast %6 : vector<1x128xf32> to vector<256x128xf32>
    %8 = arith.addf %5, %7 : vector<256x128xf32>
    %9 = vector.extract_strided_slice %8 {offsets = [0, 0], sizes = [256, 16], strides = [1, 1]} : vector<256x128xf32> to vector<256x16xf32>
    %cst_7 = arith.constant 0.000000e+00 : f32
    %10 = vector.broadcast %cst_7 : f32 to vector<256x16xf32>
    %11 = arith.maximumf %9, %10 : vector<256x16xf32>
    %c0_8 = arith.constant 0 : index
    %c0_9 = arith.constant 0 : index
    %12 = vector.load %arg5[%c0_8, %c0_9] : memref<256x16xf32, #tpu.memory_space<vmem>>, vector<256x16xf32>
    tpu.vector_store %arg5[%c0_8, %c0_9], %11 {strides = array<i32>} : memref<256x16xf32, #tpu.memory_space<vmem>>, vector<256x16xf32>,
    return
  }
  func.func @transform_0(%arg0: i32) -> (i32, i32) {
    %c0_i32 = arith.constant 0 : i32
    %c0_i32_0 = arith.constant 0 : i32
    return %arg0, %c0_i32 : i32, i32
  }
  func.func @transform_1(%arg0: i32) -> (i32, i32) {
    %c0_i32 = arith.constant 0 : i32
    %c0_i32_0 = arith.constant 0 : i32
    %c0_i32_1 = arith.constant 0 : i32
    return %c0_i32, %c0_i32_0 : i32, i32
  }
  func.func @transform_2(%arg0: i32) -> (i32, i32) {
    %c0_i32 = arith.constant 0 : i32
    %c0_i32_0 = arith.constant 0 : i32
    %c0_i32_1 = arith.constant 0 : i32
    return %c0_i32, %c0_i32_0 : i32, i32
  }
  func.func @transform_3(%arg0: i32) -> (i32, i32) {
    %c0_i32 = arith.constant 0 : i32
    %c0_i32_0 = arith.constant 0 : i32
    %c0_i32_1 = arith.constant 0 : i32
    return %c0_i32, %c0_i32_0 : i32, i32
  }
  func.func @transform_4(%arg0: i32) -> (i32, i32) {
    %c0_i32 = arith.constant 0 : i32
    %c0_i32_0 = arith.constant 0 : i32
    return %arg0, %c0_i32 : i32, i32
  }
}

module attributes {stable_mosaic.version = 11 : i64} {
  func.func @_qconv_kernel(%arg0: i32, %arg1: memref<256x256xbf16, #tpu.memory_space<vmem>>, %arg2: memref<256x256xbf16, #tpu.memory_space<vmem>>, %arg3: memref<256x128xbf16, #tpu.memory_space<vmem>>, %arg4: memref<1x256xf32, #tpu.memory_space<vmem>>, %arg5: memref<1x128xf32, #tpu.memory_space<vmem>>, %arg6: memref<1x128xf32, #tpu.memory_space<vmem>>, %arg7: memref<256x16xf32, #tpu.memory_space<vmem>>, %arg8: memref<256x16xf32, #tpu.memory_space<vmem>>) attributes {dimension_semantics = [#tpu.dimension_semantics<parallel>], iteration_bounds = array<i64: 2>, scalar_prefetch = 0 : i64, scratch_operands = 0 : i64, tpu.core_type = #tpu.core_type<tc>, window_params = [{transform_indices = @transform_0, window_bounds = array<i64: 256, 256>}, {pipeline_mode = #tpu.pipeline_mode<synchronous>, transform_indices = @transform_1, window_bounds = array<i64: 256, 256>}, {pipeline_mode = #tpu.pipeline_mode<synchronous>, transform_indices = @transform_2, window_bounds = array<i64: 256, 128>}, {pipeline_mode = #tpu.pipeline_mode<synchronous>, transform_indices = @transform_3, window_bounds = array<i64: 1, 256>}, {pipeline_mode = #tpu.pipeline_mode<synchronous>, transform_indices = @transform_4, window_bounds = array<i64: 1, 128>}, {pipeline_mode = #tpu.pipeline_mode<synchronous>, transform_indices = @transform_5, window_bounds = array<i64: 1, 128>}, {transform_indices = @transform_6, window_bounds = array<i64: 256, 16>}, {transform_indices = @transform_7, window_bounds = array<i64: 256, 16>}]} {
    %c0 = arith.constant 0 : index
    %c0_0 = arith.constant 0 : index
    %0 = vector.load %arg1[%c0, %c0_0] : memref<256x256xbf16, #tpu.memory_space<vmem>>, vector<256x256xbf16>
    %c0_1 = arith.constant 0 : index
    %c0_2 = arith.constant 0 : index
    %1 = vector.load %arg2[%c0_1, %c0_2] : memref<256x256xbf16, #tpu.memory_space<vmem>>, vector<256x256xbf16>
    %cst = arith.constant dense<0.000000e+00> : vector<256x256xf32>
    %2 = tpu.matmul %0, %1, %cst {dimension_numbers = #tpu.dot_dimension_numbers<[1], [0], [0], [1], [0, 0, 1, 1], [], []>} : vector<256x256xbf16>, vector<256x256xbf16>, vector<256x256xf32> -> vector<256x256xf32>
    %c0_3 = arith.constant 0 : index
    %c0_4 = arith.constant 0 : index
    %3 = vector.load %arg4[%c0_3, %c0_4] : memref<1x256xf32, #tpu.memory_space<vmem>>, vector<1x256xf32>
    %4 = vector.broadcast %3 : vector<1x256xf32> to vector<256x256xf32>
    %5 = arith.addf %2, %4 : vector<256x256xf32>
    %6 = arith.mulf %0, %0 : vector<256x256xbf16>
    %c0_5 = arith.constant 0 : index
    %c0_6 = arith.constant 0 : index
    %7 = vector.load %arg3[%c0_5, %c0_6] : memref<256x128xbf16, #tpu.memory_space<vmem>>, vector<256x128xbf16>
    %cst_7 = arith.constant dense<0.000000e+00> : vector<256x128xf32>
    %8 = tpu.matmul %6, %7, %cst_7 {dimension_numbers = #tpu.dot_dimension_numbers<[1], [0], [0], [1], [0, 0, 1, 1], [], []>} : vector<256x256xbf16>, vector<256x128xbf16>, vector<256x128xf32> -> vector<256x128xf32>
    %9 = vector.extract_strided_slice %5 {offsets = [0, 0], sizes = [256, 128], strides = [1, 1]} : vector<256x256xf32> to vector<256x128xf32>
    %10 = vector.extract_strided_slice %5 {offsets = [0, 128], sizes = [256, 128], strides = [1, 1]} : vector<256x256xf32> to vector<256x128xf32>
    %11 = arith.mulf %9, %10 : vector<256x128xf32>
    %12 = arith.addf %11, %8 : vector<256x128xf32>
    %c0_8 = arith.constant 0 : index
    %c0_9 = arith.constant 0 : index
    %13 = vector.load %arg5[%c0_8, %c0_9] : memref<1x128xf32, #tpu.memory_space<vmem>>, vector<1x128xf32>
    %14 = vector.broadcast %13 : vector<1x128xf32> to vector<256x128xf32>
    %15 = arith.mulf %12, %14 : vector<256x128xf32>
    %c0_10 = arith.constant 0 : index
    %c0_11 = arith.constant 0 : index
    %16 = vector.load %arg6[%c0_10, %c0_11] : memref<1x128xf32, #tpu.memory_space<vmem>>, vector<1x128xf32>
    %17 = vector.broadcast %16 : vector<1x128xf32> to vector<256x128xf32>
    %18 = arith.addf %15, %17 : vector<256x128xf32>
    %19 = vector.extract_strided_slice %18 {offsets = [0, 0], sizes = [256, 16], strides = [1, 1]} : vector<256x128xf32> to vector<256x16xf32>
    %c0_12 = arith.constant 0 : index
    %c0_13 = arith.constant 0 : index
    %20 = vector.load %arg7[%c0_12, %c0_13] : memref<256x16xf32, #tpu.memory_space<vmem>>, vector<256x16xf32>
    %21 = arith.addf %19, %20 : vector<256x16xf32>
    %cst_14 = arith.constant 0.000000e+00 : f32
    %22 = vector.broadcast %cst_14 : f32 to vector<256x16xf32>
    %23 = arith.maximumf %21, %22 : vector<256x16xf32>
    %c0_15 = arith.constant 0 : index
    %c0_16 = arith.constant 0 : index
    %24 = vector.load %arg8[%c0_15, %c0_16] : memref<256x16xf32, #tpu.memory_space<vmem>>, vector<256x16xf32>
    tpu.vector_store %arg8[%c0_15, %c0_16], %23 {strides = array<i32>} : memref<256x16xf32, #tpu.memory_space<vmem>>, vector<256x16xf32>,
    return
  }
  func.func @transform_0(%arg0: i32) -> (i32, i32) {
    %c0_i32 = arith.constant 0 : i32
    %c0_i32_0 = arith.constant 0 : i32
    return %arg0, %c0_i32 : i32, i32
  }
  func.func @transform_1(%arg0: i32) -> (i32, i32) {
    %c0_i32 = arith.constant 0 : i32
    %c0_i32_0 = arith.constant 0 : i32
    %c0_i32_1 = arith.constant 0 : i32
    return %c0_i32, %c0_i32_0 : i32, i32
  }
  func.func @transform_2(%arg0: i32) -> (i32, i32) {
    %c0_i32 = arith.constant 0 : i32
    %c0_i32_0 = arith.constant 0 : i32
    %c0_i32_1 = arith.constant 0 : i32
    return %c0_i32, %c0_i32_0 : i32, i32
  }
  func.func @transform_3(%arg0: i32) -> (i32, i32) {
    %c0_i32 = arith.constant 0 : i32
    %c0_i32_0 = arith.constant 0 : i32
    %c0_i32_1 = arith.constant 0 : i32
    return %c0_i32, %c0_i32_0 : i32, i32
  }
  func.func @transform_4(%arg0: i32) -> (i32, i32) {
    %c0_i32 = arith.constant 0 : i32
    %c0_i32_0 = arith.constant 0 : i32
    %c0_i32_1 = arith.constant 0 : i32
    return %c0_i32, %c0_i32_0 : i32, i32
  }
  func.func @transform_5(%arg0: i32) -> (i32, i32) {
    %c0_i32 = arith.constant 0 : i32
    %c0_i32_0 = arith.constant 0 : i32
    %c0_i32_1 = arith.constant 0 : i32
    return %c0_i32, %c0_i32_0 : i32, i32
  }
  func.func @transform_6(%arg0: i32) -> (i32, i32) {
    %c0_i32 = arith.constant 0 : i32
    %c0_i32_0 = arith.constant 0 : i32
    return %arg0, %c0_i32 : i32, i32
  }
  func.func @transform_7(%arg0: i32) -> (i32, i32) {
    %c0_i32 = arith.constant 0 : i32
    %c0_i32_0 = arith.constant 0 : i32
    return %arg0, %c0_i32 : i32, i32
  }
}

module attributes {stable_mosaic.version = 11 : i64} {
  func.func @_qconv_kernel(%arg0: i32, %arg1: memref<256x256xbf16, #tpu.memory_space<vmem>>, %arg2: memref<256x256xbf16, #tpu.memory_space<vmem>>, %arg3: memref<256x128xbf16, #tpu.memory_space<vmem>>, %arg4: memref<1x256xf32, #tpu.memory_space<vmem>>, %arg5: memref<1x128xf32, #tpu.memory_space<vmem>>, %arg6: memref<1x128xf32, #tpu.memory_space<vmem>>, %arg7: memref<256x16xf32, #tpu.memory_space<vmem>>) attributes {dimension_semantics = [#tpu.dimension_semantics<parallel>], iteration_bounds = array<i64: 2>, scalar_prefetch = 0 : i64, scratch_operands = 0 : i64, tpu.core_type = #tpu.core_type<tc>, window_params = [{transform_indices = @transform_0, window_bounds = array<i64: 256, 256>}, {pipeline_mode = #tpu.pipeline_mode<synchronous>, transform_indices = @transform_1, window_bounds = array<i64: 256, 256>}, {pipeline_mode = #tpu.pipeline_mode<synchronous>, transform_indices = @transform_2, window_bounds = array<i64: 256, 128>}, {pipeline_mode = #tpu.pipeline_mode<synchronous>, transform_indices = @transform_3, window_bounds = array<i64: 1, 256>}, {pipeline_mode = #tpu.pipeline_mode<synchronous>, transform_indices = @transform_4, window_bounds = array<i64: 1, 128>}, {pipeline_mode = #tpu.pipeline_mode<synchronous>, transform_indices = @transform_5, window_bounds = array<i64: 1, 128>}, {transform_indices = @transform_6, window_bounds = array<i64: 256, 16>}]} {
    %c0 = arith.constant 0 : index
    %c0_0 = arith.constant 0 : index
    %0 = vector.load %arg1[%c0, %c0_0] : memref<256x256xbf16, #tpu.memory_space<vmem>>, vector<256x256xbf16>
    %c0_1 = arith.constant 0 : index
    %c0_2 = arith.constant 0 : index
    %1 = vector.load %arg2[%c0_1, %c0_2] : memref<256x256xbf16, #tpu.memory_space<vmem>>, vector<256x256xbf16>
    %cst = arith.constant dense<0.000000e+00> : vector<256x256xf32>
    %2 = tpu.matmul %0, %1, %cst {dimension_numbers = #tpu.dot_dimension_numbers<[1], [0], [0], [1], [0, 0, 1, 1], [], []>} : vector<256x256xbf16>, vector<256x256xbf16>, vector<256x256xf32> -> vector<256x256xf32>
    %c0_3 = arith.constant 0 : index
    %c0_4 = arith.constant 0 : index
    %3 = vector.load %arg4[%c0_3, %c0_4] : memref<1x256xf32, #tpu.memory_space<vmem>>, vector<1x256xf32>
    %4 = vector.broadcast %3 : vector<1x256xf32> to vector<256x256xf32>
    %5 = arith.addf %2, %4 : vector<256x256xf32>
    %6 = arith.mulf %0, %0 : vector<256x256xbf16>
    %c0_5 = arith.constant 0 : index
    %c0_6 = arith.constant 0 : index
    %7 = vector.load %arg3[%c0_5, %c0_6] : memref<256x128xbf16, #tpu.memory_space<vmem>>, vector<256x128xbf16>
    %cst_7 = arith.constant dense<0.000000e+00> : vector<256x128xf32>
    %8 = tpu.matmul %6, %7, %cst_7 {dimension_numbers = #tpu.dot_dimension_numbers<[1], [0], [0], [1], [0, 0, 1, 1], [], []>} : vector<256x256xbf16>, vector<256x128xbf16>, vector<256x128xf32> -> vector<256x128xf32>
    %9 = vector.extract_strided_slice %5 {offsets = [0, 0], sizes = [256, 128], strides = [1, 1]} : vector<256x256xf32> to vector<256x128xf32>
    %10 = vector.extract_strided_slice %5 {offsets = [0, 128], sizes = [256, 128], strides = [1, 1]} : vector<256x256xf32> to vector<256x128xf32>
    %11 = arith.mulf %9, %10 : vector<256x128xf32>
    %12 = arith.addf %11, %8 : vector<256x128xf32>
    %c0_8 = arith.constant 0 : index
    %c0_9 = arith.constant 0 : index
    %13 = vector.load %arg5[%c0_8, %c0_9] : memref<1x128xf32, #tpu.memory_space<vmem>>, vector<1x128xf32>
    %14 = vector.broadcast %13 : vector<1x128xf32> to vector<256x128xf32>
    %15 = arith.mulf %12, %14 : vector<256x128xf32>
    %c0_10 = arith.constant 0 : index
    %c0_11 = arith.constant 0 : index
    %16 = vector.load %arg6[%c0_10, %c0_11] : memref<1x128xf32, #tpu.memory_space<vmem>>, vector<1x128xf32>
    %17 = vector.broadcast %16 : vector<1x128xf32> to vector<256x128xf32>
    %18 = arith.addf %15, %17 : vector<256x128xf32>
    %19 = vector.extract_strided_slice %18 {offsets = [0, 0], sizes = [256, 16], strides = [1, 1]} : vector<256x128xf32> to vector<256x16xf32>
    %cst_12 = arith.constant 0.000000e+00 : f32
    %20 = vector.broadcast %cst_12 : f32 to vector<256x16xf32>
    %21 = arith.maximumf %19, %20 : vector<256x16xf32>
    %c0_13 = arith.constant 0 : index
    %c0_14 = arith.constant 0 : index
    %22 = vector.load %arg7[%c0_13, %c0_14] : memref<256x16xf32, #tpu.memory_space<vmem>>, vector<256x16xf32>
    tpu.vector_store %arg7[%c0_13, %c0_14], %21 {strides = array<i32>} : memref<256x16xf32, #tpu.memory_space<vmem>>, vector<256x16xf32>,
    return
  }
  func.func @transform_0(%arg0: i32) -> (i32, i32) {
    %c0_i32 = arith.constant 0 : i32
    %c0_i32_0 = arith.constant 0 : i32
    return %arg0, %c0_i32 : i32, i32
  }
  func.func @transform_1(%arg0: i32) -> (i32, i32) {
    %c0_i32 = arith.constant 0 : i32
    %c0_i32_0 = arith.constant 0 : i32
    %c0_i32_1 = arith.constant 0 : i32
    return %c0_i32, %c0_i32_0 : i32, i32
  }
  func.func @transform_2(%arg0: i32) -> (i32, i32) {
    %c0_i32 = arith.constant 0 : i32
    %c0_i32_0 = arith.constant 0 : i32
    %c0_i32_1 = arith.constant 0 : i32
    return %c0_i32, %c0_i32_0 : i32, i32
  }
  func.func @transform_3(%arg0: i32) -> (i32, i32) {
    %c0_i32 = arith.constant 0 : i32
    %c0_i32_0 = arith.constant 0 : i32
    %c0_i32_1 = arith.constant 0 : i32
    return %c0_i32, %c0_i32_0 : i32, i32
  }
  func.func @transform_4(%arg0: i32) -> (i32, i32) {
    %c0_i32 = arith.constant 0 : i32
    %c0_i32_0 = arith.constant 0 : i32
    %c0_i32_1 = arith.constant 0 : i32
    return %c0_i32, %c0_i32_0 : i32, i32
  }
  func.func @transform_5(%arg0: i32) -> (i32, i32) {
    %c0_i32 = arith.constant 0 : i32
    %c0_i32_0 = arith.constant 0 : i32
    %c0_i32_1 = arith.constant 0 : i32
    return %c0_i32, %c0_i32_0 : i32, i32
  }
  func.func @transform_6(%arg0: i32) -> (i32, i32) {
    %c0_i32 = arith.constant 0 : i32
    %c0_i32_0 = arith.constant 0 : i32
    return %arg0, %c0_i32 : i32, i32
  }
}

module attributes {stable_mosaic.version = 11 : i64} {
  func.func @_qconv_kernel(%arg0: i32, %arg1: memref<64x256xbf16, #tpu.memory_space<vmem>>, %arg2: memref<256x256xbf16, #tpu.memory_space<vmem>>, %arg3: memref<256x128xbf16, #tpu.memory_space<vmem>>, %arg4: memref<1x256xf32, #tpu.memory_space<vmem>>, %arg5: memref<1x128xf32, #tpu.memory_space<vmem>>, %arg6: memref<1x128xf32, #tpu.memory_space<vmem>>, %arg7: memref<64x32xf32, #tpu.memory_space<vmem>>) attributes {dimension_semantics = [#tpu.dimension_semantics<parallel>], iteration_bounds = array<i64: 2>, scalar_prefetch = 0 : i64, scratch_operands = 0 : i64, tpu.core_type = #tpu.core_type<tc>, window_params = [{transform_indices = @transform_0, window_bounds = array<i64: 64, 256>}, {pipeline_mode = #tpu.pipeline_mode<synchronous>, transform_indices = @transform_1, window_bounds = array<i64: 256, 256>}, {pipeline_mode = #tpu.pipeline_mode<synchronous>, transform_indices = @transform_2, window_bounds = array<i64: 256, 128>}, {pipeline_mode = #tpu.pipeline_mode<synchronous>, transform_indices = @transform_3, window_bounds = array<i64: 1, 256>}, {pipeline_mode = #tpu.pipeline_mode<synchronous>, transform_indices = @transform_4, window_bounds = array<i64: 1, 128>}, {pipeline_mode = #tpu.pipeline_mode<synchronous>, transform_indices = @transform_5, window_bounds = array<i64: 1, 128>}, {transform_indices = @transform_6, window_bounds = array<i64: 64, 32>}]} {
    %c0 = arith.constant 0 : index
    %c0_0 = arith.constant 0 : index
    %0 = vector.load %arg1[%c0, %c0_0] : memref<64x256xbf16, #tpu.memory_space<vmem>>, vector<64x256xbf16>
    %c0_1 = arith.constant 0 : index
    %c0_2 = arith.constant 0 : index
    %1 = vector.load %arg2[%c0_1, %c0_2] : memref<256x256xbf16, #tpu.memory_space<vmem>>, vector<256x256xbf16>
    %cst = arith.constant dense<0.000000e+00> : vector<64x256xf32>
    %2 = tpu.matmul %0, %1, %cst {dimension_numbers = #tpu.dot_dimension_numbers<[1], [0], [0], [1], [0, 0, 1, 1], [], []>} : vector<64x256xbf16>, vector<256x256xbf16>, vector<64x256xf32> -> vector<64x256xf32>
    %c0_3 = arith.constant 0 : index
    %c0_4 = arith.constant 0 : index
    %3 = vector.load %arg4[%c0_3, %c0_4] : memref<1x256xf32, #tpu.memory_space<vmem>>, vector<1x256xf32>
    %4 = vector.broadcast %3 : vector<1x256xf32> to vector<64x256xf32>
    %5 = arith.addf %2, %4 : vector<64x256xf32>
    %6 = arith.mulf %0, %0 : vector<64x256xbf16>
    %c0_5 = arith.constant 0 : index
    %c0_6 = arith.constant 0 : index
    %7 = vector.load %arg3[%c0_5, %c0_6] : memref<256x128xbf16, #tpu.memory_space<vmem>>, vector<256x128xbf16>
    %cst_7 = arith.constant dense<0.000000e+00> : vector<64x128xf32>
    %8 = tpu.matmul %6, %7, %cst_7 {dimension_numbers = #tpu.dot_dimension_numbers<[1], [0], [0], [1], [0, 0, 1, 1], [], []>} : vector<64x256xbf16>, vector<256x128xbf16>, vector<64x128xf32> -> vector<64x128xf32>
    %9 = vector.extract_strided_slice %5 {offsets = [0, 0], sizes = [64, 128], strides = [1, 1]} : vector<64x256xf32> to vector<64x128xf32>
    %10 = vector.extract_strided_slice %5 {offsets = [0, 128], sizes = [64, 128], strides = [1, 1]} : vector<64x256xf32> to vector<64x128xf32>
    %11 = arith.mulf %9, %10 : vector<64x128xf32>
    %12 = arith.addf %11, %8 : vector<64x128xf32>
    %c0_8 = arith.constant 0 : index
    %c0_9 = arith.constant 0 : index
    %13 = vector.load %arg5[%c0_8, %c0_9] : memref<1x128xf32, #tpu.memory_space<vmem>>, vector<1x128xf32>
    %14 = vector.broadcast %13 : vector<1x128xf32> to vector<64x128xf32>
    %15 = arith.mulf %12, %14 : vector<64x128xf32>
    %c0_10 = arith.constant 0 : index
    %c0_11 = arith.constant 0 : index
    %16 = vector.load %arg6[%c0_10, %c0_11] : memref<1x128xf32, #tpu.memory_space<vmem>>, vector<1x128xf32>
    %17 = vector.broadcast %16 : vector<1x128xf32> to vector<64x128xf32>
    %18 = arith.addf %15, %17 : vector<64x128xf32>
    %19 = vector.extract_strided_slice %18 {offsets = [0, 0], sizes = [64, 32], strides = [1, 1]} : vector<64x128xf32> to vector<64x32xf32>
    %cst_12 = arith.constant 0.000000e+00 : f32
    %20 = vector.broadcast %cst_12 : f32 to vector<64x32xf32>
    %21 = arith.maximumf %19, %20 : vector<64x32xf32>
    %c0_13 = arith.constant 0 : index
    %c0_14 = arith.constant 0 : index
    %22 = vector.load %arg7[%c0_13, %c0_14] : memref<64x32xf32, #tpu.memory_space<vmem>>, vector<64x32xf32>
    tpu.vector_store %arg7[%c0_13, %c0_14], %21 {strides = array<i32>} : memref<64x32xf32, #tpu.memory_space<vmem>>, vector<64x32xf32>,
    return
  }
  func.func @transform_0(%arg0: i32) -> (i32, i32) {
    %c0_i32 = arith.constant 0 : i32
    %c0_i32_0 = arith.constant 0 : i32
    return %arg0, %c0_i32 : i32, i32
  }
  func.func @transform_1(%arg0: i32) -> (i32, i32) {
    %c0_i32 = arith.constant 0 : i32
    %c0_i32_0 = arith.constant 0 : i32
    %c0_i32_1 = arith.constant 0 : i32
    return %c0_i32, %c0_i32_0 : i32, i32
  }
  func.func @transform_2(%arg0: i32) -> (i32, i32) {
    %c0_i32 = arith.constant 0 : i32
    %c0_i32_0 = arith.constant 0 : i32
    %c0_i32_1 = arith.constant 0 : i32
    return %c0_i32, %c0_i32_0 : i32, i32
  }
  func.func @transform_3(%arg0: i32) -> (i32, i32) {
    %c0_i32 = arith.constant 0 : i32
    %c0_i32_0 = arith.constant 0 : i32
    %c0_i32_1 = arith.constant 0 : i32
    return %c0_i32, %c0_i32_0 : i32, i32
  }
  func.func @transform_4(%arg0: i32) -> (i32, i32) {
    %c0_i32 = arith.constant 0 : i32
    %c0_i32_0 = arith.constant 0 : i32
    %c0_i32_1 = arith.constant 0 : i32
    return %c0_i32, %c0_i32_0 : i32, i32
  }
  func.func @transform_5(%arg0: i32) -> (i32, i32) {
    %c0_i32 = arith.constant 0 : i32
    %c0_i32_0 = arith.constant 0 : i32
    %c0_i32_1 = arith.constant 0 : i32
    return %c0_i32, %c0_i32_0 : i32, i32
  }
  func.func @transform_6(%arg0: i32) -> (i32, i32) {
    %c0_i32 = arith.constant 0 : i32
    %c0_i32_0 = arith.constant 0 : i32
    return %arg0, %c0_i32 : i32, i32
  }
}

module attributes {stable_mosaic.version = 11 : i64} {
  func.func @_qconv_kernel(%arg0: i32, %arg1: memref<64x384xbf16, #tpu.memory_space<vmem>>, %arg2: memref<384x256xbf16, #tpu.memory_space<vmem>>, %arg3: memref<384x128xbf16, #tpu.memory_space<vmem>>, %arg4: memref<1x256xf32, #tpu.memory_space<vmem>>, %arg5: memref<1x128xf32, #tpu.memory_space<vmem>>, %arg6: memref<1x128xf32, #tpu.memory_space<vmem>>, %arg7: memref<64x32xf32, #tpu.memory_space<vmem>>, %arg8: memref<64x32xf32, #tpu.memory_space<vmem>>) attributes {dimension_semantics = [#tpu.dimension_semantics<parallel>], iteration_bounds = array<i64: 2>, scalar_prefetch = 0 : i64, scratch_operands = 0 : i64, tpu.core_type = #tpu.core_type<tc>, window_params = [{transform_indices = @transform_0, window_bounds = array<i64: 64, 384>}, {pipeline_mode = #tpu.pipeline_mode<synchronous>, transform_indices = @transform_1, window_bounds = array<i64: 384, 256>}, {pipeline_mode = #tpu.pipeline_mode<synchronous>, transform_indices = @transform_2, window_bounds = array<i64: 384, 128>}, {pipeline_mode = #tpu.pipeline_mode<synchronous>, transform_indices = @transform_3, window_bounds = array<i64: 1, 256>}, {pipeline_mode = #tpu.pipeline_mode<synchronous>, transform_indices = @transform_4, window_bounds = array<i64: 1, 128>}, {pipeline_mode = #tpu.pipeline_mode<synchronous>, transform_indices = @transform_5, window_bounds = array<i64: 1, 128>}, {transform_indices = @transform_6, window_bounds = array<i64: 64, 32>}, {transform_indices = @transform_7, window_bounds = array<i64: 64, 32>}]} {
    %c0 = arith.constant 0 : index
    %c0_0 = arith.constant 0 : index
    %0 = vector.load %arg1[%c0, %c0_0] : memref<64x384xbf16, #tpu.memory_space<vmem>>, vector<64x384xbf16>
    %c0_1 = arith.constant 0 : index
    %c0_2 = arith.constant 0 : index
    %1 = vector.load %arg2[%c0_1, %c0_2] : memref<384x256xbf16, #tpu.memory_space<vmem>>, vector<384x256xbf16>
    %cst = arith.constant dense<0.000000e+00> : vector<64x256xf32>
    %2 = tpu.matmul %0, %1, %cst {dimension_numbers = #tpu.dot_dimension_numbers<[1], [0], [0], [1], [0, 0, 1, 1], [], []>} : vector<64x384xbf16>, vector<384x256xbf16>, vector<64x256xf32> -> vector<64x256xf32>
    %c0_3 = arith.constant 0 : index
    %c0_4 = arith.constant 0 : index
    %3 = vector.load %arg4[%c0_3, %c0_4] : memref<1x256xf32, #tpu.memory_space<vmem>>, vector<1x256xf32>
    %4 = vector.broadcast %3 : vector<1x256xf32> to vector<64x256xf32>
    %5 = arith.addf %2, %4 : vector<64x256xf32>
    %6 = arith.mulf %0, %0 : vector<64x384xbf16>
    %c0_5 = arith.constant 0 : index
    %c0_6 = arith.constant 0 : index
    %7 = vector.load %arg3[%c0_5, %c0_6] : memref<384x128xbf16, #tpu.memory_space<vmem>>, vector<384x128xbf16>
    %cst_7 = arith.constant dense<0.000000e+00> : vector<64x128xf32>
    %8 = tpu.matmul %6, %7, %cst_7 {dimension_numbers = #tpu.dot_dimension_numbers<[1], [0], [0], [1], [0, 0, 1, 1], [], []>} : vector<64x384xbf16>, vector<384x128xbf16>, vector<64x128xf32> -> vector<64x128xf32>
    %9 = vector.extract_strided_slice %5 {offsets = [0, 0], sizes = [64, 128], strides = [1, 1]} : vector<64x256xf32> to vector<64x128xf32>
    %10 = vector.extract_strided_slice %5 {offsets = [0, 128], sizes = [64, 128], strides = [1, 1]} : vector<64x256xf32> to vector<64x128xf32>
    %11 = arith.mulf %9, %10 : vector<64x128xf32>
    %12 = arith.addf %11, %8 : vector<64x128xf32>
    %c0_8 = arith.constant 0 : index
    %c0_9 = arith.constant 0 : index
    %13 = vector.load %arg5[%c0_8, %c0_9] : memref<1x128xf32, #tpu.memory_space<vmem>>, vector<1x128xf32>
    %14 = vector.broadcast %13 : vector<1x128xf32> to vector<64x128xf32>
    %15 = arith.mulf %12, %14 : vector<64x128xf32>
    %c0_10 = arith.constant 0 : index
    %c0_11 = arith.constant 0 : index
    %16 = vector.load %arg6[%c0_10, %c0_11] : memref<1x128xf32, #tpu.memory_space<vmem>>, vector<1x128xf32>
    %17 = vector.broadcast %16 : vector<1x128xf32> to vector<64x128xf32>
    %18 = arith.addf %15, %17 : vector<64x128xf32>
    %19 = vector.extract_strided_slice %18 {offsets = [0, 0], sizes = [64, 32], strides = [1, 1]} : vector<64x128xf32> to vector<64x32xf32>
    %c0_12 = arith.constant 0 : index
    %c0_13 = arith.constant 0 : index
    %20 = vector.load %arg7[%c0_12, %c0_13] : memref<64x32xf32, #tpu.memory_space<vmem>>, vector<64x32xf32>
    %21 = arith.addf %19, %20 : vector<64x32xf32>
    %cst_14 = arith.constant 0.000000e+00 : f32
    %22 = vector.broadcast %cst_14 : f32 to vector<64x32xf32>
    %23 = arith.maximumf %21, %22 : vector<64x32xf32>
    %c0_15 = arith.constant 0 : index
    %c0_16 = arith.constant 0 : index
    %24 = vector.load %arg8[%c0_15, %c0_16] : memref<64x32xf32, #tpu.memory_space<vmem>>, vector<64x32xf32>
    tpu.vector_store %arg8[%c0_15, %c0_16], %23 {strides = array<i32>} : memref<64x32xf32, #tpu.memory_space<vmem>>, vector<64x32xf32>,
    return
  }
  func.func @transform_0(%arg0: i32) -> (i32, i32) {
    %c0_i32 = arith.constant 0 : i32
    %c0_i32_0 = arith.constant 0 : i32
    return %arg0, %c0_i32 : i32, i32
  }
  func.func @transform_1(%arg0: i32) -> (i32, i32) {
    %c0_i32 = arith.constant 0 : i32
    %c0_i32_0 = arith.constant 0 : i32
    %c0_i32_1 = arith.constant 0 : i32
    return %c0_i32, %c0_i32_0 : i32, i32
  }
  func.func @transform_2(%arg0: i32) -> (i32, i32) {
    %c0_i32 = arith.constant 0 : i32
    %c0_i32_0 = arith.constant 0 : i32
    %c0_i32_1 = arith.constant 0 : i32
    return %c0_i32, %c0_i32_0 : i32, i32
  }
  func.func @transform_3(%arg0: i32) -> (i32, i32) {
    %c0_i32 = arith.constant 0 : i32
    %c0_i32_0 = arith.constant 0 : i32
    %c0_i32_1 = arith.constant 0 : i32
    return %c0_i32, %c0_i32_0 : i32, i32
  }
  func.func @transform_4(%arg0: i32) -> (i32, i32) {
    %c0_i32 = arith.constant 0 : i32
    %c0_i32_0 = arith.constant 0 : i32
    %c0_i32_1 = arith.constant 0 : i32
    return %c0_i32, %c0_i32_0 : i32, i32
  }
  func.func @transform_5(%arg0: i32) -> (i32, i32) {
    %c0_i32 = arith.constant 0 : i32
    %c0_i32_0 = arith.constant 0 : i32
    %c0_i32_1 = arith.constant 0 : i32
    return %c0_i32, %c0_i32_0 : i32, i32
  }
  func.func @transform_6(%arg0: i32) -> (i32, i32) {
    %c0_i32 = arith.constant 0 : i32
    %c0_i32_0 = arith.constant 0 : i32
    return %arg0, %c0_i32 : i32, i32
  }
  func.func @transform_7(%arg0: i32) -> (i32, i32) {
    %c0_i32 = arith.constant 0 : i32
    %c0_i32_0 = arith.constant 0 : i32
    return %arg0, %c0_i32 : i32, i32
  }
}

module attributes {stable_mosaic.version = 11 : i64} {
  func.func @_qconv_kernel(%arg0: i32, %arg1: memref<16x384xbf16, #tpu.memory_space<vmem>>, %arg2: memref<384x256xbf16, #tpu.memory_space<vmem>>, %arg3: memref<384x128xbf16, #tpu.memory_space<vmem>>, %arg4: memref<1x256xf32, #tpu.memory_space<vmem>>, %arg5: memref<1x128xf32, #tpu.memory_space<vmem>>, %arg6: memref<1x128xf32, #tpu.memory_space<vmem>>, %arg7: memref<16x64xf32, #tpu.memory_space<vmem>>) attributes {dimension_semantics = [#tpu.dimension_semantics<parallel>], iteration_bounds = array<i64: 2>, scalar_prefetch = 0 : i64, scratch_operands = 0 : i64, tpu.core_type = #tpu.core_type<tc>, window_params = [{transform_indices = @transform_0, window_bounds = array<i64: 16, 384>}, {pipeline_mode = #tpu.pipeline_mode<synchronous>, transform_indices = @transform_1, window_bounds = array<i64: 384, 256>}, {pipeline_mode = #tpu.pipeline_mode<synchronous>, transform_indices = @transform_2, window_bounds = array<i64: 384, 128>}, {pipeline_mode = #tpu.pipeline_mode<synchronous>, transform_indices = @transform_3, window_bounds = array<i64: 1, 256>}, {pipeline_mode = #tpu.pipeline_mode<synchronous>, transform_indices = @transform_4, window_bounds = array<i64: 1, 128>}, {pipeline_mode = #tpu.pipeline_mode<synchronous>, transform_indices = @transform_5, window_bounds = array<i64: 1, 128>}, {transform_indices = @transform_6, window_bounds = array<i64: 16, 64>}]} {
    %c0 = arith.constant 0 : index
    %c0_0 = arith.constant 0 : index
    %0 = vector.load %arg1[%c0, %c0_0] : memref<16x384xbf16, #tpu.memory_space<vmem>>, vector<16x384xbf16>
    %c0_1 = arith.constant 0 : index
    %c0_2 = arith.constant 0 : index
    %1 = vector.load %arg2[%c0_1, %c0_2] : memref<384x256xbf16, #tpu.memory_space<vmem>>, vector<384x256xbf16>
    %cst = arith.constant dense<0.000000e+00> : vector<16x256xf32>
    %2 = tpu.matmul %0, %1, %cst {dimension_numbers = #tpu.dot_dimension_numbers<[1], [0], [0], [1], [0, 0, 1, 1], [], []>} : vector<16x384xbf16>, vector<384x256xbf16>, vector<16x256xf32> -> vector<16x256xf32>
    %c0_3 = arith.constant 0 : index
    %c0_4 = arith.constant 0 : index
    %3 = vector.load %arg4[%c0_3, %c0_4] : memref<1x256xf32, #tpu.memory_space<vmem>>, vector<1x256xf32>
    %4 = vector.broadcast %3 : vector<1x256xf32> to vector<16x256xf32>
    %5 = arith.addf %2, %4 : vector<16x256xf32>
    %6 = arith.mulf %0, %0 : vector<16x384xbf16>
    %c0_5 = arith.constant 0 : index
    %c0_6 = arith.constant 0 : index
    %7 = vector.load %arg3[%c0_5, %c0_6] : memref<384x128xbf16, #tpu.memory_space<vmem>>, vector<384x128xbf16>
    %cst_7 = arith.constant dense<0.000000e+00> : vector<16x128xf32>
    %8 = tpu.matmul %6, %7, %cst_7 {dimension_numbers = #tpu.dot_dimension_numbers<[1], [0], [0], [1], [0, 0, 1, 1], [], []>} : vector<16x384xbf16>, vector<384x128xbf16>, vector<16x128xf32> -> vector<16x128xf32>
    %9 = vector.extract_strided_slice %5 {offsets = [0, 0], sizes = [16, 128], strides = [1, 1]} : vector<16x256xf32> to vector<16x128xf32>
    %10 = vector.extract_strided_slice %5 {offsets = [0, 128], sizes = [16, 128], strides = [1, 1]} : vector<16x256xf32> to vector<16x128xf32>
    %11 = arith.mulf %9, %10 : vector<16x128xf32>
    %12 = arith.addf %11, %8 : vector<16x128xf32>
    %c0_8 = arith.constant 0 : index
    %c0_9 = arith.constant 0 : index
    %13 = vector.load %arg5[%c0_8, %c0_9] : memref<1x128xf32, #tpu.memory_space<vmem>>, vector<1x128xf32>
    %14 = vector.broadcast %13 : vector<1x128xf32> to vector<16x128xf32>
    %15 = arith.mulf %12, %14 : vector<16x128xf32>
    %c0_10 = arith.constant 0 : index
    %c0_11 = arith.constant 0 : index
    %16 = vector.load %arg6[%c0_10, %c0_11] : memref<1x128xf32, #tpu.memory_space<vmem>>, vector<1x128xf32>
    %17 = vector.broadcast %16 : vector<1x128xf32> to vector<16x128xf32>
    %18 = arith.addf %15, %17 : vector<16x128xf32>
    %19 = vector.extract_strided_slice %18 {offsets = [0, 0], sizes = [16, 64], strides = [1, 1]} : vector<16x128xf32> to vector<16x64xf32>
    %cst_12 = arith.constant 0.000000e+00 : f32
    %20 = vector.broadcast %cst_12 : f32 to vector<16x64xf32>
    %21 = arith.maximumf %19, %20 : vector<16x64xf32>
    %c0_13 = arith.constant 0 : index
    %c0_14 = arith.constant 0 : index
    %22 = vector.load %arg7[%c0_13, %c0_14] : memref<16x64xf32, #tpu.memory_space<vmem>>, vector<16x64xf32>
    tpu.vector_store %arg7[%c0_13, %c0_14], %21 {strides = array<i32>} : memref<16x64xf32, #tpu.memory_space<vmem>>, vector<16x64xf32>,
    return
  }
  func.func @transform_0(%arg0: i32) -> (i32, i32) {
    %c0_i32 = arith.constant 0 : i32
    %c0_i32_0 = arith.constant 0 : i32
    return %arg0, %c0_i32 : i32, i32
  }
  func.func @transform_1(%arg0: i32) -> (i32, i32) {
    %c0_i32 = arith.constant 0 : i32
    %c0_i32_0 = arith.constant 0 : i32
    %c0_i32_1 = arith.constant 0 : i32
    return %c0_i32, %c0_i32_0 : i32, i32
  }
  func.func @transform_2(%arg0: i32) -> (i32, i32) {
    %c0_i32 = arith.constant 0 : i32
    %c0_i32_0 = arith.constant 0 : i32
    %c0_i32_1 = arith.constant 0 : i32
    return %c0_i32, %c0_i32_0 : i32, i32
  }
  func.func @transform_3(%arg0: i32) -> (i32, i32) {
    %c0_i32 = arith.constant 0 : i32
    %c0_i32_0 = arith.constant 0 : i32
    %c0_i32_1 = arith.constant 0 : i32
    return %c0_i32, %c0_i32_0 : i32, i32
  }
  func.func @transform_4(%arg0: i32) -> (i32, i32) {
    %c0_i32 = arith.constant 0 : i32
    %c0_i32_0 = arith.constant 0 : i32
    %c0_i32_1 = arith.constant 0 : i32
    return %c0_i32, %c0_i32_0 : i32, i32
  }
  func.func @transform_5(%arg0: i32) -> (i32, i32) {
    %c0_i32 = arith.constant 0 : i32
    %c0_i32_0 = arith.constant 0 : i32
    %c0_i32_1 = arith.constant 0 : i32
    return %c0_i32, %c0_i32_0 : i32, i32
  }
  func.func @transform_6(%arg0: i32) -> (i32, i32) {
    %c0_i32 = arith.constant 0 : i32
    %c0_i32_0 = arith.constant 0 : i32
    return %arg0, %c0_i32 : i32, i32
  }
}

module attributes {stable_mosaic.version = 11 : i64} {
  func.func @_pool_linear_kernel(%arg0: memref<2x16x64xf32, #tpu.memory_space<vmem>>, %arg1: memref<64x128xf32, #tpu.memory_space<vmem>>, %arg2: memref<1x128xf32, #tpu.memory_space<vmem>>, %arg3: memref<2x10xf32, #tpu.memory_space<vmem>>) attributes {dimension_semantics = [], scalar_prefetch = 0 : i64, scratch_operands = 0 : i64, tpu.core_type = #tpu.core_type<tc>} {
    %c0 = arith.constant 0 : index
    %c0_0 = arith.constant 0 : index
    %c0_1 = arith.constant 0 : index
    %0 = vector.load %arg0[%c0, %c0_0, %c0_1] : memref<2x16x64xf32, #tpu.memory_space<vmem>>, vector<2x16x64xf32>
    %cst = arith.constant dense<0.000000e+00> : vector<2x64xf32>
    %1 = vector.multi_reduction <add>, %0, %cst [1] : vector<2x16x64xf32> to vector<2x64xf32>
    %cst_2 = arith.constant 6.250000e-02 : f32
    %2 = vector.broadcast %cst_2 : f32 to vector<2x64xf32>
    %3 = arith.mulf %1, %2 : vector<2x64xf32>
    %cst_3 = arith.constant 0.000000e+00 : f32
    %4 = vector.broadcast %cst_3 : f32 to vector<6x64xf32>
    %5 = tpu.concatenate %3, %4 in 0 : vector<2x64xf32>, vector<6x64xf32> -> vector<8x64xf32>
    %c0_4 = arith.constant 0 : index
    %c0_5 = arith.constant 0 : index
    %6 = vector.load %arg1[%c0_4, %c0_5] : memref<64x128xf32, #tpu.memory_space<vmem>>, vector<64x128xf32>
    %cst_6 = arith.constant dense<0.000000e+00> : vector<8x128xf32>
    %7 = tpu.matmul %5, %6, %cst_6 {dimension_numbers = #tpu.dot_dimension_numbers<[1], [0], [0], [1], [0, 0, 1, 1], [], []>} : vector<8x64xf32>, vector<64x128xf32>, vector<8x128xf32> -> vector<8x128xf32>
    %c0_7 = arith.constant 0 : index
    %c0_8 = arith.constant 0 : index
    %8 = vector.load %arg2[%c0_7, %c0_8] : memref<1x128xf32, #tpu.memory_space<vmem>>, vector<1x128xf32>
    %9 = vector.broadcast %8 : vector<1x128xf32> to vector<8x128xf32>
    %10 = arith.addf %7, %9 : vector<8x128xf32>
    %11 = vector.extract_strided_slice %10 {offsets = [0, 0], sizes = [2, 10], strides = [1, 1]} : vector<8x128xf32> to vector<2x10xf32>
    %c0_9 = arith.constant 0 : index
    %c0_10 = arith.constant 0 : index
    %12 = vector.load %arg3[%c0_9, %c0_10] : memref<2x10xf32, #tpu.memory_space<vmem>>, vector<2x10xf32>
    tpu.vector_store %arg3[%c0_9, %c0_10], %11 {strides = array<i32>} : memref<2x10xf32, #tpu.memory_space<vmem>>, vector<2x10xf32>,
    return
  }
}

module attributes {stable_mosaic.version = 11 : i64} {
  func.func @_qconv_kernel(%arg0: i32, %arg1: memref<16x640xbf16, #tpu.memory_space<vmem>>, %arg2: memref<640x256xbf16, #tpu.memory_space<vmem>>, %arg3: memref<640x128xbf16, #tpu.memory_space<vmem>>, %arg4: memref<1x256xf32, #tpu.memory_space<vmem>>, %arg5: memref<1x128xf32, #tpu.memory_space<vmem>>, %arg6: memref<1x128xf32, #tpu.memory_space<vmem>>, %arg7: memref<16x64xf32, #tpu.memory_space<vmem>>, %arg8: memref<16x64xf32, #tpu.memory_space<vmem>>) attributes {dimension_semantics = [#tpu.dimension_semantics<parallel>], iteration_bounds = array<i64: 2>, scalar_prefetch = 0 : i64, scratch_operands = 0 : i64, tpu.core_type = #tpu.core_type<tc>, window_params = [{transform_indices = @transform_0, window_bounds = array<i64: 16, 640>}, {pipeline_mode = #tpu.pipeline_mode<synchronous>, transform_indices = @transform_1, window_bounds = array<i64: 640, 256>}, {pipeline_mode = #tpu.pipeline_mode<synchronous>, transform_indices = @transform_2, window_bounds = array<i64: 640, 128>}, {pipeline_mode = #tpu.pipeline_mode<synchronous>, transform_indices = @transform_3, window_bounds = array<i64: 1, 256>}, {pipeline_mode = #tpu.pipeline_mode<synchronous>, transform_indices = @transform_4, window_bounds = array<i64: 1, 128>}, {pipeline_mode = #tpu.pipeline_mode<synchronous>, transform_indices = @transform_5, window_bounds = array<i64: 1, 128>}, {transform_indices = @transform_6, window_bounds = array<i64: 16, 64>}, {transform_indices = @transform_7, window_bounds = array<i64: 16, 64>}]} {
    %c0 = arith.constant 0 : index
    %c0_0 = arith.constant 0 : index
    %0 = vector.load %arg1[%c0, %c0_0] : memref<16x640xbf16, #tpu.memory_space<vmem>>, vector<16x640xbf16>
    %c0_1 = arith.constant 0 : index
    %c0_2 = arith.constant 0 : index
    %1 = vector.load %arg2[%c0_1, %c0_2] : memref<640x256xbf16, #tpu.memory_space<vmem>>, vector<640x256xbf16>
    %cst = arith.constant dense<0.000000e+00> : vector<16x256xf32>
    %2 = tpu.matmul %0, %1, %cst {dimension_numbers = #tpu.dot_dimension_numbers<[1], [0], [0], [1], [0, 0, 1, 1], [], []>} : vector<16x640xbf16>, vector<640x256xbf16>, vector<16x256xf32> -> vector<16x256xf32>
    %c0_3 = arith.constant 0 : index
    %c0_4 = arith.constant 0 : index
    %3 = vector.load %arg4[%c0_3, %c0_4] : memref<1x256xf32, #tpu.memory_space<vmem>>, vector<1x256xf32>
    %4 = vector.broadcast %3 : vector<1x256xf32> to vector<16x256xf32>
    %5 = arith.addf %2, %4 : vector<16x256xf32>
    %6 = arith.mulf %0, %0 : vector<16x640xbf16>
    %c0_5 = arith.constant 0 : index
    %c0_6 = arith.constant 0 : index
    %7 = vector.load %arg3[%c0_5, %c0_6] : memref<640x128xbf16, #tpu.memory_space<vmem>>, vector<640x128xbf16>
    %cst_7 = arith.constant dense<0.000000e+00> : vector<16x128xf32>
    %8 = tpu.matmul %6, %7, %cst_7 {dimension_numbers = #tpu.dot_dimension_numbers<[1], [0], [0], [1], [0, 0, 1, 1], [], []>} : vector<16x640xbf16>, vector<640x128xbf16>, vector<16x128xf32> -> vector<16x128xf32>
    %9 = vector.extract_strided_slice %5 {offsets = [0, 0], sizes = [16, 128], strides = [1, 1]} : vector<16x256xf32> to vector<16x128xf32>
    %10 = vector.extract_strided_slice %5 {offsets = [0, 128], sizes = [16, 128], strides = [1, 1]} : vector<16x256xf32> to vector<16x128xf32>
    %11 = arith.mulf %9, %10 : vector<16x128xf32>
    %12 = arith.addf %11, %8 : vector<16x128xf32>
    %c0_8 = arith.constant 0 : index
    %c0_9 = arith.constant 0 : index
    %13 = vector.load %arg5[%c0_8, %c0_9] : memref<1x128xf32, #tpu.memory_space<vmem>>, vector<1x128xf32>
    %14 = vector.broadcast %13 : vector<1x128xf32> to vector<16x128xf32>
    %15 = arith.mulf %12, %14 : vector<16x128xf32>
    %c0_10 = arith.constant 0 : index
    %c0_11 = arith.constant 0 : index
    %16 = vector.load %arg6[%c0_10, %c0_11] : memref<1x128xf32, #tpu.memory_space<vmem>>, vector<1x128xf32>
    %17 = vector.broadcast %16 : vector<1x128xf32> to vector<16x128xf32>
    %18 = arith.addf %15, %17 : vector<16x128xf32>
    %19 = vector.extract_strided_slice %18 {offsets = [0, 0], sizes = [16, 64], strides = [1, 1]} : vector<16x128xf32> to vector<16x64xf32>
    %c0_12 = arith.constant 0 : index
    %c0_13 = arith.constant 0 : index
    %20 = vector.load %arg7[%c0_12, %c0_13] : memref<16x64xf32, #tpu.memory_space<vmem>>, vector<16x64xf32>
    %21 = arith.addf %19, %20 : vector<16x64xf32>
    %cst_14 = arith.constant 0.000000e+00 : f32
    %22 = vector.broadcast %cst_14 : f32 to vector<16x64xf32>
    %23 = arith.maximumf %21, %22 : vector<16x64xf32>
    %c0_15 = arith.constant 0 : index
    %c0_16 = arith.constant 0 : index
    %24 = vector.load %arg8[%c0_15, %c0_16] : memref<16x64xf32, #tpu.memory_space<vmem>>, vector<16x64xf32>
    tpu.vector_store %arg8[%c0_15, %c0_16], %23 {strides = array<i32>} : memref<16x64xf32, #tpu.memory_space<vmem>>, vector<16x64xf32>,
    return
  }
  func.func @transform_0(%arg0: i32) -> (i32, i32) {
    %c0_i32 = arith.constant 0 : i32
    %c0_i32_0 = arith.constant 0 : i32
    return %arg0, %c0_i32 : i32, i32
  }
  func.func @transform_1(%arg0: i32) -> (i32, i32) {
    %c0_i32 = arith.constant 0 : i32
    %c0_i32_0 = arith.constant 0 : i32
    %c0_i32_1 = arith.constant 0 : i32
    return %c0_i32, %c0_i32_0 : i32, i32
  }
  func.func @transform_2(%arg0: i32) -> (i32, i32) {
    %c0_i32 = arith.constant 0 : i32
    %c0_i32_0 = arith.constant 0 : i32
    %c0_i32_1 = arith.constant 0 : i32
    return %c0_i32, %c0_i32_0 : i32, i32
  }
  func.func @transform_3(%arg0: i32) -> (i32, i32) {
    %c0_i32 = arith.constant 0 : i32
    %c0_i32_0 = arith.constant 0 : i32
    %c0_i32_1 = arith.constant 0 : i32
    return %c0_i32, %c0_i32_0 : i32, i32
  }
  func.func @transform_4(%arg0: i32) -> (i32, i32) {
    %c0_i32 = arith.constant 0 : i32
    %c0_i32_0 = arith.constant 0 : i32
    %c0_i32_1 = arith.constant 0 : i32
    return %c0_i32, %c0_i32_0 : i32, i32
  }
  func.func @transform_5(%arg0: i32) -> (i32, i32) {
    %c0_i32 = arith.constant 0 : i32
    %c0_i32_0 = arith.constant 0 : i32
    %c0_i32_1 = arith.constant 0 : i32
    return %c0_i32, %c0_i32_0 : i32, i32
  }
  func.func @transform_6(%arg0: i32) -> (i32, i32) {
    %c0_i32 = arith.constant 0 : i32
    %c0_i32_0 = arith.constant 0 : i32
    return %arg0, %c0_i32 : i32, i32
  }
  func.func @transform_7(%arg0: i32) -> (i32, i32) {
    %c0_i32 = arith.constant 0 : i32
    %c0_i32_0 = arith.constant 0 : i32
    return %arg0, %c0_i32 : i32, i32
  }
}

</mosaic_0001>

<llo_original>
// kernel: _lambda_.8
$region0: #{_lambda_.8}
  #allocation0 [shape = 'u32[]', space=smem, size = 0x4, offset = 0x4, fixed_abs, tag = 'smem constant byte address 0x4 - core index']
  #allocation1 [shape = 'u32[72,128]{1,0:T(1,128)}', space=vmem, size = 0x9000, scoped, tag = 'internal scratch']
  %s0 = inlined_call_operand.vmem [shape: bf16[512,128], index: 0, kind: input, shape index: {}]
  %s1 = inlined_call_operand.vmem [shape: bf16[128,128], index: 1, kind: input, shape index: {}]
  %s2 = inlined_call_operand.vmem [shape: f32[1,128], index: 2, kind: input, shape index: {}]
  %s3 = inlined_call_operand.vmem [shape: f32[1,128], index: 3, kind: input, shape index: {}]
  %s4 = inlined_call_operand.vmem [shape: f32[512,16], index: 4, kind: output, shape index: {}]
  %s5 = sld [smem:[#allocation0]]
  $region49: #{_lambda_.8} parent=0
    _
  %s7 = ssub.s32 1, %s5
  %s8 = scalar_select 0, %s7, %s5
  loop: start=0, step=1, limit=4
  $region2: #{_lambda_.8} parent=0 // loop_pre_header
    _
  $region3: #{_lambda_.8} parent=0 // loop_header
    %s10 = sphi 0, %s14
    %p11 = scmp.ge.s32.totalorder %s10, 4
    %s20 = sphi 0, %s22
    %s23 = sphi 0, %s20
    %s24 = sphi 0, %s23
    %s40 = sphi 0, %s24
    %s44 = sphi 0, %s44
    %s46 = sphi 0, %s44
    %s47 = sphi 0, %s46
    %s61 = sphi 0, %s47
    %s65 = sphi 0, %s65
    %s67 = sphi 0, %s65
    %s68 = sphi 0, %s67
    %s82 = sphi 0, %s68
    %s86 = sphi 0, %s86
    %s88 = sphi 0, %s86
    %s89 = sphi 0, %s88
    %s103 = sphi 0, %s89
    %s109 = sphi 0, %s111
    %s112 = sphi 0, %s109
    %s113 = sphi 0, %s112
    %s129 = sphi 0, %s113
  $region4: #{_lambda_.8} parent=0 // loop_header_branch
    %13 = sbr.rel (%p11) target = $region8
  $region5: #{_lambda_.8} parent=0 // loop_body
    %s15 = ssub.s32 %s10, 1
    %s16 = ssub.s32 %s10, 2
    %s17 = sadd.s32 %s10, 1
    %s18 = ssub.s32 %s10, %s17
    %p19 = scmp.eq.s32.totalorder %s18, 0
    %s21 = sadd.s32 %s20, 1
    %s22 = scalar_select %p19, %s20, %s21
    %p25 = pneg %p19
    %p26 = scmp.eq.s32.totalorder %s10, 1
    %p27 = por %p25, %p26
    %p28 = scmp.ne.s32.totalorder %s20, %s23
    %p29 = scmp.eq.s32.totalorder %s10, 0
    %p30 = por %p28, %p29
    %p31 = scmp.ne.s32.totalorder %s20, %s23
    %p32 = scmp.eq.s32.totalorder %s15, 1
    %p33 = por %p31, %p32
    %p34 = scmp.ne.s32.totalorder %s23, %s24
    %p35 = scmp.eq.s32.totalorder %s15, 0
    %p36 = por %p34, %p35
    %p37 = scmp.ne.s32.totalorder %s23, %s24
    %p38 = scmp.eq.s32.totalorder %s16, 1
    %p39 = por %p37, %p38
    %p41 = scmp.ne.s32.totalorder %s24, %s40
    %p42 = scmp.eq.s32.totalorder %s16, 0
    %p43 = por %p41, %p42
    %s45 = sadd.s32 %s44, 1
    %p48 = scmp.eq.s32.totalorder %s10, 1
    %p49 = scmp.ne.s32.totalorder %s44, %s46
    %p50 = scmp.eq.s32.totalorder %s10, 0
    %p51 = por %p49, %p50
    %p52 = scmp.ne.s32.totalorder %s44, %s46
    %p53 = scmp.eq.s32.totalorder %s15, 1
    %p54 = por %p52, %p53
    %p55 = scmp.ne.s32.totalorder %s46, %s47
    %p56 = scmp.eq.s32.totalorder %s15, 0
    %p57 = por %p55, %p56
    %p58 = scmp.ne.s32.totalorder %s46, %s47
    %p59 = scmp.eq.s32.totalorder %s16, 1
    %p60 = por %p58, %p59
    %p62 = scmp.ne.s32.totalorder %s47, %s61
    %p63 = scmp.eq.s32.totalorder %s16, 0
    %p64 = por %p62, %p63
    %s66 = sadd.s32 %s65, 1
    %p69 = scmp.eq.s32.totalorder %s10, 1
    %p70 = scmp.ne.s32.totalorder %s65, %s67
    %p71 = scmp.eq.s32.totalorder %s10, 0
    %p72 = por %p70, %p71
    %p73 = scmp.ne.s32.totalorder %s65, %s67
    %p74 = scmp.eq.s32.totalorder %s15, 1
    %p75 = por %p73, %p74
    %p76 = scmp.ne.s32.totalorder %s67, %s68
    %p77 = scmp.eq.s32.totalorder %s15, 0
    %p78 = por %p76, %p77
    %p79 = scmp.ne.s32.totalorder %s67, %s68
    %p80 = scmp.eq.s32.totalorder %s16, 1
    %p81 = por %p79, %p80
    %p83 = scmp.ne.s32.totalorder %s68, %s82
    %p84 = scmp.eq.s32.totalorder %s16, 0
    %p85 = por %p83, %p84
    %s87 = sadd.s32 %s86, 1
    %p90 = scmp.eq.s32.totalorder %s10, 1
    %p91 = scmp.ne.s32.totalorder %s86, %s88
    %p92 = scmp.eq.s32.totalorder %s10, 0
    %p93 = por %p91, %p92
    %p94 = scmp.ne.s32.totalorder %s86, %s88
    %p95 = scmp.eq.s32.totalorder %s15, 1
    %p96 = por %p94, %p95
    %p97 = scmp.ne.s32.totalorder %s88, %s89
    %p98 = scmp.eq.s32.totalorder %s15, 0
    %p99 = por %p97, %p98
    %p100 = scmp.ne.s32.totalorder %s88, %s89
    %p101 = scmp.eq.s32.totalorder %s16, 1
    %p102 = por %p100, %p101
    %p104 = scmp.ne.s32.totalorder %s89, %s103
    %p105 = scmp.eq.s32.totalorder %s16, 0
    %p106 = por %p104, %p105
    %s107 = ssub.s32 %s10, %s17
    %p108 = scmp.eq.s32.totalorder %s107, 0
    %s110 = sadd.s32 %s109, 1
    %s111 = scalar_select %p108, %s109, %s110
    %p114 = pneg %p108
    %p115 = scmp.eq.s32.totalorder %s10, 1
    %p116 = por %p114, %p115
    %p117 = scmp.ne.s32.totalorder %s109, %s112
    %p118 = scmp.eq.s32.totalorder %s10, 0
    %p119 = por %p117, %p118
    %p120 = scmp.ne.s32.totalorder %s109, %s112
    %p121 = scmp.eq.s32.totalorder %s15, 1
    %p122 = por %p120, %p121
    %p123 = scmp.ne.s32.totalorder %s112, %s113
    %p124 = scmp.eq.s32.totalorder %s15, 0
    %p125 = por %p123, %p124
    %p126 = scmp.ne.s32.totalorder %s112, %s113
    %p127 = scmp.eq.s32.totalorder %s16, 1
    %p128 = por %p126, %p127
    %p130 = scmp.ne.s32.totalorder %s113, %s129
    %p131 = scmp.eq.s32.totalorder %s16, 0
    %p132 = por %p130, %p131
    %p133 = scmp.le.s32.totalorder 1, %s10
    %p134 = scmp.lt.s32.totalorder %s10, 3
    %p135 = pnand %p133, %p134
    %p136 = pneg %p135
    // Predicated region
    $region9: #{_lambda_.8} parent=5 // pred_check
      _
    $region10: #{_lambda_.8} parent=5 // pred_check_branch
      %138 = sbr.rel (%p135) target = $region12
    $region11: #{_lambda_.8} parent=5 // pred_region
      %s139 = ssub.s32 %s10, 1
      // Predicated region
      $region13: #{_lambda_.8} parent=11 // pred_check
        %p140 = pneg %p57
      $region14: #{_lambda_.8} parent=11 // pred_check_branch
        %142 = sbr.rel (%p140) target = $region16
      $region15: #{_lambda_.8} parent=11 // pred_region
        _
      $region16: #{_lambda_.8} parent=11 // pred_fallthru
        _
      // Predicated region
      $region17: #{_lambda_.8} parent=11 // pred_check
        %p143 = pneg %p78
      $region18: #{_lambda_.8} parent=11 // pred_check_branch
        %145 = sbr.rel (%p143) target = $region20
      $region19: #{_lambda_.8} parent=11 // pred_region
        _
      $region20: #{_lambda_.8} parent=11 // pred_fallthru
        _
      // Predicated region
      $region21: #{_lambda_.8} parent=11 // pred_check
        %p146 = pneg %p99
      $region22: #{_lambda_.8} parent=11 // pred_check_branch
        %148 = sbr.rel (%p146) target = $region24
      $region23: #{_lambda_.8} parent=11 // pred_region
        _
      $region24: #{_lambda_.8} parent=11 // pred_fallthru
        _
    $region12: #{_lambda_.8} parent=5 // pred_fallthru
      _
    %p149 = scmp.lt.s32.totalorder %s10, 2
    // Predicated region
    $region25: #{_lambda_.8} parent=5 // pred_check
      %p150 = pneg %p149
    $region26: #{_lambda_.8} parent=5 // pred_check_branch
      %152 = sbr.rel (%p150) target = $region28
    $region27: #{_lambda_.8} parent=5 // pred_region
      // Predicated region
      $region29: #{_lambda_.8} parent=27 // pred_check
        %p153 = pneg %p30
      $region30: #{_lambda_.8} parent=27 // pred_check_branch
        %155 = sbr.rel (%p153) target = $region32
      $region31: #{_lambda_.8} parent=27 // pred_region
        %s156 = smul.u32 32, %s10
        %p157 = scmp.lt.s32.totalorder %s156, 63
        %s158 = scalar_select %p157, %s156, 63
        %s159 = smul.addr %s158, 4
        %s160 = scalar_lea.vmem %s0, %s159
        %s161 = smul.u32 32, %s10
      $region32: #{_lambda_.8} parent=27 // pred_fallthru
        _
    $region28: #{_lambda_.8} parent=5 // pred_fallthru
      _
    %p162 = scmp.le.s32.totalorder 1, %s10
    %p163 = scmp.lt.s32.totalorder %s10, 3
    %p164 = pnand %p162, %p163
    %p165 = pneg %p164
    // Predicated region
    $region33: #{_lambda_.8} parent=5 // pred_check
      _
    $region34: #{_lambda_.8} parent=5 // pred_check_branch
      %167 = sbr.rel (%p164) target = $region36
    $region35: #{_lambda_.8} parent=5 // pred_region
      %s168 = ssub.s32 %s10, 1
      %s169 = smul.u32 32, %s15
      %p170 = scmp.lt.s32.totalorder %s169, 63
      %s171 = scalar_select %p170, %s169, 63
      %s172 = smul.addr %s171, 4
      %s173 = scalar_lea.vmem %s0, %s172
      %p174 = pneg %p36
      %p175 = pneg %p33
      %p176 = pneg %p57
      %p177 = pneg %p54
      %p178 = pneg %p78
      %p179 = pneg %p75
      %p180 = pneg %p99
      %p181 = pneg %p96
      %p182 = pneg %p125
      %p183 = pneg %p122
      %s184 = smul.u32 32, %s15
      %p185 = scmp.lt.s32.totalorder %s184, 63
      %s186 = scalar_select %p185, %s184, 63
      %s187 = smul.addr %s186, 8
      %s188 = scalar_lea.vmem %s4, %s187
      %s189 = smul.u32 32, %s15
      %p190 = scmp.lt.s32.totalorder %s189, 63
      %s191 = scalar_select %p190, %s189, 63
      %s192 = smul.addr %s191, 4
      %s193 = scalar_lea.vmem %s0, %s192
      %s194 = smul.u32 32, %s15
      %s195 = smul.u32 32, %s15
      %p196 = scmp.lt.s32.totalorder %s195, 63
      %s197 = scalar_select %p196, %s195, 63
      %s198 = smul.addr %s197, 8
      %s199 = scalar_lea.vmem %s4, %s198
      %s200 = smul.u32 32, %s15
      %v201 = vld [vmem:[%s193] sm:$0xf]
      %v202 = vld [vmem:[%s193 + $0x4] sm:$0xf]
      %v203 = vld [vmem:[%s193 + $0x8] sm:$0xf]
      %v204 = vld [vmem:[%s193 + $0xc] sm:$0xf]
      %v205 = vld [vmem:[%s193 + $0x10] sm:$0xf]
      %v206 = vld [vmem:[%s193 + $0x14] sm:$0xf]
      %v207 = vld [vmem:[%s193 + $0x18] sm:$0xf]
      %v208 = vld [vmem:[%s193 + $0x1c] sm:$0xf]
      %v209 = vld [vmem:[%s193 + $0x20] sm:$0xf]
      %v210 = vld [vmem:[%s193 + $0x24] sm:$0xf]
      %v211 = vld [vmem:[%s193 + $0x28] sm:$0xf]
      %v212 = vld [vmem:[%s193 + $0x2c] sm:$0xf]
      %v213 = vld [vmem:[%s193 + $0x30] sm:$0xf]
      %v214 = vld [vmem:[%s193 + $0x34] sm:$0xf]
      %v215 = vld [vmem:[%s193 + $0x38] sm:$0xf]
      %v216 = vld [vmem:[%s193 + $0x3c] sm:$0xf]
      %v217 = vld [vmem:[%s193 + $0x40] sm:$0xf]
      %v218 = vld [vmem:[%s193 + $0x44] sm:$0xf]
      %v219 = vld [vmem:[%s193 + $0x48] sm:$0xf]
      %v220 = vld [vmem:[%s193 + $0x4c] sm:$0xf]
      %v221 = vld [vmem:[%s193 + $0x50] sm:$0xf]
      %v222 = vld [vmem:[%s193 + $0x54] sm:$0xf]
      %v223 = vld [vmem:[%s193 + $0x58] sm:$0xf]
      %v224 = vld [vmem:[%s193 + $0x5c] sm:$0xf]
      %v225 = vld [vmem:[%s193 + $0x60] sm:$0xf]
      %v226 = vld [vmem:[%s193 + $0x64] sm:$0xf]
      %v227 = vld [vmem:[%s193 + $0x68] sm:$0xf]
      %v228 = vld [vmem:[%s193 + $0x6c] sm:$0xf]
      %v229 = vld [vmem:[%s193 + $0x70] sm:$0xf]
      %v230 = vld [vmem:[%s193 + $0x74] sm:$0xf]
      %v231 = vld [vmem:[%s193 + $0x78] sm:$0xf]
      %v232 = vld [vmem:[%s193 + $0x7c] sm:$0xf]
      %v233 = vld [vmem:[%s1] sm:$0xf]
      %v234 = vld [vmem:[%s1 + $0x4] sm:$0xf]
      %v235 = vld [vmem:[%s1 + $0x8] sm:$0xf]
      %v236 = vld [vmem:[%s1 + $0xc] sm:$0xf]
      %v237 = vld [vmem:[%s1 + $0x10] sm:$0xf]
      %v238 = vld [vmem:[%s1 + $0x14] sm:$0xf]
      %v239 = vld [vmem:[%s1 + $0x18] sm:$0xf]
      %v240 = vld [vmem:[%s1 + $0x1c] sm:$0xf]
      %v241 = vld [vmem:[%s1 + $0x20] sm:$0xf]
      %v242 = vld [vmem:[%s1 + $0x24] sm:$0xf]
      %v243 = vld [vmem:[%s1 + $0x28] sm:$0xf]
      %v244 = vld [vmem:[%s1 + $0x2c] sm:$0xf]
      %v245 = vld [vmem:[%s1 + $0x30] sm:$0xf]
      %v246 = vld [vmem:[%s1 + $0x34] sm:$0xf]
      %v247 = vld [vmem:[%s1 + $0x38] sm:$0xf]
      %v248 = vld [vmem:[%s1 + $0x3c] sm:$0xf]
      %v281 = vunpack.c.l.b16 %v201
      %v282 = vunpack.c.l.b16 %v202
      %v283 = vunpack.c.l.b16 %v203
      %v284 = vunpack.c.l.b16 %v204
      %v285 = vunpack.c.l.b16 %v205
      %v286 = vunpack.c.l.b16 %v206
      %v287 = vunpack.c.l.b16 %v207
      %v288 = vunpack.c.l.b16 %v208
      %v289 = vunpack.c.l.b16 %v209
      %v290 = vunpack.c.l.b16 %v210
      %v291 = vunpack.c.l.b16 %v211
      %v292 = vunpack.c.l.b16 %v212
      %v293 = vunpack.c.l.b16 %v213
      %v294 = vunpack.c.l.b16 %v214
      %v295 = vunpack.c.l.b16 %v215
      %v296 = vunpack.c.l.b16 %v216
      %v297 = vunpack.c.l.b16 %v217
      %v298 = vunpack.c.l.b16 %v218
      %v299 = vunpack.c.l.b16 %v219
      %v300 = vunpack.c.l.b16 %v220
      %v301 = vunpack.c.l.b16 %v221
      %v302 = vunpack.c.l.b16 %v222
      %v303 = vunpack.c.l.b16 %v223
      %v304 = vunpack.c.l.b16 %v224
      %v305 = vunpack.c.l.b16 %v225
      %v306 = vunpack.c.l.b16 %v226
      %v307 = vunpack.c.l.b16 %v227
      %v308 = vunpack.c.l.b16 %v228
      %v309 = vunpack.c.l.b16 %v229
      %v310 = vunpack.c.l.b16 %v230
      %v311 = vunpack.c.l.b16 %v231
      %v312 = vunpack.c.l.b16 %v232
      %v313 = vpack.c.b16 %v282, %v281
      %v314 = vpack.c.b16 %v284, %v283
      %v315 = vpack.c.b16 %v286, %v285
      %v316 = vpack.c.b16 %v288, %v287
      %v317 = vpack.c.b16 %v290, %v289
      %v318 = vpack.c.b16 %v292, %v291
      %v319 = vpack.c.b16 %v294, %v293
      %v320 = vpack.c.b16 %v296, %v295
      %v321 = vpack.c.b16 %v298, %v297
      %v322 = vpack.c.b16 %v300, %v299
      %v323 = vpack.c.b16 %v302, %v301
      %v324 = vpack.c.b16 %v304, %v303
      %v325 = vpack.c.b16 %v306, %v305
      %v326 = vpack.c.b16 %v308, %v307
      %v327 = vpack.c.b16 %v310, %v309
      %v328 = vpack.c.b16 %v312, %v311
      %v361 = vunpack.c.l.b16 %v233
      %v362 = vunpack.c.l.b16 %v234
      %v363 = vunpack.c.l.b16 %v235
      %v364 = vunpack.c.l.b16 %v236
      %v365 = vunpack.c.l.b16 %v237
      %v366 = vunpack.c.l.b16 %v238
      %v367 = vunpack.c.l.b16 %v239
      %v368 = vunpack.c.l.b16 %v240
      %v369 = vunpack.c.l.b16 %v241
      %v370 = vunpack.c.l.b16 %v242
      %v371 = vunpack.c.l.b16 %v243
      %v372 = vunpack.c.l.b16 %v244
      %v373 = vunpack.c.l.b16 %v245
      %v374 = vunpack.c.l.b16 %v246
      %v375 = vunpack.c.l.b16 %v247
      %v376 = vunpack.c.l.b16 %v248
      %v377 = vpack.c.b16 %v362, %v361
      %v378 = vpack.c.b16 %v364, %v363
      %v379 = vpack.c.b16 %v366, %v365
      %v380 = vpack.c.b16 %v368, %v367
      %v381 = vpack.c.b16 %v370, %v369
      %v382 = vpack.c.b16 %v372, %v371
      %v383 = vpack.c.b16 %v374, %v373
      %v384 = vpack.c.b16 %v376, %v375
      %393 = vmatpush.bf16.msra.mxu0 %v384
      %394 = vmatpush.bf16.msra.mxu0 %v383
      %395 = vmatpush.bf16.msra.mxu0 %v382
      %396 = vmatpush.bf16.msra.mxu0 %v381
      %397 = vmatpush.bf16.msra.mxu0 %v380
      %398 = vmatpush.bf16.msra.mxu0 %v379
      %399 = vmatpush.bf16.msra.mxu0 %v378
      %400 = vmatpush.bf16.msra.mxu0 %v377
      %401 = vmatmul.bf16.gmra.mxu0 %v313
      %v402 = vpop.f32.mrf.mxu0
      %v403 = vadd.f32 0.0, %v402
      %v404 = vpop.f32.mrf.mxu0
      %v405 = vadd.f32 0.0, %v404
      %406 = vmatmul.bf16.gmra.mxu0 %v314
      %v407 = vpop.f32.mrf.mxu0
      %v408 = vadd.f32 0.0, %v407
      %v409 = vpop.f32.mrf.mxu0
      %v410 = vadd.f32 0.0, %v409
      %411 = vmatmul.bf16.gmra.mxu0 %v315
      %v412 = vpop.f32.mrf.mxu0
      %v413 = vadd.f32 0.0, %v412
      %v414 = vpop.f32.mrf.mxu0
      %v415 = vadd.f32 0.0, %v414
      %416 = vmatmul.bf16.gmra.mxu0 %v316
      %v417 = vpop.f32.mrf.mxu0
      %v418 = vadd.f32 0.0, %v417
      %v419 = vpop.f32.mrf.mxu0
      %v420 = vadd.f32 0.0, %v419
      %421 = vmatmul.bf16.gmra.mxu0 %v317
      %v422 = vpop.f32.mrf.mxu0
      %v423 = vadd.f32 0.0, %v422
      %v424 = vpop.f32.mrf.mxu0
      %v425 = vadd.f32 0.0, %v424
      %426 = vmatmul.bf16.gmra.mxu0 %v318
      %v427 = vpop.f32.mrf.mxu0
      %v428 = vadd.f32 0.0, %v427
      %v429 = vpop.f32.mrf.mxu0
      %v430 = vadd.f32 0.0, %v429
      %431 = vmatmul.bf16.gmra.mxu0 %v319
      %v432 = vpop.f32.mrf.mxu0
      %v433 = vadd.f32 0.0, %v432
      %v434 = vpop.f32.mrf.mxu0
      %v435 = vadd.f32 0.0, %v434
      %436 = vmatmul.bf16.gmra.mxu0 %v320
      %v437 = vpop.f32.mrf.mxu0
      %v438 = vadd.f32 0.0, %v437
      %v439 = vpop.f32.mrf.mxu0
      %v440 = vadd.f32 0.0, %v439
      %441 = vmatmul.bf16.gmra.mxu0 %v321
      %v442 = vpop.f32.mrf.mxu0
      %v443 = vadd.f32 0.0, %v442
      %v444 = vpop.f32.mrf.mxu0
      %v445 = vadd.f32 0.0, %v444
      %446 = vmatmul.bf16.gmra.mxu0 %v322
      %v447 = vpop.f32.mrf.mxu0
      %v448 = vadd.f32 0.0, %v447
      %v449 = vpop.f32.mrf.mxu0
      %v450 = vadd.f32 0.0, %v449
      %451 = vmatmul.bf16.gmra.mxu0 %v323
      %v452 = vpop.f32.mrf.mxu0
      %v453 = vadd.f32 0.0, %v452
      %v454 = vpop.f32.mrf.mxu0
      %v455 = vadd.f32 0.0, %v454
      %456 = vmatmul.bf16.gmra.mxu0 %v324
      %v457 = vpop.f32.mrf.mxu0
      %v458 = vadd.f32 0.0, %v457
      %v459 = vpop.f32.mrf.mxu0
      %v460 = vadd.f32 0.0, %v459
      %461 = vmatmul.bf16.gmra.mxu0 %v325
      %v462 = vpop.f32.mrf.mxu0
      %v463 = vadd.f32 0.0, %v462
      %v464 = vpop.f32.mrf.mxu0
      %v465 = vadd.f32 0.0, %v464
      %466 = vmatmul.bf16.gmra.mxu0 %v326
      %v467 = vpop.f32.mrf.mxu0
      %v468 = vadd.f32 0.0, %v467
      %v469 = vpop.f32.mrf.mxu0
      %v470 = vadd.f32 0.0, %v469
      %471 = vmatmul.bf16.gmra.mxu0 %v327
      %v472 = vpop.f32.mrf.mxu0
      %v473 = vadd.f32 0.0, %v472
      %v474 = vpop.f32.mrf.mxu0
      %v475 = vadd.f32 0.0, %v474
      %476 = vmatmul.bf16.gmra.mxu0 %v328
      %v477 = vpop.f32.mrf.mxu0
      %v478 = vadd.f32 0.0, %v477
      %v479 = vpop.f32.mrf.mxu0
      %v480 = vadd.f32 0.0, %v479
      %481 = vdwg.mxu0
      %v482 = vld [vmem:[%s2] sm:$0x1]
      %v484 = vperm.slane %v482, 0
      %v486 = vmul.f32 %v403, %v484
      %v487 = vmul.f32 %v405, %v484
      %v488 = vmul.f32 %v408, %v484
      %v489 = vmul.f32 %v410, %v484
      %v490 = vmul.f32 %v413, %v484
      %v491 = vmul.f32 %v415, %v484
      %v492 = vmul.f32 %v418, %v484
      %v493 = vmul.f32 %v420, %v484
      %v494 = vmul.f32 %v423, %v484
      %v495 = vmul.f32 %v425, %v484
      %v496 = vmul.f32 %v428, %v484
      %v497 = vmul.f32 %v430, %v484
      %v498 = vmul.f32 %v433, %v484
      %v499 = vmul.f32 %v435, %v484
      %v500 = vmul.f32 %v438, %v484
      %v501 = vmul.f32 %v440, %v484
      %v502 = vmul.f32 %v443, %v484
      %v503 = vmul.f32 %v445, %v484
      %v504 = vmul.f32 %v448, %v484
      %v505 = vmul.f32 %v450, %v484
      %v506 = vmul.f32 %v453, %v484
      %v507 = vmul.f32 %v455, %v484
      %v508 = vmul.f32 %v458, %v484
      %v509 = vmul.f32 %v460, %v484
      %v510 = vmul.f32 %v463, %v484
      %v511 = vmul.f32 %v465, %v484
      %v512 = vmul.f32 %v468, %v484
      %v513 = vmul.f32 %v470, %v484
      %v514 = vmul.f32 %v473, %v484
      %v515 = vmul.f32 %v475, %v484
      %v516 = vmul.f32 %v478, %v484
      %v517 = vmul.f32 %v480, %v484
      %v518 = vld [vmem:[%s3] sm:$0x1]
      %v520 = vperm.slane %v518, 0
      %v522 = vadd.f32 %v486, %v520
      %v523 = vadd.f32 %v487, %v520
      %v524 = vadd.f32 %v488, %v520
      %v525 = vadd.f32 %v489, %v520
      %v526 = vadd.f32 %v490, %v520
      %v527 = vadd.f32 %v491, %v520
      %v528 = vadd.f32 %v492, %v520
      %v529 = vadd.f32 %v493, %v520
      %v530 = vadd.f32 %v494, %v520
      %v531 = vadd.f32 %v495, %v520
      %v532 = vadd.f32 %v496, %v520
      %v533 = vadd.f32 %v497, %v520
      %v534 = vadd.f32 %v498, %v520
      %v535 = vadd.f32 %v499, %v520
      %v536 = vadd.f32 %v500, %v520
      %v537 = vadd.f32 %v501, %v520
      %v538 = vadd.f32 %v502, %v520
      %v539 = vadd.f32 %v503, %v520
      %v540 = vadd.f32 %v504, %v520
      %v541 = vadd.f32 %v505, %v520
      %v542 = vadd.f32 %v506, %v520
      %v543 = vadd.f32 %v507, %v520
      %v544 = vadd.f32 %v508, %v520
      %v545 = vadd.f32 %v509, %v520
      %v546 = vadd.f32 %v510, %v520
      %v547 = vadd.f32 %v511, %v520
      %v548 = vadd.f32 %v512, %v520
      %v549 = vadd.f32 %v513, %v520
      %v550 = vadd.f32 %v514, %v520
      %v551 = vadd.f32 %v515, %v520
      %v552 = vadd.f32 %v516, %v520
      %v553 = vadd.f32 %v517, %v520
      %v554 = vmax.f32 %v522, 0.0
      %v555 = vmax.f32 %v523, 0.0
      %v556 = vmax.f32 %v524, 0.0
      %v557 = vmax.f32 %v525, 0.0
      %v558 = vmax.f32 %v526, 0.0
      %v559 = vmax.f32 %v527, 0.0
      %v560 = vmax.f32 %v528, 0.0
      %v561 = vmax.f32 %v529, 0.0
      %v562 = vmax.f32 %v530, 0.0
      %v563 = vmax.f32 %v531, 0.0
      %v564 = vmax.f32 %v532, 0.0
      %v565 = vmax.f32 %v533, 0.0
      %v566 = vmax.f32 %v534, 0.0
      %v567 = vmax.f32 %v535, 0.0
      %v568 = vmax.f32 %v536, 0.0
      %v569 = vmax.f32 %v537, 0.0
      %v570 = vmax.f32 %v538, 0.0
      %v571 = vmax.f32 %v539, 0.0
      %v572 = vmax.f32 %v540, 0.0
      %v573 = vmax.f32 %v541, 0.0
      %v574 = vmax.f32 %v542, 0.0
      %v575 = vmax.f32 %v543, 0.0
      %v576 = vmax.f32 %v544, 0.0
      %v577 = vmax.f32 %v545, 0.0
      %v578 = vmax.f32 %v546, 0.0
      %v579 = vmax.f32 %v547, 0.0
      %v580 = vmax.f32 %v548, 0.0
      %v581 = vmax.f32 %v549, 0.0
      %v582 = vmax.f32 %v550, 0.0
      %v583 = vmax.f32 %v551, 0.0
      %v584 = vmax.f32 %v552, 0.0
      %v585 = vmax.f32 %v553, 0.0
      %vm586 = vcmask 130048
      %587 = vst.msk [vmem:[%s199] sm:$0xff] %vm586, %v554
      %588 = vst.msk [vmem:[%s199 + $0x8] sm:$0xff] %vm586, %v555
      %589 = vst.msk [vmem:[%s199 + $0x10] sm:$0xff] %vm586, %v556
      %590 = vst.msk [vmem:[%s199 + $0x18] sm:$0xff] %vm586, %v557
      %591 = vst.msk [vmem:[%s199 + $0x20] sm:$0xff] %vm586, %v558
      %592 = vst.msk [vmem:[%s199 + $0x28] sm:$0xff] %vm586, %v559
      %593 = vst.msk [vmem:[%s199 + $0x30] sm:$0xff] %vm586, %v560
      %594 = vst.msk [vmem:[%s199 + $0x38] sm:$0xff] %vm586, %v561
      %595 = vst.msk [vmem:[%s199 + $0x40] sm:$0xff] %vm586, %v562
      %596 = vst.msk [vmem:[%s199 + $0x48] sm:$0xff] %vm586, %v563
      %597 = vst.msk [vmem:[%s199 + $0x50] sm:$0xff] %vm586, %v564
      %598 = vst.msk [vmem:[%s199 + $0x58] sm:$0xff] %vm586, %v565
      %599 = vst.msk [vmem:[%s199 + $0x60] sm:$0xff] %vm586, %v566
      %600 = vst.msk [vmem:[%s199 + $0x68] sm:$0xff] %vm586, %v567
      %601 = vst.msk [vmem:[%s199 + $0x70] sm:$0xff] %vm586, %v568
      %602 = vst.msk [vmem:[%s199 + $0x78] sm:$0xff] %vm586, %v569
      %603 = vst.msk [vmem:[%s199 + $0x80] sm:$0xff] %vm586, %v570
      %604 = vst.msk [vmem:[%s199 + $0x88] sm:$0xff] %vm586, %v571
      %605 = vst.msk [vmem:[%s199 + $0x90] sm:$0xff] %vm586, %v572
      %606 = vst.msk [vmem:[%s199 + $0x98] sm:$0xff] %vm586, %v573
      %607 = vst.msk [vmem:[%s199 + $0xa0] sm:$0xff] %vm586, %v574
      %608 = vst.msk [vmem:[%s199 + $0xa8] sm:$0xff] %vm586, %v575
      %609 = vst.msk [vmem:[%s199 + $0xb0] sm:$0xff] %vm586, %v576
      %610 = vst.msk [vmem:[%s199 + $0xb8] sm:$0xff] %vm586, %v577
      %611 = vst.msk [vmem:[%s199 + $0xc0] sm:$0xff] %vm586, %v578
      %612 = vst.msk [vmem:[%s199 + $0xc8] sm:$0xff] %vm586, %v579
      %613 = vst.msk [vmem:[%s199 + $0xd0] sm:$0xff] %vm586, %v580
      %614 = vst.msk [vmem:[%s199 + $0xd8] sm:$0xff] %vm586, %v581
      %615 = vst.msk [vmem:[%s199 + $0xe0] sm:$0xff] %vm586, %v582
      %616 = vst.msk [vmem:[%s199 + $0xe8] sm:$0xff] %vm586, %v583
      %617 = vst.msk [vmem:[%s199 + $0xf0] sm:$0xff] %vm586, %v584
      %618 = vst.msk [vmem:[%s199 + $0xf8] sm:$0xff] %vm586, %v585
      %s619 = smul.u32 32, %s15
      %p620 = scmp.lt.s32.totalorder %s619, 63
      %s621 = scalar_select %p620, %s619, 63
      %s622 = smul.addr %s621, 8
      %s623 = scalar_lea.vmem %s4, %s622
      // Predicated region
      $region37: #{_lambda_.8} parent=35 // pred_check
        %p624 = pneg %p122
      $region38: #{_lambda_.8} parent=35 // pred_check_branch
        %626 = sbr.rel (%p624) target = $region40
      $region39: #{_lambda_.8} parent=35 // pred_region
        %s627 = smul.u32 32, %s15
      $region40: #{_lambda_.8} parent=35 // pred_fallthru
        _
    $region36: #{_lambda_.8} parent=5 // pred_fallthru
      _
    %p628 = scmp.le.s32.totalorder 2, %s10
    // Predicated region
    $region41: #{_lambda_.8} parent=5 // pred_check
      %p629 = pneg %p628
    $region42: #{_lambda_.8} parent=5 // pred_check_branch
      %631 = sbr.rel (%p629) target = $region44
    $region43: #{_lambda_.8} parent=5 // pred_region
      %s632 = ssub.s32 %s10, 2
      // Predicated region
      $region45: #{_lambda_.8} parent=43 // pred_check
        %p633 = pneg %p128
      $region46: #{_lambda_.8} parent=43 // pred_check_branch
        %635 = sbr.rel (%p633) target = $region48
      $region47: #{_lambda_.8} parent=43 // pred_region
        %s636 = smul.u32 32, %s16
        %p637 = scmp.lt.s32.totalorder %s636, 63
        %s638 = scalar_select %p637, %s636, 63
        %s639 = smul.addr %s638, 8
        %s640 = scalar_lea.vmem %s4, %s639
      $region48: #{_lambda_.8} parent=43 // pred_fallthru
        _
    $region44: #{_lambda_.8} parent=5 // pred_fallthru
      _
  $region6: #{_lambda_.8} parent=0 // loop_footer
    %s14 = sadd.s32 1, %s10
  $region7: #{_lambda_.8} parent=0 // loop_footer_branch
    %9 = sbr.rel target = $region3
  $region8: #{_lambda_.8} parent=0 // loop_exit
    _

// kernel: _lambda_.10
$region0: #{_lambda_.10}
  #allocation0 [shape = 'u32[]', space=smem, size = 0x4, offset = 0x4, fixed_abs, tag = 'smem constant byte address 0x4 - core index']
  #allocation1 [shape = 'u32[72,128]{1,0:T(1,128)}', space=vmem, size = 0x9000, scoped, tag = 'internal scratch']
  %s0 = inlined_call_operand.vmem [shape: bf16[512,256], index: 0, kind: input, shape index: {}]
  %s1 = inlined_call_operand.vmem [shape: bf16[256,256], index: 1, kind: input, shape index: {}]
  %s2 = inlined_call_operand.vmem [shape: bf16[256,128], index: 2, kind: input, shape index: {}]
  %s3 = inlined_call_operand.vmem [shape: f32[1,256], index: 3, kind: input, shape index: {}]
  %s4 = inlined_call_operand.vmem [shape: f32[1,128], index: 4, kind: input, shape index: {}]
  %s5 = inlined_call_operand.vmem [shape: f32[1,128], index: 5, kind: input, shape index: {}]
  %s6 = inlined_call_operand.vmem [shape: f32[512,16], index: 6, kind: input, shape index: {}]
  %s7 = inlined_call_operand.vmem [shape: f32[512,16], index: 7, kind: output, shape index: {}]
  %s8 = sld [smem:[#allocation0]]
  $region61: #{_lambda_.10} parent=0
    _
  %s10 = ssub.s32 1, %s8
  %s11 = scalar_select 0, %s10, %s8
  loop: start=0, step=1, limit=4
  $region2: #{_lambda_.10} parent=0 // loop_pre_header
    _
  $region3: #{_lambda_.10} parent=0 // loop_header
    %s13 = sphi 0, %s17
    %p14 = scmp.ge.s32.totalorder %s13, 4
    %s23 = sphi 0, %s25
    %s26 = sphi 0, %s23
    %s27 = sphi 0, %s26
    %s43 = sphi 0, %s27
    %s47 = sphi 0, %s47
    %s49 = sphi 0, %s47
    %s50 = sphi 0, %s49
    %s64 = sphi 0, %s50
    %s68 = sphi 0, %s68
    %s70 = sphi 0, %s68
    %s71 = sphi 0, %s70
    %s85 = sphi 0, %s71
    %s89 = sphi 0, %s89
    %s91 = sphi 0, %s89
    %s92 = sphi 0, %s91
    %s106 = sphi 0, %s92
    %s110 = sphi 0, %s110
    %s112 = sphi 0, %s110
    %s113 = sphi 0, %s112
    %s127 = sphi 0, %s113
    %s131 = sphi 0, %s131
    %s133 = sphi 0, %s131
    %s134 = sphi 0, %s133
    %s148 = sphi 0, %s134
    %s154 = sphi 0, %s156
    %s157 = sphi 0, %s154
    %s158 = sphi 0, %s157
    %s174 = sphi 0, %s158
    %s180 = sphi 0, %s182
    %s183 = sphi 0, %s180
    %s184 = sphi 0, %s183
    %s200 = sphi 0, %s184
  $region4: #{_lambda_.10} parent=0 // loop_header_branch
    %16 = sbr.rel (%p14) target = $region8
  $region5: #{_lambda_.10} parent=0 // loop_body
    %s18 = ssub.s32 %s13, 1
    %s19 = ssub.s32 %s13, 2
    %s20 = sadd.s32 %s13, 1
    %s21 = ssub.s32 %s13, %s20
    %p22 = scmp.eq.s32.totalorder %s21, 0
    %s24 = sadd.s32 %s23, 1
    %s25 = scalar_select %p22, %s23, %s24
    %p28 = pneg %p22
    %p29 = scmp.eq.s32.totalorder %s13, 1
    %p30 = por %p28, %p29
    %p31 = scmp.ne.s32.totalorder %s23, %s26
    %p32 = scmp.eq.s32.totalorder %s13, 0
    %p33 = por %p31, %p32
    %p34 = scmp.ne.s32.totalorder %s23, %s26
    %p35 = scmp.eq.s32.totalorder %s18, 1
    %p36 = por %p34, %p35
    %p37 = scmp.ne.s32.totalorder %s26, %s27
    %p38 = scmp.eq.s32.totalorder %s18, 0
    %p39 = por %p37, %p38
    %p40 = scmp.ne.s32.totalorder %s26, %s27
    %p41 = scmp.eq.s32.totalorder %s19, 1
    %p42 = por %p40, %p41
    %p44 = scmp.ne.s32.totalorder %s27, %s43
    %p45 = scmp.eq.s32.totalorder %s19, 0
    %p46 = por %p44, %p45
    %s48 = sadd.s32 %s47, 1
    %p51 = scmp.eq.s32.totalorder %s13, 1
    %p52 = scmp.ne.s32.totalorder %s47, %s49
    %p53 = scmp.eq.s32.totalorder %s13, 0
    %p54 = por %p52, %p53
    %p55 = scmp.ne.s32.totalorder %s47, %s49
    %p56 = scmp.eq.s32.totalorder %s18, 1
    %p57 = por %p55, %p56
    %p58 = scmp.ne.s32.totalorder %s49, %s50
    %p59 = scmp.eq.s32.totalorder %s18, 0
    %p60 = por %p58, %p59
    %p61 = scmp.ne.s32.totalorder %s49, %s50
    %p62 = scmp.eq.s32.totalorder %s19, 1
    %p63 = por %p61, %p62
    %p65 = scmp.ne.s32.totalorder %s50, %s64
    %p66 = scmp.eq.s32.totalorder %s19, 0
    %p67 = por %p65, %p66
    %s69 = sadd.s32 %s68, 1
    %p72 = scmp.eq.s32.totalorder %s13, 1
    %p73 = scmp.ne.s32.totalorder %s68, %s70
    %p74 = scmp.eq.s32.totalorder %s13, 0
    %p75 = por %p73, %p74
    %p76 = scmp.ne.s32.totalorder %s68, %s70
    %p77 = scmp.eq.s32.totalorder %s18, 1
    %p78 = por %p76, %p77
    %p79 = scmp.ne.s32.totalorder %s70, %s71
    %p80 = scmp.eq.s32.totalorder %s18, 0
    %p81 = por %p79, %p80
    %p82 = scmp.ne.s32.totalorder %s70, %s71
    %p83 = scmp.eq.s32.totalorder %s19, 1
    %p84 = por %p82, %p83
    %p86 = scmp.ne.s32.totalorder %s71, %s85
    %p87 = scmp.eq.s32.totalorder %s19, 0
    %p88 = por %p86, %p87
    %s90 = sadd.s32 %s89, 1
    %p93 = scmp.eq.s32.totalorder %s13, 1
    %p94 = scmp.ne.s32.totalorder %s89, %s91
    %p95 = scmp.eq.s32.totalorder %s13, 0
    %p96 = por %p94, %p95
    %p97 = scmp.ne.s32.totalorder %s89, %s91
    %p98 = scmp.eq.s32.totalorder %s18, 1
    %p99 = por %p97, %p98
    %p100 = scmp.ne.s32.totalorder %s91, %s92
    %p101 = scmp.eq.s32.totalorder %s18, 0
    %p102 = por %p100, %p101
    %p103 = scmp.ne.s32.totalorder %s91, %s92
    %p104 = scmp.eq.s32.totalorder %s19, 1
    %p105 = por %p103, %p104
    %p107 = scmp.ne.s32.totalorder %s92, %s106
    %p108 = scmp.eq.s32.totalorder %s19, 0
    %p109 = por %p107, %p108
    %s111 = sadd.s32 %s110, 1
    %p114 = scmp.eq.s32.totalorder %s13, 1
    %p115 = scmp.ne.s32.totalorder %s110, %s112
    %p116 = scmp.eq.s32.totalorder %s13, 0
    %p117 = por %p115, %p116
    %p118 = scmp.ne.s32.totalorder %s110, %s112
    %p119 = scmp.eq.s32.totalorder %s18, 1
    %p120 = por %p118, %p119
    %p121 = scmp.ne.s32.totalorder %s112, %s113
    %p122 = scmp.eq.s32.totalorder %s18, 0
    %p123 = por %p121, %p122
    %p124 = scmp.ne.s32.totalorder %s112, %s113
    %p125 = scmp.eq.s32.totalorder %s19, 1
    %p126 = por %p124, %p125
    %p128 = scmp.ne.s32.totalorder %s113, %s127
    %p129 = scmp.eq.s32.totalorder %s19, 0
    %p130 = por %p128, %p129
    %s132 = sadd.s32 %s131, 1
    %p135 = scmp.eq.s32.totalorder %s13, 1
    %p136 = scmp.ne.s32.totalorder %s131, %s133
    %p137 = scmp.eq.s32.totalorder %s13, 0
    %p138 = por %p136, %p137
    %p139 = scmp.ne.s32.totalorder %s131, %s133
    %p140 = scmp.eq.s32.totalorder %s18, 1
    %p141 = por %p139, %p140
    %p142 = scmp.ne.s32.totalorder %s133, %s134
    %p143 = scmp.eq.s32.totalorder %s18, 0
    %p144 = por %p142, %p143
    %p145 = scmp.ne.s32.totalorder %s133, %s134
    %p146 = scmp.eq.s32.totalorder %s19, 1
    %p147 = por %p145, %p146
    %p149 = scmp.ne.s32.totalorder %s134, %s148
    %p150 = scmp.eq.s32.totalorder %s19, 0
    %p151 = por %p149, %p150
    %s152 = ssub.s32 %s13, %s20
    %p153 = scmp.eq.s32.totalorder %s152, 0
    %s155 = sadd.s32 %s154, 1
    %s156 = scalar_select %p153, %s154, %s155
    %p159 = pneg %p153
    %p160 = scmp.eq.s32.totalorder %s13, 1
    %p161 = por %p159, %p160
    %p162 = scmp.ne.s32.totalorder %s154, %s157
    %p163 = scmp.eq.s32.totalorder %s13, 0
    %p164 = por %p162, %p163
    %p165 = scmp.ne.s32.totalorder %s154, %s157
    %p166 = scmp.eq.s32.totalorder %s18, 1
    %p167 = por %p165, %p166
    %p168 = scmp.ne.s32.totalorder %s157, %s158
    %p169 = scmp.eq.s32.totalorder %s18, 0
    %p170 = por %p168, %p169
    %p171 = scmp.ne.s32.totalorder %s157, %s158
    %p172 = scmp.eq.s32.totalorder %s19, 1
    %p173 = por %p171, %p172
    %p175 = scmp.ne.s32.totalorder %s158, %s174
    %p176 = scmp.eq.s32.totalorder %s19, 0
    %p177 = por %p175, %p176
    %s178 = ssub.s32 %s13, %s20
    %p179 = scmp.eq.s32.totalorder %s178, 0
    %s181 = sadd.s32 %s180, 1
    %s182 = scalar_select %p179, %s180, %s181
    %p185 = pneg %p179
    %p186 = scmp.eq.s32.totalorder %s13, 1
    %p187 = por %p185, %p186
    %p188 = scmp.ne.s32.totalorder %s180, %s183
    %p189 = scmp.eq.s32.totalorder %s13, 0
    %p190 = por %p188, %p189
    %p191 = scmp.ne.s32.totalorder %s180, %s183
    %p192 = scmp.eq.s32.totalorder %s18, 1
    %p193 = por %p191, %p192
    %p194 = scmp.ne.s32.totalorder %s183, %s184
    %p195 = scmp.eq.s32.totalorder %s18, 0
    %p196 = por %p194, %p195
    %p197 = scmp.ne.s32.totalorder %s183, %s184
    %p198 = scmp.eq.s32.totalorder %s19, 1
    %p199 = por %p197, %p198
    %p201 = scmp.ne.s32.totalorder %s184, %s200
    %p202 = scmp.eq.s32.totalorder %s19, 0
    %p203 = por %p201, %p202
    %p204 = scmp.le.s32.totalorder 1, %s13
    %p205 = scmp.lt.s32.totalorder %s13, 3
    %p206 = pnand %p204, %p205
    %p207 = pneg %p206
    // Predicated region
    $region9: #{_lambda_.10} parent=5 // pred_check
      _
    $region10: #{_lambda_.10} parent=5 // pred_check_branch
      %209 = sbr.rel (%p206) target = $region12
    $region11: #{_lambda_.10} parent=5 // pred_region
      %s210 = ssub.s32 %s13, 1
      // Predicated region
      $region13: #{_lambda_.10} parent=11 // pred_check
        %p211 = pneg %p60
      $region14: #{_lambda_.10} parent=11 // pred_check_branch
        %213 = sbr.rel (%p211) target = $region16
      $region15: #{_lambda_.10} parent=11 // pred_region
        _
      $region16: #{_lambda_.10} parent=11 // pred_fallthru
        _
      // Predicated region
      $region17: #{_lambda_.10} parent=11 // pred_check
        %p214 = pneg %p81
      $region18: #{_lambda_.10} parent=11 // pred_check_branch
        %216 = sbr.rel (%p214) target = $region20
      $region19: #{_lambda_.10} parent=11 // pred_region
        _
      $region20: #{_lambda_.10} parent=11 // pred_fallthru
        _
      // Predicated region
      $region21: #{_lambda_.10} parent=11 // pred_check
        %p217 = pneg %p102
      $region22: #{_lambda_.10} parent=11 // pred_check_branch
        %219 = sbr.rel (%p217) target = $region24
      $region23: #{_lambda_.10} parent=11 // pred_region
        _
      $region24: #{_lambda_.10} parent=11 // pred_fallthru
        _
      // Predicated region
      $region25: #{_lambda_.10} parent=11 // pred_check
        %p220 = pneg %p123
      $region26: #{_lambda_.10} parent=11 // pred_check_branch
        %222 = sbr.rel (%p220) target = $region28
      $region27: #{_lambda_.10} parent=11 // pred_region
        _
      $region28: #{_lambda_.10} parent=11 // pred_fallthru
        _
      // Predicated region
      $region29: #{_lambda_.10} parent=11 // pred_check
        %p223 = pneg %p144
      $region30: #{_lambda_.10} parent=11 // pred_check_branch
        %225 = sbr.rel (%p223) target = $region32
      $region31: #{_lambda_.10} parent=11 // pred_region
        _
      $region32: #{_lambda_.10} parent=11 // pred_fallthru
        _
    $region12: #{_lambda_.10} parent=5 // pred_fallthru
      _
    %p226 = scmp.lt.s32.totalorder %s13, 2
    // Predicated region
    $region33: #{_lambda_.10} parent=5 // pred_check
      %p227 = pneg %p226
    $region34: #{_lambda_.10} parent=5 // pred_check_branch
      %229 = sbr.rel (%p227) target = $region36
    $region35: #{_lambda_.10} parent=5 // pred_region
      // Predicated region
      $region37: #{_lambda_.10} parent=35 // pred_check
        %p230 = pneg %p33
      $region38: #{_lambda_.10} parent=35 // pred_check_branch
        %232 = sbr.rel (%p230) target = $region40
      $region39: #{_lambda_.10} parent=35 // pred_region
        %s233 = smul.u32 32, %s13
        %p234 = scmp.lt.s32.totalorder %s233, 63
        %s235 = scalar_select %p234, %s233, 63
        %s236 = smul.addr %s235, 2
        %s237 = smul.addr %s236, 4
        %s238 = scalar_lea.vmem %s0, %s237
        %s239 = smul.u32 32, %s13
      $region40: #{_lambda_.10} parent=35 // pred_fallthru
        _
      // Predicated region
      $region41: #{_lambda_.10} parent=35 // pred_check
        %p240 = pneg %p164
      $region42: #{_lambda_.10} parent=35 // pred_check_branch
        %242 = sbr.rel (%p240) target = $region44
      $region43: #{_lambda_.10} parent=35 // pred_region
        %s243 = smul.u32 32, %s13
        %p244 = scmp.lt.s32.totalorder %s243, 63
        %s245 = scalar_select %p244, %s243, 63
        %s246 = smul.addr %s245, 8
        %s247 = scalar_lea.vmem %s6, %s246
        %s248 = smul.u32 32, %s13
      $region44: #{_lambda_.10} parent=35 // pred_fallthru
        _
    $region36: #{_lambda_.10} parent=5 // pred_fallthru
      _
    %p249 = scmp.le.s32.totalorder 1, %s13
    %p250 = scmp.lt.s32.totalorder %s13, 3
    %p251 = pnand %p249, %p250
    %p252 = pneg %p251
    // Predicated region
    $region45: #{_lambda_.10} parent=5 // pred_check
      _
    $region46: #{_lambda_.10} parent=5 // pred_check_branch
      %254 = sbr.rel (%p251) target = $region48
    $region47: #{_lambda_.10} parent=5 // pred_region
      %s255 = ssub.s32 %s13, 1
      %s256 = smul.u32 32, %s18
      %p257 = scmp.lt.s32.totalorder %s256, 63
      %s258 = scalar_select %p257, %s256, 63
      %s259 = smul.addr %s258, 2
      %s260 = smul.addr %s259, 4
      %s261 = scalar_lea.vmem %s0, %s260
      %p262 = pneg %p39
      %p263 = pneg %p36
      %p264 = pneg %p60
      %p265 = pneg %p57
      %p266 = pneg %p81
      %p267 = pneg %p78
      %p268 = pneg %p102
      %p269 = pneg %p99
      %p270 = pneg %p123
      %p271 = pneg %p120
      %p272 = pneg %p144
      %p273 = pneg %p141
      %s274 = smul.u32 32, %s18
      %p275 = scmp.lt.s32.totalorder %s274, 63
      %s276 = scalar_select %p275, %s274, 63
      %s277 = smul.addr %s276, 8
      %s278 = scalar_lea.vmem %s6, %s277
      %p279 = pneg %p170
      %p280 = pneg %p167
      %p281 = pneg %p196
      %p282 = pneg %p193
      %s283 = smul.u32 32, %s18
      %p284 = scmp.lt.s32.totalorder %s283, 63
      %s285 = scalar_select %p284, %s283, 63
      %s286 = smul.addr %s285, 8
      %s287 = scalar_lea.vmem %s7, %s286
      %s288 = smul.u32 32, %s18
      %p289 = scmp.lt.s32.totalorder %s288, 63
      %s290 = scalar_select %p289, %s288, 63
      %s291 = smul.addr %s290, 2
      %s292 = smul.addr %s291, 4
      %s293 = scalar_lea.vmem %s0, %s292
      %s294 = smul.u32 32, %s18
      %s295 = smul.u32 32, %s18
      %p296 = scmp.lt.s32.totalorder %s295, 63
      %s297 = scalar_select %p296, %s295, 63
      %s298 = smul.addr %s297, 8
      %s299 = scalar_lea.vmem %s6, %s298
      %s300 = smul.u32 32, %s18
      %s301 = smul.u32 32, %s18
      %p302 = scmp.lt.s32.totalorder %s301, 63
      %s303 = scalar_select %p302, %s301, 63
      %s304 = smul.addr %s303, 8
      %s305 = scalar_lea.vmem %s7, %s304
      %s306 = smul.u32 32, %s18
      %v307 = vld [vmem:[%s293] sm:$0xff]
      %v308 = vld [vmem:[%s293 + $0x8] sm:$0xff]
      %v309 = vld [vmem:[%s293 + $0x10] sm:$0xff]
      %v310 = vld [vmem:[%s293 + $0x18] sm:$0xff]
      %v311 = vld [vmem:[%s293 + $0x20] sm:$0xff]
      %v312 = vld [vmem:[%s293 + $0x28] sm:$0xff]
      %v313 = vld [vmem:[%s293 + $0x30] sm:$0xff]
      %v314 = vld [vmem:[%s293 + $0x38] sm:$0xff]
      %v315 = vld [vmem:[%s293 + $0x40] sm:$0xff]
      %v316 = vld [vmem:[%s293 + $0x48] sm:$0xff]
      %v317 = vld [vmem:[%s293 + $0x50] sm:$0xff]
      %v318 = vld [vmem:[%s293 + $0x58] sm:$0xff]
      %v319 = vld [vmem:[%s293 + $0x60] sm:$0xff]
      %v320 = vld [vmem:[%s293 + $0x68] sm:$0xff]
      %v321 = vld [vmem:[%s293 + $0x70] sm:$0xff]
      %v322 = vld [vmem:[%s293 + $0x78] sm:$0xff]
      %v323 = vld [vmem:[%s293 + $0x80] sm:$0xff]
      %v324 = vld [vmem:[%s293 + $0x88] sm:$0xff]
      %v325 = vld [vmem:[%s293 + $0x90] sm:$0xff]
      %v326 = vld [vmem:[%s293 + $0x98] sm:$0xff]
      %v327 = vld [vmem:[%s293 + $0xa0] sm:$0xff]
      %v328 = vld [vmem:[%s293 + $0xa8] sm:$0xff]
      %v329 = vld [vmem:[%s293 + $0xb0] sm:$0xff]
      %v330 = vld [vmem:[%s293 + $0xb8] sm:$0xff]
      %v331 = vld [vmem:[%s293 + $0xc0] sm:$0xff]
      %v332 = vld [vmem:[%s293 + $0xc8] sm:$0xff]
      %v333 = vld [vmem:[%s293 + $0xd0] sm:$0xff]
      %v334 = vld [vmem:[%s293 + $0xd8] sm:$0xff]
      %v335 = vld [vmem:[%s293 + $0xe0] sm:$0xff]
      %v336 = vld [vmem:[%s293 + $0xe8] sm:$0xff]
      %v337 = vld [vmem:[%s293 + $0xf0] sm:$0xff]
      %v338 = vld [vmem:[%s293 + $0xf8] sm:$0xff]
      %v339 = vld [vmem:[%s1] sm:$0xff]
      %v340 = vld [vmem:[%s1 + $0x8] sm:$0xff]
      %v341 = vld [vmem:[%s1 + $0x10] sm:$0xff]
      %v342 = vld [vmem:[%s1 + $0x18] sm:$0xff]
      %v343 = vld [vmem:[%s1 + $0x20] sm:$0xff]
      %v344 = vld [vmem:[%s1 + $0x28] sm:$0xff]
      %v345 = vld [vmem:[%s1 + $0x30] sm:$0xff]
      %v346 = vld [vmem:[%s1 + $0x38] sm:$0xff]
      %v347 = vld [vmem:[%s1 + $0x40] sm:$0xff]
      %v348 = vld [vmem:[%s1 + $0x48] sm:$0xff]
      %v349 = vld [vmem:[%s1 + $0x50] sm:$0xff]
      %v350 = vld [vmem:[%s1 + $0x58] sm:$0xff]
      %v351 = vld [vmem:[%s1 + $0x60] sm:$0xff]
      %v352 = vld [vmem:[%s1 + $0x68] sm:$0xff]
      %v353 = vld [vmem:[%s1 + $0x70] sm:$0xff]
      %v354 = vld [vmem:[%s1 + $0x78] sm:$0xff]
      %v355 = vld [vmem:[%s1 + $0x80] sm:$0xff]
      %v356 = vld [vmem:[%s1 + $0x88] sm:$0xff]
      %v357 = vld [vmem:[%s1 + $0x90] sm:$0xff]
      %v358 = vld [vmem:[%s1 + $0x98] sm:$0xff]
      %v359 = vld [vmem:[%s1 + $0xa0] sm:$0xff]
      %v360 = vld [vmem:[%s1 + $0xa8] sm:$0xff]
      %v361 = vld [vmem:[%s1 + $0xb0] sm:$0xff]
      %v362 = vld [vmem:[%s1 + $0xb8] sm:$0xff]
      %v363 = vld [vmem:[%s1 + $0xc0] sm:$0xff]
      %v364 = vld [vmem:[%s1 + $0xc8] sm:$0xff]
      %v365 = vld [vmem:[%s1 + $0xd0] sm:$0xff]
      %v366 = vld [vmem:[%s1 + $0xd8] sm:$0xff]
      %v367 = vld [vmem:[%s1 + $0xe0] sm:$0xff]
      %v368 = vld [vmem:[%s1 + $0xe8] sm:$0xff]
      %v369 = vld [vmem:[%s1 + $0xf0] sm:$0xff]
      %v370 = vld [vmem:[%s1 + $0xf8] sm:$0xff]
      %v371 = vld [vmem:[%s3] sm:$0x3]
      %v373 = vperm.slane %v371, 0
      %v374 = vperm.slane %v371, 1
      %v409 = vunpack.c.l.b16 %v307
      %v410 = vunpack.c.h.b16 %v307
      %v411 = vunpack.c.l.b16 %v308
      %v412 = vunpack.c.h.b16 %v308
      %v413 = vunpack.c.l.b16 %v309
      %v414 = vunpack.c.h.b16 %v309
      %v415 = vunpack.c.l.b16 %v310
      %v416 = vunpack.c.h.b16 %v310
      %v417 = vunpack.c.l.b16 %v311
      %v418 = vunpack.c.h.b16 %v311
      %v419 = vunpack.c.l.b16 %v312
      %v420 = vunpack.c.h.b16 %v312
      %v421 = vunpack.c.l.b16 %v313
      %v422 = vunpack.c.h.b16 %v313
      %v423 = vunpack.c.l.b16 %v314
      %v424 = vunpack.c.h.b16 %v314
      %v425 = vunpack.c.l.b16 %v315
      %v426 = vunpack.c.h.b16 %v315
      %v427 = vunpack.c.l.b16 %v316
      %v428 = vunpack.c.h.b16 %v316
      %v429 = vunpack.c.l.b16 %v317
      %v430 = vunpack.c.h.b16 %v317
      %v431 = vunpack.c.l.b16 %v318
      %v432 = vunpack.c.h.b16 %v318
      %v433 = vunpack.c.l.b16 %v319
      %v434 = vunpack.c.h.b16 %v319
      %v435 = vunpack.c.l.b16 %v320
      %v436 = vunpack.c.h.b16 %v320
      %v437 = vunpack.c.l.b16 %v321
      %v438 = vunpack.c.h.b16 %v321
      %v439 = vunpack.c.l.b16 %v322
      %v440 = vunpack.c.h.b16 %v322
      %v441 = vunpack.c.l.b16 %v323
      %v442 = vunpack.c.h.b16 %v323
      %v443 = vunpack.c.l.b16 %v324
      %v444 = vunpack.c.h.b16 %v324
      %v445 = vunpack.c.l.b16 %v325
      %v446 = vunpack.c.h.b16 %v325
      %v447 = vunpack.c.l.b16 %v326
      %v448 = vunpack.c.h.b16 %v326
      %v449 = vunpack.c.l.b16 %v327
      %v450 = vunpack.c.h.b16 %v327
      %v451 = vunpack.c.l.b16 %v328
      %v452 = vunpack.c.h.b16 %v328
      %v453 = vunpack.c.l.b16 %v329
      %v454 = vunpack.c.h.b16 %v329
      %v455 = vunpack.c.l.b16 %v330
      %v456 = vunpack.c.h.b16 %v330
      %v457 = vunpack.c.l.b16 %v331
      %v458 = vunpack.c.h.b16 %v331
      %v459 = vunpack.c.l.b16 %v332
      %v460 = vunpack.c.h.b16 %v332
      %v461 = vunpack.c.l.b16 %v333
      %v462 = vunpack.c.h.b16 %v333
      %v463 = vunpack.c.l.b16 %v334
      %v464 = vunpack.c.h.b16 %v334
      %v465 = vunpack.c.l.b16 %v335
      %v466 = vunpack.c.h.b16 %v335
      %v467 = vunpack.c.l.b16 %v336
      %v468 = vunpack.c.h.b16 %v336
      %v469 = vunpack.c.l.b16 %v337
      %v470 = vunpack.c.h.b16 %v337
      %v471 = vunpack.c.l.b16 %v338
      %v472 = vunpack.c.h.b16 %v338
      %v473 = vpack.c.b16 %v411, %v409
      %v474 = vpack.c.b16 %v412, %v410
      %v475 = vpack.c.b16 %v415, %v413
      %v476 = vpack.c.b16 %v416, %v414
      %v477 = vpack.c.b16 %v419, %v417
      %v478 = vpack.c.b16 %v420, %v418
      %v479 = vpack.c.b16 %v423, %v421
      %v480 = vpack.c.b16 %v424, %v422
      %v481 = vpack.c.b16 %v427, %v425
      %v482 = vpack.c.b16 %v428, %v426
      %v483 = vpack.c.b16 %v431, %v429
      %v484 = vpack.c.b16 %v432, %v430
      %v485 = vpack.c.b16 %v435, %v433
      %v486 = vpack.c.b16 %v436, %v434
      %v487 = vpack.c.b16 %v439, %v437
      %v488 = vpack.c.b16 %v440, %v438
      %v489 = vpack.c.b16 %v443, %v441
      %v490 = vpack.c.b16 %v444, %v442
      %v491 = vpack.c.b16 %v447, %v445
      %v492 = vpack.c.b16 %v448, %v446
      %v493 = vpack.c.b16 %v451, %v449
      %v494 = vpack.c.b16 %v452, %v450
      %v495 = vpack.c.b16 %v455, %v453
      %v496 = vpack.c.b16 %v456, %v454
      %v497 = vpack.c.b16 %v459, %v457
      %v498 = vpack.c.b16 %v460, %v458
      %v499 = vpack.c.b16 %v463, %v461
      %v500 = vpack.c.b16 %v464, %v462
      %v501 = vpack.c.b16 %v467, %v465
      %v502 = vpack.c.b16 %v468, %v466
      %v503 = vpack.c.b16 %v471, %v469
      %v504 = vpack.c.b16 %v472, %v470
      %v569 = vunpack.c.l.b16 %v339
      %v570 = vunpack.c.h.b16 %v339
      %v571 = vunpack.c.l.b16 %v340
      %v572 = vunpack.c.h.b16 %v340
      %v573 = vunpack.c.l.b16 %v341
      %v574 = vunpack.c.h.b16 %v341
      %v575 = vunpack.c.l.b16 %v342
      %v576 = vunpack.c.h.b16 %v342
      %v577 = vunpack.c.l.b16 %v343
      %v578 = vunpack.c.h.b16 %v343
      %v579 = vunpack.c.l.b16 %v344
      %v580 = vunpack.c.h.b16 %v344
      %v581 = vunpack.c.l.b16 %v345
      %v582 = vunpack.c.h.b16 %v345
      %v583 = vunpack.c.l.b16 %v346
      %v584 = vunpack.c.h.b16 %v346
      %v585 = vunpack.c.l.b16 %v347
      %v586 = vunpack.c.h.b16 %v347
      %v587 = vunpack.c.l.b16 %v348
      %v588 = vunpack.c.h.b16 %v348
      %v589 = vunpack.c.l.b16 %v349
      %v590 = vunpack.c.h.b16 %v349
      %v591 = vunpack.c.l.b16 %v350
      %v592 = vunpack.c.h.b16 %v350
      %v593 = vunpack.c.l.b16 %v351
      %v594 = vunpack.c.h.b16 %v351
      %v595 = vunpack.c.l.b16 %v352
      %v596 = vunpack.c.h.b16 %v352
      %v597 = vunpack.c.l.b16 %v353
      %v598 = vunpack.c.h.b16 %v353
      %v599 = vunpack.c.l.b16 %v354
      %v600 = vunpack.c.h.b16 %v354
      %v601 = vunpack.c.l.b16 %v355
      %v602 = vunpack.c.h.b16 %v355
      %v603 = vunpack.c.l.b16 %v356
      %v604 = vunpack.c.h.b16 %v356
      %v605 = vunpack.c.l.b16 %v357
      %v606 = vunpack.c.h.b16 %v357
      %v607 = vunpack.c.l.b16 %v358
      %v608 = vunpack.c.h.b16 %v358
      %v609 = vunpack.c.l.b16 %v359
      %v610 = vunpack.c.h.b16 %v359
      %v611 = vunpack.c.l.b16 %v360
      %v612 = vunpack.c.h.b16 %v360
      %v613 = vunpack.c.l.b16 %v361
      %v614 = vunpack.c.h.b16 %v361
      %v615 = vunpack.c.l.b16 %v362
      %v616 = vunpack.c.h.b16 %v362
      %v617 = vunpack.c.l.b16 %v363
      %v618 = vunpack.c.h.b16 %v363
      %v619 = vunpack.c.l.b16 %v364
      %v620 = vunpack.c.h.b16 %v364
      %v621 = vunpack.c.l.b16 %v365
      %v622 = vunpack.c.h.b16 %v365
      %v623 = vunpack.c.l.b16 %v366
      %v624 = vunpack.c.h.b16 %v366
      %v625 = vunpack.c.l.b16 %v367
      %v626 = vunpack.c.h.b16 %v367
      %v627 = vunpack.c.l.b16 %v368
      %v628 = vunpack.c.h.b16 %v368
      %v629 = vunpack.c.l.b16 %v369
      %v630 = vunpack.c.h.b16 %v369
      %v631 = vunpack.c.l.b16 %v370
      %v632 = vunpack.c.h.b16 %v370
      %v633 = vpack.c.b16 %v571, %v569
      %v634 = vpack.c.b16 %v572, %v570
      %v635 = vpack.c.b16 %v575, %v573
      %v636 = vpack.c.b16 %v576, %v574
      %v637 = vpack.c.b16 %v579, %v577
      %v638 = vpack.c.b16 %v580, %v578
      %v639 = vpack.c.b16 %v583, %v581
      %v640 = vpack.c.b16 %v584, %v582
      %v641 = vpack.c.b16 %v587, %v585
      %v642 = vpack.c.b16 %v588, %v586
      %v643 = vpack.c.b16 %v591, %v589
      %v644 = vpack.c.b16 %v592, %v590
      %v645 = vpack.c.b16 %v595, %v593
      %v646 = vpack.c.b16 %v596, %v594
      %v647 = vpack.c.b16 %v599, %v597
      %v648 = vpack.c.b16 %v600, %v598
      %v649 = vpack.c.b16 %v603, %v601
      %v650 = vpack.c.b16 %v604, %v602
      %v651 = vpack.c.b16 %v607, %v605
      %v652 = vpack.c.b16 %v608, %v606
      %v653 = vpack.c.b16 %v611, %v609
      %v654 = vpack.c.b16 %v612, %v610
      %v655 = vpack.c.b16 %v615, %v613
      %v656 = vpack.c.b16 %v616, %v614
      %v657 = vpack.c.b16 %v619, %v617
      %v658 = vpack.c.b16 %v620, %v618
      %v659 = vpack.c.b16 %v623, %v621
      %v660 = vpack.c.b16 %v624, %v622
      %v661 = vpack.c.b16 %v627, %v625
      %v662 = vpack.c.b16 %v628, %v626
      %v663 = vpack.c.b16 %v631, %v629
      %v664 = vpack.c.b16 %v632, %v630
      %697 = vmatpush.bf16.msra.mxu0 %v647
      %698 = vmatpush.bf16.msra.mxu0 %v645
      %699 = vmatpush.bf16.msra.mxu0 %v643
      %700 = vmatpush.bf16.msra.mxu0 %v641
      %701 = vmatpush.bf16.msra.mxu0 %v639
      %702 = vmatpush.bf16.msra.mxu0 %v637
      %703 = vmatpush.bf16.msra.mxu0 %v635
      %704 = vmatpush.bf16.msra.mxu0 %v633
      %705 = vmatmul.bf16.gmra.mxu0 %v473
      %v706 = vpop.f32.mrf.mxu0
      %v707 = vadd.f32 %v373, %v706
      %v708 = vpop.f32.mrf.mxu0
      %v709 = vadd.f32 %v373, %v708
      %710 = vmatmul.bf16.gmra.mxu0 %v475
      %v711 = vpop.f32.mrf.mxu0
      %v712 = vadd.f32 %v373, %v711
      %v713 = vpop.f32.mrf.mxu0
      %v714 = vadd.f32 %v373, %v713
      %715 = vmatmul.bf16.gmra.mxu0 %v477
      %v716 = vpop.f32.mrf.mxu0
      %v717 = vadd.f32 %v373, %v716
      %v718 = vpop.f32.mrf.mxu0
      %v719 = vadd.f32 %v373, %v718
      %720 = vmatmul.bf16.gmra.mxu0 %v479
      %v721 = vpop.f32.mrf.mxu0
      %v722 = vadd.f32 %v373, %v721
      %v723 = vpop.f32.mrf.mxu0
      %v724 = vadd.f32 %v373, %v723
      %725 = vmatmul.bf16.gmra.mxu0 %v481
      %v726 = vpop.f32.mrf.mxu0
      %v727 = vadd.f32 %v373, %v726
      %v728 = vpop.f32.mrf.mxu0
      %v729 = vadd.f32 %v373, %v728
      %730 = vmatmul.bf16.gmra.mxu0 %v483
      %v731 = vpop.f32.mrf.mxu0
      %v732 = vadd.f32 %v373, %v731
      %v733 = vpop.f32.mrf.mxu0
      %v734 = vadd.f32 %v373, %v733
      %735 = vmatmul.bf16.gmra.mxu0 %v485
      %v736 = vpop.f32.mrf.mxu0
      %v737 = vadd.f32 %v373, %v736
      %v738 = vpop.f32.mrf.mxu0
      %v739 = vadd.f32 %v373, %v738
      %740 = vmatmul.bf16.gmra.mxu0 %v487
      %v741 = vpop.f32.mrf.mxu0
      %v742 = vadd.f32 %v373, %v741
      %v743 = vpop.f32.mrf.mxu0
      %v744 = vadd.f32 %v373, %v743
      %745 = vmatmul.bf16.gmra.mxu0 %v489
      %v746 = vpop.f32.mrf.mxu0
      %v747 = vadd.f32 %v373, %v746
      %v748 = vpop.f32.mrf.mxu0
      %v749 = vadd.f32 %v373, %v748
      %750 = vmatmul.bf16.gmra.mxu0 %v491
      %v751 = vpop.f32.mrf.mxu0
      %v752 = vadd.f32 %v373, %v751
      %v753 = vpop.f32.mrf.mxu0
      %v754 = vadd.f32 %v373, %v753
      %755 = vmatmul.bf16.gmra.mxu0 %v493
      %v756 = vpop.f32.mrf.mxu0
      %v757 = vadd.f32 %v373, %v756
      %v758 = vpop.f32.mrf.mxu0
      %v759 = vadd.f32 %v373, %v758
      %760 = vmatmul.bf16.gmra.mxu0 %v495
      %v761 = vpop.f32.mrf.mxu0
      %v762 = vadd.f32 %v373, %v761
      %v763 = vpop.f32.mrf.mxu0
      %v764 = vadd.f32 %v373, %v763
      %765 = vmatmul.bf16.gmra.mxu0 %v497
      %v766 = vpop.f32.mrf.mxu0
      %v767 = vadd.f32 %v373, %v766
      %v768 = vpop.f32.mrf.mxu0
      %v769 = vadd.f32 %v373, %v768
      %770 = vmatmul.bf16.gmra.mxu0 %v499
      %v771 = vpop.f32.mrf.mxu0
      %v772 = vadd.f32 %v373, %v771
      %v773 = vpop.f32.mrf.mxu0
      %v774 = vadd.f32 %v373, %v773
      %775 = vmatmul.bf16.gmra.mxu0 %v501
      %v776 = vpop.f32.mrf.mxu0
      %v777 = vadd.f32 %v373, %v776
      %v778 = vpop.f32.mrf.mxu0
      %v779 = vadd.f32 %v373, %v778
      %780 = vmatmul.bf16.gmra.mxu0 %v503
      %v781 = vpop.f32.mrf.mxu0
      %v782 = vadd.f32 %v373, %v781
      %v783 = vpop.f32.mrf.mxu0
      %v784 = vadd.f32 %v373, %v783
      %785 = vdwg.mxu0
      %786 = vmatpush.bf16.msra.mxu0 %v663
      %787 = vmatpush.bf16.msra.mxu0 %v661
      %788 = vmatpush.bf16.msra.mxu0 %v659
      %789 = vmatpush.bf16.msra.mxu0 %v657
      %790 = vmatpush.bf16.msra.mxu0 %v655
      %791 = vmatpush.bf16.msra.mxu0 %v653
      %792 = vmatpush.bf16.msra.mxu0 %v651
      %793 = vmatpush.bf16.msra.mxu0 %v649
      %794 = vmatmul.bf16.gmra.mxu0 %v474
      %v795 = vpop.f32.mrf.mxu0
      %v796 = vadd.f32 %v707, %v795
      %v797 = vpop.f32.mrf.mxu0
      %v798 = vadd.f32 %v709, %v797
      %799 = vmatmul.bf16.gmra.mxu0 %v476
      %v800 = vpop.f32.mrf.mxu0
      %v801 = vadd.f32 %v712, %v800
      %v802 = vpop.f32.mrf.mxu0
      %v803 = vadd.f32 %v714, %v802
      %804 = vmatmul.bf16.gmra.mxu0 %v478
      %v805 = vpop.f32.mrf.mxu0
      %v806 = vadd.f32 %v717, %v805
      %v807 = vpop.f32.mrf.mxu0
      %v808 = vadd.f32 %v719, %v807
      %809 = vmatmul.bf16.gmra.mxu0 %v480
      %v810 = vpop.f32.mrf.mxu0
      %v811 = vadd.f32 %v722, %v810
      %v812 = vpop.f32.mrf.mxu0
      %v813 = vadd.f32 %v724, %v812
      %814 = vmatmul.bf16.gmra.mxu0 %v482
      %v815 = vpop.f32.mrf.mxu0
      %v816 = vadd.f32 %v727, %v815
      %v817 = vpop.f32.mrf.mxu0
      %v818 = vadd.f32 %v729, %v817
      %819 = vmatmul.bf16.gmra.mxu0 %v484
      %v820 = vpop.f32.mrf.mxu0
      %v821 = vadd.f32 %v732, %v820
      %v822 = vpop.f32.mrf.mxu0
      %v823 = vadd.f32 %v734, %v822
      %824 = vmatmul.bf16.gmra.mxu0 %v486
      %v825 = vpop.f32.mrf.mxu0
      %v826 = vadd.f32 %v737, %v825
      %v827 = vpop.f32.mrf.mxu0
      %v828 = vadd.f32 %v739, %v827
      %829 = vmatmul.bf16.gmra.mxu0 %v488
      %v830 = vpop.f32.mrf.mxu0
      %v831 = vadd.f32 %v742, %v830
      %v832 = vpop.f32.mrf.mxu0
      %v833 = vadd.f32 %v744, %v832
      %834 = vmatmul.bf16.gmra.mxu0 %v490
      %v835 = vpop.f32.mrf.mxu0
      %v836 = vadd.f32 %v747, %v835
      %v837 = vpop.f32.mrf.mxu0
      %v838 = vadd.f32 %v749, %v837
      %839 = vmatmul.bf16.gmra.mxu0 %v492
      %v840 = vpop.f32.mrf.mxu0
      %v841 = vadd.f32 %v752, %v840
      %v842 = vpop.f32.mrf.mxu0
      %v843 = vadd.f32 %v754, %v842
      %844 = vmatmul.bf16.gmra.mxu0 %v494
      %v845 = vpop.f32.mrf.mxu0
      %v846 = vadd.f32 %v757, %v845
      %v847 = vpop.f32.mrf.mxu0
      %v848 = vadd.f32 %v759, %v847
      %849 = vmatmul.bf16.gmra.mxu0 %v496
      %v850 = vpop.f32.mrf.mxu0
      %v851 = vadd.f32 %v762, %v850
      %v852 = vpop.f32.mrf.mxu0
      %v853 = vadd.f32 %v764, %v852
      %854 = vmatmul.bf16.gmra.mxu0 %v498
      %v855 = vpop.f32.mrf.mxu0
      %v856 = vadd.f32 %v767, %v855
      %v857 = vpop.f32.mrf.mxu0
      %v858 = vadd.f32 %v769, %v857
      %859 = vmatmul.bf16.gmra.mxu0 %v500
      %v860 = vpop.f32.mrf.mxu0
      %v861 = vadd.f32 %v772, %v860
      %v862 = vpop.f32.mrf.mxu0
      %v863 = vadd.f32 %v774, %v862
      %864 = vmatmul.bf16.gmra.mxu0 %v502
      %v865 = vpop.f32.mrf.mxu0
      %v866 = vadd.f32 %v777, %v865
      %v867 = vpop.f32.mrf.mxu0
      %v868 = vadd.f32 %v779, %v867
      %869 = vmatmul.bf16.gmra.mxu0 %v504
      %v870 = vpop.f32.mrf.mxu0
      %v871 = vadd.f32 %v782, %v870
      %v872 = vpop.f32.mrf.mxu0
      %v873 = vadd.f32 %v784, %v872
      %874 = vdwg.mxu0
      %875 = vmatpush.bf16.msra.mxu0 %v648
      %876 = vmatpush.bf16.msra.mxu0 %v646
      %877 = vmatpush.bf16.msra.mxu0 %v644
      %878 = vmatpush.bf16.msra.mxu0 %v642
      %879 = vmatpush.bf16.msra.mxu0 %v640
      %880 = vmatpush.bf16.msra.mxu0 %v638
      %881 = vmatpush.bf16.msra.mxu0 %v636
      %882 = vmatpush.bf16.msra.mxu0 %v634
      %883 = vmatmul.bf16.gmra.mxu0 %v473
      %v884 = vpop.f32.mrf.mxu0
      %v885 = vadd.f32 %v374, %v884
      %v886 = vpop.f32.mrf.mxu0
      %v887 = vadd.f32 %v374, %v886
      %888 = vmatmul.bf16.gmra.mxu0 %v475
      %v889 = vpop.f32.mrf.mxu0
      %v890 = vadd.f32 %v374, %v889
      %v891 = vpop.f32.mrf.mxu0
      %v892 = vadd.f32 %v374, %v891
      %893 = vmatmul.bf16.gmra.mxu0 %v477
      %v894 = vpop.f32.mrf.mxu0
      %v895 = vadd.f32 %v374, %v894
      %v896 = vpop.f32.mrf.mxu0
      %v897 = vadd.f32 %v374, %v896
      %898 = vmatmul.bf16.gmra.mxu0 %v479
      %v899 = vpop.f32.mrf.mxu0
      %v900 = vadd.f32 %v374, %v899
      %v901 = vpop.f32.mrf.mxu0
      %v902 = vadd.f32 %v374, %v901
      %903 = vmatmul.bf16.gmra.mxu0 %v481
      %v904 = vpop.f32.mrf.mxu0
      %v905 = vadd.f32 %v374, %v904
      %v906 = vpop.f32.mrf.mxu0
      %v907 = vadd.f32 %v374, %v906
      %908 = vmatmul.bf16.gmra.mxu0 %v483
      %v909 = vpop.f32.mrf.mxu0
      %v910 = vadd.f32 %v374, %v909
      %v911 = vpop.f32.mrf.mxu0
      %v912 = vadd.f32 %v374, %v911
      %913 = vmatmul.bf16.gmra.mxu0 %v485
      %v914 = vpop.f32.mrf.mxu0
      %v915 = vadd.f32 %v374, %v914
      %v916 = vpop.f32.mrf.mxu0
      %v917 = vadd.f32 %v374, %v916
      %918 = vmatmul.bf16.gmra.mxu0 %v487
      %v919 = vpop.f32.mrf.mxu0
      %v920 = vadd.f32 %v374, %v919
      %v921 = vpop.f32.mrf.mxu0
      %v922 = vadd.f32 %v374, %v921
      %923 = vmatmul.bf16.gmra.mxu0 %v489
      %v924 = vpop.f32.mrf.mxu0
      %v925 = vadd.f32 %v374, %v924
      %v926 = vpop.f32.mrf.mxu0
      %v927 = vadd.f32 %v374, %v926
      %928 = vmatmul.bf16.gmra.mxu0 %v491
      %v929 = vpop.f32.mrf.mxu0
      %v930 = vadd.f32 %v374, %v929
      %v931 = vpop.f32.mrf.mxu0
      %v932 = vadd.f32 %v374, %v931
      %933 = vmatmul.bf16.gmra.mxu0 %v493
      %v934 = vpop.f32.mrf.mxu0
      %v935 = vadd.f32 %v374, %v934
      %v936 = vpop.f32.mrf.mxu0
      %v937 = vadd.f32 %v374, %v936
      %938 = vmatmul.bf16.gmra.mxu0 %v495
      %v939 = vpop.f32.mrf.mxu0
      %v940 = vadd.f32 %v374, %v939
      %v941 = vpop.f32.mrf.mxu0
      %v942 = vadd.f32 %v374, %v941
      %943 = vmatmul.bf16.gmra.mxu0 %v497
      %v944 = vpop.f32.mrf.mxu0
      %v945 = vadd.f32 %v374, %v944
      %v946 = vpop.f32.mrf.mxu0
      %v947 = vadd.f32 %v374, %v946
      %948 = vmatmul.bf16.gmra.mxu0 %v499
      %v949 = vpop.f32.mrf.mxu0
      %v950 = vadd.f32 %v374, %v949
      %v951 = vpop.f32.mrf.mxu0
      %v952 = vadd.f32 %v374, %v951
      %953 = vmatmul.bf16.gmra.mxu0 %v501
      %v954 = vpop.f32.mrf.mxu0
      %v955 = vadd.f32 %v374, %v954
      %v956 = vpop.f32.mrf.mxu0
      %v957 = vadd.f32 %v374, %v956
      %958 = vmatmul.bf16.gmra.mxu0 %v503
      %v959 = vpop.f32.mrf.mxu0
      %v960 = vadd.f32 %v374, %v959
      %v961 = vpop.f32.mrf.mxu0
      %v962 = vadd.f32 %v374, %v961
      %963 = vdwg.mxu0
      %964 = vmatpush.bf16.msra.mxu0 %v664
      %965 = vmatpush.bf16.msra.mxu0 %v662
      %966 = vmatpush.bf16.msra.mxu0 %v660
      %967 = vmatpush.bf16.msra.mxu0 %v658
      %968 = vmatpush.bf16.msra.mxu0 %v656
      %969 = vmatpush.bf16.msra.mxu0 %v654
      %970 = vmatpush.bf16.msra.mxu0 %v652
      %971 = vmatpush.bf16.msra.mxu0 %v650
      %972 = vmatmul.bf16.gmra.mxu0 %v474
      %v973 = vpop.f32.mrf.mxu0
      %v974 = vadd.f32 %v885, %v973
      %v975 = vpop.f32.mrf.mxu0
      %v976 = vadd.f32 %v887, %v975
      %977 = vmatmul.bf16.gmra.mxu0 %v476
      %v978 = vpop.f32.mrf.mxu0
      %v979 = vadd.f32 %v890, %v978
      %v980 = vpop.f32.mrf.mxu0
      %v981 = vadd.f32 %v892, %v980
      %982 = vmatmul.bf16.gmra.mxu0 %v478
      %v983 = vpop.f32.mrf.mxu0
      %v984 = vadd.f32 %v895, %v983
      %v985 = vpop.f32.mrf.mxu0
      %v986 = vadd.f32 %v897, %v985
      %987 = vmatmul.bf16.gmra.mxu0 %v480
      %v988 = vpop.f32.mrf.mxu0
      %v989 = vadd.f32 %v900, %v988
      %v990 = vpop.f32.mrf.mxu0
      %v991 = vadd.f32 %v902, %v990
      %992 = vmatmul.bf16.gmra.mxu0 %v482
      %v993 = vpop.f32.mrf.mxu0
      %v994 = vadd.f32 %v905, %v993
      %v995 = vpop.f32.mrf.mxu0
      %v996 = vadd.f32 %v907, %v995
      %997 = vmatmul.bf16.gmra.mxu0 %v484
      %v998 = vpop.f32.mrf.mxu0
      %v999 = vadd.f32 %v910, %v998
      %v1000 = vpop.f32.mrf.mxu0
      %v1001 = vadd.f32 %v912, %v1000
      %1002 = vmatmul.bf16.gmra.mxu0 %v486
      %v1003 = vpop.f32.mrf.mxu0
      %v1004 = vadd.f32 %v915, %v1003
      %v1005 = vpop.f32.mrf.mxu0
      %v1006 = vadd.f32 %v917, %v1005
      %1007 = vmatmul.bf16.gmra.mxu0 %v488
      %v1008 = vpop.f32.mrf.mxu0
      %v1009 = vadd.f32 %v920, %v1008
      %v1010 = vpop.f32.mrf.mxu0
      %v1011 = vadd.f32 %v922, %v1010
      %1012 = vmatmul.bf16.gmra.mxu0 %v490
      %v1013 = vpop.f32.mrf.mxu0
      %v1014 = vadd.f32 %v925, %v1013
      %v1015 = vpop.f32.mrf.mxu0
      %v1016 = vadd.f32 %v927, %v1015
      %1017 = vmatmul.bf16.gmra.mxu0 %v492
      %v1018 = vpop.f32.mrf.mxu0
      %v1019 = vadd.f32 %v930, %v1018
      %v1020 = vpop.f32.mrf.mxu0
      %v1021 = vadd.f32 %v932, %v1020
      %1022 = vmatmul.bf16.gmra.mxu0 %v494
      %v1023 = vpop.f32.mrf.mxu0
      %v1024 = vadd.f32 %v935, %v1023
      %v1025 = vpop.f32.mrf.mxu0
      %v1026 = vadd.f32 %v937, %v1025
      %1027 = vmatmul.bf16.gmra.mxu0 %v496
      %v1028 = vpop.f32.mrf.mxu0
      %v1029 = vadd.f32 %v940, %v1028
      %v1030 = vpop.f32.mrf.mxu0
      %v1031 = vadd.f32 %v942, %v1030
      %1032 = vmatmul.bf16.gmra.mxu0 %v498
      %v1033 = vpop.f32.mrf.mxu0
      %v1034 = vadd.f32 %v945, %v1033
      %v1035 = vpop.f32.mrf.mxu0
      %v1036 = vadd.f32 %v947, %v1035
      %1037 = vmatmul.bf16.gmra.mxu0 %v500
      %v1038 = vpop.f32.mrf.mxu0
      %v1039 = vadd.f32 %v950, %v1038
      %v1040 = vpop.f32.mrf.mxu0
      %v1041 = vadd.f32 %v952, %v1040
      %1042 = vmatmul.bf16.gmra.mxu0 %v502
      %v1043 = vpop.f32.mrf.mxu0
      %v1044 = vadd.f32 %v955, %v1043
      %v1045 = vpop.f32.mrf.mxu0
      %v1046 = vadd.f32 %v957, %v1045
      %1047 = vmatmul.bf16.gmra.mxu0 %v504
      %v1048 = vpop.f32.mrf.mxu0
      %v1049 = vadd.f32 %v960, %v1048
      %v1050 = vpop.f32.mrf.mxu0
      %v1051 = vadd.f32 %v962, %v1050
      %1052 = vdwg.mxu0
      %v1053 = vunpack.c.l.bf16 %v307
      %v1054 = vunpack.c.h.bf16 %v307
      %v1055 = vunpack.c.l.bf16 %v308
      %v1056 = vunpack.c.h.bf16 %v308
      %v1057 = vunpack.c.l.bf16 %v309
      %v1058 = vunpack.c.h.bf16 %v309
      %v1059 = vunpack.c.l.bf16 %v310
      %v1060 = vunpack.c.h.bf16 %v310
      %v1061 = vunpack.c.l.bf16 %v311
      %v1062 = vunpack.c.h.bf16 %v311
      %v1063 = vunpack.c.l.bf16 %v312
      %v1064 = vunpack.c.h.bf16 %v312
      %v1065 = vunpack.c.l.bf16 %v313
      %v1066 = vunpack.c.h.bf16 %v313
      %v1067 = vunpack.c.l.bf16 %v314
      %v1068 = vunpack.c.h.bf16 %v314
      %v1069 = vunpack.c.l.bf16 %v315
      %v1070 = vunpack.c.h.bf16 %v315
      %v1071 = vunpack.c.l.bf16 %v316
      %v1072 = vunpack.c.h.bf16 %v316
      %v1073 = vunpack.c.l.bf16 %v317
      %v1074 = vunpack.c.h.bf16 %v317
      %v1075 = vunpack.c.l.bf16 %v318
      %v1076 = vunpack.c.h.bf16 %v318
      %v1077 = vunpack.c.l.bf16 %v319
      %v1078 = vunpack.c.h.bf16 %v319
      %v1079 = vunpack.c.l.bf16 %v320
      %v1080 = vunpack.c.h.bf16 %v320
      %v1081 = vunpack.c.l.bf16 %v321
      %v1082 = vunpack.c.h.bf16 %v321
      %v1083 = vunpack.c.l.bf16 %v322
      %v1084 = vunpack.c.h.bf16 %v322
      %v1085 = vunpack.c.l.bf16 %v323
      %v1086 = vunpack.c.h.bf16 %v323
      %v1087 = vunpack.c.l.bf16 %v324
      %v1088 = vunpack.c.h.bf16 %v324
      %v1089 = vunpack.c.l.bf16 %v325
      %v1090 = vunpack.c.h.bf16 %v325
      %v1091 = vunpack.c.l.bf16 %v326
      %v1092 = vunpack.c.h.bf16 %v326
      %v1093 = vunpack.c.l.bf16 %v327
      %v1094 = vunpack.c.h.bf16 %v327
      %v1095 = vunpack.c.l.bf16 %v328
      %v1096 = vunpack.c.h.bf16 %v328
      %v1097 = vunpack.c.l.bf16 %v329
      %v1098 = vunpack.c.h.bf16 %v329
      %v1099 = vunpack.c.l.bf16 %v330
      %v1100 = vunpack.c.h.bf16 %v330
      %v1101 = vunpack.c.l.bf16 %v331
      %v1102 = vunpack.c.h.bf16 %v331
      %v1103 = vunpack.c.l.bf16 %v332
      %v1104 = vunpack.c.h.bf16 %v332
      %v1105 = vunpack.c.l.bf16 %v333
      %v1106 = vunpack.c.h.bf16 %v333
      %v1107 = vunpack.c.l.bf16 %v334
      %v1108 = vunpack.c.h.bf16 %v334
      %v1109 = vunpack.c.l.bf16 %v335
      %v1110 = vunpack.c.h.bf16 %v335
      %v1111 = vunpack.c.l.bf16 %v336
      %v1112 = vunpack.c.h.bf16 %v336
      %v1113 = vunpack.c.l.bf16 %v337
      %v1114 = vunpack.c.h.bf16 %v337
      %v1115 = vunpack.c.l.bf16 %v338
      %v1116 = vunpack.c.h.bf16 %v338
      %v1117 = vmul.f32 %v1053, %v1053
      %v1118 = vmul.f32 %v1054, %v1054
      %v1119 = vmul.f32 %v1055, %v1055
      %v1120 = vmul.f32 %v1056, %v1056
      %v1121 = vmul.f32 %v1057, %v1057
      %v1122 = vmul.f32 %v1058, %v1058
      %v1123 = vmul.f32 %v1059, %v1059
      %v1124 = vmul.f32 %v1060, %v1060
      %v1125 = vmul.f32 %v1061, %v1061
      %v1126 = vmul.f32 %v1062, %v1062
      %v1127 = vmul.f32 %v1063, %v1063
      %v1128 = vmul.f32 %v1064, %v1064
      %v1129 = vmul.f32 %v1065, %v1065
      %v1130 = vmul.f32 %v1066, %v1066
      %v1131 = vmul.f32 %v1067, %v1067
      %v1132 = vmul.f32 %v1068, %v1068
      %v1133 = vmul.f32 %v1069, %v1069
      %v1134 = vmul.f32 %v1070, %v1070
      %v1135 = vmul.f32 %v1071, %v1071
      %v1136 = vmul.f32 %v1072, %v1072
      %v1137 = vmul.f32 %v1073, %v1073
      %v1138 = vmul.f32 %v1074, %v1074
      %v1139 = vmul.f32 %v1075, %v1075
      %v1140 = vmul.f32 %v1076, %v1076
      %v1141 = vmul.f32 %v1077, %v1077
      %v1142 = vmul.f32 %v1078, %v1078
      %v1143 = vmul.f32 %v1079, %v1079
      %v1144 = vmul.f32 %v1080, %v1080
      %v1145 = vmul.f32 %v1081, %v1081
      %v1146 = vmul.f32 %v1082, %v1082
      %v1147 = vmul.f32 %v1083, %v1083
      %v1148 = vmul.f32 %v1084, %v1084
      %v1149 = vmul.f32 %v1085, %v1085
      %v1150 = vmul.f32 %v1086, %v1086
      %v1151 = vmul.f32 %v1087, %v1087
      %v1152 = vmul.f32 %v1088, %v1088
      %v1153 = vmul.f32 %v1089, %v1089
      %v1154 = vmul.f32 %v1090, %v1090
      %v1155 = vmul.f32 %v1091, %v1091
      %v1156 = vmul.f32 %v1092, %v1092
      %v1157 = vmul.f32 %v1093, %v1093
      %v1158 = vmul.f32 %v1094, %v1094
      %v1159 = vmul.f32 %v1095, %v1095
      %v1160 = vmul.f32 %v1096, %v1096
      %v1161 = vmul.f32 %v1097, %v1097
      %v1162 = vmul.f32 %v1098, %v1098
      %v1163 = vmul.f32 %v1099, %v1099
      %v1164 = vmul.f32 %v1100, %v1100
      %v1165 = vmul.f32 %v1101, %v1101
      %v1166 = vmul.f32 %v1102, %v1102
      %v1167 = vmul.f32 %v1103, %v1103
      %v1168 = vmul.f32 %v1104, %v1104
      %v1169 = vmul.f32 %v1105, %v1105
      %v1170 = vmul.f32 %v1106, %v1106
      %v1171 = vmul.f32 %v1107, %v1107
      %v1172 = vmul.f32 %v1108, %v1108
      %v1173 = vmul.f32 %v1109, %v1109
      %v1174 = vmul.f32 %v1110, %v1110
      %v1175 = vmul.f32 %v1111, %v1111
      %v1176 = vmul.f32 %v1112, %v1112
      %v1177 = vmul.f32 %v1113, %v1113
      %v1178 = vmul.f32 %v1114, %v1114
      %v1179 = vmul.f32 %v1115, %v1115
      %v1180 = vmul.f32 %v1116, %v1116
      %v1181 = vpack.c.bf16 %v1119, %v1117
      %v1182 = vpack.c.bf16 %v1120, %v1118
      %v1183 = vpack.c.bf16 %v1123, %v1121
      %v1184 = vpack.c.bf16 %v1124, %v1122
      %v1185 = vpack.c.bf16 %v1127, %v1125
      %v1186 = vpack.c.bf16 %v1128, %v1126
      %v1187 = vpack.c.bf16 %v1131, %v1129
      %v1188 = vpack.c.bf16 %v1132, %v1130
      %v1189 = vpack.c.bf16 %v1135, %v1133
      %v1190 = vpack.c.bf16 %v1136, %v1134
      %v1191 = vpack.c.bf16 %v1139, %v1137
      %v1192 = vpack.c.bf16 %v1140, %v1138
      %v1193 = vpack.c.bf16 %v1143, %v1141
      %v1194 = vpack.c.bf16 %v1144, %v1142
      %v1195 = vpack.c.bf16 %v1147, %v1145
      %v1196 = vpack.c.bf16 %v1148, %v1146
      %v1197 = vpack.c.bf16 %v1151, %v1149
      %v1198 = vpack.c.bf16 %v1152, %v1150
      %v1199 = vpack.c.bf16 %v1155, %v1153
      %v1200 = vpack.c.bf16 %v1156, %v1154
      %v1201 = vpack.c.bf16 %v1159, %v1157
      %v1202 = vpack.c.bf16 %v1160, %v1158
      %v1203 = vpack.c.bf16 %v1163, %v1161
      %v1204 = vpack.c.bf16 %v1164, %v1162
      %v1205 = vpack.c.bf16 %v1167, %v1165
      %v1206 = vpack.c.bf16 %v1168, %v1166
      %v1207 = vpack.c.bf16 %v1171, %v1169
      %v1208 = vpack.c.bf16 %v1172, %v1170
      %v1209 = vpack.c.bf16 %v1175, %v1173
      %v1210 = vpack.c.bf16 %v1176, %v1174
      %v1211 = vpack.c.bf16 %v1179, %v1177
      %v1212 = vpack.c.bf16 %v1180, %v1178
      %v1213 = vld [vmem:[%s2] sm:$0xf]
      %v1214 = vld [vmem:[%s2 + $0x4] sm:$0xf]
      %v1215 = vld [vmem:[%s2 + $0x8] sm:$0xf]
      %v1216 = vld [vmem:[%s2 + $0xc] sm:$0xf]
      %v1217 = vld [vmem:[%s2 + $0x10] sm:$0xf]
      %v1218 = vld [vmem:[%s2 + $0x14] sm:$0xf]
      %v1219 = vld [vmem:[%s2 + $0x18] sm:$0xf]
      %v1220 = vld [vmem:[%s2 + $0x1c] sm:$0xf]
      %v1221 = vld [vmem:[%s2 + $0x20] sm:$0xf]
      %v1222 = vld [vmem:[%s2 + $0x24] sm:$0xf]
      %v1223 = vld [vmem:[%s2 + $0x28] sm:$0xf]
      %v1224 = vld [vmem:[%s2 + $0x2c] sm:$0xf]
      %v1225 = vld [vmem:[%s2 + $0x30] sm:$0xf]
      %v1226 = vld [vmem:[%s2 + $0x34] sm:$0xf]
      %v1227 = vld [vmem:[%s2 + $0x38] sm:$0xf]
      %v1228 = vld [vmem:[%s2 + $0x3c] sm:$0xf]
      %v1229 = vld [vmem:[%s2 + $0x40] sm:$0xf]
      %v1230 = vld [vmem:[%s2 + $0x44] sm:$0xf]
      %v1231 = vld [vmem:[%s2 + $0x48] sm:$0xf]
      %v1232 = vld [vmem:[%s2 + $0x4c] sm:$0xf]
      %v1233 = vld [vmem:[%s2 + $0x50] sm:$0xf]
      %v1234 = vld [vmem:[%s2 + $0x54] sm:$0xf]
      %v1235 = vld [vmem:[%s2 + $0x58] sm:$0xf]
      %v1236 = vld [vmem:[%s2 + $0x5c] sm:$0xf]
      %v1237 = vld [vmem:[%s2 + $0x60] sm:$0xf]
      %v1238 = vld [vmem:[%s2 + $0x64] sm:$0xf]
      %v1239 = vld [vmem:[%s2 + $0x68] sm:$0xf]
      %v1240 = vld [vmem:[%s2 + $0x6c] sm:$0xf]
      %v1241 = vld [vmem:[%s2 + $0x70] sm:$0xf]
      %v1242 = vld [vmem:[%s2 + $0x74] sm:$0xf]
      %v1243 = vld [vmem:[%s2 + $0x78] sm:$0xf]
      %v1244 = vld [vmem:[%s2 + $0x7c] sm:$0xf]
      %v1277 = vunpack.c.l.b16 %v1213
      %v1278 = vunpack.c.l.b16 %v1214
      %v1279 = vunpack.c.l.b16 %v1215
      %v1280 = vunpack.c.l.b16 %v1216
      %v1281 = vunpack.c.l.b16 %v1217
      %v1282 = vunpack.c.l.b16 %v1218
      %v1283 = vunpack.c.l.b16 %v1219
      %v1284 = vunpack.c.l.b16 %v1220
      %v1285 = vunpack.c.l.b16 %v1221
      %v1286 = vunpack.c.l.b16 %v1222
      %v1287 = vunpack.c.l.b16 %v1223
      %v1288 = vunpack.c.l.b16 %v1224
      %v1289 = vunpack.c.l.b16 %v1225
      %v1290 = vunpack.c.l.b16 %v1226
      %v1291 = vunpack.c.l.b16 %v1227
      %v1292 = vunpack.c.l.b16 %v1228
      %v1293 = vunpack.c.l.b16 %v1229
      %v1294 = vunpack.c.l.b16 %v1230
      %v1295 = vunpack.c.l.b16 %v1231
      %v1296 = vunpack.c.l.b16 %v1232
      %v1297 = vunpack.c.l.b16 %v1233
      %v1298 = vunpack.c.l.b16 %v1234
      %v1299 = vunpack.c.l.b16 %v1235
      %v1300 = vunpack.c.l.b16 %v1236
      %v1301 = vunpack.c.l.b16 %v1237
      %v1302 = vunpack.c.l.b16 %v1238
      %v1303 = vunpack.c.l.b16 %v1239
      %v1304 = vunpack.c.l.b16 %v1240
      %v1305 = vunpack.c.l.b16 %v1241
      %v1306 = vunpack.c.l.b16 %v1242
      %v1307 = vunpack.c.l.b16 %v1243
      %v1308 = vunpack.c.l.b16 %v1244
      %v1309 = vpack.c.b16 %v1278, %v1277
      %v1310 = vpack.c.b16 %v1280, %v1279
      %v1311 = vpack.c.b16 %v1282, %v1281
      %v1312 = vpack.c.b16 %v1284, %v1283
      %v1313 = vpack.c.b16 %v1286, %v1285
      %v1314 = vpack.c.b16 %v1288, %v1287
      %v1315 = vpack.c.b16 %v1290, %v1289
      %v1316 = vpack.c.b16 %v1292, %v1291
      %v1317 = vpack.c.b16 %v1294, %v1293
      %v1318 = vpack.c.b16 %v1296, %v1295
      %v1319 = vpack.c.b16 %v1298, %v1297
      %v1320 = vpack.c.b16 %v1300, %v1299
      %v1321 = vpack.c.b16 %v1302, %v1301
      %v1322 = vpack.c.b16 %v1304, %v1303
      %v1323 = vpack.c.b16 %v1306, %v1305
      %v1324 = vpack.c.b16 %v1308, %v1307
      %1341 = vmatpush.bf16.msra.mxu0 %v1316
      %1342 = vmatpush.bf16.msra.mxu0 %v1315
      %1343 = vmatpush.bf16.msra.mxu0 %v1314
      %1344 = vmatpush.bf16.msra.mxu0 %v1313
      %1345 = vmatpush.bf16.msra.mxu0 %v1312
      %1346 = vmatpush.bf16.msra.mxu0 %v1311
      %1347 = vmatpush.bf16.msra.mxu0 %v1310
      %1348 = vmatpush.bf16.msra.mxu0 %v1309
      %1349 = vmatmul.bf16.gmra.mxu0 %v1181
      %v1350 = vpop.f32.mrf.mxu0
      %v1351 = vadd.f32 0.0, %v1350
      %v1352 = vpop.f32.mrf.mxu0
      %v1353 = vadd.f32 0.0, %v1352
      %1354 = vmatmul.bf16.gmra.mxu0 %v1183
      %v1355 = vpop.f32.mrf.mxu0
      %v1356 = vadd.f32 0.0, %v1355
      %v1357 = vpop.f32.mrf.mxu0
      %v1358 = vadd.f32 0.0, %v1357
      %1359 = vmatmul.bf16.gmra.mxu0 %v1185
      %v1360 = vpop.f32.mrf.mxu0
      %v1361 = vadd.f32 0.0, %v1360
      %v1362 = vpop.f32.mrf.mxu0
      %v1363 = vadd.f32 0.0, %v1362
      %1364 = vmatmul.bf16.gmra.mxu0 %v1187
      %v1365 = vpop.f32.mrf.mxu0
      %v1366 = vadd.f32 0.0, %v1365
      %v1367 = vpop.f32.mrf.mxu0
      %v1368 = vadd.f32 0.0, %v1367
      %1369 = vmatmul.bf16.gmra.mxu0 %v1189
      %v1370 = vpop.f32.mrf.mxu0
      %v1371 = vadd.f32 0.0, %v1370
      %v1372 = vpop.f32.mrf.mxu0
      %v1373 = vadd.f32 0.0, %v1372
      %1374 = vmatmul.bf16.gmra.mxu0 %v1191
      %v1375 = vpop.f32.mrf.mxu0
      %v1376 = vadd.f32 0.0, %v1375
      %v1377 = vpop.f32.mrf.mxu0
      %v1378 = vadd.f32 0.0, %v1377
      %1379 = vmatmul.bf16.gmra.mxu0 %v1193
      %v1380 = vpop.f32.mrf.mxu0
      %v1381 = vadd.f32 0.0, %v1380
      %v1382 = vpop.f32.mrf.mxu0
      %v1383 = vadd.f32 0.0, %v1382
      %1384 = vmatmul.bf16.gmra.mxu0 %v1195
      %v1385 = vpop.f32.mrf.mxu0
      %v1386 = vadd.f32 0.0, %v1385
      %v1387 = vpop.f32.mrf.mxu0
      %v1388 = vadd.f32 0.0, %v1387
      %1389 = vmatmul.bf16.gmra.mxu0 %v1197
      %v1390 = vpop.f32.mrf.mxu0
      %v1391 = vadd.f32 0.0, %v1390
      %v1392 = vpop.f32.mrf.mxu0
      %v1393 = vadd.f32 0.0, %v1392
      %1394 = vmatmul.bf16.gmra.mxu0 %v1199
      %v1395 = vpop.f32.mrf.mxu0
      %v1396 = vadd.f32 0.0, %v1395
      %v1397 = vpop.f32.mrf.mxu0
      %v1398 = vadd.f32 0.0, %v1397
      %1399 = vmatmul.bf16.gmra.mxu0 %v1201
      %v1400 = vpop.f32.mrf.mxu0
      %v1401 = vadd.f32 0.0, %v1400
      %v1402 = vpop.f32.mrf.mxu0
      %v1403 = vadd.f32 0.0, %v1402
      %1404 = vmatmul.bf16.gmra.mxu0 %v1203
      %v1405 = vpop.f32.mrf.mxu0
      %v1406 = vadd.f32 0.0, %v1405
      %v1407 = vpop.f32.mrf.mxu0
      %v1408 = vadd.f32 0.0, %v1407
      %1409 = vmatmul.bf16.gmra.mxu0 %v1205
      %v1410 = vpop.f32.mrf.mxu0
      %v1411 = vadd.f32 0.0, %v1410
      %v1412 = vpop.f32.mrf.mxu0
      %v1413 = vadd.f32 0.0, %v1412
      %1414 = vmatmul.bf16.gmra.mxu0 %v1207
      %v1415 = vpop.f32.mrf.mxu0
      %v1416 = vadd.f32 0.0, %v1415
      %v1417 = vpop.f32.mrf.mxu0
      %v1418 = vadd.f32 0.0, %v1417
      %1419 = vmatmul.bf16.gmra.mxu0 %v1209
      %v1420 = vpop.f32.mrf.mxu0
      %v1421 = vadd.f32 0.0, %v1420
      %v1422 = vpop.f32.mrf.mxu0
      %v1423 = vadd.f32 0.0, %v1422
      %1424 = vmatmul.bf16.gmra.mxu0 %v1211
      %v1425 = vpop.f32.mrf.mxu0
      %v1426 = vadd.f32 0.0, %v1425
      %v1427 = vpop.f32.mrf.mxu0
      %v1428 = vadd.f32 0.0, %v1427
      %1429 = vdwg.mxu0
      %1430 = vmatpush.bf16.msra.mxu0 %v1324
      %1431 = vmatpush.bf16.msra.mxu0 %v1323
      %1432 = vmatpush.bf16.msra.mxu0 %v1322
      %1433 = vmatpush.bf16.msra.mxu0 %v1321
      %1434 = vmatpush.bf16.msra.mxu0 %v1320
      %1435 = vmatpush.bf16.msra.mxu0 %v1319
      %1436 = vmatpush.bf16.msra.mxu0 %v1318
      %1437 = vmatpush.bf16.msra.mxu0 %v1317
      %1438 = vmatmul.bf16.gmra.mxu0 %v1182
      %v1439 = vpop.f32.mrf.mxu0
      %v1440 = vadd.f32 %v1351, %v1439
      %v1441 = vpop.f32.mrf.mxu0
      %v1442 = vadd.f32 %v1353, %v1441
      %1443 = vmatmul.bf16.gmra.mxu0 %v1184
      %v1444 = vpop.f32.mrf.mxu0
      %v1445 = vadd.f32 %v1356, %v1444
      %v1446 = vpop.f32.mrf.mxu0
      %v1447 = vadd.f32 %v1358, %v1446
      %1448 = vmatmul.bf16.gmra.mxu0 %v1186
      %v1449 = vpop.f32.mrf.mxu0
      %v1450 = vadd.f32 %v1361, %v1449
      %v1451 = vpop.f32.mrf.mxu0
      %v1452 = vadd.f32 %v1363, %v1451
      %1453 = vmatmul.bf16.gmra.mxu0 %v1188
      %v1454 = vpop.f32.mrf.mxu0
      %v1455 = vadd.f32 %v1366, %v1454
      %v1456 = vpop.f32.mrf.mxu0
      %v1457 = vadd.f32 %v1368, %v1456
      %1458 = vmatmul.bf16.gmra.mxu0 %v1190
      %v1459 = vpop.f32.mrf.mxu0
      %v1460 = vadd.f32 %v1371, %v1459
      %v1461 = vpop.f32.mrf.mxu0
      %v1462 = vadd.f32 %v1373, %v1461
      %1463 = vmatmul.bf16.gmra.mxu0 %v1192
      %v1464 = vpop.f32.mrf.mxu0
      %v1465 = vadd.f32 %v1376, %v1464
      %v1466 = vpop.f32.mrf.mxu0
      %v1467 = vadd.f32 %v1378, %v1466
      %1468 = vmatmul.bf16.gmra.mxu0 %v1194
      %v1469 = vpop.f32.mrf.mxu0
      %v1470 = vadd.f32 %v1381, %v1469
      %v1471 = vpop.f32.mrf.mxu0
      %v1472 = vadd.f32 %v1383, %v1471
      %1473 = vmatmul.bf16.gmra.mxu0 %v1196
      %v1474 = vpop.f32.mrf.mxu0
      %v1475 = vadd.f32 %v1386, %v1474
      %v1476 = vpop.f32.mrf.mxu0
      %v1477 = vadd.f32 %v1388, %v1476
      %1478 = vmatmul.bf16.gmra.mxu0 %v1198
      %v1479 = vpop.f32.mrf.mxu0
      %v1480 = vadd.f32 %v1391, %v1479
      %v1481 = vpop.f32.mrf.mxu0
      %v1482 = vadd.f32 %v1393, %v1481
      %1483 = vmatmul.bf16.gmra.mxu0 %v1200
      %v1484 = vpop.f32.mrf.mxu0
      %v1485 = vadd.f32 %v1396, %v1484
      %v1486 = vpop.f32.mrf.mxu0
      %v1487 = vadd.f32 %v1398, %v1486
      %1488 = vmatmul.bf16.gmra.mxu0 %v1202
      %v1489 = vpop.f32.mrf.mxu0
      %v1490 = vadd.f32 %v1401, %v1489
      %v1491 = vpop.f32.mrf.mxu0
      %v1492 = vadd.f32 %v1403, %v1491
      %1493 = vmatmul.bf16.gmra.mxu0 %v1204
      %v1494 = vpop.f32.mrf.mxu0
      %v1495 = vadd.f32 %v1406, %v1494
      %v1496 = vpop.f32.mrf.mxu0
      %v1497 = vadd.f32 %v1408, %v1496
      %1498 = vmatmul.bf16.gmra.mxu0 %v1206
      %v1499 = vpop.f32.mrf.mxu0
      %v1500 = vadd.f32 %v1411, %v1499
      %v1501 = vpop.f32.mrf.mxu0
      %v1502 = vadd.f32 %v1413, %v1501
      %1503 = vmatmul.bf16.gmra.mxu0 %v1208
      %v1504 = vpop.f32.mrf.mxu0
      %v1505 = vadd.f32 %v1416, %v1504
      %v1506 = vpop.f32.mrf.mxu0
      %v1507 = vadd.f32 %v1418, %v1506
      %1508 = vmatmul.bf16.gmra.mxu0 %v1210
      %v1509 = vpop.f32.mrf.mxu0
      %v1510 = vadd.f32 %v1421, %v1509
      %v1511 = vpop.f32.mrf.mxu0
      %v1512 = vadd.f32 %v1423, %v1511
      %1513 = vmatmul.bf16.gmra.mxu0 %v1212
      %v1514 = vpop.f32.mrf.mxu0
      %v1515 = vadd.f32 %v1426, %v1514
      %v1516 = vpop.f32.mrf.mxu0
      %v1517 = vadd.f32 %v1428, %v1516
      %1518 = vdwg.mxu0
      %v1519 = vmul.f32 %v796, %v974
      %v1520 = vmul.f32 %v798, %v976
      %v1521 = vmul.f32 %v801, %v979
      %v1522 = vmul.f32 %v803, %v981
      %v1523 = vmul.f32 %v806, %v984
      %v1524 = vmul.f32 %v808, %v986
      %v1525 = vmul.f32 %v811, %v989
      %v1526 = vmul.f32 %v813, %v991
      %v1527 = vmul.f32 %v816, %v994
      %v1528 = vmul.f32 %v818, %v996
      %v1529 = vmul.f32 %v821, %v999
      %v1530 = vmul.f32 %v823, %v1001
      %v1531 = vmul.f32 %v826, %v1004
      %v1532 = vmul.f32 %v828, %v1006
      %v1533 = vmul.f32 %v831, %v1009
      %v1534 = vmul.f32 %v833, %v1011
      %v1535 = vmul.f32 %v836, %v1014
      %v1536 = vmul.f32 %v838, %v1016
      %v1537 = vmul.f32 %v841, %v1019
      %v1538 = vmul.f32 %v843, %v1021
      %v1539 = vmul.f32 %v846, %v1024
      %v1540 = vmul.f32 %v848, %v1026
      %v1541 = vmul.f32 %v851, %v1029
      %v1542 = vmul.f32 %v853, %v1031
      %v1543 = vmul.f32 %v856, %v1034
      %v1544 = vmul.f32 %v858, %v1036
      %v1545 = vmul.f32 %v861, %v1039
      %v1546 = vmul.f32 %v863, %v1041
      %v1547 = vmul.f32 %v866, %v1044
      %v1548 = vmul.f32 %v868, %v1046
      %v1549 = vmul.f32 %v871, %v1049
      %v1550 = vmul.f32 %v873, %v1051
      %v1551 = vadd.f32 %v1519, %v1440
      %v1552 = vadd.f32 %v1520, %v1442
      %v1553 = vadd.f32 %v1521, %v1445
      %v1554 = vadd.f32 %v1522, %v1447
      %v1555 = vadd.f32 %v1523, %v1450
      %v1556 = vadd.f32 %v1524, %v1452
      %v1557 = vadd.f32 %v1525, %v1455
      %v1558 = vadd.f32 %v1526, %v1457
      %v1559 = vadd.f32 %v1527, %v1460
      %v1560 = vadd.f32 %v1528, %v1462
      %v1561 = vadd.f32 %v1529, %v1465
      %v1562 = vadd.f32 %v1530, %v1467
      %v1563 = vadd.f32 %v1531, %v1470
      %v1564 = vadd.f32 %v1532, %v1472
      %v1565 = vadd.f32 %v1533, %v1475
      %v1566 = vadd.f32 %v1534, %v1477
      %v1567 = vadd.f32 %v1535, %v1480
      %v1568 = vadd.f32 %v1536, %v1482
      %v1569 = vadd.f32 %v1537, %v1485
      %v1570 = vadd.f32 %v1538, %v1487
      %v1571 = vadd.f32 %v1539, %v1490
      %v1572 = vadd.f32 %v1540, %v1492
      %v1573 = vadd.f32 %v1541, %v1495
      %v1574 = vadd.f32 %v1542, %v1497
      %v1575 = vadd.f32 %v1543, %v1500
      %v1576 = vadd.f32 %v1544, %v1502
      %v1577 = vadd.f32 %v1545, %v1505
      %v1578 = vadd.f32 %v1546, %v1507
      %v1579 = vadd.f32 %v1547, %v1510
      %v1580 = vadd.f32 %v1548, %v1512
      %v1581 = vadd.f32 %v1549, %v1515
      %v1582 = vadd.f32 %v1550, %v1517
      %v1583 = vld [vmem:[%s4] sm:$0x1]
      %v1585 = vperm.slane %v1583, 0
      %v1587 = vmul.f32 %v1551, %v1585
      %v1588 = vmul.f32 %v1552, %v1585
      %v1589 = vmul.f32 %v1553, %v1585
      %v1590 = vmul.f32 %v1554, %v1585
      %v1591 = vmul.f32 %v1555, %v1585
      %v1592 = vmul.f32 %v1556, %v1585
      %v1593 = vmul.f32 %v1557, %v1585
      %v1594 = vmul.f32 %v1558, %v1585
      %v1595 = vmul.f32 %v1559, %v1585
      %v1596 = vmul.f32 %v1560, %v1585
      %v1597 = vmul.f32 %v1561, %v1585
      %v1598 = vmul.f32 %v1562, %v1585
      %v1599 = vmul.f32 %v1563, %v1585
      %v1600 = vmul.f32 %v1564, %v1585
      %v1601 = vmul.f32 %v1565, %v1585
      %v1602 = vmul.f32 %v1566, %v1585
      %v1603 = vmul.f32 %v1567, %v1585
      %v1604 = vmul.f32 %v1568, %v1585
      %v1605 = vmul.f32 %v1569, %v1585
      %v1606 = vmul.f32 %v1570, %v1585
      %v1607 = vmul.f32 %v1571, %v1585
      %v1608 = vmul.f32 %v1572, %v1585
      %v1609 = vmul.f32 %v1573, %v1585
      %v1610 = vmul.f32 %v1574, %v1585
      %v1611 = vmul.f32 %v1575, %v1585
      %v1612 = vmul.f32 %v1576, %v1585
      %v1613 = vmul.f32 %v1577, %v1585
      %v1614 = vmul.f32 %v1578, %v1585
      %v1615 = vmul.f32 %v1579, %v1585
      %v1616 = vmul.f32 %v1580, %v1585
      %v1617 = vmul.f32 %v1581, %v1585
      %v1618 = vmul.f32 %v1582, %v1585
      %v1619 = vld [vmem:[%s5] sm:$0x1]
      %v1621 = vperm.slane %v1619, 0
      %v1623 = vadd.f32 %v1587, %v1621
      %v1624 = vadd.f32 %v1588, %v1621
      %v1625 = vadd.f32 %v1589, %v1621
      %v1626 = vadd.f32 %v1590, %v1621
      %v1627 = vadd.f32 %v1591, %v1621
      %v1628 = vadd.f32 %v1592, %v1621
      %v1629 = vadd.f32 %v1593, %v1621
      %v1630 = vadd.f32 %v1594, %v1621
      %v1631 = vadd.f32 %v1595, %v1621
      %v1632 = vadd.f32 %v1596, %v1621
      %v1633 = vadd.f32 %v1597, %v1621
      %v1634 = vadd.f32 %v1598, %v1621
      %v1635 = vadd.f32 %v1599, %v1621
      %v1636 = vadd.f32 %v1600, %v1621
      %v1637 = vadd.f32 %v1601, %v1621
      %v1638 = vadd.f32 %v1602, %v1621
      %v1639 = vadd.f32 %v1603, %v1621
      %v1640 = vadd.f32 %v1604, %v1621
      %v1641 = vadd.f32 %v1605, %v1621
      %v1642 = vadd.f32 %v1606, %v1621
      %v1643 = vadd.f32 %v1607, %v1621
      %v1644 = vadd.f32 %v1608, %v1621
      %v1645 = vadd.f32 %v1609, %v1621
      %v1646 = vadd.f32 %v1610, %v1621
      %v1647 = vadd.f32 %v1611, %v1621
      %v1648 = vadd.f32 %v1612, %v1621
      %v1649 = vadd.f32 %v1613, %v1621
      %v1650 = vadd.f32 %v1614, %v1621
      %v1651 = vadd.f32 %v1615, %v1621
      %v1652 = vadd.f32 %v1616, %v1621
      %v1653 = vadd.f32 %v1617, %v1621
      %v1654 = vadd.f32 %v1618, %v1621
      %v1655 = vld [vmem:[%s299] sm:$0xff]
      %v1656 = vld [vmem:[%s299 + $0x8] sm:$0xff]
      %v1657 = vld [vmem:[%s299 + $0x10] sm:$0xff]
      %v1658 = vld [vmem:[%s299 + $0x18] sm:$0xff]
      %v1659 = vld [vmem:[%s299 + $0x20] sm:$0xff]
      %v1660 = vld [vmem:[%s299 + $0x28] sm:$0xff]
      %v1661 = vld [vmem:[%s299 + $0x30] sm:$0xff]
      %v1662 = vld [vmem:[%s299 + $0x38] sm:$0xff]
      %v1663 = vld [vmem:[%s299 + $0x40] sm:$0xff]
      %v1664 = vld [vmem:[%s299 + $0x48] sm:$0xff]
      %v1665 = vld [vmem:[%s299 + $0x50] sm:$0xff]
      %v1666 = vld [vmem:[%s299 + $0x58] sm:$0xff]
      %v1667 = vld [vmem:[%s299 + $0x60] sm:$0xff]
      %v1668 = vld [vmem:[%s299 + $0x68] sm:$0xff]
      %v1669 = vld [vmem:[%s299 + $0x70] sm:$0xff]
      %v1670 = vld [vmem:[%s299 + $0x78] sm:$0xff]
      %v1671 = vld [vmem:[%s299 + $0x80] sm:$0xff]
      %v1672 = vld [vmem:[%s299 + $0x88] sm:$0xff]
      %v1673 = vld [vmem:[%s299 + $0x90] sm:$0xff]
      %v1674 = vld [vmem:[%s299 + $0x98] sm:$0xff]
      %v1675 = vld [vmem:[%s299 + $0xa0] sm:$0xff]
      %v1676 = vld [vmem:[%s299 + $0xa8] sm:$0xff]
      %v1677 = vld [vmem:[%s299 + $0xb0] sm:$0xff]
      %v1678 = vld [vmem:[%s299 + $0xb8] sm:$0xff]
      %v1679 = vld [vmem:[%s299 + $0xc0] sm:$0xff]
      %v1680 = vld [vmem:[%s299 + $0xc8] sm:$0xff]
      %v1681 = vld [vmem:[%s299 + $0xd0] sm:$0xff]
      %v1682 = vld [vmem:[%s299 + $0xd8] sm:$0xff]
      %v1683 = vld [vmem:[%s299 + $0xe0] sm:$0xff]
      %v1684 = vld [vmem:[%s299 + $0xe8] sm:$0xff]
      %v1685 = vld [vmem:[%s299 + $0xf0] sm:$0xff]
      %v1686 = vld [vmem:[%s299 + $0xf8] sm:$0xff]
      %v1687 = vadd.f32 %v1623, %v1655
      %v1688 = vadd.f32 %v1624, %v1656
      %v1689 = vadd.f32 %v1625, %v1657
      %v1690 = vadd.f32 %v1626, %v1658
      %v1691 = vadd.f32 %v1627, %v1659
      %v1692 = vadd.f32 %v1628, %v1660
      %v1693 = vadd.f32 %v1629, %v1661
      %v1694 = vadd.f32 %v1630, %v1662
      %v1695 = vadd.f32 %v1631, %v1663
      %v1696 = vadd.f32 %v1632, %v1664
      %v1697 = vadd.f32 %v1633, %v1665
      %v1698 = vadd.f32 %v1634, %v1666
      %v1699 = vadd.f32 %v1635, %v1667
      %v1700 = vadd.f32 %v1636, %v1668
      %v1701 = vadd.f32 %v1637, %v1669
      %v1702 = vadd.f32 %v1638, %v1670
      %v1703 = vadd.f32 %v1639, %v1671
      %v1704 = vadd.f32 %v1640, %v1672
      %v1705 = vadd.f32 %v1641, %v1673
      %v1706 = vadd.f32 %v1642, %v1674
      %v1707 = vadd.f32 %v1643, %v1675
      %v1708 = vadd.f32 %v1644, %v1676
      %v1709 = vadd.f32 %v1645, %v1677
      %v1710 = vadd.f32 %v1646, %v1678
      %v1711 = vadd.f32 %v1647, %v1679
      %v1712 = vadd.f32 %v1648, %v1680
      %v1713 = vadd.f32 %v1649, %v1681
      %v1714 = vadd.f32 %v1650, %v1682
      %v1715 = vadd.f32 %v1651, %v1683
      %v1716 = vadd.f32 %v1652, %v1684
      %v1717 = vadd.f32 %v1653, %v1685
      %v1718 = vadd.f32 %v1654, %v1686
      %v1719 = vmax.f32 %v1687, 0.0
      %v1720 = vmax.f32 %v1688, 0.0
      %v1721 = vmax.f32 %v1689, 0.0
      %v1722 = vmax.f32 %v1690, 0.0
      %v1723 = vmax.f32 %v1691, 0.0
      %v1724 = vmax.f32 %v1692, 0.0
      %v1725 = vmax.f32 %v1693, 0.0
      %v1726 = vmax.f32 %v1694, 0.0
      %v1727 = vmax.f32 %v1695, 0.0
      %v1728 = vmax.f32 %v1696, 0.0
      %v1729 = vmax.f32 %v1697, 0.0
      %v1730 = vmax.f32 %v1698, 0.0
      %v1731 = vmax.f32 %v1699, 0.0
      %v1732 = vmax.f32 %v1700, 0.0
      %v1733 = vmax.f32 %v1701, 0.0
      %v1734 = vmax.f32 %v1702, 0.0
      %v1735 = vmax.f32 %v1703, 0.0
      %v1736 = vmax.f32 %v1704, 0.0
      %v1737 = vmax.f32 %v1705, 0.0
      %v1738 = vmax.f32 %v1706, 0.0
      %v1739 = vmax.f32 %v1707, 0.0
      %v1740 = vmax.f32 %v1708, 0.0
      %v1741 = vmax.f32 %v1709, 0.0
      %v1742 = vmax.f32 %v1710, 0.0
      %v1743 = vmax.f32 %v1711, 0.0
      %v1744 = vmax.f32 %v1712, 0.0
      %v1745 = vmax.f32 %v1713, 0.0
      %v1746 = vmax.f32 %v1714, 0.0
      %v1747 = vmax.f32 %v1715, 0.0
      %v1748 = vmax.f32 %v1716, 0.0
      %v1749 = vmax.f32 %v1717, 0.0
      %v1750 = vmax.f32 %v1718, 0.0
      %vm1751 = vcmask 130048
      %1752 = vst.msk [vmem:[%s305] sm:$0xff] %vm1751, %v1719
      %1753 = vst.msk [vmem:[%s305 + $0x8] sm:$0xff] %vm1751, %v1720
      %1754 = vst.msk [vmem:[%s305 + $0x10] sm:$0xff] %vm1751, %v1721
      %1755 = vst.msk [vmem:[%s305 + $0x18] sm:$0xff] %vm1751, %v1722
      %1756 = vst.msk [vmem:[%s305 + $0x20] sm:$0xff] %vm1751, %v1723
      %1757 = vst.msk [vmem:[%s305 + $0x28] sm:$0xff] %vm1751, %v1724
      %1758 = vst.msk [vmem:[%s305 + $0x30] sm:$0xff] %vm1751, %v1725
      %1759 = vst.msk [vmem:[%s305 + $0x38] sm:$0xff] %vm1751, %v1726
      %1760 = vst.msk [vmem:[%s305 + $0x40] sm:$0xff] %vm1751, %v1727
      %1761 = vst.msk [vmem:[%s305 + $0x48] sm:$0xff] %vm1751, %v1728
      %1762 = vst.msk [vmem:[%s305 + $0x50] sm:$0xff] %vm1751, %v1729
      %1763 = vst.msk [vmem:[%s305 + $0x58] sm:$0xff] %vm1751, %v1730
      %1764 = vst.msk [vmem:[%s305 + $0x60] sm:$0xff] %vm1751, %v1731
      %1765 = vst.msk [vmem:[%s305 + $0x68] sm:$0xff] %vm1751, %v1732
      %1766 = vst.msk [vmem:[%s305 + $0x70] sm:$0xff] %vm1751, %v1733
      %1767 = vst.msk [vmem:[%s305 + $0x78] sm:$0xff] %vm1751, %v1734
      %1768 = vst.msk [vmem:[%s305 + $0x80] sm:$0xff] %vm1751, %v1735
      %1769 = vst.msk [vmem:[%s305 + $0x88] sm:$0xff] %vm1751, %v1736
      %1770 = vst.msk [vmem:[%s305 + $0x90] sm:$0xff] %vm1751, %v1737
      %1771 = vst.msk [vmem:[%s305 + $0x98] sm:$0xff] %vm1751, %v1738
      %1772 = vst.msk [vmem:[%s305 + $0xa0] sm:$0xff] %vm1751, %v1739
      %1773 = vst.msk [vmem:[%s305 + $0xa8] sm:$0xff] %vm1751, %v1740
      %1774 = vst.msk [vmem:[%s305 + $0xb0] sm:$0xff] %vm1751, %v1741
      %1775 = vst.msk [vmem:[%s305 + $0xb8] sm:$0xff] %vm1751, %v1742
      %1776 = vst.msk [vmem:[%s305 + $0xc0] sm:$0xff] %vm1751, %v1743
      %1777 = vst.msk [vmem:[%s305 + $0xc8] sm:$0xff] %vm1751, %v1744
      %1778 = vst.msk [vmem:[%s305 + $0xd0] sm:$0xff] %vm1751, %v1745
      %1779 = vst.msk [vmem:[%s305 + $0xd8] sm:$0xff] %vm1751, %v1746
      %1780 = vst.msk [vmem:[%s305 + $0xe0] sm:$0xff] %vm1751, %v1747
      %1781 = vst.msk [vmem:[%s305 + $0xe8] sm:$0xff] %vm1751, %v1748
      %1782 = vst.msk [vmem:[%s305 + $0xf0] sm:$0xff] %vm1751, %v1749
      %1783 = vst.msk [vmem:[%s305 + $0xf8] sm:$0xff] %vm1751, %v1750
      %s1784 = smul.u32 32, %s18
      %p1785 = scmp.lt.s32.totalorder %s1784, 63
      %s1786 = scalar_select %p1785, %s1784, 63
      %s1787 = smul.addr %s1786, 8
      %s1788 = scalar_lea.vmem %s7, %s1787
      // Predicated region
      $region49: #{_lambda_.10} parent=47 // pred_check
        %p1789 = pneg %p193
      $region50: #{_lambda_.10} parent=47 // pred_check_branch
        %1791 = sbr.rel (%p1789) target = $region52
      $region51: #{_lambda_.10} parent=47 // pred_region
        %s1792 = smul.u32 32, %s18
      $region52: #{_lambda_.10} parent=47 // pred_fallthru
        _
    $region48: #{_lambda_.10} parent=5 // pred_fallthru
      _
    %p1793 = scmp.le.s32.totalorder 2, %s13
    // Predicated region
    $region53: #{_lambda_.10} parent=5 // pred_check
      %p1794 = pneg %p1793
    $region54: #{_lambda_.10} parent=5 // pred_check_branch
      %1796 = sbr.rel (%p1794) target = $region56
    $region55: #{_lambda_.10} parent=5 // pred_region
      %s1797 = ssub.s32 %s13, 2
      // Predicated region
      $region57: #{_lambda_.10} parent=55 // pred_check
        %p1798 = pneg %p199
      $region58: #{_lambda_.10} parent=55 // pred_check_branch
        %1800 = sbr.rel (%p1798) target = $region60
      $region59: #{_lambda_.10} parent=55 // pred_region
        %s1801 = smul.u32 32, %s19
        %p1802 = scmp.lt.s32.totalorder %s1801, 63
        %s1803 = scalar_select %p1802, %s1801, 63
        %s1804 = smul.addr %s1803, 8
        %s1805 = scalar_lea.vmem %s7, %s1804
      $region60: #{_lambda_.10} parent=55 // pred_fallthru
        _
    $region56: #{_lambda_.10} parent=5 // pred_fallthru
      _
  $region6: #{_lambda_.10} parent=0 // loop_footer
    %s17 = sadd.s32 1, %s13
  $region7: #{_lambda_.10} parent=0 // loop_footer_branch
    %12 = sbr.rel target = $region3
  $region8: #{_lambda_.10} parent=0 // loop_exit
    _

// kernel: _lambda_.9
$region0: #{_lambda_.9}
  #allocation0 [shape = 'u32[]', space=smem, size = 0x4, offset = 0x4, fixed_abs, tag = 'smem constant byte address 0x4 - core index']
  #allocation1 [shape = 'u32[72,128]{1,0:T(1,128)}', space=vmem, size = 0x9000, scoped, tag = 'internal scratch']
  %s0 = inlined_call_operand.vmem [shape: bf16[512,256], index: 0, kind: input, shape index: {}]
  %s1 = inlined_call_operand.vmem [shape: bf16[256,256], index: 1, kind: input, shape index: {}]
  %s2 = inlined_call_operand.vmem [shape: bf16[256,128], index: 2, kind: input, shape index: {}]
  %s3 = inlined_call_operand.vmem [shape: f32[1,256], index: 3, kind: input, shape index: {}]
  %s4 = inlined_call_operand.vmem [shape: f32[1,128], index: 4, kind: input, shape index: {}]
  %s5 = inlined_call_operand.vmem [shape: f32[1,128], index: 5, kind: input, shape index: {}]
  %s6 = inlined_call_operand.vmem [shape: f32[512,16], index: 6, kind: output, shape index: {}]
  %s7 = sld [smem:[#allocation0]]
  $region57: #{_lambda_.9} parent=0
    _
  %s9 = ssub.s32 1, %s7
  %s10 = scalar_select 0, %s9, %s7
  loop: start=0, step=1, limit=4
  $region2: #{_lambda_.9} parent=0 // loop_pre_header
    _
  $region3: #{_lambda_.9} parent=0 // loop_header
    %s12 = sphi 0, %s16
    %p13 = scmp.ge.s32.totalorder %s12, 4
    %s22 = sphi 0, %s24
    %s25 = sphi 0, %s22
    %s26 = sphi 0, %s25
    %s42 = sphi 0, %s26
    %s46 = sphi 0, %s46
    %s48 = sphi 0, %s46
    %s49 = sphi 0, %s48
    %s63 = sphi 0, %s49
    %s67 = sphi 0, %s67
    %s69 = sphi 0, %s67
    %s70 = sphi 0, %s69
    %s84 = sphi 0, %s70
    %s88 = sphi 0, %s88
    %s90 = sphi 0, %s88
    %s91 = sphi 0, %s90
    %s105 = sphi 0, %s91
    %s109 = sphi 0, %s109
    %s111 = sphi 0, %s109
    %s112 = sphi 0, %s111
    %s126 = sphi 0, %s112
    %s130 = sphi 0, %s130
    %s132 = sphi 0, %s130
    %s133 = sphi 0, %s132
    %s147 = sphi 0, %s133
    %s153 = sphi 0, %s155
    %s156 = sphi 0, %s153
    %s157 = sphi 0, %s156
    %s173 = sphi 0, %s157
  $region4: #{_lambda_.9} parent=0 // loop_header_branch
    %15 = sbr.rel (%p13) target = $region8
  $region5: #{_lambda_.9} parent=0 // loop_body
    %s17 = ssub.s32 %s12, 1
    %s18 = ssub.s32 %s12, 2
    %s19 = sadd.s32 %s12, 1
    %s20 = ssub.s32 %s12, %s19
    %p21 = scmp.eq.s32.totalorder %s20, 0
    %s23 = sadd.s32 %s22, 1
    %s24 = scalar_select %p21, %s22, %s23
    %p27 = pneg %p21
    %p28 = scmp.eq.s32.totalorder %s12, 1
    %p29 = por %p27, %p28
    %p30 = scmp.ne.s32.totalorder %s22, %s25
    %p31 = scmp.eq.s32.totalorder %s12, 0
    %p32 = por %p30, %p31
    %p33 = scmp.ne.s32.totalorder %s22, %s25
    %p34 = scmp.eq.s32.totalorder %s17, 1
    %p35 = por %p33, %p34
    %p36 = scmp.ne.s32.totalorder %s25, %s26
    %p37 = scmp.eq.s32.totalorder %s17, 0
    %p38 = por %p36, %p37
    %p39 = scmp.ne.s32.totalorder %s25, %s26
    %p40 = scmp.eq.s32.totalorder %s18, 1
    %p41 = por %p39, %p40
    %p43 = scmp.ne.s32.totalorder %s26, %s42
    %p44 = scmp.eq.s32.totalorder %s18, 0
    %p45 = por %p43, %p44
    %s47 = sadd.s32 %s46, 1
    %p50 = scmp.eq.s32.totalorder %s12, 1
    %p51 = scmp.ne.s32.totalorder %s46, %s48
    %p52 = scmp.eq.s32.totalorder %s12, 0
    %p53 = por %p51, %p52
    %p54 = scmp.ne.s32.totalorder %s46, %s48
    %p55 = scmp.eq.s32.totalorder %s17, 1
    %p56 = por %p54, %p55
    %p57 = scmp.ne.s32.totalorder %s48, %s49
    %p58 = scmp.eq.s32.totalorder %s17, 0
    %p59 = por %p57, %p58
    %p60 = scmp.ne.s32.totalorder %s48, %s49
    %p61 = scmp.eq.s32.totalorder %s18, 1
    %p62 = por %p60, %p61
    %p64 = scmp.ne.s32.totalorder %s49, %s63
    %p65 = scmp.eq.s32.totalorder %s18, 0
    %p66 = por %p64, %p65
    %s68 = sadd.s32 %s67, 1
    %p71 = scmp.eq.s32.totalorder %s12, 1
    %p72 = scmp.ne.s32.totalorder %s67, %s69
    %p73 = scmp.eq.s32.totalorder %s12, 0
    %p74 = por %p72, %p73
    %p75 = scmp.ne.s32.totalorder %s67, %s69
    %p76 = scmp.eq.s32.totalorder %s17, 1
    %p77 = por %p75, %p76
    %p78 = scmp.ne.s32.totalorder %s69, %s70
    %p79 = scmp.eq.s32.totalorder %s17, 0
    %p80 = por %p78, %p79
    %p81 = scmp.ne.s32.totalorder %s69, %s70
    %p82 = scmp.eq.s32.totalorder %s18, 1
    %p83 = por %p81, %p82
    %p85 = scmp.ne.s32.totalorder %s70, %s84
    %p86 = scmp.eq.s32.totalorder %s18, 0
    %p87 = por %p85, %p86
    %s89 = sadd.s32 %s88, 1
    %p92 = scmp.eq.s32.totalorder %s12, 1
    %p93 = scmp.ne.s32.totalorder %s88, %s90
    %p94 = scmp.eq.s32.totalorder %s12, 0
    %p95 = por %p93, %p94
    %p96 = scmp.ne.s32.totalorder %s88, %s90
    %p97 = scmp.eq.s32.totalorder %s17, 1
    %p98 = por %p96, %p97
    %p99 = scmp.ne.s32.totalorder %s90, %s91
    %p100 = scmp.eq.s32.totalorder %s17, 0
    %p101 = por %p99, %p100
    %p102 = scmp.ne.s32.totalorder %s90, %s91
    %p103 = scmp.eq.s32.totalorder %s18, 1
    %p104 = por %p102, %p103
    %p106 = scmp.ne.s32.totalorder %s91, %s105
    %p107 = scmp.eq.s32.totalorder %s18, 0
    %p108 = por %p106, %p107
    %s110 = sadd.s32 %s109, 1
    %p113 = scmp.eq.s32.totalorder %s12, 1
    %p114 = scmp.ne.s32.totalorder %s109, %s111
    %p115 = scmp.eq.s32.totalorder %s12, 0
    %p116 = por %p114, %p115
    %p117 = scmp.ne.s32.totalorder %s109, %s111
    %p118 = scmp.eq.s32.totalorder %s17, 1
    %p119 = por %p117, %p118
    %p120 = scmp.ne.s32.totalorder %s111, %s112
    %p121 = scmp.eq.s32.totalorder %s17, 0
    %p122 = por %p120, %p121
    %p123 = scmp.ne.s32.totalorder %s111, %s112
    %p124 = scmp.eq.s32.totalorder %s18, 1
    %p125 = por %p123, %p124
    %p127 = scmp.ne.s32.totalorder %s112, %s126
    %p128 = scmp.eq.s32.totalorder %s18, 0
    %p129 = por %p127, %p128
    %s131 = sadd.s32 %s130, 1
    %p134 = scmp.eq.s32.totalorder %s12, 1
    %p135 = scmp.ne.s32.totalorder %s130, %s132
    %p136 = scmp.eq.s32.totalorder %s12, 0
    %p137 = por %p135, %p136
    %p138 = scmp.ne.s32.totalorder %s130, %s132
    %p139 = scmp.eq.s32.totalorder %s17, 1
    %p140 = por %p138, %p139
    %p141 = scmp.ne.s32.totalorder %s132, %s133
    %p142 = scmp.eq.s32.totalorder %s17, 0
    %p143 = por %p141, %p142
    %p144 = scmp.ne.s32.totalorder %s132, %s133
    %p145 = scmp.eq.s32.totalorder %s18, 1
    %p146 = por %p144, %p145
    %p148 = scmp.ne.s32.totalorder %s133, %s147
    %p149 = scmp.eq.s32.totalorder %s18, 0
    %p150 = por %p148, %p149
    %s151 = ssub.s32 %s12, %s19
    %p152 = scmp.eq.s32.totalorder %s151, 0
    %s154 = sadd.s32 %s153, 1
    %s155 = scalar_select %p152, %s153, %s154
    %p158 = pneg %p152
    %p159 = scmp.eq.s32.totalorder %s12, 1
    %p160 = por %p158, %p159
    %p161 = scmp.ne.s32.totalorder %s153, %s156
    %p162 = scmp.eq.s32.totalorder %s12, 0
    %p163 = por %p161, %p162
    %p164 = scmp.ne.s32.totalorder %s153, %s156
    %p165 = scmp.eq.s32.totalorder %s17, 1
    %p166 = por %p164, %p165
    %p167 = scmp.ne.s32.totalorder %s156, %s157
    %p168 = scmp.eq.s32.totalorder %s17, 0
    %p169 = por %p167, %p168
    %p170 = scmp.ne.s32.totalorder %s156, %s157
    %p171 = scmp.eq.s32.totalorder %s18, 1
    %p172 = por %p170, %p171
    %p174 = scmp.ne.s32.totalorder %s157, %s173
    %p175 = scmp.eq.s32.totalorder %s18, 0
    %p176 = por %p174, %p175
    %p177 = scmp.le.s32.totalorder 1, %s12
    %p178 = scmp.lt.s32.totalorder %s12, 3
    %p179 = pnand %p177, %p178
    %p180 = pneg %p179
    // Predicated region
    $region9: #{_lambda_.9} parent=5 // pred_check
      _
    $region10: #{_lambda_.9} parent=5 // pred_check_branch
      %182 = sbr.rel (%p179) target = $region12
    $region11: #{_lambda_.9} parent=5 // pred_region
      %s183 = ssub.s32 %s12, 1
      // Predicated region
      $region13: #{_lambda_.9} parent=11 // pred_check
        %p184 = pneg %p59
      $region14: #{_lambda_.9} parent=11 // pred_check_branch
        %186 = sbr.rel (%p184) target = $region16
      $region15: #{_lambda_.9} parent=11 // pred_region
        _
      $region16: #{_lambda_.9} parent=11 // pred_fallthru
        _
      // Predicated region
      $region17: #{_lambda_.9} parent=11 // pred_check
        %p187 = pneg %p80
      $region18: #{_lambda_.9} parent=11 // pred_check_branch
        %189 = sbr.rel (%p187) target = $region20
      $region19: #{_lambda_.9} parent=11 // pred_region
        _
      $region20: #{_lambda_.9} parent=11 // pred_fallthru
        _
      // Predicated region
      $region21: #{_lambda_.9} parent=11 // pred_check
        %p190 = pneg %p101
      $region22: #{_lambda_.9} parent=11 // pred_check_branch
        %192 = sbr.rel (%p190) target = $region24
      $region23: #{_lambda_.9} parent=11 // pred_region
        _
      $region24: #{_lambda_.9} parent=11 // pred_fallthru
        _
      // Predicated region
      $region25: #{_lambda_.9} parent=11 // pred_check
        %p193 = pneg %p122
      $region26: #{_lambda_.9} parent=11 // pred_check_branch
        %195 = sbr.rel (%p193) target = $region28
      $region27: #{_lambda_.9} parent=11 // pred_region
        _
      $region28: #{_lambda_.9} parent=11 // pred_fallthru
        _
      // Predicated region
      $region29: #{_lambda_.9} parent=11 // pred_check
        %p196 = pneg %p143
      $region30: #{_lambda_.9} parent=11 // pred_check_branch
        %198 = sbr.rel (%p196) target = $region32
      $region31: #{_lambda_.9} parent=11 // pred_region
        _
      $region32: #{_lambda_.9} parent=11 // pred_fallthru
        _
    $region12: #{_lambda_.9} parent=5 // pred_fallthru
      _
    %p199 = scmp.lt.s32.totalorder %s12, 2
    // Predicated region
    $region33: #{_lambda_.9} parent=5 // pred_check
      %p200 = pneg %p199
    $region34: #{_lambda_.9} parent=5 // pred_check_branch
      %202 = sbr.rel (%p200) target = $region36
    $region35: #{_lambda_.9} parent=5 // pred_region
      // Predicated region
      $region37: #{_lambda_.9} parent=35 // pred_check
        %p203 = pneg %p32
      $region38: #{_lambda_.9} parent=35 // pred_check_branch
        %205 = sbr.rel (%p203) target = $region40
      $region39: #{_lambda_.9} parent=35 // pred_region
        %s206 = smul.u32 32, %s12
        %p207 = scmp.lt.s32.totalorder %s206, 63
        %s208 = scalar_select %p207, %s206, 63
        %s209 = smul.addr %s208, 2
        %s210 = smul.addr %s209, 4
        %s211 = scalar_lea.vmem %s0, %s210
        %s212 = smul.u32 32, %s12
      $region40: #{_lambda_.9} parent=35 // pred_fallthru
        _
    $region36: #{_lambda_.9} parent=5 // pred_fallthru
      _
    %p213 = scmp.le.s32.totalorder 1, %s12
    %p214 = scmp.lt.s32.totalorder %s12, 3
    %p215 = pnand %p213, %p214
    %p216 = pneg %p215
    // Predicated region
    $region41: #{_lambda_.9} parent=5 // pred_check
      _
    $region42: #{_lambda_.9} parent=5 // pred_check_branch
      %218 = sbr.rel (%p215) target = $region44
    $region43: #{_lambda_.9} parent=5 // pred_region
      %s219 = ssub.s32 %s12, 1
      %s220 = smul.u32 32, %s17
      %p221 = scmp.lt.s32.totalorder %s220, 63
      %s222 = scalar_select %p221, %s220, 63
      %s223 = smul.addr %s222, 2
      %s224 = smul.addr %s223, 4
      %s225 = scalar_lea.vmem %s0, %s224
      %p226 = pneg %p38
      %p227 = pneg %p35
      %p228 = pneg %p59
      %p229 = pneg %p56
      %p230 = pneg %p80
      %p231 = pneg %p77
      %p232 = pneg %p101
      %p233 = pneg %p98
      %p234 = pneg %p122
      %p235 = pneg %p119
      %p236 = pneg %p143
      %p237 = pneg %p140
      %p238 = pneg %p169
      %p239 = pneg %p166
      %s240 = smul.u32 32, %s17
      %p241 = scmp.lt.s32.totalorder %s240, 63
      %s242 = scalar_select %p241, %s240, 63
      %s243 = smul.addr %s242, 8
      %s244 = scalar_lea.vmem %s6, %s243
      %s245 = smul.u32 32, %s17
      %p246 = scmp.lt.s32.totalorder %s245, 63
      %s247 = scalar_select %p246, %s245, 63
      %s248 = smul.addr %s247, 2
      %s249 = smul.addr %s248, 4
      %s250 = scalar_lea.vmem %s0, %s249
      %s251 = smul.u32 32, %s17
      %s252 = smul.u32 32, %s17
      %p253 = scmp.lt.s32.totalorder %s252, 63
      %s254 = scalar_select %p253, %s252, 63
      %s255 = smul.addr %s254, 8
      %s256 = scalar_lea.vmem %s6, %s255
      %s257 = smul.u32 32, %s17
      %v258 = vld [vmem:[%s250] sm:$0xff]
      %v259 = vld [vmem:[%s250 + $0x8] sm:$0xff]
      %v260 = vld [vmem:[%s250 + $0x10] sm:$0xff]
      %v261 = vld [vmem:[%s250 + $0x18] sm:$0xff]
      %v262 = vld [vmem:[%s250 + $0x20] sm:$0xff]
      %v263 = vld [vmem:[%s250 + $0x28] sm:$0xff]
      %v264 = vld [vmem:[%s250 + $0x30] sm:$0xff]
      %v265 = vld [vmem:[%s250 + $0x38] sm:$0xff]
      %v266 = vld [vmem:[%s250 + $0x40] sm:$0xff]
      %v267 = vld [vmem:[%s250 + $0x48] sm:$0xff]
      %v268 = vld [vmem:[%s250 + $0x50] sm:$0xff]
      %v269 = vld [vmem:[%s250 + $0x58] sm:$0xff]
      %v270 = vld [vmem:[%s250 + $0x60] sm:$0xff]
      %v271 = vld [vmem:[%s250 + $0x68] sm:$0xff]
      %v272 = vld [vmem:[%s250 + $0x70] sm:$0xff]
      %v273 = vld [vmem:[%s250 + $0x78] sm:$0xff]
      %v274 = vld [vmem:[%s250 + $0x80] sm:$0xff]
      %v275 = vld [vmem:[%s250 + $0x88] sm:$0xff]
      %v276 = vld [vmem:[%s250 + $0x90] sm:$0xff]
      %v277 = vld [vmem:[%s250 + $0x98] sm:$0xff]
      %v278 = vld [vmem:[%s250 + $0xa0] sm:$0xff]
      %v279 = vld [vmem:[%s250 + $0xa8] sm:$0xff]
      %v280 = vld [vmem:[%s250 + $0xb0] sm:$0xff]
      %v281 = vld [vmem:[%s250 + $0xb8] sm:$0xff]
      %v282 = vld [vmem:[%s250 + $0xc0] sm:$0xff]
      %v283 = vld [vmem:[%s250 + $0xc8] sm:$0xff]
      %v284 = vld [vmem:[%s250 + $0xd0] sm:$0xff]
      %v285 = vld [vmem:[%s250 + $0xd8] sm:$0xff]
      %v286 = vld [vmem:[%s250 + $0xe0] sm:$0xff]
      %v287 = vld [vmem:[%s250 + $0xe8] sm:$0xff]
      %v288 = vld [vmem:[%s250 + $0xf0] sm:$0xff]
      %v289 = vld [vmem:[%s250 + $0xf8] sm:$0xff]
      %v290 = vld [vmem:[%s1] sm:$0xff]
      %v291 = vld [vmem:[%s1 + $0x8] sm:$0xff]
      %v292 = vld [vmem:[%s1 + $0x10] sm:$0xff]
      %v293 = vld [vmem:[%s1 + $0x18] sm:$0xff]
      %v294 = vld [vmem:[%s1 + $0x20] sm:$0xff]
      %v295 = vld [vmem:[%s1 + $0x28] sm:$0xff]
      %v296 = vld [vmem:[%s1 + $0x30] sm:$0xff]
      %v297 = vld [vmem:[%s1 + $0x38] sm:$0xff]
      %v298 = vld [vmem:[%s1 + $0x40] sm:$0xff]
      %v299 = vld [vmem:[%s1 + $0x48] sm:$0xff]
      %v300 = vld [vmem:[%s1 + $0x50] sm:$0xff]
      %v301 = vld [vmem:[%s1 + $0x58] sm:$0xff]
      %v302 = vld [vmem:[%s1 + $0x60] sm:$0xff]
      %v303 = vld [vmem:[%s1 + $0x68] sm:$0xff]
      %v304 = vld [vmem:[%s1 + $0x70] sm:$0xff]
      %v305 = vld [vmem:[%s1 + $0x78] sm:$0xff]
      %v306 = vld [vmem:[%s1 + $0x80] sm:$0xff]
      %v307 = vld [vmem:[%s1 + $0x88] sm:$0xff]
      %v308 = vld [vmem:[%s1 + $0x90] sm:$0xff]
      %v309 = vld [vmem:[%s1 + $0x98] sm:$0xff]
      %v310 = vld [vmem:[%s1 + $0xa0] sm:$0xff]
      %v311 = vld [vmem:[%s1 + $0xa8] sm:$0xff]
      %v312 = vld [vmem:[%s1 + $0xb0] sm:$0xff]
      %v313 = vld [vmem:[%s1 + $0xb8] sm:$0xff]
      %v314 = vld [vmem:[%s1 + $0xc0] sm:$0xff]
      %v315 = vld [vmem:[%s1 + $0xc8] sm:$0xff]
      %v316 = vld [vmem:[%s1 + $0xd0] sm:$0xff]
      %v317 = vld [vmem:[%s1 + $0xd8] sm:$0xff]
      %v318 = vld [vmem:[%s1 + $0xe0] sm:$0xff]
      %v319 = vld [vmem:[%s1 + $0xe8] sm:$0xff]
      %v320 = vld [vmem:[%s1 + $0xf0] sm:$0xff]
      %v321 = vld [vmem:[%s1 + $0xf8] sm:$0xff]
      %v322 = vld [vmem:[%s3] sm:$0x3]
      %v324 = vperm.slane %v322, 0
      %v325 = vperm.slane %v322, 1
      %v360 = vunpack.c.l.b16 %v258
      %v361 = vunpack.c.h.b16 %v258
      %v362 = vunpack.c.l.b16 %v259
      %v363 = vunpack.c.h.b16 %v259
      %v364 = vunpack.c.l.b16 %v260
      %v365 = vunpack.c.h.b16 %v260
      %v366 = vunpack.c.l.b16 %v261
      %v367 = vunpack.c.h.b16 %v261
      %v368 = vunpack.c.l.b16 %v262
      %v369 = vunpack.c.h.b16 %v262
      %v370 = vunpack.c.l.b16 %v263
      %v371 = vunpack.c.h.b16 %v263
      %v372 = vunpack.c.l.b16 %v264
      %v373 = vunpack.c.h.b16 %v264
      %v374 = vunpack.c.l.b16 %v265
      %v375 = vunpack.c.h.b16 %v265
      %v376 = vunpack.c.l.b16 %v266
      %v377 = vunpack.c.h.b16 %v266
      %v378 = vunpack.c.l.b16 %v267
      %v379 = vunpack.c.h.b16 %v267
      %v380 = vunpack.c.l.b16 %v268
      %v381 = vunpack.c.h.b16 %v268
      %v382 = vunpack.c.l.b16 %v269
      %v383 = vunpack.c.h.b16 %v269
      %v384 = vunpack.c.l.b16 %v270
      %v385 = vunpack.c.h.b16 %v270
      %v386 = vunpack.c.l.b16 %v271
      %v387 = vunpack.c.h.b16 %v271
      %v388 = vunpack.c.l.b16 %v272
      %v389 = vunpack.c.h.b16 %v272
      %v390 = vunpack.c.l.b16 %v273
      %v391 = vunpack.c.h.b16 %v273
      %v392 = vunpack.c.l.b16 %v274
      %v393 = vunpack.c.h.b16 %v274
      %v394 = vunpack.c.l.b16 %v275
      %v395 = vunpack.c.h.b16 %v275
      %v396 = vunpack.c.l.b16 %v276
      %v397 = vunpack.c.h.b16 %v276
      %v398 = vunpack.c.l.b16 %v277
      %v399 = vunpack.c.h.b16 %v277
      %v400 = vunpack.c.l.b16 %v278
      %v401 = vunpack.c.h.b16 %v278
      %v402 = vunpack.c.l.b16 %v279
      %v403 = vunpack.c.h.b16 %v279
      %v404 = vunpack.c.l.b16 %v280
      %v405 = vunpack.c.h.b16 %v280
      %v406 = vunpack.c.l.b16 %v281
      %v407 = vunpack.c.h.b16 %v281
      %v408 = vunpack.c.l.b16 %v282
      %v409 = vunpack.c.h.b16 %v282
      %v410 = vunpack.c.l.b16 %v283
      %v411 = vunpack.c.h.b16 %v283
      %v412 = vunpack.c.l.b16 %v284
      %v413 = vunpack.c.h.b16 %v284
      %v414 = vunpack.c.l.b16 %v285
      %v415 = vunpack.c.h.b16 %v285
      %v416 = vunpack.c.l.b16 %v286
      %v417 = vunpack.c.h.b16 %v286
      %v418 = vunpack.c.l.b16 %v287
      %v419 = vunpack.c.h.b16 %v287
      %v420 = vunpack.c.l.b16 %v288
      %v421 = vunpack.c.h.b16 %v288
      %v422 = vunpack.c.l.b16 %v289
      %v423 = vunpack.c.h.b16 %v289
      %v424 = vpack.c.b16 %v362, %v360
      %v425 = vpack.c.b16 %v363, %v361
      %v426 = vpack.c.b16 %v366, %v364
      %v427 = vpack.c.b16 %v367, %v365
      %v428 = vpack.c.b16 %v370, %v368
      %v429 = vpack.c.b16 %v371, %v369
      %v430 = vpack.c.b16 %v374, %v372
      %v431 = vpack.c.b16 %v375, %v373
      %v432 = vpack.c.b16 %v378, %v376
      %v433 = vpack.c.b16 %v379, %v377
      %v434 = vpack.c.b16 %v382, %v380
      %v435 = vpack.c.b16 %v383, %v381
      %v436 = vpack.c.b16 %v386, %v384
      %v437 = vpack.c.b16 %v387, %v385
      %v438 = vpack.c.b16 %v390, %v388
      %v439 = vpack.c.b16 %v391, %v389
      %v440 = vpack.c.b16 %v394, %v392
      %v441 = vpack.c.b16 %v395, %v393
      %v442 = vpack.c.b16 %v398, %v396
      %v443 = vpack.c.b16 %v399, %v397
      %v444 = vpack.c.b16 %v402, %v400
      %v445 = vpack.c.b16 %v403, %v401
      %v446 = vpack.c.b16 %v406, %v404
      %v447 = vpack.c.b16 %v407, %v405
      %v448 = vpack.c.b16 %v410, %v408
      %v449 = vpack.c.b16 %v411, %v409
      %v450 = vpack.c.b16 %v414, %v412
      %v451 = vpack.c.b16 %v415, %v413
      %v452 = vpack.c.b16 %v418, %v416
      %v453 = vpack.c.b16 %v419, %v417
      %v454 = vpack.c.b16 %v422, %v420
      %v455 = vpack.c.b16 %v423, %v421
      %v520 = vunpack.c.l.b16 %v290
      %v521 = vunpack.c.h.b16 %v290
      %v522 = vunpack.c.l.b16 %v291
      %v523 = vunpack.c.h.b16 %v291
      %v524 = vunpack.c.l.b16 %v292
      %v525 = vunpack.c.h.b16 %v292
      %v526 = vunpack.c.l.b16 %v293
      %v527 = vunpack.c.h.b16 %v293
      %v528 = vunpack.c.l.b16 %v294
      %v529 = vunpack.c.h.b16 %v294
      %v530 = vunpack.c.l.b16 %v295
      %v531 = vunpack.c.h.b16 %v295
      %v532 = vunpack.c.l.b16 %v296
      %v533 = vunpack.c.h.b16 %v296
      %v534 = vunpack.c.l.b16 %v297
      %v535 = vunpack.c.h.b16 %v297
      %v536 = vunpack.c.l.b16 %v298
      %v537 = vunpack.c.h.b16 %v298
      %v538 = vunpack.c.l.b16 %v299
      %v539 = vunpack.c.h.b16 %v299
      %v540 = vunpack.c.l.b16 %v300
      %v541 = vunpack.c.h.b16 %v300
      %v542 = vunpack.c.l.b16 %v301
      %v543 = vunpack.c.h.b16 %v301
      %v544 = vunpack.c.l.b16 %v302
      %v545 = vunpack.c.h.b16 %v302
      %v546 = vunpack.c.l.b16 %v303
      %v547 = vunpack.c.h.b16 %v303
      %v548 = vunpack.c.l.b16 %v304
      %v549 = vunpack.c.h.b16 %v304
      %v550 = vunpack.c.l.b16 %v305
      %v551 = vunpack.c.h.b16 %v305
      %v552 = vunpack.c.l.b16 %v306
      %v553 = vunpack.c.h.b16 %v306
      %v554 = vunpack.c.l.b16 %v307
      %v555 = vunpack.c.h.b16 %v307
      %v556 = vunpack.c.l.b16 %v308
      %v557 = vunpack.c.h.b16 %v308
      %v558 = vunpack.c.l.b16 %v309
      %v559 = vunpack.c.h.b16 %v309
      %v560 = vunpack.c.l.b16 %v310
      %v561 = vunpack.c.h.b16 %v310
      %v562 = vunpack.c.l.b16 %v311
      %v563 = vunpack.c.h.b16 %v311
      %v564 = vunpack.c.l.b16 %v312
      %v565 = vunpack.c.h.b16 %v312
      %v566 = vunpack.c.l.b16 %v313
      %v567 = vunpack.c.h.b16 %v313
      %v568 = vunpack.c.l.b16 %v314
      %v569 = vunpack.c.h.b16 %v314
      %v570 = vunpack.c.l.b16 %v315
      %v571 = vunpack.c.h.b16 %v315
      %v572 = vunpack.c.l.b16 %v316
      %v573 = vunpack.c.h.b16 %v316
      %v574 = vunpack.c.l.b16 %v317
      %v575 = vunpack.c.h.b16 %v317
      %v576 = vunpack.c.l.b16 %v318
      %v577 = vunpack.c.h.b16 %v318
      %v578 = vunpack.c.l.b16 %v319
      %v579 = vunpack.c.h.b16 %v319
      %v580 = vunpack.c.l.b16 %v320
      %v581 = vunpack.c.h.b16 %v320
      %v582 = vunpack.c.l.b16 %v321
      %v583 = vunpack.c.h.b16 %v321
      %v584 = vpack.c.b16 %v522, %v520
      %v585 = vpack.c.b16 %v523, %v521
      %v586 = vpack.c.b16 %v526, %v524
      %v587 = vpack.c.b16 %v527, %v525
      %v588 = vpack.c.b16 %v530, %v528
      %v589 = vpack.c.b16 %v531, %v529
      %v590 = vpack.c.b16 %v534, %v532
      %v591 = vpack.c.b16 %v535, %v533
      %v592 = vpack.c.b16 %v538, %v536
      %v593 = vpack.c.b16 %v539, %v537
      %v594 = vpack.c.b16 %v542, %v540
      %v595 = vpack.c.b16 %v543, %v541
      %v596 = vpack.c.b16 %v546, %v544
      %v597 = vpack.c.b16 %v547, %v545
      %v598 = vpack.c.b16 %v550, %v548
      %v599 = vpack.c.b16 %v551, %v549
      %v600 = vpack.c.b16 %v554, %v552
      %v601 = vpack.c.b16 %v555, %v553
      %v602 = vpack.c.b16 %v558, %v556
      %v603 = vpack.c.b16 %v559, %v557
      %v604 = vpack.c.b16 %v562, %v560
      %v605 = vpack.c.b16 %v563, %v561
      %v606 = vpack.c.b16 %v566, %v564
      %v607 = vpack.c.b16 %v567, %v565
      %v608 = vpack.c.b16 %v570, %v568
      %v609 = vpack.c.b16 %v571, %v569
      %v610 = vpack.c.b16 %v574, %v572
      %v611 = vpack.c.b16 %v575, %v573
      %v612 = vpack.c.b16 %v578, %v576
      %v613 = vpack.c.b16 %v579, %v577
      %v614 = vpack.c.b16 %v582, %v580
      %v615 = vpack.c.b16 %v583, %v581
      %648 = vmatpush.bf16.msra.mxu0 %v598
      %649 = vmatpush.bf16.msra.mxu0 %v596
      %650 = vmatpush.bf16.msra.mxu0 %v594
      %651 = vmatpush.bf16.msra.mxu0 %v592
      %652 = vmatpush.bf16.msra.mxu0 %v590
      %653 = vmatpush.bf16.msra.mxu0 %v588
      %654 = vmatpush.bf16.msra.mxu0 %v586
      %655 = vmatpush.bf16.msra.mxu0 %v584
      %656 = vmatmul.bf16.gmra.mxu0 %v424
      %v657 = vpop.f32.mrf.mxu0
      %v658 = vadd.f32 %v324, %v657
      %v659 = vpop.f32.mrf.mxu0
      %v660 = vadd.f32 %v324, %v659
      %661 = vmatmul.bf16.gmra.mxu0 %v426
      %v662 = vpop.f32.mrf.mxu0
      %v663 = vadd.f32 %v324, %v662
      %v664 = vpop.f32.mrf.mxu0
      %v665 = vadd.f32 %v324, %v664
      %666 = vmatmul.bf16.gmra.mxu0 %v428
      %v667 = vpop.f32.mrf.mxu0
      %v668 = vadd.f32 %v324, %v667
      %v669 = vpop.f32.mrf.mxu0
      %v670 = vadd.f32 %v324, %v669
      %671 = vmatmul.bf16.gmra.mxu0 %v430
      %v672 = vpop.f32.mrf.mxu0
      %v673 = vadd.f32 %v324, %v672
      %v674 = vpop.f32.mrf.mxu0
      %v675 = vadd.f32 %v324, %v674
      %676 = vmatmul.bf16.gmra.mxu0 %v432
      %v677 = vpop.f32.mrf.mxu0
      %v678 = vadd.f32 %v324, %v677
      %v679 = vpop.f32.mrf.mxu0
      %v680 = vadd.f32 %v324, %v679
      %681 = vmatmul.bf16.gmra.mxu0 %v434
      %v682 = vpop.f32.mrf.mxu0
      %v683 = vadd.f32 %v324, %v682
      %v684 = vpop.f32.mrf.mxu0
      %v685 = vadd.f32 %v324, %v684
      %686 = vmatmul.bf16.gmra.mxu0 %v436
      %v687 = vpop.f32.mrf.mxu0
      %v688 = vadd.f32 %v324, %v687
      %v689 = vpop.f32.mrf.mxu0
      %v690 = vadd.f32 %v324, %v689
      %691 = vmatmul.bf16.gmra.mxu0 %v438
      %v692 = vpop.f32.mrf.mxu0
      %v693 = vadd.f32 %v324, %v692
      %v694 = vpop.f32.mrf.mxu0
      %v695 = vadd.f32 %v324, %v694
      %696 = vmatmul.bf16.gmra.mxu0 %v440
      %v697 = vpop.f32.mrf.mxu0
      %v698 = vadd.f32 %v324, %v697
      %v699 = vpop.f32.mrf.mxu0
      %v700 = vadd.f32 %v324, %v699
      %701 = vmatmul.bf16.gmra.mxu0 %v442
      %v702 = vpop.f32.mrf.mxu0
      %v703 = vadd.f32 %v324, %v702
      %v704 = vpop.f32.mrf.mxu0
      %v705 = vadd.f32 %v324, %v704
      %706 = vmatmul.bf16.gmra.mxu0 %v444
      %v707 = vpop.f32.mrf.mxu0
      %v708 = vadd.f32 %v324, %v707
      %v709 = vpop.f32.mrf.mxu0
      %v710 = vadd.f32 %v324, %v709
      %711 = vmatmul.bf16.gmra.mxu0 %v446
      %v712 = vpop.f32.mrf.mxu0
      %v713 = vadd.f32 %v324, %v712
      %v714 = vpop.f32.mrf.mxu0
      %v715 = vadd.f32 %v324, %v714
      %716 = vmatmul.bf16.gmra.mxu0 %v448
      %v717 = vpop.f32.mrf.mxu0
      %v718 = vadd.f32 %v324, %v717
      %v719 = vpop.f32.mrf.mxu0
      %v720 = vadd.f32 %v324, %v719
      %721 = vmatmul.bf16.gmra.mxu0 %v450
      %v722 = vpop.f32.mrf.mxu0
      %v723 = vadd.f32 %v324, %v722
      %v724 = vpop.f32.mrf.mxu0
      %v725 = vadd.f32 %v324, %v724
      %726 = vmatmul.bf16.gmra.mxu0 %v452
      %v727 = vpop.f32.mrf.mxu0
      %v728 = vadd.f32 %v324, %v727
      %v729 = vpop.f32.mrf.mxu0
      %v730 = vadd.f32 %v324, %v729
      %731 = vmatmul.bf16.gmra.mxu0 %v454
      %v732 = vpop.f32.mrf.mxu0
      %v733 = vadd.f32 %v324, %v732
      %v734 = vpop.f32.mrf.mxu0
      %v735 = vadd.f32 %v324, %v734
      %736 = vdwg.mxu0
      %737 = vmatpush.bf16.msra.mxu0 %v614
      %738 = vmatpush.bf16.msra.mxu0 %v612
      %739 = vmatpush.bf16.msra.mxu0 %v610
      %740 = vmatpush.bf16.msra.mxu0 %v608
      %741 = vmatpush.bf16.msra.mxu0 %v606
      %742 = vmatpush.bf16.msra.mxu0 %v604
      %743 = vmatpush.bf16.msra.mxu0 %v602
      %744 = vmatpush.bf16.msra.mxu0 %v600
      %745 = vmatmul.bf16.gmra.mxu0 %v425
      %v746 = vpop.f32.mrf.mxu0
      %v747 = vadd.f32 %v658, %v746
      %v748 = vpop.f32.mrf.mxu0
      %v749 = vadd.f32 %v660, %v748
      %750 = vmatmul.bf16.gmra.mxu0 %v427
      %v751 = vpop.f32.mrf.mxu0
      %v752 = vadd.f32 %v663, %v751
      %v753 = vpop.f32.mrf.mxu0
      %v754 = vadd.f32 %v665, %v753
      %755 = vmatmul.bf16.gmra.mxu0 %v429
      %v756 = vpop.f32.mrf.mxu0
      %v757 = vadd.f32 %v668, %v756
      %v758 = vpop.f32.mrf.mxu0
      %v759 = vadd.f32 %v670, %v758
      %760 = vmatmul.bf16.gmra.mxu0 %v431
      %v761 = vpop.f32.mrf.mxu0
      %v762 = vadd.f32 %v673, %v761
      %v763 = vpop.f32.mrf.mxu0
      %v764 = vadd.f32 %v675, %v763
      %765 = vmatmul.bf16.gmra.mxu0 %v433
      %v766 = vpop.f32.mrf.mxu0
      %v767 = vadd.f32 %v678, %v766
      %v768 = vpop.f32.mrf.mxu0
      %v769 = vadd.f32 %v680, %v768
      %770 = vmatmul.bf16.gmra.mxu0 %v435
      %v771 = vpop.f32.mrf.mxu0
      %v772 = vadd.f32 %v683, %v771
      %v773 = vpop.f32.mrf.mxu0
      %v774 = vadd.f32 %v685, %v773
      %775 = vmatmul.bf16.gmra.mxu0 %v437
      %v776 = vpop.f32.mrf.mxu0
      %v777 = vadd.f32 %v688, %v776
      %v778 = vpop.f32.mrf.mxu0
      %v779 = vadd.f32 %v690, %v778
      %780 = vmatmul.bf16.gmra.mxu0 %v439
      %v781 = vpop.f32.mrf.mxu0
      %v782 = vadd.f32 %v693, %v781
      %v783 = vpop.f32.mrf.mxu0
      %v784 = vadd.f32 %v695, %v783
      %785 = vmatmul.bf16.gmra.mxu0 %v441
      %v786 = vpop.f32.mrf.mxu0
      %v787 = vadd.f32 %v698, %v786
      %v788 = vpop.f32.mrf.mxu0
      %v789 = vadd.f32 %v700, %v788
      %790 = vmatmul.bf16.gmra.mxu0 %v443
      %v791 = vpop.f32.mrf.mxu0
      %v792 = vadd.f32 %v703, %v791
      %v793 = vpop.f32.mrf.mxu0
      %v794 = vadd.f32 %v705, %v793
      %795 = vmatmul.bf16.gmra.mxu0 %v445
      %v796 = vpop.f32.mrf.mxu0
      %v797 = vadd.f32 %v708, %v796
      %v798 = vpop.f32.mrf.mxu0
      %v799 = vadd.f32 %v710, %v798
      %800 = vmatmul.bf16.gmra.mxu0 %v447
      %v801 = vpop.f32.mrf.mxu0
      %v802 = vadd.f32 %v713, %v801
      %v803 = vpop.f32.mrf.mxu0
      %v804 = vadd.f32 %v715, %v803
      %805 = vmatmul.bf16.gmra.mxu0 %v449
      %v806 = vpop.f32.mrf.mxu0
      %v807 = vadd.f32 %v718, %v806
      %v808 = vpop.f32.mrf.mxu0
      %v809 = vadd.f32 %v720, %v808
      %810 = vmatmul.bf16.gmra.mxu0 %v451
      %v811 = vpop.f32.mrf.mxu0
      %v812 = vadd.f32 %v723, %v811
      %v813 = vpop.f32.mrf.mxu0
      %v814 = vadd.f32 %v725, %v813
      %815 = vmatmul.bf16.gmra.mxu0 %v453
      %v816 = vpop.f32.mrf.mxu0
      %v817 = vadd.f32 %v728, %v816
      %v818 = vpop.f32.mrf.mxu0
      %v819 = vadd.f32 %v730, %v818
      %820 = vmatmul.bf16.gmra.mxu0 %v455
      %v821 = vpop.f32.mrf.mxu0
      %v822 = vadd.f32 %v733, %v821
      %v823 = vpop.f32.mrf.mxu0
      %v824 = vadd.f32 %v735, %v823
      %825 = vdwg.mxu0
      %826 = vmatpush.bf16.msra.mxu0 %v599
      %827 = vmatpush.bf16.msra.mxu0 %v597
      %828 = vmatpush.bf16.msra.mxu0 %v595
      %829 = vmatpush.bf16.msra.mxu0 %v593
      %830 = vmatpush.bf16.msra.mxu0 %v591
      %831 = vmatpush.bf16.msra.mxu0 %v589
      %832 = vmatpush.bf16.msra.mxu0 %v587
      %833 = vmatpush.bf16.msra.mxu0 %v585
      %834 = vmatmul.bf16.gmra.mxu0 %v424
      %v835 = vpop.f32.mrf.mxu0
      %v836 = vadd.f32 %v325, %v835
      %v837 = vpop.f32.mrf.mxu0
      %v838 = vadd.f32 %v325, %v837
      %839 = vmatmul.bf16.gmra.mxu0 %v426
      %v840 = vpop.f32.mrf.mxu0
      %v841 = vadd.f32 %v325, %v840
      %v842 = vpop.f32.mrf.mxu0
      %v843 = vadd.f32 %v325, %v842
      %844 = vmatmul.bf16.gmra.mxu0 %v428
      %v845 = vpop.f32.mrf.mxu0
      %v846 = vadd.f32 %v325, %v845
      %v847 = vpop.f32.mrf.mxu0
      %v848 = vadd.f32 %v325, %v847
      %849 = vmatmul.bf16.gmra.mxu0 %v430
      %v850 = vpop.f32.mrf.mxu0
      %v851 = vadd.f32 %v325, %v850
      %v852 = vpop.f32.mrf.mxu0
      %v853 = vadd.f32 %v325, %v852
      %854 = vmatmul.bf16.gmra.mxu0 %v432
      %v855 = vpop.f32.mrf.mxu0
      %v856 = vadd.f32 %v325, %v855
      %v857 = vpop.f32.mrf.mxu0
      %v858 = vadd.f32 %v325, %v857
      %859 = vmatmul.bf16.gmra.mxu0 %v434
      %v860 = vpop.f32.mrf.mxu0
      %v861 = vadd.f32 %v325, %v860
      %v862 = vpop.f32.mrf.mxu0
      %v863 = vadd.f32 %v325, %v862
      %864 = vmatmul.bf16.gmra.mxu0 %v436
      %v865 = vpop.f32.mrf.mxu0
      %v866 = vadd.f32 %v325, %v865
      %v867 = vpop.f32.mrf.mxu0
      %v868 = vadd.f32 %v325, %v867
      %869 = vmatmul.bf16.gmra.mxu0 %v438
      %v870 = vpop.f32.mrf.mxu0
      %v871 = vadd.f32 %v325, %v870
      %v872 = vpop.f32.mrf.mxu0
      %v873 = vadd.f32 %v325, %v872
      %874 = vmatmul.bf16.gmra.mxu0 %v440
      %v875 = vpop.f32.mrf.mxu0
      %v876 = vadd.f32 %v325, %v875
      %v877 = vpop.f32.mrf.mxu0
      %v878 = vadd.f32 %v325, %v877
      %879 = vmatmul.bf16.gmra.mxu0 %v442
      %v880 = vpop.f32.mrf.mxu0
      %v881 = vadd.f32 %v325, %v880
      %v882 = vpop.f32.mrf.mxu0
      %v883 = vadd.f32 %v325, %v882
      %884 = vmatmul.bf16.gmra.mxu0 %v444
      %v885 = vpop.f32.mrf.mxu0
      %v886 = vadd.f32 %v325, %v885
      %v887 = vpop.f32.mrf.mxu0
      %v888 = vadd.f32 %v325, %v887
      %889 = vmatmul.bf16.gmra.mxu0 %v446
      %v890 = vpop.f32.mrf.mxu0
      %v891 = vadd.f32 %v325, %v890
      %v892 = vpop.f32.mrf.mxu0
      %v893 = vadd.f32 %v325, %v892
      %894 = vmatmul.bf16.gmra.mxu0 %v448
      %v895 = vpop.f32.mrf.mxu0
      %v896 = vadd.f32 %v325, %v895
      %v897 = vpop.f32.mrf.mxu0
      %v898 = vadd.f32 %v325, %v897
      %899 = vmatmul.bf16.gmra.mxu0 %v450
      %v900 = vpop.f32.mrf.mxu0
      %v901 = vadd.f32 %v325, %v900
      %v902 = vpop.f32.mrf.mxu0
      %v903 = vadd.f32 %v325, %v902
      %904 = vmatmul.bf16.gmra.mxu0 %v452
      %v905 = vpop.f32.mrf.mxu0
      %v906 = vadd.f32 %v325, %v905
      %v907 = vpop.f32.mrf.mxu0
      %v908 = vadd.f32 %v325, %v907
      %909 = vmatmul.bf16.gmra.mxu0 %v454
      %v910 = vpop.f32.mrf.mxu0
      %v911 = vadd.f32 %v325, %v910
      %v912 = vpop.f32.mrf.mxu0
      %v913 = vadd.f32 %v325, %v912
      %914 = vdwg.mxu0
      %915 = vmatpush.bf16.msra.mxu0 %v615
      %916 = vmatpush.bf16.msra.mxu0 %v613
      %917 = vmatpush.bf16.msra.mxu0 %v611
      %918 = vmatpush.bf16.msra.mxu0 %v609
      %919 = vmatpush.bf16.msra.mxu0 %v607
      %920 = vmatpush.bf16.msra.mxu0 %v605
      %921 = vmatpush.bf16.msra.mxu0 %v603
      %922 = vmatpush.bf16.msra.mxu0 %v601
      %923 = vmatmul.bf16.gmra.mxu0 %v425
      %v924 = vpop.f32.mrf.mxu0
      %v925 = vadd.f32 %v836, %v924
      %v926 = vpop.f32.mrf.mxu0
      %v927 = vadd.f32 %v838, %v926
      %928 = vmatmul.bf16.gmra.mxu0 %v427
      %v929 = vpop.f32.mrf.mxu0
      %v930 = vadd.f32 %v841, %v929
      %v931 = vpop.f32.mrf.mxu0
      %v932 = vadd.f32 %v843, %v931
      %933 = vmatmul.bf16.gmra.mxu0 %v429
      %v934 = vpop.f32.mrf.mxu0
      %v935 = vadd.f32 %v846, %v934
      %v936 = vpop.f32.mrf.mxu0
      %v937 = vadd.f32 %v848, %v936
      %938 = vmatmul.bf16.gmra.mxu0 %v431
      %v939 = vpop.f32.mrf.mxu0
      %v940 = vadd.f32 %v851, %v939
      %v941 = vpop.f32.mrf.mxu0
      %v942 = vadd.f32 %v853, %v941
      %943 = vmatmul.bf16.gmra.mxu0 %v433
      %v944 = vpop.f32.mrf.mxu0
      %v945 = vadd.f32 %v856, %v944
      %v946 = vpop.f32.mrf.mxu0
      %v947 = vadd.f32 %v858, %v946
      %948 = vmatmul.bf16.gmra.mxu0 %v435
      %v949 = vpop.f32.mrf.mxu0
      %v950 = vadd.f32 %v861, %v949
      %v951 = vpop.f32.mrf.mxu0
      %v952 = vadd.f32 %v863, %v951
      %953 = vmatmul.bf16.gmra.mxu0 %v437
      %v954 = vpop.f32.mrf.mxu0
      %v955 = vadd.f32 %v866, %v954
      %v956 = vpop.f32.mrf.mxu0
      %v957 = vadd.f32 %v868, %v956
      %958 = vmatmul.bf16.gmra.mxu0 %v439
      %v959 = vpop.f32.mrf.mxu0
      %v960 = vadd.f32 %v871, %v959
      %v961 = vpop.f32.mrf.mxu0
      %v962 = vadd.f32 %v873, %v961
      %963 = vmatmul.bf16.gmra.mxu0 %v441
      %v964 = vpop.f32.mrf.mxu0
      %v965 = vadd.f32 %v876, %v964
      %v966 = vpop.f32.mrf.mxu0
      %v967 = vadd.f32 %v878, %v966
      %968 = vmatmul.bf16.gmra.mxu0 %v443
      %v969 = vpop.f32.mrf.mxu0
      %v970 = vadd.f32 %v881, %v969
      %v971 = vpop.f32.mrf.mxu0
      %v972 = vadd.f32 %v883, %v971
      %973 = vmatmul.bf16.gmra.mxu0 %v445
      %v974 = vpop.f32.mrf.mxu0
      %v975 = vadd.f32 %v886, %v974
      %v976 = vpop.f32.mrf.mxu0
      %v977 = vadd.f32 %v888, %v976
      %978 = vmatmul.bf16.gmra.mxu0 %v447
      %v979 = vpop.f32.mrf.mxu0
      %v980 = vadd.f32 %v891, %v979
      %v981 = vpop.f32.mrf.mxu0
      %v982 = vadd.f32 %v893, %v981
      %983 = vmatmul.bf16.gmra.mxu0 %v449
      %v984 = vpop.f32.mrf.mxu0
      %v985 = vadd.f32 %v896, %v984
      %v986 = vpop.f32.mrf.mxu0
      %v987 = vadd.f32 %v898, %v986
      %988 = vmatmul.bf16.gmra.mxu0 %v451
      %v989 = vpop.f32.mrf.mxu0
      %v990 = vadd.f32 %v901, %v989
      %v991 = vpop.f32.mrf.mxu0
      %v992 = vadd.f32 %v903, %v991
      %993 = vmatmul.bf16.gmra.mxu0 %v453
      %v994 = vpop.f32.mrf.mxu0
      %v995 = vadd.f32 %v906, %v994
      %v996 = vpop.f32.mrf.mxu0
      %v997 = vadd.f32 %v908, %v996
      %998 = vmatmul.bf16.gmra.mxu0 %v455
      %v999 = vpop.f32.mrf.mxu0
      %v1000 = vadd.f32 %v911, %v999
      %v1001 = vpop.f32.mrf.mxu0
      %v1002 = vadd.f32 %v913, %v1001
      %1003 = vdwg.mxu0
      %v1004 = vunpack.c.l.bf16 %v258
      %v1005 = vunpack.c.h.bf16 %v258
      %v1006 = vunpack.c.l.bf16 %v259
      %v1007 = vunpack.c.h.bf16 %v259
      %v1008 = vunpack.c.l.bf16 %v260
      %v1009 = vunpack.c.h.bf16 %v260
      %v1010 = vunpack.c.l.bf16 %v261
      %v1011 = vunpack.c.h.bf16 %v261
      %v1012 = vunpack.c.l.bf16 %v262
      %v1013 = vunpack.c.h.bf16 %v262
      %v1014 = vunpack.c.l.bf16 %v263
      %v1015 = vunpack.c.h.bf16 %v263
      %v1016 = vunpack.c.l.bf16 %v264
      %v1017 = vunpack.c.h.bf16 %v264
      %v1018 = vunpack.c.l.bf16 %v265
      %v1019 = vunpack.c.h.bf16 %v265
      %v1020 = vunpack.c.l.bf16 %v266
      %v1021 = vunpack.c.h.bf16 %v266
      %v1022 = vunpack.c.l.bf16 %v267
      %v1023 = vunpack.c.h.bf16 %v267
      %v1024 = vunpack.c.l.bf16 %v268
      %v1025 = vunpack.c.h.bf16 %v268
      %v1026 = vunpack.c.l.bf16 %v269
      %v1027 = vunpack.c.h.bf16 %v269
      %v1028 = vunpack.c.l.bf16 %v270
      %v1029 = vunpack.c.h.bf16 %v270
      %v1030 = vunpack.c.l.bf16 %v271
      %v1031 = vunpack.c.h.bf16 %v271
      %v1032 = vunpack.c.l.bf16 %v272
      %v1033 = vunpack.c.h.bf16 %v272
      %v1034 = vunpack.c.l.bf16 %v273
      %v1035 = vunpack.c.h.bf16 %v273
      %v1036 = vunpack.c.l.bf16 %v274
      %v1037 = vunpack.c.h.bf16 %v274
      %v1038 = vunpack.c.l.bf16 %v275
      %v1039 = vunpack.c.h.bf16 %v275
      %v1040 = vunpack.c.l.bf16 %v276
      %v1041 = vunpack.c.h.bf16 %v276
      %v1042 = vunpack.c.l.bf16 %v277
      %v1043 = vunpack.c.h.bf16 %v277
      %v1044 = vunpack.c.l.bf16 %v278
      %v1045 = vunpack.c.h.bf16 %v278
      %v1046 = vunpack.c.l.bf16 %v279
      %v1047 = vunpack.c.h.bf16 %v279
      %v1048 = vunpack.c.l.bf16 %v280
      %v1049 = vunpack.c.h.bf16 %v280
      %v1050 = vunpack.c.l.bf16 %v281
      %v1051 = vunpack.c.h.bf16 %v281
      %v1052 = vunpack.c.l.bf16 %v282
      %v1053 = vunpack.c.h.bf16 %v282
      %v1054 = vunpack.c.l.bf16 %v283
      %v1055 = vunpack.c.h.bf16 %v283
      %v1056 = vunpack.c.l.bf16 %v284
      %v1057 = vunpack.c.h.bf16 %v284
      %v1058 = vunpack.c.l.bf16 %v285
      %v1059 = vunpack.c.h.bf16 %v285
      %v1060 = vunpack.c.l.bf16 %v286
      %v1061 = vunpack.c.h.bf16 %v286
      %v1062 = vunpack.c.l.bf16 %v287
      %v1063 = vunpack.c.h.bf16 %v287
      %v1064 = vunpack.c.l.bf16 %v288
      %v1065 = vunpack.c.h.bf16 %v288
      %v1066 = vunpack.c.l.bf16 %v289
      %v1067 = vunpack.c.h.bf16 %v289
      %v1068 = vmul.f32 %v1004, %v1004
      %v1069 = vmul.f32 %v1005, %v1005
      %v1070 = vmul.f32 %v1006, %v1006
      %v1071 = vmul.f32 %v1007, %v1007
      %v1072 = vmul.f32 %v1008, %v1008
      %v1073 = vmul.f32 %v1009, %v1009
      %v1074 = vmul.f32 %v1010, %v1010
      %v1075 = vmul.f32 %v1011, %v1011
      %v1076 = vmul.f32 %v1012, %v1012
      %v1077 = vmul.f32 %v1013, %v1013
      %v1078 = vmul.f32 %v1014, %v1014
      %v1079 = vmul.f32 %v1015, %v1015
      %v1080 = vmul.f32 %v1016, %v1016
      %v1081 = vmul.f32 %v1017, %v1017
      %v1082 = vmul.f32 %v1018, %v1018
      %v1083 = vmul.f32 %v1019, %v1019
      %v1084 = vmul.f32 %v1020, %v1020
      %v1085 = vmul.f32 %v1021, %v1021
      %v1086 = vmul.f32 %v1022, %v1022
      %v1087 = vmul.f32 %v1023, %v1023
      %v1088 = vmul.f32 %v1024, %v1024
      %v1089 = vmul.f32 %v1025, %v1025
      %v1090 = vmul.f32 %v1026, %v1026
      %v1091 = vmul.f32 %v1027, %v1027
      %v1092 = vmul.f32 %v1028, %v1028
      %v1093 = vmul.f32 %v1029, %v1029
      %v1094 = vmul.f32 %v1030, %v1030
      %v1095 = vmul.f32 %v1031, %v1031
      %v1096 = vmul.f32 %v1032, %v1032
      %v1097 = vmul.f32 %v1033, %v1033
      %v1098 = vmul.f32 %v1034, %v1034
      %v1099 = vmul.f32 %v1035, %v1035
      %v1100 = vmul.f32 %v1036, %v1036
      %v1101 = vmul.f32 %v1037, %v1037
      %v1102 = vmul.f32 %v1038, %v1038
      %v1103 = vmul.f32 %v1039, %v1039
      %v1104 = vmul.f32 %v1040, %v1040
      %v1105 = vmul.f32 %v1041, %v1041
      %v1106 = vmul.f32 %v1042, %v1042
      %v1107 = vmul.f32 %v1043, %v1043
      %v1108 = vmul.f32 %v1044, %v1044
      %v1109 = vmul.f32 %v1045, %v1045
      %v1110 = vmul.f32 %v1046, %v1046
      %v1111 = vmul.f32 %v1047, %v1047
      %v1112 = vmul.f32 %v1048, %v1048
      %v1113 = vmul.f32 %v1049, %v1049
      %v1114 = vmul.f32 %v1050, %v1050
      %v1115 = vmul.f32 %v1051, %v1051
      %v1116 = vmul.f32 %v1052, %v1052
      %v1117 = vmul.f32 %v1053, %v1053
      %v1118 = vmul.f32 %v1054, %v1054
      %v1119 = vmul.f32 %v1055, %v1055
      %v1120 = vmul.f32 %v1056, %v1056
      %v1121 = vmul.f32 %v1057, %v1057
      %v1122 = vmul.f32 %v1058, %v1058
      %v1123 = vmul.f32 %v1059, %v1059
      %v1124 = vmul.f32 %v1060, %v1060
      %v1125 = vmul.f32 %v1061, %v1061
      %v1126 = vmul.f32 %v1062, %v1062
      %v1127 = vmul.f32 %v1063, %v1063
      %v1128 = vmul.f32 %v1064, %v1064
      %v1129 = vmul.f32 %v1065, %v1065
      %v1130 = vmul.f32 %v1066, %v1066
      %v1131 = vmul.f32 %v1067, %v1067
      %v1132 = vpack.c.bf16 %v1070, %v1068
      %v1133 = vpack.c.bf16 %v1071, %v1069
      %v1134 = vpack.c.bf16 %v1074, %v1072
      %v1135 = vpack.c.bf16 %v1075, %v1073
      %v1136 = vpack.c.bf16 %v1078, %v1076
      %v1137 = vpack.c.bf16 %v1079, %v1077
      %v1138 = vpack.c.bf16 %v1082, %v1080
      %v1139 = vpack.c.bf16 %v1083, %v1081
      %v1140 = vpack.c.bf16 %v1086, %v1084
      %v1141 = vpack.c.bf16 %v1087, %v1085
      %v1142 = vpack.c.bf16 %v1090, %v1088
      %v1143 = vpack.c.bf16 %v1091, %v1089
      %v1144 = vpack.c.bf16 %v1094, %v1092
      %v1145 = vpack.c.bf16 %v1095, %v1093
      %v1146 = vpack.c.bf16 %v1098, %v1096
      %v1147 = vpack.c.bf16 %v1099, %v1097
      %v1148 = vpack.c.bf16 %v1102, %v1100
      %v1149 = vpack.c.bf16 %v1103, %v1101
      %v1150 = vpack.c.bf16 %v1106, %v1104
      %v1151 = vpack.c.bf16 %v1107, %v1105
      %v1152 = vpack.c.bf16 %v1110, %v1108
      %v1153 = vpack.c.bf16 %v1111, %v1109
      %v1154 = vpack.c.bf16 %v1114, %v1112
      %v1155 = vpack.c.bf16 %v1115, %v1113
      %v1156 = vpack.c.bf16 %v1118, %v1116
      %v1157 = vpack.c.bf16 %v1119, %v1117
      %v1158 = vpack.c.bf16 %v1122, %v1120
      %v1159 = vpack.c.bf16 %v1123, %v1121
      %v1160 = vpack.c.bf16 %v1126, %v1124
      %v1161 = vpack.c.bf16 %v1127, %v1125
      %v1162 = vpack.c.bf16 %v1130, %v1128
      %v1163 = vpack.c.bf16 %v1131, %v1129
      %v1164 = vld [vmem:[%s2] sm:$0xf]
      %v1165 = vld [vmem:[%s2 + $0x4] sm:$0xf]
      %v1166 = vld [vmem:[%s2 + $0x8] sm:$0xf]
      %v1167 = vld [vmem:[%s2 + $0xc] sm:$0xf]
      %v1168 = vld [vmem:[%s2 + $0x10] sm:$0xf]
      %v1169 = vld [vmem:[%s2 + $0x14] sm:$0xf]
      %v1170 = vld [vmem:[%s2 + $0x18] sm:$0xf]
      %v1171 = vld [vmem:[%s2 + $0x1c] sm:$0xf]
      %v1172 = vld [vmem:[%s2 + $0x20] sm:$0xf]
      %v1173 = vld [vmem:[%s2 + $0x24] sm:$0xf]
      %v1174 = vld [vmem:[%s2 + $0x28] sm:$0xf]
      %v1175 = vld [vmem:[%s2 + $0x2c] sm:$0xf]
      %v1176 = vld [vmem:[%s2 + $0x30] sm:$0xf]
      %v1177 = vld [vmem:[%s2 + $0x34] sm:$0xf]
      %v1178 = vld [vmem:[%s2 + $0x38] sm:$0xf]
      %v1179 = vld [vmem:[%s2 + $0x3c] sm:$0xf]
      %v1180 = vld [vmem:[%s2 + $0x40] sm:$0xf]
      %v1181 = vld [vmem:[%s2 + $0x44] sm:$0xf]
      %v1182 = vld [vmem:[%s2 + $0x48] sm:$0xf]
      %v1183 = vld [vmem:[%s2 + $0x4c] sm:$0xf]
      %v1184 = vld [vmem:[%s2 + $0x50] sm:$0xf]
      %v1185 = vld [vmem:[%s2 + $0x54] sm:$0xf]
      %v1186 = vld [vmem:[%s2 + $0x58] sm:$0xf]
      %v1187 = vld [vmem:[%s2 + $0x5c] sm:$0xf]
      %v1188 = vld [vmem:[%s2 + $0x60] sm:$0xf]
      %v1189 = vld [vmem:[%s2 + $0x64] sm:$0xf]
      %v1190 = vld [vmem:[%s2 + $0x68] sm:$0xf]
      %v1191 = vld [vmem:[%s2 + $0x6c] sm:$0xf]
      %v1192 = vld [vmem:[%s2 + $0x70] sm:$0xf]
      %v1193 = vld [vmem:[%s2 + $0x74] sm:$0xf]
      %v1194 = vld [vmem:[%s2 + $0x78] sm:$0xf]
      %v1195 = vld [vmem:[%s2 + $0x7c] sm:$0xf]
      %v1228 = vunpack.c.l.b16 %v1164
      %v1229 = vunpack.c.l.b16 %v1165
      %v1230 = vunpack.c.l.b16 %v1166
      %v1231 = vunpack.c.l.b16 %v1167
      %v1232 = vunpack.c.l.b16 %v1168
      %v1233 = vunpack.c.l.b16 %v1169
      %v1234 = vunpack.c.l.b16 %v1170
      %v1235 = vunpack.c.l.b16 %v1171
      %v1236 = vunpack.c.l.b16 %v1172
      %v1237 = vunpack.c.l.b16 %v1173
      %v1238 = vunpack.c.l.b16 %v1174
      %v1239 = vunpack.c.l.b16 %v1175
      %v1240 = vunpack.c.l.b16 %v1176
      %v1241 = vunpack.c.l.b16 %v1177
      %v1242 = vunpack.c.l.b16 %v1178
      %v1243 = vunpack.c.l.b16 %v1179
      %v1244 = vunpack.c.l.b16 %v1180
      %v1245 = vunpack.c.l.b16 %v1181
      %v1246 = vunpack.c.l.b16 %v1182
      %v1247 = vunpack.c.l.b16 %v1183
      %v1248 = vunpack.c.l.b16 %v1184
      %v1249 = vunpack.c.l.b16 %v1185
      %v1250 = vunpack.c.l.b16 %v1186
      %v1251 = vunpack.c.l.b16 %v1187
      %v1252 = vunpack.c.l.b16 %v1188
      %v1253 = vunpack.c.l.b16 %v1189
      %v1254 = vunpack.c.l.b16 %v1190
      %v1255 = vunpack.c.l.b16 %v1191
      %v1256 = vunpack.c.l.b16 %v1192
      %v1257 = vunpack.c.l.b16 %v1193
      %v1258 = vunpack.c.l.b16 %v1194
      %v1259 = vunpack.c.l.b16 %v1195
      %v1260 = vpack.c.b16 %v1229, %v1228
      %v1261 = vpack.c.b16 %v1231, %v1230
      %v1262 = vpack.c.b16 %v1233, %v1232
      %v1263 = vpack.c.b16 %v1235, %v1234
      %v1264 = vpack.c.b16 %v1237, %v1236
      %v1265 = vpack.c.b16 %v1239, %v1238
      %v1266 = vpack.c.b16 %v1241, %v1240
      %v1267 = vpack.c.b16 %v1243, %v1242
      %v1268 = vpack.c.b16 %v1245, %v1244
      %v1269 = vpack.c.b16 %v1247, %v1246
      %v1270 = vpack.c.b16 %v1249, %v1248
      %v1271 = vpack.c.b16 %v1251, %v1250
      %v1272 = vpack.c.b16 %v1253, %v1252
      %v1273 = vpack.c.b16 %v1255, %v1254
      %v1274 = vpack.c.b16 %v1257, %v1256
      %v1275 = vpack.c.b16 %v1259, %v1258
      %1292 = vmatpush.bf16.msra.mxu0 %v1267
      %1293 = vmatpush.bf16.msra.mxu0 %v1266
      %1294 = vmatpush.bf16.msra.mxu0 %v1265
      %1295 = vmatpush.bf16.msra.mxu0 %v1264
      %1296 = vmatpush.bf16.msra.mxu0 %v1263
      %1297 = vmatpush.bf16.msra.mxu0 %v1262
      %1298 = vmatpush.bf16.msra.mxu0 %v1261
      %1299 = vmatpush.bf16.msra.mxu0 %v1260
      %1300 = vmatmul.bf16.gmra.mxu0 %v1132
      %v1301 = vpop.f32.mrf.mxu0
      %v1302 = vadd.f32 0.0, %v1301
      %v1303 = vpop.f32.mrf.mxu0
      %v1304 = vadd.f32 0.0, %v1303
      %1305 = vmatmul.bf16.gmra.mxu0 %v1134
      %v1306 = vpop.f32.mrf.mxu0
      %v1307 = vadd.f32 0.0, %v1306
      %v1308 = vpop.f32.mrf.mxu0
      %v1309 = vadd.f32 0.0, %v1308
      %1310 = vmatmul.bf16.gmra.mxu0 %v1136
      %v1311 = vpop.f32.mrf.mxu0
      %v1312 = vadd.f32 0.0, %v1311
      %v1313 = vpop.f32.mrf.mxu0
      %v1314 = vadd.f32 0.0, %v1313
      %1315 = vmatmul.bf16.gmra.mxu0 %v1138
      %v1316 = vpop.f32.mrf.mxu0
      %v1317 = vadd.f32 0.0, %v1316
      %v1318 = vpop.f32.mrf.mxu0
      %v1319 = vadd.f32 0.0, %v1318
      %1320 = vmatmul.bf16.gmra.mxu0 %v1140
      %v1321 = vpop.f32.mrf.mxu0
      %v1322 = vadd.f32 0.0, %v1321
      %v1323 = vpop.f32.mrf.mxu0
      %v1324 = vadd.f32 0.0, %v1323
      %1325 = vmatmul.bf16.gmra.mxu0 %v1142
      %v1326 = vpop.f32.mrf.mxu0
      %v1327 = vadd.f32 0.0, %v1326
      %v1328 = vpop.f32.mrf.mxu0
      %v1329 = vadd.f32 0.0, %v1328
      %1330 = vmatmul.bf16.gmra.mxu0 %v1144
      %v1331 = vpop.f32.mrf.mxu0
      %v1332 = vadd.f32 0.0, %v1331
      %v1333 = vpop.f32.mrf.mxu0
      %v1334 = vadd.f32 0.0, %v1333
      %1335 = vmatmul.bf16.gmra.mxu0 %v1146
      %v1336 = vpop.f32.mrf.mxu0
      %v1337 = vadd.f32 0.0, %v1336
      %v1338 = vpop.f32.mrf.mxu0
      %v1339 = vadd.f32 0.0, %v1338
      %1340 = vmatmul.bf16.gmra.mxu0 %v1148
      %v1341 = vpop.f32.mrf.mxu0
      %v1342 = vadd.f32 0.0, %v1341
      %v1343 = vpop.f32.mrf.mxu0
      %v1344 = vadd.f32 0.0, %v1343
      %1345 = vmatmul.bf16.gmra.mxu0 %v1150
      %v1346 = vpop.f32.mrf.mxu0
      %v1347 = vadd.f32 0.0, %v1346
      %v1348 = vpop.f32.mrf.mxu0
      %v1349 = vadd.f32 0.0, %v1348
      %1350 = vmatmul.bf16.gmra.mxu0 %v1152
      %v1351 = vpop.f32.mrf.mxu0
      %v1352 = vadd.f32 0.0, %v1351
      %v1353 = vpop.f32.mrf.mxu0
      %v1354 = vadd.f32 0.0, %v1353
      %1355 = vmatmul.bf16.gmra.mxu0 %v1154
      %v1356 = vpop.f32.mrf.mxu0
      %v1357 = vadd.f32 0.0, %v1356
      %v1358 = vpop.f32.mrf.mxu0
      %v1359 = vadd.f32 0.0, %v1358
      %1360 = vmatmul.bf16.gmra.mxu0 %v1156
      %v1361 = vpop.f32.mrf.mxu0
      %v1362 = vadd.f32 0.0, %v1361
      %v1363 = vpop.f32.mrf.mxu0
      %v1364 = vadd.f32 0.0, %v1363
      %1365 = vmatmul.bf16.gmra.mxu0 %v1158
      %v1366 = vpop.f32.mrf.mxu0
      %v1367 = vadd.f32 0.0, %v1366
      %v1368 = vpop.f32.mrf.mxu0
      %v1369 = vadd.f32 0.0, %v1368
      %1370 = vmatmul.bf16.gmra.mxu0 %v1160
      %v1371 = vpop.f32.mrf.mxu0
      %v1372 = vadd.f32 0.0, %v1371
      %v1373 = vpop.f32.mrf.mxu0
      %v1374 = vadd.f32 0.0, %v1373
      %1375 = vmatmul.bf16.gmra.mxu0 %v1162
      %v1376 = vpop.f32.mrf.mxu0
      %v1377 = vadd.f32 0.0, %v1376
      %v1378 = vpop.f32.mrf.mxu0
      %v1379 = vadd.f32 0.0, %v1378
      %1380 = vdwg.mxu0
      %1381 = vmatpush.bf16.msra.mxu0 %v1275
      %1382 = vmatpush.bf16.msra.mxu0 %v1274
      %1383 = vmatpush.bf16.msra.mxu0 %v1273
      %1384 = vmatpush.bf16.msra.mxu0 %v1272
      %1385 = vmatpush.bf16.msra.mxu0 %v1271
      %1386 = vmatpush.bf16.msra.mxu0 %v1270
      %1387 = vmatpush.bf16.msra.mxu0 %v1269
      %1388 = vmatpush.bf16.msra.mxu0 %v1268
      %1389 = vmatmul.bf16.gmra.mxu0 %v1133
      %v1390 = vpop.f32.mrf.mxu0
      %v1391 = vadd.f32 %v1302, %v1390
      %v1392 = vpop.f32.mrf.mxu0
      %v1393 = vadd.f32 %v1304, %v1392
      %1394 = vmatmul.bf16.gmra.mxu0 %v1135
      %v1395 = vpop.f32.mrf.mxu0
      %v1396 = vadd.f32 %v1307, %v1395
      %v1397 = vpop.f32.mrf.mxu0
      %v1398 = vadd.f32 %v1309, %v1397
      %1399 = vmatmul.bf16.gmra.mxu0 %v1137
      %v1400 = vpop.f32.mrf.mxu0
      %v1401 = vadd.f32 %v1312, %v1400
      %v1402 = vpop.f32.mrf.mxu0
      %v1403 = vadd.f32 %v1314, %v1402
      %1404 = vmatmul.bf16.gmra.mxu0 %v1139
      %v1405 = vpop.f32.mrf.mxu0
      %v1406 = vadd.f32 %v1317, %v1405
      %v1407 = vpop.f32.mrf.mxu0
      %v1408 = vadd.f32 %v1319, %v1407
      %1409 = vmatmul.bf16.gmra.mxu0 %v1141
      %v1410 = vpop.f32.mrf.mxu0
      %v1411 = vadd.f32 %v1322, %v1410
      %v1412 = vpop.f32.mrf.mxu0
      %v1413 = vadd.f32 %v1324, %v1412
      %1414 = vmatmul.bf16.gmra.mxu0 %v1143
      %v1415 = vpop.f32.mrf.mxu0
      %v1416 = vadd.f32 %v1327, %v1415
      %v1417 = vpop.f32.mrf.mxu0
      %v1418 = vadd.f32 %v1329, %v1417
      %1419 = vmatmul.bf16.gmra.mxu0 %v1145
      %v1420 = vpop.f32.mrf.mxu0
      %v1421 = vadd.f32 %v1332, %v1420
      %v1422 = vpop.f32.mrf.mxu0
      %v1423 = vadd.f32 %v1334, %v1422
      %1424 = vmatmul.bf16.gmra.mxu0 %v1147
      %v1425 = vpop.f32.mrf.mxu0
      %v1426 = vadd.f32 %v1337, %v1425
      %v1427 = vpop.f32.mrf.mxu0
      %v1428 = vadd.f32 %v1339, %v1427
      %1429 = vmatmul.bf16.gmra.mxu0 %v1149
      %v1430 = vpop.f32.mrf.mxu0
      %v1431 = vadd.f32 %v1342, %v1430
      %v1432 = vpop.f32.mrf.mxu0
      %v1433 = vadd.f32 %v1344, %v1432
      %1434 = vmatmul.bf16.gmra.mxu0 %v1151
      %v1435 = vpop.f32.mrf.mxu0
      %v1436 = vadd.f32 %v1347, %v1435
      %v1437 = vpop.f32.mrf.mxu0
      %v1438 = vadd.f32 %v1349, %v1437
      %1439 = vmatmul.bf16.gmra.mxu0 %v1153
      %v1440 = vpop.f32.mrf.mxu0
      %v1441 = vadd.f32 %v1352, %v1440
      %v1442 = vpop.f32.mrf.mxu0
      %v1443 = vadd.f32 %v1354, %v1442
      %1444 = vmatmul.bf16.gmra.mxu0 %v1155
      %v1445 = vpop.f32.mrf.mxu0
      %v1446 = vadd.f32 %v1357, %v1445
      %v1447 = vpop.f32.mrf.mxu0
      %v1448 = vadd.f32 %v1359, %v1447
      %1449 = vmatmul.bf16.gmra.mxu0 %v1157
      %v1450 = vpop.f32.mrf.mxu0
      %v1451 = vadd.f32 %v1362, %v1450
      %v1452 = vpop.f32.mrf.mxu0
      %v1453 = vadd.f32 %v1364, %v1452
      %1454 = vmatmul.bf16.gmra.mxu0 %v1159
      %v1455 = vpop.f32.mrf.mxu0
      %v1456 = vadd.f32 %v1367, %v1455
      %v1457 = vpop.f32.mrf.mxu0
      %v1458 = vadd.f32 %v1369, %v1457
      %1459 = vmatmul.bf16.gmra.mxu0 %v1161
      %v1460 = vpop.f32.mrf.mxu0
      %v1461 = vadd.f32 %v1372, %v1460
      %v1462 = vpop.f32.mrf.mxu0
      %v1463 = vadd.f32 %v1374, %v1462
      %1464 = vmatmul.bf16.gmra.mxu0 %v1163
      %v1465 = vpop.f32.mrf.mxu0
      %v1466 = vadd.f32 %v1377, %v1465
      %v1467 = vpop.f32.mrf.mxu0
      %v1468 = vadd.f32 %v1379, %v1467
      %1469 = vdwg.mxu0
      %v1470 = vmul.f32 %v747, %v925
      %v1471 = vmul.f32 %v749, %v927
      %v1472 = vmul.f32 %v752, %v930
      %v1473 = vmul.f32 %v754, %v932
      %v1474 = vmul.f32 %v757, %v935
      %v1475 = vmul.f32 %v759, %v937
      %v1476 = vmul.f32 %v762, %v940
      %v1477 = vmul.f32 %v764, %v942
      %v1478 = vmul.f32 %v767, %v945
      %v1479 = vmul.f32 %v769, %v947
      %v1480 = vmul.f32 %v772, %v950
      %v1481 = vmul.f32 %v774, %v952
      %v1482 = vmul.f32 %v777, %v955
      %v1483 = vmul.f32 %v779, %v957
      %v1484 = vmul.f32 %v782, %v960
      %v1485 = vmul.f32 %v784, %v962
      %v1486 = vmul.f32 %v787, %v965
      %v1487 = vmul.f32 %v789, %v967
      %v1488 = vmul.f32 %v792, %v970
      %v1489 = vmul.f32 %v794, %v972
      %v1490 = vmul.f32 %v797, %v975
      %v1491 = vmul.f32 %v799, %v977
      %v1492 = vmul.f32 %v802, %v980
      %v1493 = vmul.f32 %v804, %v982
      %v1494 = vmul.f32 %v807, %v985
      %v1495 = vmul.f32 %v809, %v987
      %v1496 = vmul.f32 %v812, %v990
      %v1497 = vmul.f32 %v814, %v992
      %v1498 = vmul.f32 %v817, %v995
      %v1499 = vmul.f32 %v819, %v997
      %v1500 = vmul.f32 %v822, %v1000
      %v1501 = vmul.f32 %v824, %v1002
      %v1502 = vadd.f32 %v1470, %v1391
      %v1503 = vadd.f32 %v1471, %v1393
      %v1504 = vadd.f32 %v1472, %v1396
      %v1505 = vadd.f32 %v1473, %v1398
      %v1506 = vadd.f32 %v1474, %v1401
      %v1507 = vadd.f32 %v1475, %v1403
      %v1508 = vadd.f32 %v1476, %v1406
      %v1509 = vadd.f32 %v1477, %v1408
      %v1510 = vadd.f32 %v1478, %v1411
      %v1511 = vadd.f32 %v1479, %v1413
      %v1512 = vadd.f32 %v1480, %v1416
      %v1513 = vadd.f32 %v1481, %v1418
      %v1514 = vadd.f32 %v1482, %v1421
      %v1515 = vadd.f32 %v1483, %v1423
      %v1516 = vadd.f32 %v1484, %v1426
      %v1517 = vadd.f32 %v1485, %v1428
      %v1518 = vadd.f32 %v1486, %v1431
      %v1519 = vadd.f32 %v1487, %v1433
      %v1520 = vadd.f32 %v1488, %v1436
      %v1521 = vadd.f32 %v1489, %v1438
      %v1522 = vadd.f32 %v1490, %v1441
      %v1523 = vadd.f32 %v1491, %v1443
      %v1524 = vadd.f32 %v1492, %v1446
      %v1525 = vadd.f32 %v1493, %v1448
      %v1526 = vadd.f32 %v1494, %v1451
      %v1527 = vadd.f32 %v1495, %v1453
      %v1528 = vadd.f32 %v1496, %v1456
      %v1529 = vadd.f32 %v1497, %v1458
      %v1530 = vadd.f32 %v1498, %v1461
      %v1531 = vadd.f32 %v1499, %v1463
      %v1532 = vadd.f32 %v1500, %v1466
      %v1533 = vadd.f32 %v1501, %v1468
      %v1534 = vld [vmem:[%s4] sm:$0x1]
      %v1536 = vperm.slane %v1534, 0
      %v1538 = vmul.f32 %v1502, %v1536
      %v1539 = vmul.f32 %v1503, %v1536
      %v1540 = vmul.f32 %v1504, %v1536
      %v1541 = vmul.f32 %v1505, %v1536
      %v1542 = vmul.f32 %v1506, %v1536
      %v1543 = vmul.f32 %v1507, %v1536
      %v1544 = vmul.f32 %v1508, %v1536
      %v1545 = vmul.f32 %v1509, %v1536
      %v1546 = vmul.f32 %v1510, %v1536
      %v1547 = vmul.f32 %v1511, %v1536
      %v1548 = vmul.f32 %v1512, %v1536
      %v1549 = vmul.f32 %v1513, %v1536
      %v1550 = vmul.f32 %v1514, %v1536
      %v1551 = vmul.f32 %v1515, %v1536
      %v1552 = vmul.f32 %v1516, %v1536
      %v1553 = vmul.f32 %v1517, %v1536
      %v1554 = vmul.f32 %v1518, %v1536
      %v1555 = vmul.f32 %v1519, %v1536
      %v1556 = vmul.f32 %v1520, %v1536
      %v1557 = vmul.f32 %v1521, %v1536
      %v1558 = vmul.f32 %v1522, %v1536
      %v1559 = vmul.f32 %v1523, %v1536
      %v1560 = vmul.f32 %v1524, %v1536
      %v1561 = vmul.f32 %v1525, %v1536
      %v1562 = vmul.f32 %v1526, %v1536
      %v1563 = vmul.f32 %v1527, %v1536
      %v1564 = vmul.f32 %v1528, %v1536
      %v1565 = vmul.f32 %v1529, %v1536
      %v1566 = vmul.f32 %v1530, %v1536
      %v1567 = vmul.f32 %v1531, %v1536
      %v1568 = vmul.f32 %v1532, %v1536
      %v1569 = vmul.f32 %v1533, %v1536
      %v1570 = vld [vmem:[%s5] sm:$0x1]
      %v1572 = vperm.slane %v1570, 0
      %v1574 = vadd.f32 %v1538, %v1572
      %v1575 = vadd.f32 %v1539, %v1572
      %v1576 = vadd.f32 %v1540, %v1572
      %v1577 = vadd.f32 %v1541, %v1572
      %v1578 = vadd.f32 %v1542, %v1572
      %v1579 = vadd.f32 %v1543, %v1572
      %v1580 = vadd.f32 %v1544, %v1572
      %v1581 = vadd.f32 %v1545, %v1572
      %v1582 = vadd.f32 %v1546, %v1572
      %v1583 = vadd.f32 %v1547, %v1572
      %v1584 = vadd.f32 %v1548, %v1572
      %v1585 = vadd.f32 %v1549, %v1572
      %v1586 = vadd.f32 %v1550, %v1572
      %v1587 = vadd.f32 %v1551, %v1572
      %v1588 = vadd.f32 %v1552, %v1572
      %v1589 = vadd.f32 %v1553, %v1572
      %v1590 = vadd.f32 %v1554, %v1572
      %v1591 = vadd.f32 %v1555, %v1572
      %v1592 = vadd.f32 %v1556, %v1572
      %v1593 = vadd.f32 %v1557, %v1572
      %v1594 = vadd.f32 %v1558, %v1572
      %v1595 = vadd.f32 %v1559, %v1572
      %v1596 = vadd.f32 %v1560, %v1572
      %v1597 = vadd.f32 %v1561, %v1572
      %v1598 = vadd.f32 %v1562, %v1572
      %v1599 = vadd.f32 %v1563, %v1572
      %v1600 = vadd.f32 %v1564, %v1572
      %v1601 = vadd.f32 %v1565, %v1572
      %v1602 = vadd.f32 %v1566, %v1572
      %v1603 = vadd.f32 %v1567, %v1572
      %v1604 = vadd.f32 %v1568, %v1572
      %v1605 = vadd.f32 %v1569, %v1572
      %v1606 = vmax.f32 %v1574, 0.0
      %v1607 = vmax.f32 %v1575, 0.0
      %v1608 = vmax.f32 %v1576, 0.0
      %v1609 = vmax.f32 %v1577, 0.0
      %v1610 = vmax.f32 %v1578, 0.0
      %v1611 = vmax.f32 %v1579, 0.0
      %v1612 = vmax.f32 %v1580, 0.0
      %v1613 = vmax.f32 %v1581, 0.0
      %v1614 = vmax.f32 %v1582, 0.0
      %v1615 = vmax.f32 %v1583, 0.0
      %v1616 = vmax.f32 %v1584, 0.0
      %v1617 = vmax.f32 %v1585, 0.0
      %v1618 = vmax.f32 %v1586, 0.0
      %v1619 = vmax.f32 %v1587, 0.0
      %v1620 = vmax.f32 %v1588, 0.0
      %v1621 = vmax.f32 %v1589, 0.0
      %v1622 = vmax.f32 %v1590, 0.0
      %v1623 = vmax.f32 %v1591, 0.0
      %v1624 = vmax.f32 %v1592, 0.0
      %v1625 = vmax.f32 %v1593, 0.0
      %v1626 = vmax.f32 %v1594, 0.0
      %v1627 = vmax.f32 %v1595, 0.0
      %v1628 = vmax.f32 %v1596, 0.0
      %v1629 = vmax.f32 %v1597, 0.0
      %v1630 = vmax.f32 %v1598, 0.0
      %v1631 = vmax.f32 %v1599, 0.0
      %v1632 = vmax.f32 %v1600, 0.0
      %v1633 = vmax.f32 %v1601, 0.0
      %v1634 = vmax.f32 %v1602, 0.0
      %v1635 = vmax.f32 %v1603, 0.0
      %v1636 = vmax.f32 %v1604, 0.0
      %v1637 = vmax.f32 %v1605, 0.0
      %vm1638 = vcmask 130048
      %1639 = vst.msk [vmem:[%s256] sm:$0xff] %vm1638, %v1606
      %1640 = vst.msk [vmem:[%s256 + $0x8] sm:$0xff] %vm1638, %v1607
      %1641 = vst.msk [vmem:[%s256 + $0x10] sm:$0xff] %vm1638, %v1608
      %1642 = vst.msk [vmem:[%s256 + $0x18] sm:$0xff] %vm1638, %v1609
      %1643 = vst.msk [vmem:[%s256 + $0x20] sm:$0xff] %vm1638, %v1610
      %1644 = vst.msk [vmem:[%s256 + $0x28] sm:$0xff] %vm1638, %v1611
      %1645 = vst.msk [vmem:[%s256 + $0x30] sm:$0xff] %vm1638, %v1612
      %1646 = vst.msk [vmem:[%s256 + $0x38] sm:$0xff] %vm1638, %v1613
      %1647 = vst.msk [vmem:[%s256 + $0x40] sm:$0xff] %vm1638, %v1614
      %1648 = vst.msk [vmem:[%s256 + $0x48] sm:$0xff] %vm1638, %v1615
      %1649 = vst.msk [vmem:[%s256 + $0x50] sm:$0xff] %vm1638, %v1616
      %1650 = vst.msk [vmem:[%s256 + $0x58] sm:$0xff] %vm1638, %v1617
      %1651 = vst.msk [vmem:[%s256 + $0x60] sm:$0xff] %vm1638, %v1618
      %1652 = vst.msk [vmem:[%s256 + $0x68] sm:$0xff] %vm1638, %v1619
      %1653 = vst.msk [vmem:[%s256 + $0x70] sm:$0xff] %vm1638, %v1620
      %1654 = vst.msk [vmem:[%s256 + $0x78] sm:$0xff] %vm1638, %v1621
      %1655 = vst.msk [vmem:[%s256 + $0x80] sm:$0xff] %vm1638, %v1622
      %1656 = vst.msk [vmem:[%s256 + $0x88] sm:$0xff] %vm1638, %v1623
      %1657 = vst.msk [vmem:[%s256 + $0x90] sm:$0xff] %vm1638, %v1624
      %1658 = vst.msk [vmem:[%s256 + $0x98] sm:$0xff] %vm1638, %v1625
      %1659 = vst.msk [vmem:[%s256 + $0xa0] sm:$0xff] %vm1638, %v1626
      %1660 = vst.msk [vmem:[%s256 + $0xa8] sm:$0xff] %vm1638, %v1627
      %1661 = vst.msk [vmem:[%s256 + $0xb0] sm:$0xff] %vm1638, %v1628
      %1662 = vst.msk [vmem:[%s256 + $0xb8] sm:$0xff] %vm1638, %v1629
      %1663 = vst.msk [vmem:[%s256 + $0xc0] sm:$0xff] %vm1638, %v1630
      %1664 = vst.msk [vmem:[%s256 + $0xc8] sm:$0xff] %vm1638, %v1631
      %1665 = vst.msk [vmem:[%s256 + $0xd0] sm:$0xff] %vm1638, %v1632
      %1666 = vst.msk [vmem:[%s256 + $0xd8] sm:$0xff] %vm1638, %v1633
      %1667 = vst.msk [vmem:[%s256 + $0xe0] sm:$0xff] %vm1638, %v1634
      %1668 = vst.msk [vmem:[%s256 + $0xe8] sm:$0xff] %vm1638, %v1635
      %1669 = vst.msk [vmem:[%s256 + $0xf0] sm:$0xff] %vm1638, %v1636
      %1670 = vst.msk [vmem:[%s256 + $0xf8] sm:$0xff] %vm1638, %v1637
      %s1671 = smul.u32 32, %s17
      %p1672 = scmp.lt.s32.totalorder %s1671, 63
      %s1673 = scalar_select %p1672, %s1671, 63
      %s1674 = smul.addr %s1673, 8
      %s1675 = scalar_lea.vmem %s6, %s1674
      // Predicated region
      $region45: #{_lambda_.9} parent=43 // pred_check
        %p1676 = pneg %p166
      $region46: #{_lambda_.9} parent=43 // pred_check_branch
        %1678 = sbr.rel (%p1676) target = $region48
      $region47: #{_lambda_.9} parent=43 // pred_region
        %s1679 = smul.u32 32, %s17
      $region48: #{_lambda_.9} parent=43 // pred_fallthru
        _
    $region44: #{_lambda_.9} parent=5 // pred_fallthru
      _
    %p1680 = scmp.le.s32.totalorder 2, %s12
    // Predicated region
    $region49: #{_lambda_.9} parent=5 // pred_check
      %p1681 = pneg %p1680
    $region50: #{_lambda_.9} parent=5 // pred_check_branch
      %1683 = sbr.rel (%p1681) target = $region52
    $region51: #{_lambda_.9} parent=5 // pred_region
      %s1684 = ssub.s32 %s12, 2
      // Predicated region
      $region53: #{_lambda_.9} parent=51 // pred_check
        %p1685 = pneg %p172
      $region54: #{_lambda_.9} parent=51 // pred_check_branch
        %1687 = sbr.rel (%p1685) target = $region56
      $region55: #{_lambda_.9} parent=51 // pred_region
        %s1688 = smul.u32 32, %s18
        %p1689 = scmp.lt.s32.totalorder %s1688, 63
        %s1690 = scalar_select %p1689, %s1688, 63
        %s1691 = smul.addr %s1690, 8
        %s1692 = scalar_lea.vmem %s6, %s1691
      $region56: #{_lambda_.9} parent=51 // pred_fallthru
        _
    $region52: #{_lambda_.9} parent=5 // pred_fallthru
      _
  $region6: #{_lambda_.9} parent=0 // loop_footer
    %s16 = sadd.s32 1, %s12
  $region7: #{_lambda_.9} parent=0 // loop_footer_branch
    %11 = sbr.rel target = $region3
  $region8: #{_lambda_.9} parent=0 // loop_exit
    _

// kernel: _lambda_.11
$region0: #{_lambda_.11}
  #allocation0 [shape = 'u32[]', space=smem, size = 0x4, offset = 0x4, fixed_abs, tag = 'smem constant byte address 0x4 - core index']
  #allocation1 [shape = 'u32[72,128]{1,0:T(1,128)}', space=vmem, size = 0x9000, scoped, tag = 'internal scratch']
  %s0 = inlined_call_operand.vmem [shape: bf16[128,256], index: 0, kind: input, shape index: {}]
  %s1 = inlined_call_operand.vmem [shape: bf16[256,256], index: 1, kind: input, shape index: {}]
  %s2 = inlined_call_operand.vmem [shape: bf16[256,128], index: 2, kind: input, shape index: {}]
  %s3 = inlined_call_operand.vmem [shape: f32[1,256], index: 3, kind: input, shape index: {}]
  %s4 = inlined_call_operand.vmem [shape: f32[1,128], index: 4, kind: input, shape index: {}]
  %s5 = inlined_call_operand.vmem [shape: f32[1,128], index: 5, kind: input, shape index: {}]
  %s6 = inlined_call_operand.vmem [shape: f32[128,32], index: 6, kind: output, shape index: {}]
  %s7 = sld [smem:[#allocation0]]
  $region57: #{_lambda_.11} parent=0
    _
  %s9 = ssub.s32 1, %s7
  %s10 = scalar_select 0, %s9, %s7
  loop: start=0, step=1, limit=4
  $region2: #{_lambda_.11} parent=0 // loop_pre_header
    _
  $region3: #{_lambda_.11} parent=0 // loop_header
    %s12 = sphi 0, %s16
    %p13 = scmp.ge.s32.totalorder %s12, 4
    %s22 = sphi 0, %s24
    %s25 = sphi 0, %s22
    %s26 = sphi 0, %s25
    %s42 = sphi 0, %s26
    %s46 = sphi 0, %s46
    %s48 = sphi 0, %s46
    %s49 = sphi 0, %s48
    %s63 = sphi 0, %s49
    %s67 = sphi 0, %s67
    %s69 = sphi 0, %s67
    %s70 = sphi 0, %s69
    %s84 = sphi 0, %s70
    %s88 = sphi 0, %s88
    %s90 = sphi 0, %s88
    %s91 = sphi 0, %s90
    %s105 = sphi 0, %s91
    %s109 = sphi 0, %s109
    %s111 = sphi 0, %s109
    %s112 = sphi 0, %s111
    %s126 = sphi 0, %s112
    %s130 = sphi 0, %s130
    %s132 = sphi 0, %s130
    %s133 = sphi 0, %s132
    %s147 = sphi 0, %s133
    %s153 = sphi 0, %s155
    %s156 = sphi 0, %s153
    %s157 = sphi 0, %s156
    %s173 = sphi 0, %s157
  $region4: #{_lambda_.11} parent=0 // loop_header_branch
    %15 = sbr.rel (%p13) target = $region8
  $region5: #{_lambda_.11} parent=0 // loop_body
    %s17 = ssub.s32 %s12, 1
    %s18 = ssub.s32 %s12, 2
    %s19 = sadd.s32 %s12, 1
    %s20 = ssub.s32 %s12, %s19
    %p21 = scmp.eq.s32.totalorder %s20, 0
    %s23 = sadd.s32 %s22, 1
    %s24 = scalar_select %p21, %s22, %s23
    %p27 = pneg %p21
    %p28 = scmp.eq.s32.totalorder %s12, 1
    %p29 = por %p27, %p28
    %p30 = scmp.ne.s32.totalorder %s22, %s25
    %p31 = scmp.eq.s32.totalorder %s12, 0
    %p32 = por %p30, %p31
    %p33 = scmp.ne.s32.totalorder %s22, %s25
    %p34 = scmp.eq.s32.totalorder %s17, 1
    %p35 = por %p33, %p34
    %p36 = scmp.ne.s32.totalorder %s25, %s26
    %p37 = scmp.eq.s32.totalorder %s17, 0
    %p38 = por %p36, %p37
    %p39 = scmp.ne.s32.totalorder %s25, %s26
    %p40 = scmp.eq.s32.totalorder %s18, 1
    %p41 = por %p39, %p40
    %p43 = scmp.ne.s32.totalorder %s26, %s42
    %p44 = scmp.eq.s32.totalorder %s18, 0
    %p45 = por %p43, %p44
    %s47 = sadd.s32 %s46, 1
    %p50 = scmp.eq.s32.totalorder %s12, 1
    %p51 = scmp.ne.s32.totalorder %s46, %s48
    %p52 = scmp.eq.s32.totalorder %s12, 0
    %p53 = por %p51, %p52
    %p54 = scmp.ne.s32.totalorder %s46, %s48
    %p55 = scmp.eq.s32.totalorder %s17, 1
    %p56 = por %p54, %p55
    %p57 = scmp.ne.s32.totalorder %s48, %s49
    %p58 = scmp.eq.s32.totalorder %s17, 0
    %p59 = por %p57, %p58
    %p60 = scmp.ne.s32.totalorder %s48, %s49
    %p61 = scmp.eq.s32.totalorder %s18, 1
    %p62 = por %p60, %p61
    %p64 = scmp.ne.s32.totalorder %s49, %s63
    %p65 = scmp.eq.s32.totalorder %s18, 0
    %p66 = por %p64, %p65
    %s68 = sadd.s32 %s67, 1
    %p71 = scmp.eq.s32.totalorder %s12, 1
    %p72 = scmp.ne.s32.totalorder %s67, %s69
    %p73 = scmp.eq.s32.totalorder %s12, 0
    %p74 = por %p72, %p73
    %p75 = scmp.ne.s32.totalorder %s67, %s69
    %p76 = scmp.eq.s32.totalorder %s17, 1
    %p77 = por %p75, %p76
    %p78 = scmp.ne.s32.totalorder %s69, %s70
    %p79 = scmp.eq.s32.totalorder %s17, 0
    %p80 = por %p78, %p79
    %p81 = scmp.ne.s32.totalorder %s69, %s70
    %p82 = scmp.eq.s32.totalorder %s18, 1
    %p83 = por %p81, %p82
    %p85 = scmp.ne.s32.totalorder %s70, %s84
    %p86 = scmp.eq.s32.totalorder %s18, 0
    %p87 = por %p85, %p86
    %s89 = sadd.s32 %s88, 1
    %p92 = scmp.eq.s32.totalorder %s12, 1
    %p93 = scmp.ne.s32.totalorder %s88, %s90
    %p94 = scmp.eq.s32.totalorder %s12, 0
    %p95 = por %p93, %p94
    %p96 = scmp.ne.s32.totalorder %s88, %s90
    %p97 = scmp.eq.s32.totalorder %s17, 1
    %p98 = por %p96, %p97
    %p99 = scmp.ne.s32.totalorder %s90, %s91
    %p100 = scmp.eq.s32.totalorder %s17, 0
    %p101 = por %p99, %p100
    %p102 = scmp.ne.s32.totalorder %s90, %s91
    %p103 = scmp.eq.s32.totalorder %s18, 1
    %p104 = por %p102, %p103
    %p106 = scmp.ne.s32.totalorder %s91, %s105
    %p107 = scmp.eq.s32.totalorder %s18, 0
    %p108 = por %p106, %p107
    %s110 = sadd.s32 %s109, 1
    %p113 = scmp.eq.s32.totalorder %s12, 1
    %p114 = scmp.ne.s32.totalorder %s109, %s111
    %p115 = scmp.eq.s32.totalorder %s12, 0
    %p116 = por %p114, %p115
    %p117 = scmp.ne.s32.totalorder %s109, %s111
    %p118 = scmp.eq.s32.totalorder %s17, 1
    %p119 = por %p117, %p118
    %p120 = scmp.ne.s32.totalorder %s111, %s112
    %p121 = scmp.eq.s32.totalorder %s17, 0
    %p122 = por %p120, %p121
    %p123 = scmp.ne.s32.totalorder %s111, %s112
    %p124 = scmp.eq.s32.totalorder %s18, 1
    %p125 = por %p123, %p124
    %p127 = scmp.ne.s32.totalorder %s112, %s126
    %p128 = scmp.eq.s32.totalorder %s18, 0
    %p129 = por %p127, %p128
    %s131 = sadd.s32 %s130, 1
    %p134 = scmp.eq.s32.totalorder %s12, 1
    %p135 = scmp.ne.s32.totalorder %s130, %s132
    %p136 = scmp.eq.s32.totalorder %s12, 0
    %p137 = por %p135, %p136
    %p138 = scmp.ne.s32.totalorder %s130, %s132
    %p139 = scmp.eq.s32.totalorder %s17, 1
    %p140 = por %p138, %p139
    %p141 = scmp.ne.s32.totalorder %s132, %s133
    %p142 = scmp.eq.s32.totalorder %s17, 0
    %p143 = por %p141, %p142
    %p144 = scmp.ne.s32.totalorder %s132, %s133
    %p145 = scmp.eq.s32.totalorder %s18, 1
    %p146 = por %p144, %p145
    %p148 = scmp.ne.s32.totalorder %s133, %s147
    %p149 = scmp.eq.s32.totalorder %s18, 0
    %p150 = por %p148, %p149
    %s151 = ssub.s32 %s12, %s19
    %p152 = scmp.eq.s32.totalorder %s151, 0
    %s154 = sadd.s32 %s153, 1
    %s155 = scalar_select %p152, %s153, %s154
    %p158 = pneg %p152
    %p159 = scmp.eq.s32.totalorder %s12, 1
    %p160 = por %p158, %p159
    %p161 = scmp.ne.s32.totalorder %s153, %s156
    %p162 = scmp.eq.s32.totalorder %s12, 0
    %p163 = por %p161, %p162
    %p164 = scmp.ne.s32.totalorder %s153, %s156
    %p165 = scmp.eq.s32.totalorder %s17, 1
    %p166 = por %p164, %p165
    %p167 = scmp.ne.s32.totalorder %s156, %s157
    %p168 = scmp.eq.s32.totalorder %s17, 0
    %p169 = por %p167, %p168
    %p170 = scmp.ne.s32.totalorder %s156, %s157
    %p171 = scmp.eq.s32.totalorder %s18, 1
    %p172 = por %p170, %p171
    %p174 = scmp.ne.s32.totalorder %s157, %s173
    %p175 = scmp.eq.s32.totalorder %s18, 0
    %p176 = por %p174, %p175
    %p177 = scmp.le.s32.totalorder 1, %s12
    %p178 = scmp.lt.s32.totalorder %s12, 3
    %p179 = pnand %p177, %p178
    %p180 = pneg %p179
    // Predicated region
    $region9: #{_lambda_.11} parent=5 // pred_check
      _
    $region10: #{_lambda_.11} parent=5 // pred_check_branch
      %182 = sbr.rel (%p179) target = $region12
    $region11: #{_lambda_.11} parent=5 // pred_region
      %s183 = ssub.s32 %s12, 1
      // Predicated region
      $region13: #{_lambda_.11} parent=11 // pred_check
        %p184 = pneg %p59
      $region14: #{_lambda_.11} parent=11 // pred_check_branch
        %186 = sbr.rel (%p184) target = $region16
      $region15: #{_lambda_.11} parent=11 // pred_region
        _
      $region16: #{_lambda_.11} parent=11 // pred_fallthru
        _
      // Predicated region
      $region17: #{_lambda_.11} parent=11 // pred_check
        %p187 = pneg %p80
      $region18: #{_lambda_.11} parent=11 // pred_check_branch
        %189 = sbr.rel (%p187) target = $region20
      $region19: #{_lambda_.11} parent=11 // pred_region
        _
      $region20: #{_lambda_.11} parent=11 // pred_fallthru
        _
      // Predicated region
      $region21: #{_lambda_.11} parent=11 // pred_check
        %p190 = pneg %p101
      $region22: #{_lambda_.11} parent=11 // pred_check_branch
        %192 = sbr.rel (%p190) target = $region24
      $region23: #{_lambda_.11} parent=11 // pred_region
        _
      $region24: #{_lambda_.11} parent=11 // pred_fallthru
        _
      // Predicated region
      $region25: #{_lambda_.11} parent=11 // pred_check
        %p193 = pneg %p122
      $region26: #{_lambda_.11} parent=11 // pred_check_branch
        %195 = sbr.rel (%p193) target = $region28
      $region27: #{_lambda_.11} parent=11 // pred_region
        _
      $region28: #{_lambda_.11} parent=11 // pred_fallthru
        _
      // Predicated region
      $region29: #{_lambda_.11} parent=11 // pred_check
        %p196 = pneg %p143
      $region30: #{_lambda_.11} parent=11 // pred_check_branch
        %198 = sbr.rel (%p196) target = $region32
      $region31: #{_lambda_.11} parent=11 // pred_region
        _
      $region32: #{_lambda_.11} parent=11 // pred_fallthru
        _
    $region12: #{_lambda_.11} parent=5 // pred_fallthru
      _
    %p199 = scmp.lt.s32.totalorder %s12, 2
    // Predicated region
    $region33: #{_lambda_.11} parent=5 // pred_check
      %p200 = pneg %p199
    $region34: #{_lambda_.11} parent=5 // pred_check_branch
      %202 = sbr.rel (%p200) target = $region36
    $region35: #{_lambda_.11} parent=5 // pred_region
      // Predicated region
      $region37: #{_lambda_.11} parent=35 // pred_check
        %p203 = pneg %p32
      $region38: #{_lambda_.11} parent=35 // pred_check_branch
        %205 = sbr.rel (%p203) target = $region40
      $region39: #{_lambda_.11} parent=35 // pred_region
        %s206 = smul.u32 8, %s12
        %p207 = scmp.lt.s32.totalorder %s206, 15
        %s208 = scalar_select %p207, %s206, 15
        %s209 = smul.addr %s208, 2
        %s210 = smul.addr %s209, 4
        %s211 = scalar_lea.vmem %s0, %s210
        %s212 = smul.u32 8, %s12
      $region40: #{_lambda_.11} parent=35 // pred_fallthru
        _
    $region36: #{_lambda_.11} parent=5 // pred_fallthru
      _
    %p213 = scmp.le.s32.totalorder 1, %s12
    %p214 = scmp.lt.s32.totalorder %s12, 3
    %p215 = pnand %p213, %p214
    %p216 = pneg %p215
    // Predicated region
    $region41: #{_lambda_.11} parent=5 // pred_check
      _
    $region42: #{_lambda_.11} parent=5 // pred_check_branch
      %218 = sbr.rel (%p215) target = $region44
    $region43: #{_lambda_.11} parent=5 // pred_region
      %s219 = ssub.s32 %s12, 1
      %s220 = smul.u32 8, %s17
      %p221 = scmp.lt.s32.totalorder %s220, 15
      %s222 = scalar_select %p221, %s220, 15
      %s223 = smul.addr %s222, 2
      %s224 = smul.addr %s223, 4
      %s225 = scalar_lea.vmem %s0, %s224
      %p226 = pneg %p38
      %p227 = pneg %p35
      %p228 = pneg %p59
      %p229 = pneg %p56
      %p230 = pneg %p80
      %p231 = pneg %p77
      %p232 = pneg %p101
      %p233 = pneg %p98
      %p234 = pneg %p122
      %p235 = pneg %p119
      %p236 = pneg %p143
      %p237 = pneg %p140
      %p238 = pneg %p169
      %p239 = pneg %p166
      %s240 = smul.u32 8, %s17
      %p241 = scmp.lt.s32.totalorder %s240, 15
      %s242 = scalar_select %p241, %s240, 15
      %s243 = smul.addr %s242, 8
      %s244 = scalar_lea.vmem %s6, %s243
      %s245 = smul.u32 8, %s17
      %p246 = scmp.lt.s32.totalorder %s245, 15
      %s247 = scalar_select %p246, %s245, 15
      %s248 = smul.addr %s247, 2
      %s249 = smul.addr %s248, 4
      %s250 = scalar_lea.vmem %s0, %s249
      %s251 = smul.u32 8, %s17
      %s252 = smul.u32 8, %s17
      %p253 = scmp.lt.s32.totalorder %s252, 15
      %s254 = scalar_select %p253, %s252, 15
      %s255 = smul.addr %s254, 8
      %s256 = scalar_lea.vmem %s6, %s255
      %s257 = smul.u32 8, %s17
      %v258 = vld [vmem:[%s250] sm:$0xff]
      %v259 = vld [vmem:[%s250 + $0x8] sm:$0xff]
      %v260 = vld [vmem:[%s250 + $0x10] sm:$0xff]
      %v261 = vld [vmem:[%s250 + $0x18] sm:$0xff]
      %v262 = vld [vmem:[%s250 + $0x20] sm:$0xff]
      %v263 = vld [vmem:[%s250 + $0x28] sm:$0xff]
      %v264 = vld [vmem:[%s250 + $0x30] sm:$0xff]
      %v265 = vld [vmem:[%s250 + $0x38] sm:$0xff]
      %v266 = vld [vmem:[%s1] sm:$0xff]
      %v267 = vld [vmem:[%s1 + $0x8] sm:$0xff]
      %v268 = vld [vmem:[%s1 + $0x10] sm:$0xff]
      %v269 = vld [vmem:[%s1 + $0x18] sm:$0xff]
      %v270 = vld [vmem:[%s1 + $0x20] sm:$0xff]
      %v271 = vld [vmem:[%s1 + $0x28] sm:$0xff]
      %v272 = vld [vmem:[%s1 + $0x30] sm:$0xff]
      %v273 = vld [vmem:[%s1 + $0x38] sm:$0xff]
      %v274 = vld [vmem:[%s1 + $0x40] sm:$0xff]
      %v275 = vld [vmem:[%s1 + $0x48] sm:$0xff]
      %v276 = vld [vmem:[%s1 + $0x50] sm:$0xff]
      %v277 = vld [vmem:[%s1 + $0x58] sm:$0xff]
      %v278 = vld [vmem:[%s1 + $0x60] sm:$0xff]
      %v279 = vld [vmem:[%s1 + $0x68] sm:$0xff]
      %v280 = vld [vmem:[%s1 + $0x70] sm:$0xff]
      %v281 = vld [vmem:[%s1 + $0x78] sm:$0xff]
      %v282 = vld [vmem:[%s1 + $0x80] sm:$0xff]
      %v283 = vld [vmem:[%s1 + $0x88] sm:$0xff]
      %v284 = vld [vmem:[%s1 + $0x90] sm:$0xff]
      %v285 = vld [vmem:[%s1 + $0x98] sm:$0xff]
      %v286 = vld [vmem:[%s1 + $0xa0] sm:$0xff]
      %v287 = vld [vmem:[%s1 + $0xa8] sm:$0xff]
      %v288 = vld [vmem:[%s1 + $0xb0] sm:$0xff]
      %v289 = vld [vmem:[%s1 + $0xb8] sm:$0xff]
      %v290 = vld [vmem:[%s1 + $0xc0] sm:$0xff]
      %v291 = vld [vmem:[%s1 + $0xc8] sm:$0xff]
      %v292 = vld [vmem:[%s1 + $0xd0] sm:$0xff]
      %v293 = vld [vmem:[%s1 + $0xd8] sm:$0xff]
      %v294 = vld [vmem:[%s1 + $0xe0] sm:$0xff]
      %v295 = vld [vmem:[%s1 + $0xe8] sm:$0xff]
      %v296 = vld [vmem:[%s1 + $0xf0] sm:$0xff]
      %v297 = vld [vmem:[%s1 + $0xf8] sm:$0xff]
      %v298 = vld [vmem:[%s3] sm:$0x3]
      %v300 = vperm.slane %v298, 0
      %v301 = vperm.slane %v298, 1
      %v312 = vunpack.c.l.b16 %v258
      %v313 = vunpack.c.h.b16 %v258
      %v314 = vunpack.c.l.b16 %v259
      %v315 = vunpack.c.h.b16 %v259
      %v316 = vunpack.c.l.b16 %v260
      %v317 = vunpack.c.h.b16 %v260
      %v318 = vunpack.c.l.b16 %v261
      %v319 = vunpack.c.h.b16 %v261
      %v320 = vunpack.c.l.b16 %v262
      %v321 = vunpack.c.h.b16 %v262
      %v322 = vunpack.c.l.b16 %v263
      %v323 = vunpack.c.h.b16 %v263
      %v324 = vunpack.c.l.b16 %v264
      %v325 = vunpack.c.h.b16 %v264
      %v326 = vunpack.c.l.b16 %v265
      %v327 = vunpack.c.h.b16 %v265
      %v328 = vpack.c.b16 %v314, %v312
      %v329 = vpack.c.b16 %v315, %v313
      %v330 = vpack.c.b16 %v318, %v316
      %v331 = vpack.c.b16 %v319, %v317
      %v332 = vpack.c.b16 %v322, %v320
      %v333 = vpack.c.b16 %v323, %v321
      %v334 = vpack.c.b16 %v326, %v324
      %v335 = vpack.c.b16 %v327, %v325
      %v376 = vunpack.c.l.b16 %v266
      %v377 = vunpack.c.h.b16 %v266
      %v378 = vunpack.c.l.b16 %v267
      %v379 = vunpack.c.h.b16 %v267
      %v380 = vunpack.c.l.b16 %v268
      %v381 = vunpack.c.h.b16 %v268
      %v382 = vunpack.c.l.b16 %v269
      %v383 = vunpack.c.h.b16 %v269
      %v384 = vunpack.c.l.b16 %v270
      %v385 = vunpack.c.h.b16 %v270
      %v386 = vunpack.c.l.b16 %v271
      %v387 = vunpack.c.h.b16 %v271
      %v388 = vunpack.c.l.b16 %v272
      %v389 = vunpack.c.h.b16 %v272
      %v390 = vunpack.c.l.b16 %v273
      %v391 = vunpack.c.h.b16 %v273
      %v392 = vunpack.c.l.b16 %v274
      %v393 = vunpack.c.h.b16 %v274
      %v394 = vunpack.c.l.b16 %v275
      %v395 = vunpack.c.h.b16 %v275
      %v396 = vunpack.c.l.b16 %v276
      %v397 = vunpack.c.h.b16 %v276
      %v398 = vunpack.c.l.b16 %v277
      %v399 = vunpack.c.h.b16 %v277
      %v400 = vunpack.c.l.b16 %v278
      %v401 = vunpack.c.h.b16 %v278
      %v402 = vunpack.c.l.b16 %v279
      %v403 = vunpack.c.h.b16 %v279
      %v404 = vunpack.c.l.b16 %v280
      %v405 = vunpack.c.h.b16 %v280
      %v406 = vunpack.c.l.b16 %v281
      %v407 = vunpack.c.h.b16 %v281
      %v408 = vunpack.c.l.b16 %v282
      %v409 = vunpack.c.h.b16 %v282
      %v410 = vunpack.c.l.b16 %v283
      %v411 = vunpack.c.h.b16 %v283
      %v412 = vunpack.c.l.b16 %v284
      %v413 = vunpack.c.h.b16 %v284
      %v414 = vunpack.c.l.b16 %v285
      %v415 = vunpack.c.h.b16 %v285
      %v416 = vunpack.c.l.b16 %v286
      %v417 = vunpack.c.h.b16 %v286
      %v418 = vunpack.c.l.b16 %v287
      %v419 = vunpack.c.h.b16 %v287
      %v420 = vunpack.c.l.b16 %v288
      %v421 = vunpack.c.h.b16 %v288
      %v422 = vunpack.c.l.b16 %v289
      %v423 = vunpack.c.h.b16 %v289
      %v424 = vunpack.c.l.b16 %v290
      %v425 = vunpack.c.h.b16 %v290
      %v426 = vunpack.c.l.b16 %v291
      %v427 = vunpack.c.h.b16 %v291
      %v428 = vunpack.c.l.b16 %v292
      %v429 = vunpack.c.h.b16 %v292
      %v430 = vunpack.c.l.b16 %v293
      %v431 = vunpack.c.h.b16 %v293
      %v432 = vunpack.c.l.b16 %v294
      %v433 = vunpack.c.h.b16 %v294
      %v434 = vunpack.c.l.b16 %v295
      %v435 = vunpack.c.h.b16 %v295
      %v436 = vunpack.c.l.b16 %v296
      %v437 = vunpack.c.h.b16 %v296
      %v438 = vunpack.c.l.b16 %v297
      %v439 = vunpack.c.h.b16 %v297
      %v440 = vpack.c.b16 %v378, %v376
      %v441 = vpack.c.b16 %v379, %v377
      %v442 = vpack.c.b16 %v382, %v380
      %v443 = vpack.c.b16 %v383, %v381
      %v444 = vpack.c.b16 %v386, %v384
      %v445 = vpack.c.b16 %v387, %v385
      %v446 = vpack.c.b16 %v390, %v388
      %v447 = vpack.c.b16 %v391, %v389
      %v448 = vpack.c.b16 %v394, %v392
      %v449 = vpack.c.b16 %v395, %v393
      %v450 = vpack.c.b16 %v398, %v396
      %v451 = vpack.c.b16 %v399, %v397
      %v452 = vpack.c.b16 %v402, %v400
      %v453 = vpack.c.b16 %v403, %v401
      %v454 = vpack.c.b16 %v406, %v404
      %v455 = vpack.c.b16 %v407, %v405
      %v456 = vpack.c.b16 %v410, %v408
      %v457 = vpack.c.b16 %v411, %v409
      %v458 = vpack.c.b16 %v414, %v412
      %v459 = vpack.c.b16 %v415, %v413
      %v460 = vpack.c.b16 %v418, %v416
      %v461 = vpack.c.b16 %v419, %v417
      %v462 = vpack.c.b16 %v422, %v420
      %v463 = vpack.c.b16 %v423, %v421
      %v464 = vpack.c.b16 %v426, %v424
      %v465 = vpack.c.b16 %v427, %v425
      %v466 = vpack.c.b16 %v430, %v428
      %v467 = vpack.c.b16 %v431, %v429
      %v468 = vpack.c.b16 %v434, %v432
      %v469 = vpack.c.b16 %v435, %v433
      %v470 = vpack.c.b16 %v438, %v436
      %v471 = vpack.c.b16 %v439, %v437
      %504 = vmatpush.bf16.msra.mxu0 %v454
      %505 = vmatpush.bf16.msra.mxu0 %v452
      %506 = vmatpush.bf16.msra.mxu0 %v450
      %507 = vmatpush.bf16.msra.mxu0 %v448
      %508 = vmatpush.bf16.msra.mxu0 %v446
      %509 = vmatpush.bf16.msra.mxu0 %v444
      %510 = vmatpush.bf16.msra.mxu0 %v442
      %511 = vmatpush.bf16.msra.mxu0 %v440
      %512 = vmatmul.bf16.gmra.mxu0 %v328
      %v513 = vpop.f32.mrf.mxu0
      %v514 = vadd.f32 %v300, %v513
      %v515 = vpop.f32.mrf.mxu0
      %v516 = vadd.f32 %v300, %v515
      %517 = vmatmul.bf16.gmra.mxu0 %v330
      %v518 = vpop.f32.mrf.mxu0
      %v519 = vadd.f32 %v300, %v518
      %v520 = vpop.f32.mrf.mxu0
      %v521 = vadd.f32 %v300, %v520
      %522 = vmatmul.bf16.gmra.mxu0 %v332
      %v523 = vpop.f32.mrf.mxu0
      %v524 = vadd.f32 %v300, %v523
      %v525 = vpop.f32.mrf.mxu0
      %v526 = vadd.f32 %v300, %v525
      %527 = vmatmul.bf16.gmra.mxu0 %v334
      %v528 = vpop.f32.mrf.mxu0
      %v529 = vadd.f32 %v300, %v528
      %v530 = vpop.f32.mrf.mxu0
      %v531 = vadd.f32 %v300, %v530
      %532 = vdwg.mxu0
      %533 = vmatpush.bf16.msra.mxu0 %v470
      %534 = vmatpush.bf16.msra.mxu0 %v468
      %535 = vmatpush.bf16.msra.mxu0 %v466
      %536 = vmatpush.bf16.msra.mxu0 %v464
      %537 = vmatpush.bf16.msra.mxu0 %v462
      %538 = vmatpush.bf16.msra.mxu0 %v460
      %539 = vmatpush.bf16.msra.mxu0 %v458
      %540 = vmatpush.bf16.msra.mxu0 %v456
      %541 = vmatmul.bf16.gmra.mxu0 %v329
      %v542 = vpop.f32.mrf.mxu0
      %v543 = vadd.f32 %v514, %v542
      %v544 = vpop.f32.mrf.mxu0
      %v545 = vadd.f32 %v516, %v544
      %546 = vmatmul.bf16.gmra.mxu0 %v331
      %v547 = vpop.f32.mrf.mxu0
      %v548 = vadd.f32 %v519, %v547
      %v549 = vpop.f32.mrf.mxu0
      %v550 = vadd.f32 %v521, %v549
      %551 = vmatmul.bf16.gmra.mxu0 %v333
      %v552 = vpop.f32.mrf.mxu0
      %v553 = vadd.f32 %v524, %v552
      %v554 = vpop.f32.mrf.mxu0
      %v555 = vadd.f32 %v526, %v554
      %556 = vmatmul.bf16.gmra.mxu0 %v335
      %v557 = vpop.f32.mrf.mxu0
      %v558 = vadd.f32 %v529, %v557
      %v559 = vpop.f32.mrf.mxu0
      %v560 = vadd.f32 %v531, %v559
      %561 = vdwg.mxu0
      %562 = vmatpush.bf16.msra.mxu0 %v455
      %563 = vmatpush.bf16.msra.mxu0 %v453
      %564 = vmatpush.bf16.msra.mxu0 %v451
      %565 = vmatpush.bf16.msra.mxu0 %v449
      %566 = vmatpush.bf16.msra.mxu0 %v447
      %567 = vmatpush.bf16.msra.mxu0 %v445
      %568 = vmatpush.bf16.msra.mxu0 %v443
      %569 = vmatpush.bf16.msra.mxu0 %v441
      %570 = vmatmul.bf16.gmra.mxu0 %v328
      %v571 = vpop.f32.mrf.mxu0
      %v572 = vadd.f32 %v301, %v571
      %v573 = vpop.f32.mrf.mxu0
      %v574 = vadd.f32 %v301, %v573
      %575 = vmatmul.bf16.gmra.mxu0 %v330
      %v576 = vpop.f32.mrf.mxu0
      %v577 = vadd.f32 %v301, %v576
      %v578 = vpop.f32.mrf.mxu0
      %v579 = vadd.f32 %v301, %v578
      %580 = vmatmul.bf16.gmra.mxu0 %v332
      %v581 = vpop.f32.mrf.mxu0
      %v582 = vadd.f32 %v301, %v581
      %v583 = vpop.f32.mrf.mxu0
      %v584 = vadd.f32 %v301, %v583
      %585 = vmatmul.bf16.gmra.mxu0 %v334
      %v586 = vpop.f32.mrf.mxu0
      %v587 = vadd.f32 %v301, %v586
      %v588 = vpop.f32.mrf.mxu0
      %v589 = vadd.f32 %v301, %v588
      %590 = vdwg.mxu0
      %591 = vmatpush.bf16.msra.mxu0 %v471
      %592 = vmatpush.bf16.msra.mxu0 %v469
      %593 = vmatpush.bf16.msra.mxu0 %v467
      %594 = vmatpush.bf16.msra.mxu0 %v465
      %595 = vmatpush.bf16.msra.mxu0 %v463
      %596 = vmatpush.bf16.msra.mxu0 %v461
      %597 = vmatpush.bf16.msra.mxu0 %v459
      %598 = vmatpush.bf16.msra.mxu0 %v457
      %599 = vmatmul.bf16.gmra.mxu0 %v329
      %v600 = vpop.f32.mrf.mxu0
      %v601 = vadd.f32 %v572, %v600
      %v602 = vpop.f32.mrf.mxu0
      %v603 = vadd.f32 %v574, %v602
      %604 = vmatmul.bf16.gmra.mxu0 %v331
      %v605 = vpop.f32.mrf.mxu0
      %v606 = vadd.f32 %v577, %v605
      %v607 = vpop.f32.mrf.mxu0
      %v608 = vadd.f32 %v579, %v607
      %609 = vmatmul.bf16.gmra.mxu0 %v333
      %v610 = vpop.f32.mrf.mxu0
      %v611 = vadd.f32 %v582, %v610
      %v612 = vpop.f32.mrf.mxu0
      %v613 = vadd.f32 %v584, %v612
      %614 = vmatmul.bf16.gmra.mxu0 %v335
      %v615 = vpop.f32.mrf.mxu0
      %v616 = vadd.f32 %v587, %v615
      %v617 = vpop.f32.mrf.mxu0
      %v618 = vadd.f32 %v589, %v617
      %619 = vdwg.mxu0
      %v620 = vunpack.c.l.bf16 %v258
      %v621 = vunpack.c.h.bf16 %v258
      %v622 = vunpack.c.l.bf16 %v259
      %v623 = vunpack.c.h.bf16 %v259
      %v624 = vunpack.c.l.bf16 %v260
      %v625 = vunpack.c.h.bf16 %v260
      %v626 = vunpack.c.l.bf16 %v261
      %v627 = vunpack.c.h.bf16 %v261
      %v628 = vunpack.c.l.bf16 %v262
      %v629 = vunpack.c.h.bf16 %v262
      %v630 = vunpack.c.l.bf16 %v263
      %v631 = vunpack.c.h.bf16 %v263
      %v632 = vunpack.c.l.bf16 %v264
      %v633 = vunpack.c.h.bf16 %v264
      %v634 = vunpack.c.l.bf16 %v265
      %v635 = vunpack.c.h.bf16 %v265
      %v636 = vmul.f32 %v620, %v620
      %v637 = vmul.f32 %v621, %v621
      %v638 = vmul.f32 %v622, %v622
      %v639 = vmul.f32 %v623, %v623
      %v640 = vmul.f32 %v624, %v624
      %v641 = vmul.f32 %v625, %v625
      %v642 = vmul.f32 %v626, %v626
      %v643 = vmul.f32 %v627, %v627
      %v644 = vmul.f32 %v628, %v628
      %v645 = vmul.f32 %v629, %v629
      %v646 = vmul.f32 %v630, %v630
      %v647 = vmul.f32 %v631, %v631
      %v648 = vmul.f32 %v632, %v632
      %v649 = vmul.f32 %v633, %v633
      %v650 = vmul.f32 %v634, %v634
      %v651 = vmul.f32 %v635, %v635
      %v652 = vpack.c.bf16 %v638, %v636
      %v653 = vpack.c.bf16 %v639, %v637
      %v654 = vpack.c.bf16 %v642, %v640
      %v655 = vpack.c.bf16 %v643, %v641
      %v656 = vpack.c.bf16 %v646, %v644
      %v657 = vpack.c.bf16 %v647, %v645
      %v658 = vpack.c.bf16 %v650, %v648
      %v659 = vpack.c.bf16 %v651, %v649
      %v660 = vld [vmem:[%s2] sm:$0xf]
      %v661 = vld [vmem:[%s2 + $0x4] sm:$0xf]
      %v662 = vld [vmem:[%s2 + $0x8] sm:$0xf]
      %v663 = vld [vmem:[%s2 + $0xc] sm:$0xf]
      %v664 = vld [vmem:[%s2 + $0x10] sm:$0xf]
      %v665 = vld [vmem:[%s2 + $0x14] sm:$0xf]
      %v666 = vld [vmem:[%s2 + $0x18] sm:$0xf]
      %v667 = vld [vmem:[%s2 + $0x1c] sm:$0xf]
      %v668 = vld [vmem:[%s2 + $0x20] sm:$0xf]
      %v669 = vld [vmem:[%s2 + $0x24] sm:$0xf]
      %v670 = vld [vmem:[%s2 + $0x28] sm:$0xf]
      %v671 = vld [vmem:[%s2 + $0x2c] sm:$0xf]
      %v672 = vld [vmem:[%s2 + $0x30] sm:$0xf]
      %v673 = vld [vmem:[%s2 + $0x34] sm:$0xf]
      %v674 = vld [vmem:[%s2 + $0x38] sm:$0xf]
      %v675 = vld [vmem:[%s2 + $0x3c] sm:$0xf]
      %v676 = vld [vmem:[%s2 + $0x40] sm:$0xf]
      %v677 = vld [vmem:[%s2 + $0x44] sm:$0xf]
      %v678 = vld [vmem:[%s2 + $0x48] sm:$0xf]
      %v679 = vld [vmem:[%s2 + $0x4c] sm:$0xf]
      %v680 = vld [vmem:[%s2 + $0x50] sm:$0xf]
      %v681 = vld [vmem:[%s2 + $0x54] sm:$0xf]
      %v682 = vld [vmem:[%s2 + $0x58] sm:$0xf]
      %v683 = vld [vmem:[%s2 + $0x5c] sm:$0xf]
      %v684 = vld [vmem:[%s2 + $0x60] sm:$0xf]
      %v685 = vld [vmem:[%s2 + $0x64] sm:$0xf]
      %v686 = vld [vmem:[%s2 + $0x68] sm:$0xf]
      %v687 = vld [vmem:[%s2 + $0x6c] sm:$0xf]
      %v688 = vld [vmem:[%s2 + $0x70] sm:$0xf]
      %v689 = vld [vmem:[%s2 + $0x74] sm:$0xf]
      %v690 = vld [vmem:[%s2 + $0x78] sm:$0xf]
      %v691 = vld [vmem:[%s2 + $0x7c] sm:$0xf]
      %v724 = vunpack.c.l.b16 %v660
      %v725 = vunpack.c.l.b16 %v661
      %v726 = vunpack.c.l.b16 %v662
      %v727 = vunpack.c.l.b16 %v663
      %v728 = vunpack.c.l.b16 %v664
      %v729 = vunpack.c.l.b16 %v665
      %v730 = vunpack.c.l.b16 %v666
      %v731 = vunpack.c.l.b16 %v667
      %v732 = vunpack.c.l.b16 %v668
      %v733 = vunpack.c.l.b16 %v669
      %v734 = vunpack.c.l.b16 %v670
      %v735 = vunpack.c.l.b16 %v671
      %v736 = vunpack.c.l.b16 %v672
      %v737 = vunpack.c.l.b16 %v673
      %v738 = vunpack.c.l.b16 %v674
      %v739 = vunpack.c.l.b16 %v675
      %v740 = vunpack.c.l.b16 %v676
      %v741 = vunpack.c.l.b16 %v677
      %v742 = vunpack.c.l.b16 %v678
      %v743 = vunpack.c.l.b16 %v679
      %v744 = vunpack.c.l.b16 %v680
      %v745 = vunpack.c.l.b16 %v681
      %v746 = vunpack.c.l.b16 %v682
      %v747 = vunpack.c.l.b16 %v683
      %v748 = vunpack.c.l.b16 %v684
      %v749 = vunpack.c.l.b16 %v685
      %v750 = vunpack.c.l.b16 %v686
      %v751 = vunpack.c.l.b16 %v687
      %v752 = vunpack.c.l.b16 %v688
      %v753 = vunpack.c.l.b16 %v689
      %v754 = vunpack.c.l.b16 %v690
      %v755 = vunpack.c.l.b16 %v691
      %v756 = vpack.c.b16 %v725, %v724
      %v757 = vpack.c.b16 %v727, %v726
      %v758 = vpack.c.b16 %v729, %v728
      %v759 = vpack.c.b16 %v731, %v730
      %v760 = vpack.c.b16 %v733, %v732
      %v761 = vpack.c.b16 %v735, %v734
      %v762 = vpack.c.b16 %v737, %v736
      %v763 = vpack.c.b16 %v739, %v738
      %v764 = vpack.c.b16 %v741, %v740
      %v765 = vpack.c.b16 %v743, %v742
      %v766 = vpack.c.b16 %v745, %v744
      %v767 = vpack.c.b16 %v747, %v746
      %v768 = vpack.c.b16 %v749, %v748
      %v769 = vpack.c.b16 %v751, %v750
      %v770 = vpack.c.b16 %v753, %v752
      %v771 = vpack.c.b16 %v755, %v754
      %788 = vmatpush.bf16.msra.mxu0 %v763
      %789 = vmatpush.bf16.msra.mxu0 %v762
      %790 = vmatpush.bf16.msra.mxu0 %v761
      %791 = vmatpush.bf16.msra.mxu0 %v760
      %792 = vmatpush.bf16.msra.mxu0 %v759
      %793 = vmatpush.bf16.msra.mxu0 %v758
      %794 = vmatpush.bf16.msra.mxu0 %v757
      %795 = vmatpush.bf16.msra.mxu0 %v756
      %796 = vmatmul.bf16.gmra.mxu0 %v652
      %v797 = vpop.f32.mrf.mxu0
      %v798 = vadd.f32 0.0, %v797
      %v799 = vpop.f32.mrf.mxu0
      %v800 = vadd.f32 0.0, %v799
      %801 = vmatmul.bf16.gmra.mxu0 %v654
      %v802 = vpop.f32.mrf.mxu0
      %v803 = vadd.f32 0.0, %v802
      %v804 = vpop.f32.mrf.mxu0
      %v805 = vadd.f32 0.0, %v804
      %806 = vmatmul.bf16.gmra.mxu0 %v656
      %v807 = vpop.f32.mrf.mxu0
      %v808 = vadd.f32 0.0, %v807
      %v809 = vpop.f32.mrf.mxu0
      %v810 = vadd.f32 0.0, %v809
      %811 = vmatmul.bf16.gmra.mxu0 %v658
      %v812 = vpop.f32.mrf.mxu0
      %v813 = vadd.f32 0.0, %v812
      %v814 = vpop.f32.mrf.mxu0
      %v815 = vadd.f32 0.0, %v814
      %816 = vdwg.mxu0
      %817 = vmatpush.bf16.msra.mxu0 %v771
      %818 = vmatpush.bf16.msra.mxu0 %v770
      %819 = vmatpush.bf16.msra.mxu0 %v769
      %820 = vmatpush.bf16.msra.mxu0 %v768
      %821 = vmatpush.bf16.msra.mxu0 %v767
      %822 = vmatpush.bf16.msra.mxu0 %v766
      %823 = vmatpush.bf16.msra.mxu0 %v765
      %824 = vmatpush.bf16.msra.mxu0 %v764
      %825 = vmatmul.bf16.gmra.mxu0 %v653
      %v826 = vpop.f32.mrf.mxu0
      %v827 = vadd.f32 %v798, %v826
      %v828 = vpop.f32.mrf.mxu0
      %v829 = vadd.f32 %v800, %v828
      %830 = vmatmul.bf16.gmra.mxu0 %v655
      %v831 = vpop.f32.mrf.mxu0
      %v832 = vadd.f32 %v803, %v831
      %v833 = vpop.f32.mrf.mxu0
      %v834 = vadd.f32 %v805, %v833
      %835 = vmatmul.bf16.gmra.mxu0 %v657
      %v836 = vpop.f32.mrf.mxu0
      %v837 = vadd.f32 %v808, %v836
      %v838 = vpop.f32.mrf.mxu0
      %v839 = vadd.f32 %v810, %v838
      %840 = vmatmul.bf16.gmra.mxu0 %v659
      %v841 = vpop.f32.mrf.mxu0
      %v842 = vadd.f32 %v813, %v841
      %v843 = vpop.f32.mrf.mxu0
      %v844 = vadd.f32 %v815, %v843
      %845 = vdwg.mxu0
      %v846 = vmul.f32 %v543, %v601
      %v847 = vmul.f32 %v545, %v603
      %v848 = vmul.f32 %v548, %v606
      %v849 = vmul.f32 %v550, %v608
      %v850 = vmul.f32 %v553, %v611
      %v851 = vmul.f32 %v555, %v613
      %v852 = vmul.f32 %v558, %v616
      %v853 = vmul.f32 %v560, %v618
      %v854 = vadd.f32 %v846, %v827
      %v855 = vadd.f32 %v847, %v829
      %v856 = vadd.f32 %v848, %v832
      %v857 = vadd.f32 %v849, %v834
      %v858 = vadd.f32 %v850, %v837
      %v859 = vadd.f32 %v851, %v839
      %v860 = vadd.f32 %v852, %v842
      %v861 = vadd.f32 %v853, %v844
      %v862 = vld [vmem:[%s4] sm:$0x1]
      %v864 = vperm.slane %v862, 0
      %v866 = vmul.f32 %v854, %v864
      %v867 = vmul.f32 %v855, %v864
      %v868 = vmul.f32 %v856, %v864
      %v869 = vmul.f32 %v857, %v864
      %v870 = vmul.f32 %v858, %v864
      %v871 = vmul.f32 %v859, %v864
      %v872 = vmul.f32 %v860, %v864
      %v873 = vmul.f32 %v861, %v864
      %v874 = vld [vmem:[%s5] sm:$0x1]
      %v876 = vperm.slane %v874, 0
      %v878 = vadd.f32 %v866, %v876
      %v879 = vadd.f32 %v867, %v876
      %v880 = vadd.f32 %v868, %v876
      %v881 = vadd.f32 %v869, %v876
      %v882 = vadd.f32 %v870, %v876
      %v883 = vadd.f32 %v871, %v876
      %v884 = vadd.f32 %v872, %v876
      %v885 = vadd.f32 %v873, %v876
      %v886 = vmax.f32 %v878, 0.0
      %v887 = vmax.f32 %v879, 0.0
      %v888 = vmax.f32 %v880, 0.0
      %v889 = vmax.f32 %v881, 0.0
      %v890 = vmax.f32 %v882, 0.0
      %v891 = vmax.f32 %v883, 0.0
      %v892 = vmax.f32 %v884, 0.0
      %v893 = vmax.f32 %v885, 0.0
      %vm894 = vcmask 261120
      %895 = vst.msk [vmem:[%s256] sm:$0xff] %vm894, %v886
      %896 = vst.msk [vmem:[%s256 + $0x8] sm:$0xff] %vm894, %v887
      %897 = vst.msk [vmem:[%s256 + $0x10] sm:$0xff] %vm894, %v888
      %898 = vst.msk [vmem:[%s256 + $0x18] sm:$0xff] %vm894, %v889
      %899 = vst.msk [vmem:[%s256 + $0x20] sm:$0xff] %vm894, %v890
      %900 = vst.msk [vmem:[%s256 + $0x28] sm:$0xff] %vm894, %v891
      %901 = vst.msk [vmem:[%s256 + $0x30] sm:$0xff] %vm894, %v892
      %902 = vst.msk [vmem:[%s256 + $0x38] sm:$0xff] %vm894, %v893
      %s903 = smul.u32 8, %s17
      %p904 = scmp.lt.s32.totalorder %s903, 15
      %s905 = scalar_select %p904, %s903, 15
      %s906 = smul.addr %s905, 8
      %s907 = scalar_lea.vmem %s6, %s906
      // Predicated region
      $region45: #{_lambda_.11} parent=43 // pred_check
        %p908 = pneg %p166
      $region46: #{_lambda_.11} parent=43 // pred_check_branch
        %910 = sbr.rel (%p908) target = $region48
      $region47: #{_lambda_.11} parent=43 // pred_region
        %s911 = smul.u32 8, %s17
      $region48: #{_lambda_.11} parent=43 // pred_fallthru
        _
    $region44: #{_lambda_.11} parent=5 // pred_fallthru
      _
    %p912 = scmp.le.s32.totalorder 2, %s12
    // Predicated region
    $region49: #{_lambda_.11} parent=5 // pred_check
      %p913 = pneg %p912
    $region50: #{_lambda_.11} parent=5 // pred_check_branch
      %915 = sbr.rel (%p913) target = $region52
    $region51: #{_lambda_.11} parent=5 // pred_region
      %s916 = ssub.s32 %s12, 2
      // Predicated region
      $region53: #{_lambda_.11} parent=51 // pred_check
        %p917 = pneg %p172
      $region54: #{_lambda_.11} parent=51 // pred_check_branch
        %919 = sbr.rel (%p917) target = $region56
      $region55: #{_lambda_.11} parent=51 // pred_region
        %s920 = smul.u32 8, %s18
        %p921 = scmp.lt.s32.totalorder %s920, 15
        %s922 = scalar_select %p921, %s920, 15
        %s923 = smul.addr %s922, 8
        %s924 = scalar_lea.vmem %s6, %s923
      $region56: #{_lambda_.11} parent=51 // pred_fallthru
        _
    $region52: #{_lambda_.11} parent=5 // pred_fallthru
      _
  $region6: #{_lambda_.11} parent=0 // loop_footer
    %s16 = sadd.s32 1, %s12
  $region7: #{_lambda_.11} parent=0 // loop_footer_branch
    %11 = sbr.rel target = $region3
  $region8: #{_lambda_.11} parent=0 // loop_exit
    _

// kernel: _lambda_.12
$region0: #{_lambda_.12}
  #allocation0 [shape = 'u32[]', space=smem, size = 0x4, offset = 0x4, fixed_abs, tag = 'smem constant byte address 0x4 - core index']
  #allocation1 [shape = 'u32[72,128]{1,0:T(1,128)}', space=vmem, size = 0x9000, scoped, tag = 'internal scratch']
  %s0 = inlined_call_operand.vmem [shape: bf16[128,384], index: 0, kind: input, shape index: {}]
  %s1 = inlined_call_operand.vmem [shape: bf16[384,256], index: 1, kind: input, shape index: {}]
  %s2 = inlined_call_operand.vmem [shape: bf16[384,128], index: 2, kind: input, shape index: {}]
  %s3 = inlined_call_operand.vmem [shape: f32[1,256], index: 3, kind: input, shape index: {}]
  %s4 = inlined_call_operand.vmem [shape: f32[1,128], index: 4, kind: input, shape index: {}]
  %s5 = inlined_call_operand.vmem [shape: f32[1,128], index: 5, kind: input, shape index: {}]
  %s6 = inlined_call_operand.vmem [shape: f32[128,32], index: 6, kind: input, shape index: {}]
  %s7 = inlined_call_operand.vmem [shape: f32[128,32], index: 7, kind: output, shape index: {}]
  %s8 = sld [smem:[#allocation0]]
  $region61: #{_lambda_.12} parent=0
    _
  %s10 = ssub.s32 1, %s8
  %s11 = scalar_select 0, %s10, %s8
  loop: start=0, step=1, limit=4
  $region2: #{_lambda_.12} parent=0 // loop_pre_header
    _
  $region3: #{_lambda_.12} parent=0 // loop_header
    %s13 = sphi 0, %s17
    %p14 = scmp.ge.s32.totalorder %s13, 4
    %s23 = sphi 0, %s25
    %s26 = sphi 0, %s23
    %s27 = sphi 0, %s26
    %s43 = sphi 0, %s27
    %s47 = sphi 0, %s47
    %s49 = sphi 0, %s47
    %s50 = sphi 0, %s49
    %s64 = sphi 0, %s50
    %s68 = sphi 0, %s68
    %s70 = sphi 0, %s68
    %s71 = sphi 0, %s70
    %s85 = sphi 0, %s71
    %s89 = sphi 0, %s89
    %s91 = sphi 0, %s89
    %s92 = sphi 0, %s91
    %s106 = sphi 0, %s92
    %s110 = sphi 0, %s110
    %s112 = sphi 0, %s110
    %s113 = sphi 0, %s112
    %s127 = sphi 0, %s113
    %s131 = sphi 0, %s131
    %s133 = sphi 0, %s131
    %s134 = sphi 0, %s133
    %s148 = sphi 0, %s134
    %s154 = sphi 0, %s156
    %s157 = sphi 0, %s154
    %s158 = sphi 0, %s157
    %s174 = sphi 0, %s158
    %s180 = sphi 0, %s182
    %s183 = sphi 0, %s180
    %s184 = sphi 0, %s183
    %s200 = sphi 0, %s184
  $region4: #{_lambda_.12} parent=0 // loop_header_branch
    %16 = sbr.rel (%p14) target = $region8
  $region5: #{_lambda_.12} parent=0 // loop_body
    %s18 = ssub.s32 %s13, 1
    %s19 = ssub.s32 %s13, 2
    %s20 = sadd.s32 %s13, 1
    %s21 = ssub.s32 %s13, %s20
    %p22 = scmp.eq.s32.totalorder %s21, 0
    %s24 = sadd.s32 %s23, 1
    %s25 = scalar_select %p22, %s23, %s24
    %p28 = pneg %p22
    %p29 = scmp.eq.s32.totalorder %s13, 1
    %p30 = por %p28, %p29
    %p31 = scmp.ne.s32.totalorder %s23, %s26
    %p32 = scmp.eq.s32.totalorder %s13, 0
    %p33 = por %p31, %p32
    %p34 = scmp.ne.s32.totalorder %s23, %s26
    %p35 = scmp.eq.s32.totalorder %s18, 1
    %p36 = por %p34, %p35
    %p37 = scmp.ne.s32.totalorder %s26, %s27
    %p38 = scmp.eq.s32.totalorder %s18, 0
    %p39 = por %p37, %p38
    %p40 = scmp.ne.s32.totalorder %s26, %s27
    %p41 = scmp.eq.s32.totalorder %s19, 1
    %p42 = por %p40, %p41
    %p44 = scmp.ne.s32.totalorder %s27, %s43
    %p45 = scmp.eq.s32.totalorder %s19, 0
    %p46 = por %p44, %p45
    %s48 = sadd.s32 %s47, 1
    %p51 = scmp.eq.s32.totalorder %s13, 1
    %p52 = scmp.ne.s32.totalorder %s47, %s49
    %p53 = scmp.eq.s32.totalorder %s13, 0
    %p54 = por %p52, %p53
    %p55 = scmp.ne.s32.totalorder %s47, %s49
    %p56 = scmp.eq.s32.totalorder %s18, 1
    %p57 = por %p55, %p56
    %p58 = scmp.ne.s32.totalorder %s49, %s50
    %p59 = scmp.eq.s32.totalorder %s18, 0
    %p60 = por %p58, %p59
    %p61 = scmp.ne.s32.totalorder %s49, %s50
    %p62 = scmp.eq.s32.totalorder %s19, 1
    %p63 = por %p61, %p62
    %p65 = scmp.ne.s32.totalorder %s50, %s64
    %p66 = scmp.eq.s32.totalorder %s19, 0
    %p67 = por %p65, %p66
    %s69 = sadd.s32 %s68, 1
    %p72 = scmp.eq.s32.totalorder %s13, 1
    %p73 = scmp.ne.s32.totalorder %s68, %s70
    %p74 = scmp.eq.s32.totalorder %s13, 0
    %p75 = por %p73, %p74
    %p76 = scmp.ne.s32.totalorder %s68, %s70
    %p77 = scmp.eq.s32.totalorder %s18, 1
    %p78 = por %p76, %p77
    %p79 = scmp.ne.s32.totalorder %s70, %s71
    %p80 = scmp.eq.s32.totalorder %s18, 0
    %p81 = por %p79, %p80
    %p82 = scmp.ne.s32.totalorder %s70, %s71
    %p83 = scmp.eq.s32.totalorder %s19, 1
    %p84 = por %p82, %p83
    %p86 = scmp.ne.s32.totalorder %s71, %s85
    %p87 = scmp.eq.s32.totalorder %s19, 0
    %p88 = por %p86, %p87
    %s90 = sadd.s32 %s89, 1
    %p93 = scmp.eq.s32.totalorder %s13, 1
    %p94 = scmp.ne.s32.totalorder %s89, %s91
    %p95 = scmp.eq.s32.totalorder %s13, 0
    %p96 = por %p94, %p95
    %p97 = scmp.ne.s32.totalorder %s89, %s91
    %p98 = scmp.eq.s32.totalorder %s18, 1
    %p99 = por %p97, %p98
    %p100 = scmp.ne.s32.totalorder %s91, %s92
    %p101 = scmp.eq.s32.totalorder %s18, 0
    %p102 = por %p100, %p101
    %p103 = scmp.ne.s32.totalorder %s91, %s92
    %p104 = scmp.eq.s32.totalorder %s19, 1
    %p105 = por %p103, %p104
    %p107 = scmp.ne.s32.totalorder %s92, %s106
    %p108 = scmp.eq.s32.totalorder %s19, 0
    %p109 = por %p107, %p108
    %s111 = sadd.s32 %s110, 1
    %p114 = scmp.eq.s32.totalorder %s13, 1
    %p115 = scmp.ne.s32.totalorder %s110, %s112
    %p116 = scmp.eq.s32.totalorder %s13, 0
    %p117 = por %p115, %p116
    %p118 = scmp.ne.s32.totalorder %s110, %s112
    %p119 = scmp.eq.s32.totalorder %s18, 1
    %p120 = por %p118, %p119
    %p121 = scmp.ne.s32.totalorder %s112, %s113
    %p122 = scmp.eq.s32.totalorder %s18, 0
    %p123 = por %p121, %p122
    %p124 = scmp.ne.s32.totalorder %s112, %s113
    %p125 = scmp.eq.s32.totalorder %s19, 1
    %p126 = por %p124, %p125
    %p128 = scmp.ne.s32.totalorder %s113, %s127
    %p129 = scmp.eq.s32.totalorder %s19, 0
    %p130 = por %p128, %p129
    %s132 = sadd.s32 %s131, 1
    %p135 = scmp.eq.s32.totalorder %s13, 1
    %p136 = scmp.ne.s32.totalorder %s131, %s133
    %p137 = scmp.eq.s32.totalorder %s13, 0
    %p138 = por %p136, %p137
    %p139 = scmp.ne.s32.totalorder %s131, %s133
    %p140 = scmp.eq.s32.totalorder %s18, 1
    %p141 = por %p139, %p140
    %p142 = scmp.ne.s32.totalorder %s133, %s134
    %p143 = scmp.eq.s32.totalorder %s18, 0
    %p144 = por %p142, %p143
    %p145 = scmp.ne.s32.totalorder %s133, %s134
    %p146 = scmp.eq.s32.totalorder %s19, 1
    %p147 = por %p145, %p146
    %p149 = scmp.ne.s32.totalorder %s134, %s148
    %p150 = scmp.eq.s32.totalorder %s19, 0
    %p151 = por %p149, %p150
    %s152 = ssub.s32 %s13, %s20
    %p153 = scmp.eq.s32.totalorder %s152, 0
    %s155 = sadd.s32 %s154, 1
    %s156 = scalar_select %p153, %s154, %s155
    %p159 = pneg %p153
    %p160 = scmp.eq.s32.totalorder %s13, 1
    %p161 = por %p159, %p160
    %p162 = scmp.ne.s32.totalorder %s154, %s157
    %p163 = scmp.eq.s32.totalorder %s13, 0
    %p164 = por %p162, %p163
    %p165 = scmp.ne.s32.totalorder %s154, %s157
    %p166 = scmp.eq.s32.totalorder %s18, 1
    %p167 = por %p165, %p166
    %p168 = scmp.ne.s32.totalorder %s157, %s158
    %p169 = scmp.eq.s32.totalorder %s18, 0
    %p170 = por %p168, %p169
    %p171 = scmp.ne.s32.totalorder %s157, %s158
    %p172 = scmp.eq.s32.totalorder %s19, 1
    %p173 = por %p171, %p172
    %p175 = scmp.ne.s32.totalorder %s158, %s174
    %p176 = scmp.eq.s32.totalorder %s19, 0
    %p177 = por %p175, %p176
    %s178 = ssub.s32 %s13, %s20
    %p179 = scmp.eq.s32.totalorder %s178, 0
    %s181 = sadd.s32 %s180, 1
    %s182 = scalar_select %p179, %s180, %s181
    %p185 = pneg %p179
    %p186 = scmp.eq.s32.totalorder %s13, 1
    %p187 = por %p185, %p186
    %p188 = scmp.ne.s32.totalorder %s180, %s183
    %p189 = scmp.eq.s32.totalorder %s13, 0
    %p190 = por %p188, %p189
    %p191 = scmp.ne.s32.totalorder %s180, %s183
    %p192 = scmp.eq.s32.totalorder %s18, 1
    %p193 = por %p191, %p192
    %p194 = scmp.ne.s32.totalorder %s183, %s184
    %p195 = scmp.eq.s32.totalorder %s18, 0
    %p196 = por %p194, %p195
    %p197 = scmp.ne.s32.totalorder %s183, %s184
    %p198 = scmp.eq.s32.totalorder %s19, 1
    %p199 = por %p197, %p198
    %p201 = scmp.ne.s32.totalorder %s184, %s200
    %p202 = scmp.eq.s32.totalorder %s19, 0
    %p203 = por %p201, %p202
    %p204 = scmp.le.s32.totalorder 1, %s13
    %p205 = scmp.lt.s32.totalorder %s13, 3
    %p206 = pnand %p204, %p205
    %p207 = pneg %p206
    // Predicated region
    $region9: #{_lambda_.12} parent=5 // pred_check
      _
    $region10: #{_lambda_.12} parent=5 // pred_check_branch
      %209 = sbr.rel (%p206) target = $region12
    $region11: #{_lambda_.12} parent=5 // pred_region
      %s210 = ssub.s32 %s13, 1
      // Predicated region
      $region13: #{_lambda_.12} parent=11 // pred_check
        %p211 = pneg %p60
      $region14: #{_lambda_.12} parent=11 // pred_check_branch
        %213 = sbr.rel (%p211) target = $region16
      $region15: #{_lambda_.12} parent=11 // pred_region
        _
      $region16: #{_lambda_.12} parent=11 // pred_fallthru
        _
      // Predicated region
      $region17: #{_lambda_.12} parent=11 // pred_check
        %p214 = pneg %p81
      $region18: #{_lambda_.12} parent=11 // pred_check_branch
        %216 = sbr.rel (%p214) target = $region20
      $region19: #{_lambda_.12} parent=11 // pred_region
        _
      $region20: #{_lambda_.12} parent=11 // pred_fallthru
        _
      // Predicated region
      $region21: #{_lambda_.12} parent=11 // pred_check
        %p217 = pneg %p102
      $region22: #{_lambda_.12} parent=11 // pred_check_branch
        %219 = sbr.rel (%p217) target = $region24
      $region23: #{_lambda_.12} parent=11 // pred_region
        _
      $region24: #{_lambda_.12} parent=11 // pred_fallthru
        _
      // Predicated region
      $region25: #{_lambda_.12} parent=11 // pred_check
        %p220 = pneg %p123
      $region26: #{_lambda_.12} parent=11 // pred_check_branch
        %222 = sbr.rel (%p220) target = $region28
      $region27: #{_lambda_.12} parent=11 // pred_region
        _
      $region28: #{_lambda_.12} parent=11 // pred_fallthru
        _
      // Predicated region
      $region29: #{_lambda_.12} parent=11 // pred_check
        %p223 = pneg %p144
      $region30: #{_lambda_.12} parent=11 // pred_check_branch
        %225 = sbr.rel (%p223) target = $region32
      $region31: #{_lambda_.12} parent=11 // pred_region
        _
      $region32: #{_lambda_.12} parent=11 // pred_fallthru
        _
    $region12: #{_lambda_.12} parent=5 // pred_fallthru
      _
    %p226 = scmp.lt.s32.totalorder %s13, 2
    // Predicated region
    $region33: #{_lambda_.12} parent=5 // pred_check
      %p227 = pneg %p226
    $region34: #{_lambda_.12} parent=5 // pred_check_branch
      %229 = sbr.rel (%p227) target = $region36
    $region35: #{_lambda_.12} parent=5 // pred_region
      // Predicated region
      $region37: #{_lambda_.12} parent=35 // pred_check
        %p230 = pneg %p33
      $region38: #{_lambda_.12} parent=35 // pred_check_branch
        %232 = sbr.rel (%p230) target = $region40
      $region39: #{_lambda_.12} parent=35 // pred_region
        %s233 = smul.u32 8, %s13
        %p234 = scmp.lt.s32.totalorder %s233, 15
        %s235 = scalar_select %p234, %s233, 15
        %s236 = smul.addr %s235, 3
        %s237 = smul.addr %s236, 4
        %s238 = scalar_lea.vmem %s0, %s237
        %s239 = smul.u32 8, %s13
      $region40: #{_lambda_.12} parent=35 // pred_fallthru
        _
      // Predicated region
      $region41: #{_lambda_.12} parent=35 // pred_check
        %p240 = pneg %p164
      $region42: #{_lambda_.12} parent=35 // pred_check_branch
        %242 = sbr.rel (%p240) target = $region44
      $region43: #{_lambda_.12} parent=35 // pred_region
        %s243 = smul.u32 8, %s13
        %p244 = scmp.lt.s32.totalorder %s243, 15
        %s245 = scalar_select %p244, %s243, 15
        %s246 = smul.addr %s245, 8
        %s247 = scalar_lea.vmem %s6, %s246
        %s248 = smul.u32 8, %s13
      $region44: #{_lambda_.12} parent=35 // pred_fallthru
        _
    $region36: #{_lambda_.12} parent=5 // pred_fallthru
      _
    %p249 = scmp.le.s32.totalorder 1, %s13
    %p250 = scmp.lt.s32.totalorder %s13, 3
    %p251 = pnand %p249, %p250
    %p252 = pneg %p251
    // Predicated region
    $region45: #{_lambda_.12} parent=5 // pred_check
      _
    $region46: #{_lambda_.12} parent=5 // pred_check_branch
      %254 = sbr.rel (%p251) target = $region48
    $region47: #{_lambda_.12} parent=5 // pred_region
      %s255 = ssub.s32 %s13, 1
      %s256 = smul.u32 8, %s18
      %p257 = scmp.lt.s32.totalorder %s256, 15
      %s258 = scalar_select %p257, %s256, 15
      %s259 = smul.addr %s258, 3
      %s260 = smul.addr %s259, 4
      %s261 = scalar_lea.vmem %s0, %s260
      %p262 = pneg %p39
      %p263 = pneg %p36
      %p264 = pneg %p60
      %p265 = pneg %p57
      %p266 = pneg %p81
      %p267 = pneg %p78
      %p268 = pneg %p102
      %p269 = pneg %p99
      %p270 = pneg %p123
      %p271 = pneg %p120
      %p272 = pneg %p144
      %p273 = pneg %p141
      %s274 = smul.u32 8, %s18
      %p275 = scmp.lt.s32.totalorder %s274, 15
      %s276 = scalar_select %p275, %s274, 15
      %s277 = smul.addr %s276, 8
      %s278 = scalar_lea.vmem %s6, %s277
      %p279 = pneg %p170
      %p280 = pneg %p167
      %p281 = pneg %p196
      %p282 = pneg %p193
      %s283 = smul.u32 8, %s18
      %p284 = scmp.lt.s32.totalorder %s283, 15
      %s285 = scalar_select %p284, %s283, 15
      %s286 = smul.addr %s285, 8
      %s287 = scalar_lea.vmem %s7, %s286
      %s288 = smul.u32 8, %s18
      %p289 = scmp.lt.s32.totalorder %s288, 15
      %s290 = scalar_select %p289, %s288, 15
      %s291 = smul.addr %s290, 3
      %s292 = smul.addr %s291, 4
      %s293 = scalar_lea.vmem %s0, %s292
      %s294 = smul.u32 8, %s18
      %s295 = smul.u32 8, %s18
      %p296 = scmp.lt.s32.totalorder %s295, 15
      %s297 = scalar_select %p296, %s295, 15
      %s298 = smul.addr %s297, 8
      %s299 = scalar_lea.vmem %s6, %s298
      %s300 = smul.u32 8, %s18
      %s301 = smul.u32 8, %s18
      %p302 = scmp.lt.s32.totalorder %s301, 15
      %s303 = scalar_select %p302, %s301, 15
      %s304 = smul.addr %s303, 8
      %s305 = scalar_lea.vmem %s7, %s304
      %s306 = smul.u32 8, %s18
      %v307 = vld [vmem:[%s293] sm:$0xff]
      %v308 = vld [vmem:[%s293 + $0x8] sm:$0xf]
      %v309 = vld [vmem:[%s293 + $0xc] sm:$0xff]
      %v310 = vld [vmem:[%s293 + $0x14] sm:$0xf]
      %v311 = vld [vmem:[%s293 + $0x18] sm:$0xff]
      %v312 = vld [vmem:[%s293 + $0x20] sm:$0xf]
      %v313 = vld [vmem:[%s293 + $0x24] sm:$0xff]
      %v314 = vld [vmem:[%s293 + $0x2c] sm:$0xf]
      %v315 = vld [vmem:[%s293 + $0x30] sm:$0xff]
      %v316 = vld [vmem:[%s293 + $0x38] sm:$0xf]
      %v317 = vld [vmem:[%s293 + $0x3c] sm:$0xff]
      %v318 = vld [vmem:[%s293 + $0x44] sm:$0xf]
      %v319 = vld [vmem:[%s293 + $0x48] sm:$0xff]
      %v320 = vld [vmem:[%s293 + $0x50] sm:$0xf]
      %v321 = vld [vmem:[%s293 + $0x54] sm:$0xff]
      %v322 = vld [vmem:[%s293 + $0x5c] sm:$0xf]
      %v323 = vld [vmem:[%s1] sm:$0xff]
      %v324 = vld [vmem:[%s1 + $0x8] sm:$0xff]
      %v325 = vld [vmem:[%s1 + $0x10] sm:$0xff]
      %v326 = vld [vmem:[%s1 + $0x18] sm:$0xff]
      %v327 = vld [vmem:[%s1 + $0x20] sm:$0xff]
      %v328 = vld [vmem:[%s1 + $0x28] sm:$0xff]
      %v329 = vld [vmem:[%s1 + $0x30] sm:$0xff]
      %v330 = vld [vmem:[%s1 + $0x38] sm:$0xff]
      %v331 = vld [vmem:[%s1 + $0x40] sm:$0xff]
      %v332 = vld [vmem:[%s1 + $0x48] sm:$0xff]
      %v333 = vld [vmem:[%s1 + $0x50] sm:$0xff]
      %v334 = vld [vmem:[%s1 + $0x58] sm:$0xff]
      %v335 = vld [vmem:[%s1 + $0x60] sm:$0xff]
      %v336 = vld [vmem:[%s1 + $0x68] sm:$0xff]
      %v337 = vld [vmem:[%s1 + $0x70] sm:$0xff]
      %v338 = vld [vmem:[%s1 + $0x78] sm:$0xff]
      %v339 = vld [vmem:[%s1 + $0x80] sm:$0xff]
      %v340 = vld [vmem:[%s1 + $0x88] sm:$0xff]
      %v341 = vld [vmem:[%s1 + $0x90] sm:$0xff]
      %v342 = vld [vmem:[%s1 + $0x98] sm:$0xff]
      %v343 = vld [vmem:[%s1 + $0xa0] sm:$0xff]
      %v344 = vld [vmem:[%s1 + $0xa8] sm:$0xff]
      %v345 = vld [vmem:[%s1 + $0xb0] sm:$0xff]
      %v346 = vld [vmem:[%s1 + $0xb8] sm:$0xff]
      %v347 = vld [vmem:[%s1 + $0xc0] sm:$0xff]
      %v348 = vld [vmem:[%s1 + $0xc8] sm:$0xff]
      %v349 = vld [vmem:[%s1 + $0xd0] sm:$0xff]
      %v350 = vld [vmem:[%s1 + $0xd8] sm:$0xff]
      %v351 = vld [vmem:[%s1 + $0xe0] sm:$0xff]
      %v352 = vld [vmem:[%s1 + $0xe8] sm:$0xff]
      %v353 = vld [vmem:[%s1 + $0xf0] sm:$0xff]
      %v354 = vld [vmem:[%s1 + $0xf8] sm:$0xff]
      %v355 = vld [vmem:[%s1 + $0x100] sm:$0xff]
      %v356 = vld [vmem:[%s1 + $0x108] sm:$0xff]
      %v357 = vld [vmem:[%s1 + $0x110] sm:$0xff]
      %v358 = vld [vmem:[%s1 + $0x118] sm:$0xff]
      %v359 = vld [vmem:[%s1 + $0x120] sm:$0xff]
      %v360 = vld [vmem:[%s1 + $0x128] sm:$0xff]
      %v361 = vld [vmem:[%s1 + $0x130] sm:$0xff]
      %v362 = vld [vmem:[%s1 + $0x138] sm:$0xff]
      %v363 = vld [vmem:[%s1 + $0x140] sm:$0xff]
      %v364 = vld [vmem:[%s1 + $0x148] sm:$0xff]
      %v365 = vld [vmem:[%s1 + $0x150] sm:$0xff]
      %v366 = vld [vmem:[%s1 + $0x158] sm:$0xff]
      %v367 = vld [vmem:[%s1 + $0x160] sm:$0xff]
      %v368 = vld [vmem:[%s1 + $0x168] sm:$0xff]
      %v369 = vld [vmem:[%s1 + $0x170] sm:$0xff]
      %v370 = vld [vmem:[%s1 + $0x178] sm:$0xff]
      %v371 = vld [vmem:[%s3] sm:$0x3]
      %v373 = vperm.slane %v371, 0
      %v374 = vperm.slane %v371, 1
      %v393 = vunpack.c.l.b16 %v307
      %v394 = vunpack.c.h.b16 %v307
      %v395 = vunpack.c.l.b16 %v308
      %v396 = vunpack.c.l.b16 %v309
      %v397 = vunpack.c.h.b16 %v309
      %v398 = vunpack.c.l.b16 %v310
      %v399 = vunpack.c.l.b16 %v311
      %v400 = vunpack.c.h.b16 %v311
      %v401 = vunpack.c.l.b16 %v312
      %v402 = vunpack.c.l.b16 %v313
      %v403 = vunpack.c.h.b16 %v313
      %v404 = vunpack.c.l.b16 %v314
      %v405 = vunpack.c.l.b16 %v315
      %v406 = vunpack.c.h.b16 %v315
      %v407 = vunpack.c.l.b16 %v316
      %v408 = vunpack.c.l.b16 %v317
      %v409 = vunpack.c.h.b16 %v317
      %v410 = vunpack.c.l.b16 %v318
      %v411 = vunpack.c.l.b16 %v319
      %v412 = vunpack.c.h.b16 %v319
      %v413 = vunpack.c.l.b16 %v320
      %v414 = vunpack.c.l.b16 %v321
      %v415 = vunpack.c.h.b16 %v321
      %v416 = vunpack.c.l.b16 %v322
      %v417 = vpack.c.b16 %v396, %v393
      %v418 = vpack.c.b16 %v397, %v394
      %v419 = vpack.c.b16 %v398, %v395
      %v420 = vpack.c.b16 %v402, %v399
      %v421 = vpack.c.b16 %v403, %v400
      %v422 = vpack.c.b16 %v404, %v401
      %v423 = vpack.c.b16 %v408, %v405
      %v424 = vpack.c.b16 %v409, %v406
      %v425 = vpack.c.b16 %v410, %v407
      %v426 = vpack.c.b16 %v414, %v411
      %v427 = vpack.c.b16 %v415, %v412
      %v428 = vpack.c.b16 %v416, %v413
      %v489 = vunpack.c.l.b16 %v323
      %v490 = vunpack.c.h.b16 %v323
      %v491 = vunpack.c.l.b16 %v324
      %v492 = vunpack.c.h.b16 %v324
      %v493 = vunpack.c.l.b16 %v325
      %v494 = vunpack.c.h.b16 %v325
      %v495 = vunpack.c.l.b16 %v326
      %v496 = vunpack.c.h.b16 %v326
      %v497 = vunpack.c.l.b16 %v327
      %v498 = vunpack.c.h.b16 %v327
      %v499 = vunpack.c.l.b16 %v328
      %v500 = vunpack.c.h.b16 %v328
      %v501 = vunpack.c.l.b16 %v329
      %v502 = vunpack.c.h.b16 %v329
      %v503 = vunpack.c.l.b16 %v330
      %v504 = vunpack.c.h.b16 %v330
      %v505 = vunpack.c.l.b16 %v331
      %v506 = vunpack.c.h.b16 %v331
      %v507 = vunpack.c.l.b16 %v332
      %v508 = vunpack.c.h.b16 %v332
      %v509 = vunpack.c.l.b16 %v333
      %v510 = vunpack.c.h.b16 %v333
      %v511 = vunpack.c.l.b16 %v334
      %v512 = vunpack.c.h.b16 %v334
      %v513 = vunpack.c.l.b16 %v335
      %v514 = vunpack.c.h.b16 %v335
      %v515 = vunpack.c.l.b16 %v336
      %v516 = vunpack.c.h.b16 %v336
      %v517 = vunpack.c.l.b16 %v337
      %v518 = vunpack.c.h.b16 %v337
      %v519 = vunpack.c.l.b16 %v338
      %v520 = vunpack.c.h.b16 %v338
      %v521 = vunpack.c.l.b16 %v339
      %v522 = vunpack.c.h.b16 %v339
      %v523 = vunpack.c.l.b16 %v340
      %v524 = vunpack.c.h.b16 %v340
      %v525 = vunpack.c.l.b16 %v341
      %v526 = vunpack.c.h.b16 %v341
      %v527 = vunpack.c.l.b16 %v342
      %v528 = vunpack.c.h.b16 %v342
      %v529 = vunpack.c.l.b16 %v343
      %v530 = vunpack.c.h.b16 %v343
      %v531 = vunpack.c.l.b16 %v344
      %v532 = vunpack.c.h.b16 %v344
      %v533 = vunpack.c.l.b16 %v345
      %v534 = vunpack.c.h.b16 %v345
      %v535 = vunpack.c.l.b16 %v346
      %v536 = vunpack.c.h.b16 %v346
      %v537 = vunpack.c.l.b16 %v347
      %v538 = vunpack.c.h.b16 %v347
      %v539 = vunpack.c.l.b16 %v348
      %v540 = vunpack.c.h.b16 %v348
      %v541 = vunpack.c.l.b16 %v349
      %v542 = vunpack.c.h.b16 %v349
      %v543 = vunpack.c.l.b16 %v350
      %v544 = vunpack.c.h.b16 %v350
      %v545 = vunpack.c.l.b16 %v351
      %v546 = vunpack.c.h.b16 %v351
      %v547 = vunpack.c.l.b16 %v352
      %v548 = vunpack.c.h.b16 %v352
      %v549 = vunpack.c.l.b16 %v353
      %v550 = vunpack.c.h.b16 %v353
      %v551 = vunpack.c.l.b16 %v354
      %v552 = vunpack.c.h.b16 %v354
      %v553 = vunpack.c.l.b16 %v355
      %v554 = vunpack.c.h.b16 %v355
      %v555 = vunpack.c.l.b16 %v356
      %v556 = vunpack.c.h.b16 %v356
      %v557 = vunpack.c.l.b16 %v357
      %v558 = vunpack.c.h.b16 %v357
      %v559 = vunpack.c.l.b16 %v358
      %v560 = vunpack.c.h.b16 %v358
      %v561 = vunpack.c.l.b16 %v359
      %v562 = vunpack.c.h.b16 %v359
      %v563 = vunpack.c.l.b16 %v360
      %v564 = vunpack.c.h.b16 %v360
      %v565 = vunpack.c.l.b16 %v361
      %v566 = vunpack.c.h.b16 %v361
      %v567 = vunpack.c.l.b16 %v362
      %v568 = vunpack.c.h.b16 %v362
      %v569 = vunpack.c.l.b16 %v363
      %v570 = vunpack.c.h.b16 %v363
      %v571 = vunpack.c.l.b16 %v364
      %v572 = vunpack.c.h.b16 %v364
      %v573 = vunpack.c.l.b16 %v365
      %v574 = vunpack.c.h.b16 %v365
      %v575 = vunpack.c.l.b16 %v366
      %v576 = vunpack.c.h.b16 %v366
      %v577 = vunpack.c.l.b16 %v367
      %v578 = vunpack.c.h.b16 %v367
      %v579 = vunpack.c.l.b16 %v368
      %v580 = vunpack.c.h.b16 %v368
      %v581 = vunpack.c.l.b16 %v369
      %v582 = vunpack.c.h.b16 %v369
      %v583 = vunpack.c.l.b16 %v370
      %v584 = vunpack.c.h.b16 %v370
      %v585 = vpack.c.b16 %v491, %v489
      %v586 = vpack.c.b16 %v492, %v490
      %v587 = vpack.c.b16 %v495, %v493
      %v588 = vpack.c.b16 %v496, %v494
      %v589 = vpack.c.b16 %v499, %v497
      %v590 = vpack.c.b16 %v500, %v498
      %v591 = vpack.c.b16 %v503, %v501
      %v592 = vpack.c.b16 %v504, %v502
      %v593 = vpack.c.b16 %v507, %v505
      %v594 = vpack.c.b16 %v508, %v506
      %v595 = vpack.c.b16 %v511, %v509
      %v596 = vpack.c.b16 %v512, %v510
      %v597 = vpack.c.b16 %v515, %v513
      %v598 = vpack.c.b16 %v516, %v514
      %v599 = vpack.c.b16 %v519, %v517
      %v600 = vpack.c.b16 %v520, %v518
      %v601 = vpack.c.b16 %v523, %v521
      %v602 = vpack.c.b16 %v524, %v522
      %v603 = vpack.c.b16 %v527, %v525
      %v604 = vpack.c.b16 %v528, %v526
      %v605 = vpack.c.b16 %v531, %v529
      %v606 = vpack.c.b16 %v532, %v530
      %v607 = vpack.c.b16 %v535, %v533
      %v608 = vpack.c.b16 %v536, %v534
      %v609 = vpack.c.b16 %v539, %v537
      %v610 = vpack.c.b16 %v540, %v538
      %v611 = vpack.c.b16 %v543, %v541
      %v612 = vpack.c.b16 %v544, %v542
      %v613 = vpack.c.b16 %v547, %v545
      %v614 = vpack.c.b16 %v548, %v546
      %v615 = vpack.c.b16 %v551, %v549
      %v616 = vpack.c.b16 %v552, %v550
      %v617 = vpack.c.b16 %v555, %v553
      %v618 = vpack.c.b16 %v556, %v554
      %v619 = vpack.c.b16 %v559, %v557
      %v620 = vpack.c.b16 %v560, %v558
      %v621 = vpack.c.b16 %v563, %v561
      %v622 = vpack.c.b16 %v564, %v562
      %v623 = vpack.c.b16 %v567, %v565
      %v624 = vpack.c.b16 %v568, %v566
      %v625 = vpack.c.b16 %v571, %v569
      %v626 = vpack.c.b16 %v572, %v570
      %v627 = vpack.c.b16 %v575, %v573
      %v628 = vpack.c.b16 %v576, %v574
      %v629 = vpack.c.b16 %v579, %v577
      %v630 = vpack.c.b16 %v580, %v578
      %v631 = vpack.c.b16 %v583, %v581
      %v632 = vpack.c.b16 %v584, %v582
      %681 = vmatpush.bf16.msra.mxu0 %v599
      %682 = vmatpush.bf16.msra.mxu0 %v597
      %683 = vmatpush.bf16.msra.mxu0 %v595
      %684 = vmatpush.bf16.msra.mxu0 %v593
      %685 = vmatpush.bf16.msra.mxu0 %v591
      %686 = vmatpush.bf16.msra.mxu0 %v589
      %687 = vmatpush.bf16.msra.mxu0 %v587
      %688 = vmatpush.bf16.msra.mxu0 %v585
      %689 = vmatmul.bf16.gmra.mxu0 %v417
      %v690 = vpop.f32.mrf.mxu0
      %v691 = vadd.f32 %v373, %v690
      %v692 = vpop.f32.mrf.mxu0
      %v693 = vadd.f32 %v373, %v692
      %694 = vmatmul.bf16.gmra.mxu0 %v420
      %v695 = vpop.f32.mrf.mxu0
      %v696 = vadd.f32 %v373, %v695
      %v697 = vpop.f32.mrf.mxu0
      %v698 = vadd.f32 %v373, %v697
      %699 = vmatmul.bf16.gmra.mxu0 %v423
      %v700 = vpop.f32.mrf.mxu0
      %v701 = vadd.f32 %v373, %v700
      %v702 = vpop.f32.mrf.mxu0
      %v703 = vadd.f32 %v373, %v702
      %704 = vmatmul.bf16.gmra.mxu0 %v426
      %v705 = vpop.f32.mrf.mxu0
      %v706 = vadd.f32 %v373, %v705
      %v707 = vpop.f32.mrf.mxu0
      %v708 = vadd.f32 %v373, %v707
      %709 = vdwg.mxu0
      %710 = vmatpush.bf16.msra.mxu0 %v615
      %711 = vmatpush.bf16.msra.mxu0 %v613
      %712 = vmatpush.bf16.msra.mxu0 %v611
      %713 = vmatpush.bf16.msra.mxu0 %v609
      %714 = vmatpush.bf16.msra.mxu0 %v607
      %715 = vmatpush.bf16.msra.mxu0 %v605
      %716 = vmatpush.bf16.msra.mxu0 %v603
      %717 = vmatpush.bf16.msra.mxu0 %v601
      %718 = vmatmul.bf16.gmra.mxu0 %v418
      %v719 = vpop.f32.mrf.mxu0
      %v720 = vadd.f32 %v691, %v719
      %v721 = vpop.f32.mrf.mxu0
      %v722 = vadd.f32 %v693, %v721
      %723 = vmatmul.bf16.gmra.mxu0 %v421
      %v724 = vpop.f32.mrf.mxu0
      %v725 = vadd.f32 %v696, %v724
      %v726 = vpop.f32.mrf.mxu0
      %v727 = vadd.f32 %v698, %v726
      %728 = vmatmul.bf16.gmra.mxu0 %v424
      %v729 = vpop.f32.mrf.mxu0
      %v730 = vadd.f32 %v701, %v729
      %v731 = vpop.f32.mrf.mxu0
      %v732 = vadd.f32 %v703, %v731
      %733 = vmatmul.bf16.gmra.mxu0 %v427
      %v734 = vpop.f32.mrf.mxu0
      %v735 = vadd.f32 %v706, %v734
      %v736 = vpop.f32.mrf.mxu0
      %v737 = vadd.f32 %v708, %v736
      %738 = vdwg.mxu0
      %739 = vmatpush.bf16.msra.mxu0 %v631
      %740 = vmatpush.bf16.msra.mxu0 %v629
      %741 = vmatpush.bf16.msra.mxu0 %v627
      %742 = vmatpush.bf16.msra.mxu0 %v625
      %743 = vmatpush.bf16.msra.mxu0 %v623
      %744 = vmatpush.bf16.msra.mxu0 %v621
      %745 = vmatpush.bf16.msra.mxu0 %v619
      %746 = vmatpush.bf16.msra.mxu0 %v617
      %747 = vmatmul.bf16.gmra.mxu0 %v419
      %v748 = vpop.f32.mrf.mxu0
      %v749 = vadd.f32 %v720, %v748
      %v750 = vpop.f32.mrf.mxu0
      %v751 = vadd.f32 %v722, %v750
      %752 = vmatmul.bf16.gmra.mxu0 %v422
      %v753 = vpop.f32.mrf.mxu0
      %v754 = vadd.f32 %v725, %v753
      %v755 = vpop.f32.mrf.mxu0
      %v756 = vadd.f32 %v727, %v755
      %757 = vmatmul.bf16.gmra.mxu0 %v425
      %v758 = vpop.f32.mrf.mxu0
      %v759 = vadd.f32 %v730, %v758
      %v760 = vpop.f32.mrf.mxu0
      %v761 = vadd.f32 %v732, %v760
      %762 = vmatmul.bf16.gmra.mxu0 %v428
      %v763 = vpop.f32.mrf.mxu0
      %v764 = vadd.f32 %v735, %v763
      %v765 = vpop.f32.mrf.mxu0
      %v766 = vadd.f32 %v737, %v765
      %767 = vdwg.mxu0
      %768 = vmatpush.bf16.msra.mxu0 %v600
      %769 = vmatpush.bf16.msra.mxu0 %v598
      %770 = vmatpush.bf16.msra.mxu0 %v596
      %771 = vmatpush.bf16.msra.mxu0 %v594
      %772 = vmatpush.bf16.msra.mxu0 %v592
      %773 = vmatpush.bf16.msra.mxu0 %v590
      %774 = vmatpush.bf16.msra.mxu0 %v588
      %775 = vmatpush.bf16.msra.mxu0 %v586
      %776 = vmatmul.bf16.gmra.mxu0 %v417
      %v777 = vpop.f32.mrf.mxu0
      %v778 = vadd.f32 %v374, %v777
      %v779 = vpop.f32.mrf.mxu0
      %v780 = vadd.f32 %v374, %v779
      %781 = vmatmul.bf16.gmra.mxu0 %v420
      %v782 = vpop.f32.mrf.mxu0
      %v783 = vadd.f32 %v374, %v782
      %v784 = vpop.f32.mrf.mxu0
      %v785 = vadd.f32 %v374, %v784
      %786 = vmatmul.bf16.gmra.mxu0 %v423
      %v787 = vpop.f32.mrf.mxu0
      %v788 = vadd.f32 %v374, %v787
      %v789 = vpop.f32.mrf.mxu0
      %v790 = vadd.f32 %v374, %v789
      %791 = vmatmul.bf16.gmra.mxu0 %v426
      %v792 = vpop.f32.mrf.mxu0
      %v793 = vadd.f32 %v374, %v792
      %v794 = vpop.f32.mrf.mxu0
      %v795 = vadd.f32 %v374, %v794
      %796 = vdwg.mxu0
      %797 = vmatpush.bf16.msra.mxu0 %v616
      %798 = vmatpush.bf16.msra.mxu0 %v614
      %799 = vmatpush.bf16.msra.mxu0 %v612
      %800 = vmatpush.bf16.msra.mxu0 %v610
      %801 = vmatpush.bf16.msra.mxu0 %v608
      %802 = vmatpush.bf16.msra.mxu0 %v606
      %803 = vmatpush.bf16.msra.mxu0 %v604
      %804 = vmatpush.bf16.msra.mxu0 %v602
      %805 = vmatmul.bf16.gmra.mxu0 %v418
      %v806 = vpop.f32.mrf.mxu0
      %v807 = vadd.f32 %v778, %v806
      %v808 = vpop.f32.mrf.mxu0
      %v809 = vadd.f32 %v780, %v808
      %810 = vmatmul.bf16.gmra.mxu0 %v421
      %v811 = vpop.f32.mrf.mxu0
      %v812 = vadd.f32 %v783, %v811
      %v813 = vpop.f32.mrf.mxu0
      %v814 = vadd.f32 %v785, %v813
      %815 = vmatmul.bf16.gmra.mxu0 %v424
      %v816 = vpop.f32.mrf.mxu0
      %v817 = vadd.f32 %v788, %v816
      %v818 = vpop.f32.mrf.mxu0
      %v819 = vadd.f32 %v790, %v818
      %820 = vmatmul.bf16.gmra.mxu0 %v427
      %v821 = vpop.f32.mrf.mxu0
      %v822 = vadd.f32 %v793, %v821
      %v823 = vpop.f32.mrf.mxu0
      %v824 = vadd.f32 %v795, %v823
      %825 = vdwg.mxu0
      %826 = vmatpush.bf16.msra.mxu0 %v632
      %827 = vmatpush.bf16.msra.mxu0 %v630
      %828 = vmatpush.bf16.msra.mxu0 %v628
      %829 = vmatpush.bf16.msra.mxu0 %v626
      %830 = vmatpush.bf16.msra.mxu0 %v624
      %831 = vmatpush.bf16.msra.mxu0 %v622
      %832 = vmatpush.bf16.msra.mxu0 %v620
      %833 = vmatpush.bf16.msra.mxu0 %v618
      %834 = vmatmul.bf16.gmra.mxu0 %v419
      %v835 = vpop.f32.mrf.mxu0
      %v836 = vadd.f32 %v807, %v835
      %v837 = vpop.f32.mrf.mxu0
      %v838 = vadd.f32 %v809, %v837
      %839 = vmatmul.bf16.gmra.mxu0 %v422
      %v840 = vpop.f32.mrf.mxu0
      %v841 = vadd.f32 %v812, %v840
      %v842 = vpop.f32.mrf.mxu0
      %v843 = vadd.f32 %v814, %v842
      %844 = vmatmul.bf16.gmra.mxu0 %v425
      %v845 = vpop.f32.mrf.mxu0
      %v846 = vadd.f32 %v817, %v845
      %v847 = vpop.f32.mrf.mxu0
      %v848 = vadd.f32 %v819, %v847
      %849 = vmatmul.bf16.gmra.mxu0 %v428
      %v850 = vpop.f32.mrf.mxu0
      %v851 = vadd.f32 %v822, %v850
      %v852 = vpop.f32.mrf.mxu0
      %v853 = vadd.f32 %v824, %v852
      %854 = vdwg.mxu0
      %v855 = vunpack.c.l.bf16 %v307
      %v856 = vunpack.c.h.bf16 %v307
      %v857 = vunpack.c.l.bf16 %v308
      %v858 = vunpack.c.l.bf16 %v309
      %v859 = vunpack.c.h.bf16 %v309
      %v860 = vunpack.c.l.bf16 %v310
      %v861 = vunpack.c.l.bf16 %v311
      %v862 = vunpack.c.h.bf16 %v311
      %v863 = vunpack.c.l.bf16 %v312
      %v864 = vunpack.c.l.bf16 %v313
      %v865 = vunpack.c.h.bf16 %v313
      %v866 = vunpack.c.l.bf16 %v314
      %v867 = vunpack.c.l.bf16 %v315
      %v868 = vunpack.c.h.bf16 %v315
      %v869 = vunpack.c.l.bf16 %v316
      %v870 = vunpack.c.l.bf16 %v317
      %v871 = vunpack.c.h.bf16 %v317
      %v872 = vunpack.c.l.bf16 %v318
      %v873 = vunpack.c.l.bf16 %v319
      %v874 = vunpack.c.h.bf16 %v319
      %v875 = vunpack.c.l.bf16 %v320
      %v876 = vunpack.c.l.bf16 %v321
      %v877 = vunpack.c.h.bf16 %v321
      %v878 = vunpack.c.l.bf16 %v322
      %v879 = vmul.f32 %v855, %v855
      %v880 = vmul.f32 %v856, %v856
      %v881 = vmul.f32 %v857, %v857
      %v882 = vmul.f32 %v858, %v858
      %v883 = vmul.f32 %v859, %v859
      %v884 = vmul.f32 %v860, %v860
      %v885 = vmul.f32 %v861, %v861
      %v886 = vmul.f32 %v862, %v862
      %v887 = vmul.f32 %v863, %v863
      %v888 = vmul.f32 %v864, %v864
      %v889 = vmul.f32 %v865, %v865
      %v890 = vmul.f32 %v866, %v866
      %v891 = vmul.f32 %v867, %v867
      %v892 = vmul.f32 %v868, %v868
      %v893 = vmul.f32 %v869, %v869
      %v894 = vmul.f32 %v870, %v870
      %v895 = vmul.f32 %v871, %v871
      %v896 = vmul.f32 %v872, %v872
      %v897 = vmul.f32 %v873, %v873
      %v898 = vmul.f32 %v874, %v874
      %v899 = vmul.f32 %v875, %v875
      %v900 = vmul.f32 %v876, %v876
      %v901 = vmul.f32 %v877, %v877
      %v902 = vmul.f32 %v878, %v878
      %v903 = vpack.c.bf16 %v882, %v879
      %v904 = vpack.c.bf16 %v883, %v880
      %v905 = vpack.c.bf16 %v884, %v881
      %v906 = vpack.c.bf16 %v888, %v885
      %v907 = vpack.c.bf16 %v889, %v886
      %v908 = vpack.c.bf16 %v890, %v887
      %v909 = vpack.c.bf16 %v894, %v891
      %v910 = vpack.c.bf16 %v895, %v892
      %v911 = vpack.c.bf16 %v896, %v893
      %v912 = vpack.c.bf16 %v900, %v897
      %v913 = vpack.c.bf16 %v901, %v898
      %v914 = vpack.c.bf16 %v902, %v899
      %v915 = vld [vmem:[%s2] sm:$0xf]
      %v916 = vld [vmem:[%s2 + $0x4] sm:$0xf]
      %v917 = vld [vmem:[%s2 + $0x8] sm:$0xf]
      %v918 = vld [vmem:[%s2 + $0xc] sm:$0xf]
      %v919 = vld [vmem:[%s2 + $0x10] sm:$0xf]
      %v920 = vld [vmem:[%s2 + $0x14] sm:$0xf]
      %v921 = vld [vmem:[%s2 + $0x18] sm:$0xf]
      %v922 = vld [vmem:[%s2 + $0x1c] sm:$0xf]
      %v923 = vld [vmem:[%s2 + $0x20] sm:$0xf]
      %v924 = vld [vmem:[%s2 + $0x24] sm:$0xf]
      %v925 = vld [vmem:[%s2 + $0x28] sm:$0xf]
      %v926 = vld [vmem:[%s2 + $0x2c] sm:$0xf]
      %v927 = vld [vmem:[%s2 + $0x30] sm:$0xf]
      %v928 = vld [vmem:[%s2 + $0x34] sm:$0xf]
      %v929 = vld [vmem:[%s2 + $0x38] sm:$0xf]
      %v930 = vld [vmem:[%s2 + $0x3c] sm:$0xf]
      %v931 = vld [vmem:[%s2 + $0x40] sm:$0xf]
      %v932 = vld [vmem:[%s2 + $0x44] sm:$0xf]
      %v933 = vld [vmem:[%s2 + $0x48] sm:$0xf]
      %v934 = vld [vmem:[%s2 + $0x4c] sm:$0xf]
      %v935 = vld [vmem:[%s2 + $0x50] sm:$0xf]
      %v936 = vld [vmem:[%s2 + $0x54] sm:$0xf]
      %v937 = vld [vmem:[%s2 + $0x58] sm:$0xf]
      %v938 = vld [vmem:[%s2 + $0x5c] sm:$0xf]
      %v939 = vld [vmem:[%s2 + $0x60] sm:$0xf]
      %v940 = vld [vmem:[%s2 + $0x64] sm:$0xf]
      %v941 = vld [vmem:[%s2 + $0x68] sm:$0xf]
      %v942 = vld [vmem:[%s2 + $0x6c] sm:$0xf]
      %v943 = vld [vmem:[%s2 + $0x70] sm:$0xf]
      %v944 = vld [vmem:[%s2 + $0x74] sm:$0xf]
      %v945 = vld [vmem:[%s2 + $0x78] sm:$0xf]
      %v946 = vld [vmem:[%s2 + $0x7c] sm:$0xf]
      %v947 = vld [vmem:[%s2 + $0x80] sm:$0xf]
      %v948 = vld [vmem:[%s2 + $0x84] sm:$0xf]
      %v949 = vld [vmem:[%s2 + $0x88] sm:$0xf]
      %v950 = vld [vmem:[%s2 + $0x8c] sm:$0xf]
      %v951 = vld [vmem:[%s2 + $0x90] sm:$0xf]
      %v952 = vld [vmem:[%s2 + $0x94] sm:$0xf]
      %v953 = vld [vmem:[%s2 + $0x98] sm:$0xf]
      %v954 = vld [vmem:[%s2 + $0x9c] sm:$0xf]
      %v955 = vld [vmem:[%s2 + $0xa0] sm:$0xf]
      %v956 = vld [vmem:[%s2 + $0xa4] sm:$0xf]
      %v957 = vld [vmem:[%s2 + $0xa8] sm:$0xf]
      %v958 = vld [vmem:[%s2 + $0xac] sm:$0xf]
      %v959 = vld [vmem:[%s2 + $0xb0] sm:$0xf]
      %v960 = vld [vmem:[%s2 + $0xb4] sm:$0xf]
      %v961 = vld [vmem:[%s2 + $0xb8] sm:$0xf]
      %v962 = vld [vmem:[%s2 + $0xbc] sm:$0xf]
      %v1011 = vunpack.c.l.b16 %v915
      %v1012 = vunpack.c.l.b16 %v916
      %v1013 = vunpack.c.l.b16 %v917
      %v1014 = vunpack.c.l.b16 %v918
      %v1015 = vunpack.c.l.b16 %v919
      %v1016 = vunpack.c.l.b16 %v920
      %v1017 = vunpack.c.l.b16 %v921
      %v1018 = vunpack.c.l.b16 %v922
      %v1019 = vunpack.c.l.b16 %v923
      %v1020 = vunpack.c.l.b16 %v924
      %v1021 = vunpack.c.l.b16 %v925
      %v1022 = vunpack.c.l.b16 %v926
      %v1023 = vunpack.c.l.b16 %v927
      %v1024 = vunpack.c.l.b16 %v928
      %v1025 = vunpack.c.l.b16 %v929
      %v1026 = vunpack.c.l.b16 %v930
      %v1027 = vunpack.c.l.b16 %v931
      %v1028 = vunpack.c.l.b16 %v932
      %v1029 = vunpack.c.l.b16 %v933
      %v1030 = vunpack.c.l.b16 %v934
      %v1031 = vunpack.c.l.b16 %v935
      %v1032 = vunpack.c.l.b16 %v936
      %v1033 = vunpack.c.l.b16 %v937
      %v1034 = vunpack.c.l.b16 %v938
      %v1035 = vunpack.c.l.b16 %v939
      %v1036 = vunpack.c.l.b16 %v940
      %v1037 = vunpack.c.l.b16 %v941
      %v1038 = vunpack.c.l.b16 %v942
      %v1039 = vunpack.c.l.b16 %v943
      %v1040 = vunpack.c.l.b16 %v944
      %v1041 = vunpack.c.l.b16 %v945
      %v1042 = vunpack.c.l.b16 %v946
      %v1043 = vunpack.c.l.b16 %v947
      %v1044 = vunpack.c.l.b16 %v948
      %v1045 = vunpack.c.l.b16 %v949
      %v1046 = vunpack.c.l.b16 %v950
      %v1047 = vunpack.c.l.b16 %v951
      %v1048 = vunpack.c.l.b16 %v952
      %v1049 = vunpack.c.l.b16 %v953
      %v1050 = vunpack.c.l.b16 %v954
      %v1051 = vunpack.c.l.b16 %v955
      %v1052 = vunpack.c.l.b16 %v956
      %v1053 = vunpack.c.l.b16 %v957
      %v1054 = vunpack.c.l.b16 %v958
      %v1055 = vunpack.c.l.b16 %v959
      %v1056 = vunpack.c.l.b16 %v960
      %v1057 = vunpack.c.l.b16 %v961
      %v1058 = vunpack.c.l.b16 %v962
      %v1059 = vpack.c.b16 %v1012, %v1011
      %v1060 = vpack.c.b16 %v1014, %v1013
      %v1061 = vpack.c.b16 %v1016, %v1015
      %v1062 = vpack.c.b16 %v1018, %v1017
      %v1063 = vpack.c.b16 %v1020, %v1019
      %v1064 = vpack.c.b16 %v1022, %v1021
      %v1065 = vpack.c.b16 %v1024, %v1023
      %v1066 = vpack.c.b16 %v1026, %v1025
      %v1067 = vpack.c.b16 %v1028, %v1027
      %v1068 = vpack.c.b16 %v1030, %v1029
      %v1069 = vpack.c.b16 %v1032, %v1031
      %v1070 = vpack.c.b16 %v1034, %v1033
      %v1071 = vpack.c.b16 %v1036, %v1035
      %v1072 = vpack.c.b16 %v1038, %v1037
      %v1073 = vpack.c.b16 %v1040, %v1039
      %v1074 = vpack.c.b16 %v1042, %v1041
      %v1075 = vpack.c.b16 %v1044, %v1043
      %v1076 = vpack.c.b16 %v1046, %v1045
      %v1077 = vpack.c.b16 %v1048, %v1047
      %v1078 = vpack.c.b16 %v1050, %v1049
      %v1079 = vpack.c.b16 %v1052, %v1051
      %v1080 = vpack.c.b16 %v1054, %v1053
      %v1081 = vpack.c.b16 %v1056, %v1055
      %v1082 = vpack.c.b16 %v1058, %v1057
      %1107 = vmatpush.bf16.msra.mxu0 %v1066
      %1108 = vmatpush.bf16.msra.mxu0 %v1065
      %1109 = vmatpush.bf16.msra.mxu0 %v1064
      %1110 = vmatpush.bf16.msra.mxu0 %v1063
      %1111 = vmatpush.bf16.msra.mxu0 %v1062
      %1112 = vmatpush.bf16.msra.mxu0 %v1061
      %1113 = vmatpush.bf16.msra.mxu0 %v1060
      %1114 = vmatpush.bf16.msra.mxu0 %v1059
      %1115 = vmatmul.bf16.gmra.mxu0 %v903
      %v1116 = vpop.f32.mrf.mxu0
      %v1117 = vadd.f32 0.0, %v1116
      %v1118 = vpop.f32.mrf.mxu0
      %v1119 = vadd.f32 0.0, %v1118
      %1120 = vmatmul.bf16.gmra.mxu0 %v906
      %v1121 = vpop.f32.mrf.mxu0
      %v1122 = vadd.f32 0.0, %v1121
      %v1123 = vpop.f32.mrf.mxu0
      %v1124 = vadd.f32 0.0, %v1123
      %1125 = vmatmul.bf16.gmra.mxu0 %v909
      %v1126 = vpop.f32.mrf.mxu0
      %v1127 = vadd.f32 0.0, %v1126
      %v1128 = vpop.f32.mrf.mxu0
      %v1129 = vadd.f32 0.0, %v1128
      %1130 = vmatmul.bf16.gmra.mxu0 %v912
      %v1131 = vpop.f32.mrf.mxu0
      %v1132 = vadd.f32 0.0, %v1131
      %v1133 = vpop.f32.mrf.mxu0
      %v1134 = vadd.f32 0.0, %v1133
      %1135 = vdwg.mxu0
      %1136 = vmatpush.bf16.msra.mxu0 %v1074
      %1137 = vmatpush.bf16.msra.mxu0 %v1073
      %1138 = vmatpush.bf16.msra.mxu0 %v1072
      %1139 = vmatpush.bf16.msra.mxu0 %v1071
      %1140 = vmatpush.bf16.msra.mxu0 %v1070
      %1141 = vmatpush.bf16.msra.mxu0 %v1069
      %1142 = vmatpush.bf16.msra.mxu0 %v1068
      %1143 = vmatpush.bf16.msra.mxu0 %v1067
      %1144 = vmatmul.bf16.gmra.mxu0 %v904
      %v1145 = vpop.f32.mrf.mxu0
      %v1146 = vadd.f32 %v1117, %v1145
      %v1147 = vpop.f32.mrf.mxu0
      %v1148 = vadd.f32 %v1119, %v1147
      %1149 = vmatmul.bf16.gmra.mxu0 %v907
      %v1150 = vpop.f32.mrf.mxu0
      %v1151 = vadd.f32 %v1122, %v1150
      %v1152 = vpop.f32.mrf.mxu0
      %v1153 = vadd.f32 %v1124, %v1152
      %1154 = vmatmul.bf16.gmra.mxu0 %v910
      %v1155 = vpop.f32.mrf.mxu0
      %v1156 = vadd.f32 %v1127, %v1155
      %v1157 = vpop.f32.mrf.mxu0
      %v1158 = vadd.f32 %v1129, %v1157
      %1159 = vmatmul.bf16.gmra.mxu0 %v913
      %v1160 = vpop.f32.mrf.mxu0
      %v1161 = vadd.f32 %v1132, %v1160
      %v1162 = vpop.f32.mrf.mxu0
      %v1163 = vadd.f32 %v1134, %v1162
      %1164 = vdwg.mxu0
      %1165 = vmatpush.bf16.msra.mxu0 %v1082
      %1166 = vmatpush.bf16.msra.mxu0 %v1081
      %1167 = vmatpush.bf16.msra.mxu0 %v1080
      %1168 = vmatpush.bf16.msra.mxu0 %v1079
      %1169 = vmatpush.bf16.msra.mxu0 %v1078
      %1170 = vmatpush.bf16.msra.mxu0 %v1077
      %1171 = vmatpush.bf16.msra.mxu0 %v1076
      %1172 = vmatpush.bf16.msra.mxu0 %v1075
      %1173 = vmatmul.bf16.gmra.mxu0 %v905
      %v1174 = vpop.f32.mrf.mxu0
      %v1175 = vadd.f32 %v1146, %v1174
      %v1176 = vpop.f32.mrf.mxu0
      %v1177 = vadd.f32 %v1148, %v1176
      %1178 = vmatmul.bf16.gmra.mxu0 %v908
      %v1179 = vpop.f32.mrf.mxu0
      %v1180 = vadd.f32 %v1151, %v1179
      %v1181 = vpop.f32.mrf.mxu0
      %v1182 = vadd.f32 %v1153, %v1181
      %1183 = vmatmul.bf16.gmra.mxu0 %v911
      %v1184 = vpop.f32.mrf.mxu0
      %v1185 = vadd.f32 %v1156, %v1184
      %v1186 = vpop.f32.mrf.mxu0
      %v1187 = vadd.f32 %v1158, %v1186
      %1188 = vmatmul.bf16.gmra.mxu0 %v914
      %v1189 = vpop.f32.mrf.mxu0
      %v1190 = vadd.f32 %v1161, %v1189
      %v1191 = vpop.f32.mrf.mxu0
      %v1192 = vadd.f32 %v1163, %v1191
      %1193 = vdwg.mxu0
      %v1194 = vmul.f32 %v749, %v836
      %v1195 = vmul.f32 %v751, %v838
      %v1196 = vmul.f32 %v754, %v841
      %v1197 = vmul.f32 %v756, %v843
      %v1198 = vmul.f32 %v759, %v846
      %v1199 = vmul.f32 %v761, %v848
      %v1200 = vmul.f32 %v764, %v851
      %v1201 = vmul.f32 %v766, %v853
      %v1202 = vadd.f32 %v1194, %v1175
      %v1203 = vadd.f32 %v1195, %v1177
      %v1204 = vadd.f32 %v1196, %v1180
      %v1205 = vadd.f32 %v1197, %v1182
      %v1206 = vadd.f32 %v1198, %v1185
      %v1207 = vadd.f32 %v1199, %v1187
      %v1208 = vadd.f32 %v1200, %v1190
      %v1209 = vadd.f32 %v1201, %v1192
      %v1210 = vld [vmem:[%s4] sm:$0x1]
      %v1212 = vperm.slane %v1210, 0
      %v1214 = vmul.f32 %v1202, %v1212
      %v1215 = vmul.f32 %v1203, %v1212
      %v1216 = vmul.f32 %v1204, %v1212
      %v1217 = vmul.f32 %v1205, %v1212
      %v1218 = vmul.f32 %v1206, %v1212
      %v1219 = vmul.f32 %v1207, %v1212
      %v1220 = vmul.f32 %v1208, %v1212
      %v1221 = vmul.f32 %v1209, %v1212
      %v1222 = vld [vmem:[%s5] sm:$0x1]
      %v1224 = vperm.slane %v1222, 0
      %v1226 = vadd.f32 %v1214, %v1224
      %v1227 = vadd.f32 %v1215, %v1224
      %v1228 = vadd.f32 %v1216, %v1224
      %v1229 = vadd.f32 %v1217, %v1224
      %v1230 = vadd.f32 %v1218, %v1224
      %v1231 = vadd.f32 %v1219, %v1224
      %v1232 = vadd.f32 %v1220, %v1224
      %v1233 = vadd.f32 %v1221, %v1224
      %v1234 = vld [vmem:[%s299] sm:$0xff]
      %v1235 = vld [vmem:[%s299 + $0x8] sm:$0xff]
      %v1236 = vld [vmem:[%s299 + $0x10] sm:$0xff]
      %v1237 = vld [vmem:[%s299 + $0x18] sm:$0xff]
      %v1238 = vld [vmem:[%s299 + $0x20] sm:$0xff]
      %v1239 = vld [vmem:[%s299 + $0x28] sm:$0xff]
      %v1240 = vld [vmem:[%s299 + $0x30] sm:$0xff]
      %v1241 = vld [vmem:[%s299 + $0x38] sm:$0xff]
      %v1242 = vadd.f32 %v1226, %v1234
      %v1243 = vadd.f32 %v1227, %v1235
      %v1244 = vadd.f32 %v1228, %v1236
      %v1245 = vadd.f32 %v1229, %v1237
      %v1246 = vadd.f32 %v1230, %v1238
      %v1247 = vadd.f32 %v1231, %v1239
      %v1248 = vadd.f32 %v1232, %v1240
      %v1249 = vadd.f32 %v1233, %v1241
      %v1250 = vmax.f32 %v1242, 0.0
      %v1251 = vmax.f32 %v1243, 0.0
      %v1252 = vmax.f32 %v1244, 0.0
      %v1253 = vmax.f32 %v1245, 0.0
      %v1254 = vmax.f32 %v1246, 0.0
      %v1255 = vmax.f32 %v1247, 0.0
      %v1256 = vmax.f32 %v1248, 0.0
      %v1257 = vmax.f32 %v1249, 0.0
      %vm1258 = vcmask 261120
      %1259 = vst.msk [vmem:[%s305] sm:$0xff] %vm1258, %v1250
      %1260 = vst.msk [vmem:[%s305 + $0x8] sm:$0xff] %vm1258, %v1251
      %1261 = vst.msk [vmem:[%s305 + $0x10] sm:$0xff] %vm1258, %v1252
      %1262 = vst.msk [vmem:[%s305 + $0x18] sm:$0xff] %vm1258, %v1253
      %1263 = vst.msk [vmem:[%s305 + $0x20] sm:$0xff] %vm1258, %v1254
      %1264 = vst.msk [vmem:[%s305 + $0x28] sm:$0xff] %vm1258, %v1255
      %1265 = vst.msk [vmem:[%s305 + $0x30] sm:$0xff] %vm1258, %v1256
      %1266 = vst.msk [vmem:[%s305 + $0x38] sm:$0xff] %vm1258, %v1257
      %s1267 = smul.u32 8, %s18
      %p1268 = scmp.lt.s32.totalorder %s1267, 15
      %s1269 = scalar_select %p1268, %s1267, 15
      %s1270 = smul.addr %s1269, 8
      %s1271 = scalar_lea.vmem %s7, %s1270
      // Predicated region
      $region49: #{_lambda_.12} parent=47 // pred_check
        %p1272 = pneg %p193
      $region50: #{_lambda_.12} parent=47 // pred_check_branch
        %1274 = sbr.rel (%p1272) target = $region52
      $region51: #{_lambda_.12} parent=47 // pred_region
        %s1275 = smul.u32 8, %s18
      $region52: #{_lambda_.12} parent=47 // pred_fallthru
        _
    $region48: #{_lambda_.12} parent=5 // pred_fallthru
      _
    %p1276 = scmp.le.s32.totalorder 2, %s13
    // Predicated region
    $region53: #{_lambda_.12} parent=5 // pred_check
      %p1277 = pneg %p1276
    $region54: #{_lambda_.12} parent=5 // pred_check_branch
      %1279 = sbr.rel (%p1277) target = $region56
    $region55: #{_lambda_.12} parent=5 // pred_region
      %s1280 = ssub.s32 %s13, 2
      // Predicated region
      $region57: #{_lambda_.12} parent=55 // pred_check
        %p1281 = pneg %p199
      $region58: #{_lambda_.12} parent=55 // pred_check_branch
        %1283 = sbr.rel (%p1281) target = $region60
      $region59: #{_lambda_.12} parent=55 // pred_region
        %s1284 = smul.u32 8, %s19
        %p1285 = scmp.lt.s32.totalorder %s1284, 15
        %s1286 = scalar_select %p1285, %s1284, 15
        %s1287 = smul.addr %s1286, 8
        %s1288 = scalar_lea.vmem %s7, %s1287
      $region60: #{_lambda_.12} parent=55 // pred_fallthru
        _
    $region56: #{_lambda_.12} parent=5 // pred_fallthru
      _
  $region6: #{_lambda_.12} parent=0 // loop_footer
    %s17 = sadd.s32 1, %s13
  $region7: #{_lambda_.12} parent=0 // loop_footer_branch
    %12 = sbr.rel target = $region3
  $region8: #{_lambda_.12} parent=0 // loop_exit
    _

// kernel: _lambda_.15
$region0: #{_lambda_.15}
  #allocation0 [shape = 'u32[]', space=smem, size = 0x4, offset = 0x4, fixed_abs, tag = 'smem constant byte address 0x4 - core index']
  #allocation1 [shape = 'u32[72,128]{1,0:T(1,128)}', space=vmem, size = 0x9000, scoped, tag = 'internal scratch']
  %s0 = inlined_call_operand.vmem [shape: f32[2,16,64], index: 0, kind: input, shape index: {}]
  %s1 = inlined_call_operand.vmem [shape: f32[64,128], index: 1, kind: input, shape index: {}]
  %s2 = inlined_call_operand.vmem [shape: f32[1,128], index: 2, kind: input, shape index: {}]
  %s3 = inlined_call_operand.hbm [shape: f32[2,10], index: 3, kind: output, shape index: {}]
  %s4 = sld [smem:[#allocation0]]
  $region22: #{_lambda_.15} parent=0
    _
  %s6 = ssub.s32 1, %s4
  %s7 = scalar_select 0, %s6, %s4
  $region1: #{_lambda_.15} parent=0
    #allocation2 [shape = 'u8[1024]{0}', space=vmem, size = 0x400, scoped, tag = 'output window, operand 0, single buffered']
    #allocation3 [shape = 's32[1]{0}', space=sflag, size = 0x4, scoped, tag = 'scoped memory for _lambda_.15']
    %8 = vsyncpa [#allocation3], 0
    // Predicated region
    $region2: #{_lambda_.15} parent=1 // pred_check
      _
    $region3: #{_lambda_.15} parent=1 // pred_check_branch
      %10 = sbr.rel (0) target = $region5
    $region4: #{_lambda_.15} parent=1 // pred_region
      _
    $region5: #{_lambda_.15} parent=1 // pred_fallthru
      _
    // Predicated region
    $region6: #{_lambda_.15} parent=1 // pred_check
      _
    $region7: #{_lambda_.15} parent=1 // pred_check_branch
      %12 = sbr.rel (0) target = $region9
    $region8: #{_lambda_.15} parent=1 // pred_region
      _
    $region9: #{_lambda_.15} parent=1 // pred_fallthru
      _
    // Predicated region
    $region10: #{_lambda_.15} parent=1 // pred_check
      _
    $region11: #{_lambda_.15} parent=1 // pred_check_branch
      %14 = sbr.rel (0) target = $region13
    $region12: #{_lambda_.15} parent=1 // pred_region
      _
    $region13: #{_lambda_.15} parent=1 // pred_fallthru
      _
    %v15 = vld [vmem:[%s0] sm:$0xff]
    %v16 = vld [vmem:[%s0 + $0x8] sm:$0xff]
    %v17 = vld [vmem:[%s0 + $0x10] sm:$0xff]
    %v18 = vld [vmem:[%s0 + $0x18] sm:$0xff]
    %vm19 = vcmask 523264
    %v20 = vsel %vm19, %v15, 0.0
    %v21 = vsel %vm19, %v16, 0.0
    %v22 = vadd.f32 %v20, %v21
    %v23 = vrot.slane %v22, 4
    %v24 = vadd.f32 %v22, %v23
    %v25 = vrot.slane %v24, 2
    %v26 = vadd.f32 %v24, %v25
    %v27 = vrot.slane %v26, 1
    %v28 = vadd.f32 %v26, %v27
    %v29 = vsel %vm19, %v17, 0.0
    %v30 = vsel %vm19, %v18, 0.0
    %v31 = vadd.f32 %v29, %v30
    %v32 = vrot.slane %v31, 4
    %v33 = vadd.f32 %v31, %v32
    %v34 = vrot.slane %v33, 2
    %v35 = vadd.f32 %v33, %v34
    %v36 = vrot.slane %v35, 1
    %v37 = vadd.f32 %v35, %v36
    %v38 = vmul.f32 %v28, 0.0625
    %v39 = vmul.f32 %v37, 0.0625
    %vm42 = vcmask 1041409
    %v43 = vsel %vm42, %v39, %v38
    %vm45 = vcmask 1041408
    %v46 = vsel %vm45, %v43, 0.0
    %v47 = vld [vmem:[%s1] sm:$0xff]
    %v48 = vld [vmem:[%s1 + $0x8] sm:$0xff]
    %v49 = vld [vmem:[%s1 + $0x10] sm:$0xff]
    %v50 = vld [vmem:[%s1 + $0x18] sm:$0xff]
    %v51 = vld [vmem:[%s1 + $0x20] sm:$0xff]
    %v52 = vld [vmem:[%s1 + $0x28] sm:$0xff]
    %v53 = vld [vmem:[%s1 + $0x30] sm:$0xff]
    %v54 = vld [vmem:[%s1 + $0x38] sm:$0xff]
    %v55 = vld [vmem:[%s2] sm:$0x1]
    %v57 = vperm.slane %v55, 0
    %v60 = vsel %vm19, %v46, 0
    %62 = vmatpush.msra.mxu0 0.0
    %63 = vmatpush.msra.mxu0 0.0
    %64 = vmatpush.msra.mxu0 0.0
    %65 = vmatpush.msra.mxu0 0.0
    %66 = vmatpush.msra.mxu0 0.0
    %67 = vmatpush.msra.mxu0 0.0
    %68 = vmatpush.msra.mxu0 0.0
    %69 = vmatpush.msra.mxu0 0.0
    %70 = vmatpush.msra.mxu0 %v54
    %71 = vmatpush.msra.mxu0 %v53
    %72 = vmatpush.msra.mxu0 %v52
    %73 = vmatpush.msra.mxu0 %v51
    %74 = vmatpush.msra.mxu0 %v50
    %75 = vmatpush.msra.mxu0 %v49
    %76 = vmatpush.msra.mxu0 %v48
    %77 = vmatpush.msra.mxu0 %v47
    %78 = vmatmul.f32.gmra.mxu0 %v60
    %v79 = vpop.f32.mrf.mxu0
    %v80 = vadd.f32 %v57, %v79
    %81 = vdwg.mxu0
    %vm82 = vcmask 74752
    %83 = vst.msk [vmem:[#allocation2] sm:$0x3] %vm82, %v80
    // Predicated region
    $region14: #{_lambda_.15} parent=1 // pred_check
      _
    $region15: #{_lambda_.15} parent=1 // pred_check_branch
      %85 = sbr.rel (0) target = $region17
    $region16: #{_lambda_.15} parent=1 // pred_region
      %87 = vsyncadd [#allocation3], 0
      %s89 = sshll.u32 [#allocation2], 4
      %s90 = int_to_ptr.vmem [resolvable:$true] %s89
      %s91 = sshll.u32 %s3, 4
      %s92 = int_to_ptr.hbm [resolvable:$true] %s91
      %94 = dma.vmem_to_hbm [thread:$0]  %s90, 32, %s92, [#allocation3]
    $region17: #{_lambda_.15} parent=1 // pred_fallthru
      _
    // Predicated region
    $region18: #{_lambda_.15} parent=1 // pred_check
      _
    $region19: #{_lambda_.15} parent=1 // pred_check_branch
      %96 = sbr.rel (0) target = $region21
    $region20: #{_lambda_.15} parent=1 // pred_region
      %98 = dma.done [#allocation3], 32
    $region21: #{_lambda_.15} parent=1 // pred_fallthru
      _
    %99 = vsyncpa [#allocation3], 1

// kernel: _lambda_.13
$region0: #{_lambda_.13}
  #allocation0 [shape = 'u32[]', space=smem, size = 0x4, offset = 0x4, fixed_abs, tag = 'smem constant byte address 0x4 - core index']
  #allocation1 [shape = 'u32[72,128]{1,0:T(1,128)}', space=vmem, size = 0x9000, scoped, tag = 'internal scratch']
  %s0 = inlined_call_operand.vmem [shape: bf16[32,384], index: 0, kind: input, shape index: {}]
  %s1 = inlined_call_operand.vmem [shape: bf16[384,256], index: 1, kind: input, shape index: {}]
  %s2 = inlined_call_operand.vmem [shape: bf16[384,128], index: 2, kind: input, shape index: {}]
  %s3 = inlined_call_operand.vmem [shape: f32[1,256], index: 3, kind: input, shape index: {}]
  %s4 = inlined_call_operand.vmem [shape: f32[1,128], index: 4, kind: input, shape index: {}]
  %s5 = inlined_call_operand.vmem [shape: f32[1,128], index: 5, kind: input, shape index: {}]
  %s6 = inlined_call_operand.vmem [shape: f32[32,64], index: 6, kind: output, shape index: {}]
  %s7 = sld [smem:[#allocation0]]
  $region57: #{_lambda_.13} parent=0
    _
  %s9 = ssub.s32 1, %s7
  %s10 = scalar_select 0, %s9, %s7
  loop: start=0, step=1, limit=4
  $region2: #{_lambda_.13} parent=0 // loop_pre_header
    _
  $region3: #{_lambda_.13} parent=0 // loop_header
    %s12 = sphi 0, %s16
    %p13 = scmp.ge.s32.totalorder %s12, 4
    %s22 = sphi 0, %s24
    %s25 = sphi 0, %s22
    %s26 = sphi 0, %s25
    %s42 = sphi 0, %s26
    %s46 = sphi 0, %s46
    %s48 = sphi 0, %s46
    %s49 = sphi 0, %s48
    %s63 = sphi 0, %s49
    %s67 = sphi 0, %s67
    %s69 = sphi 0, %s67
    %s70 = sphi 0, %s69
    %s84 = sphi 0, %s70
    %s88 = sphi 0, %s88
    %s90 = sphi 0, %s88
    %s91 = sphi 0, %s90
    %s105 = sphi 0, %s91
    %s109 = sphi 0, %s109
    %s111 = sphi 0, %s109
    %s112 = sphi 0, %s111
    %s126 = sphi 0, %s112
    %s130 = sphi 0, %s130
    %s132 = sphi 0, %s130
    %s133 = sphi 0, %s132
    %s147 = sphi 0, %s133
    %s153 = sphi 0, %s155
    %s156 = sphi 0, %s153
    %s157 = sphi 0, %s156
    %s173 = sphi 0, %s157
  $region4: #{_lambda_.13} parent=0 // loop_header_branch
    %15 = sbr.rel (%p13) target = $region8
  $region5: #{_lambda_.13} parent=0 // loop_body
    %s17 = ssub.s32 %s12, 1
    %s18 = ssub.s32 %s12, 2
    %s19 = sadd.s32 %s12, 1
    %s20 = ssub.s32 %s12, %s19
    %p21 = scmp.eq.s32.totalorder %s20, 0
    %s23 = sadd.s32 %s22, 1
    %s24 = scalar_select %p21, %s22, %s23
    %p27 = pneg %p21
    %p28 = scmp.eq.s32.totalorder %s12, 1
    %p29 = por %p27, %p28
    %p30 = scmp.ne.s32.totalorder %s22, %s25
    %p31 = scmp.eq.s32.totalorder %s12, 0
    %p32 = por %p30, %p31
    %p33 = scmp.ne.s32.totalorder %s22, %s25
    %p34 = scmp.eq.s32.totalorder %s17, 1
    %p35 = por %p33, %p34
    %p36 = scmp.ne.s32.totalorder %s25, %s26
    %p37 = scmp.eq.s32.totalorder %s17, 0
    %p38 = por %p36, %p37
    %p39 = scmp.ne.s32.totalorder %s25, %s26
    %p40 = scmp.eq.s32.totalorder %s18, 1
    %p41 = por %p39, %p40
    %p43 = scmp.ne.s32.totalorder %s26, %s42
    %p44 = scmp.eq.s32.totalorder %s18, 0
    %p45 = por %p43, %p44
    %s47 = sadd.s32 %s46, 1
    %p50 = scmp.eq.s32.totalorder %s12, 1
    %p51 = scmp.ne.s32.totalorder %s46, %s48
    %p52 = scmp.eq.s32.totalorder %s12, 0
    %p53 = por %p51, %p52
    %p54 = scmp.ne.s32.totalorder %s46, %s48
    %p55 = scmp.eq.s32.totalorder %s17, 1
    %p56 = por %p54, %p55
    %p57 = scmp.ne.s32.totalorder %s48, %s49
    %p58 = scmp.eq.s32.totalorder %s17, 0
    %p59 = por %p57, %p58
    %p60 = scmp.ne.s32.totalorder %s48, %s49
    %p61 = scmp.eq.s32.totalorder %s18, 1
    %p62 = por %p60, %p61
    %p64 = scmp.ne.s32.totalorder %s49, %s63
    %p65 = scmp.eq.s32.totalorder %s18, 0
    %p66 = por %p64, %p65
    %s68 = sadd.s32 %s67, 1
    %p71 = scmp.eq.s32.totalorder %s12, 1
    %p72 = scmp.ne.s32.totalorder %s67, %s69
    %p73 = scmp.eq.s32.totalorder %s12, 0
    %p74 = por %p72, %p73
    %p75 = scmp.ne.s32.totalorder %s67, %s69
    %p76 = scmp.eq.s32.totalorder %s17, 1
    %p77 = por %p75, %p76
    %p78 = scmp.ne.s32.totalorder %s69, %s70
    %p79 = scmp.eq.s32.totalorder %s17, 0
    %p80 = por %p78, %p79
    %p81 = scmp.ne.s32.totalorder %s69, %s70
    %p82 = scmp.eq.s32.totalorder %s18, 1
    %p83 = por %p81, %p82
    %p85 = scmp.ne.s32.totalorder %s70, %s84
    %p86 = scmp.eq.s32.totalorder %s18, 0
    %p87 = por %p85, %p86
    %s89 = sadd.s32 %s88, 1
    %p92 = scmp.eq.s32.totalorder %s12, 1
    %p93 = scmp.ne.s32.totalorder %s88, %s90
    %p94 = scmp.eq.s32.totalorder %s12, 0
    %p95 = por %p93, %p94
    %p96 = scmp.ne.s32.totalorder %s88, %s90
    %p97 = scmp.eq.s32.totalorder %s17, 1
    %p98 = por %p96, %p97
    %p99 = scmp.ne.s32.totalorder %s90, %s91
    %p100 = scmp.eq.s32.totalorder %s17, 0
    %p101 = por %p99, %p100
    %p102 = scmp.ne.s32.totalorder %s90, %s91
    %p103 = scmp.eq.s32.totalorder %s18, 1
    %p104 = por %p102, %p103
    %p106 = scmp.ne.s32.totalorder %s91, %s105
    %p107 = scmp.eq.s32.totalorder %s18, 0
    %p108 = por %p106, %p107
    %s110 = sadd.s32 %s109, 1
    %p113 = scmp.eq.s32.totalorder %s12, 1
    %p114 = scmp.ne.s32.totalorder %s109, %s111
    %p115 = scmp.eq.s32.totalorder %s12, 0
    %p116 = por %p114, %p115
    %p117 = scmp.ne.s32.totalorder %s109, %s111
    %p118 = scmp.eq.s32.totalorder %s17, 1
    %p119 = por %p117, %p118
    %p120 = scmp.ne.s32.totalorder %s111, %s112
    %p121 = scmp.eq.s32.totalorder %s17, 0
    %p122 = por %p120, %p121
    %p123 = scmp.ne.s32.totalorder %s111, %s112
    %p124 = scmp.eq.s32.totalorder %s18, 1
    %p125 = por %p123, %p124
    %p127 = scmp.ne.s32.totalorder %s112, %s126
    %p128 = scmp.eq.s32.totalorder %s18, 0
    %p129 = por %p127, %p128
    %s131 = sadd.s32 %s130, 1
    %p134 = scmp.eq.s32.totalorder %s12, 1
    %p135 = scmp.ne.s32.totalorder %s130, %s132
    %p136 = scmp.eq.s32.totalorder %s12, 0
    %p137 = por %p135, %p136
    %p138 = scmp.ne.s32.totalorder %s130, %s132
    %p139 = scmp.eq.s32.totalorder %s17, 1
    %p140 = por %p138, %p139
    %p141 = scmp.ne.s32.totalorder %s132, %s133
    %p142 = scmp.eq.s32.totalorder %s17, 0
    %p143 = por %p141, %p142
    %p144 = scmp.ne.s32.totalorder %s132, %s133
    %p145 = scmp.eq.s32.totalorder %s18, 1
    %p146 = por %p144, %p145
    %p148 = scmp.ne.s32.totalorder %s133, %s147
    %p149 = scmp.eq.s32.totalorder %s18, 0
    %p150 = por %p148, %p149
    %s151 = ssub.s32 %s12, %s19
    %p152 = scmp.eq.s32.totalorder %s151, 0
    %s154 = sadd.s32 %s153, 1
    %s155 = scalar_select %p152, %s153, %s154
    %p158 = pneg %p152
    %p159 = scmp.eq.s32.totalorder %s12, 1
    %p160 = por %p158, %p159
    %p161 = scmp.ne.s32.totalorder %s153, %s156
    %p162 = scmp.eq.s32.totalorder %s12, 0
    %p163 = por %p161, %p162
    %p164 = scmp.ne.s32.totalorder %s153, %s156
    %p165 = scmp.eq.s32.totalorder %s17, 1
    %p166 = por %p164, %p165
    %p167 = scmp.ne.s32.totalorder %s156, %s157
    %p168 = scmp.eq.s32.totalorder %s17, 0
    %p169 = por %p167, %p168
    %p170 = scmp.ne.s32.totalorder %s156, %s157
    %p171 = scmp.eq.s32.totalorder %s18, 1
    %p172 = por %p170, %p171
    %p174 = scmp.ne.s32.totalorder %s157, %s173
    %p175 = scmp.eq.s32.totalorder %s18, 0
    %p176 = por %p174, %p175
    %p177 = scmp.le.s32.totalorder 1, %s12
    %p178 = scmp.lt.s32.totalorder %s12, 3
    %p179 = pnand %p177, %p178
    %p180 = pneg %p179
    // Predicated region
    $region9: #{_lambda_.13} parent=5 // pred_check
      _
    $region10: #{_lambda_.13} parent=5 // pred_check_branch
      %182 = sbr.rel (%p179) target = $region12
    $region11: #{_lambda_.13} parent=5 // pred_region
      %s183 = ssub.s32 %s12, 1
      // Predicated region
      $region13: #{_lambda_.13} parent=11 // pred_check
        %p184 = pneg %p59
      $region14: #{_lambda_.13} parent=11 // pred_check_branch
        %186 = sbr.rel (%p184) target = $region16
      $region15: #{_lambda_.13} parent=11 // pred_region
        _
      $region16: #{_lambda_.13} parent=11 // pred_fallthru
        _
      // Predicated region
      $region17: #{_lambda_.13} parent=11 // pred_check
        %p187 = pneg %p80
      $region18: #{_lambda_.13} parent=11 // pred_check_branch
        %189 = sbr.rel (%p187) target = $region20
      $region19: #{_lambda_.13} parent=11 // pred_region
        _
      $region20: #{_lambda_.13} parent=11 // pred_fallthru
        _
      // Predicated region
      $region21: #{_lambda_.13} parent=11 // pred_check
        %p190 = pneg %p101
      $region22: #{_lambda_.13} parent=11 // pred_check_branch
        %192 = sbr.rel (%p190) target = $region24
      $region23: #{_lambda_.13} parent=11 // pred_region
        _
      $region24: #{_lambda_.13} parent=11 // pred_fallthru
        _
      // Predicated region
      $region25: #{_lambda_.13} parent=11 // pred_check
        %p193 = pneg %p122
      $region26: #{_lambda_.13} parent=11 // pred_check_branch
        %195 = sbr.rel (%p193) target = $region28
      $region27: #{_lambda_.13} parent=11 // pred_region
        _
      $region28: #{_lambda_.13} parent=11 // pred_fallthru
        _
      // Predicated region
      $region29: #{_lambda_.13} parent=11 // pred_check
        %p196 = pneg %p143
      $region30: #{_lambda_.13} parent=11 // pred_check_branch
        %198 = sbr.rel (%p196) target = $region32
      $region31: #{_lambda_.13} parent=11 // pred_region
        _
      $region32: #{_lambda_.13} parent=11 // pred_fallthru
        _
    $region12: #{_lambda_.13} parent=5 // pred_fallthru
      _
    %p199 = scmp.lt.s32.totalorder %s12, 2
    // Predicated region
    $region33: #{_lambda_.13} parent=5 // pred_check
      %p200 = pneg %p199
    $region34: #{_lambda_.13} parent=5 // pred_check_branch
      %202 = sbr.rel (%p200) target = $region36
    $region35: #{_lambda_.13} parent=5 // pred_region
      // Predicated region
      $region37: #{_lambda_.13} parent=35 // pred_check
        %p203 = pneg %p32
      $region38: #{_lambda_.13} parent=35 // pred_check_branch
        %205 = sbr.rel (%p203) target = $region40
      $region39: #{_lambda_.13} parent=35 // pred_region
        %s206 = smul.u32 2, %s12
        %p207 = scmp.lt.s32.totalorder %s206, 3
        %s208 = scalar_select %p207, %s206, 3
        %s209 = smul.addr %s208, 3
        %s210 = smul.addr %s209, 4
        %s211 = scalar_lea.vmem %s0, %s210
        %s212 = smul.u32 2, %s12
      $region40: #{_lambda_.13} parent=35 // pred_fallthru
        _
    $region36: #{_lambda_.13} parent=5 // pred_fallthru
      _
    %p213 = scmp.le.s32.totalorder 1, %s12
    %p214 = scmp.lt.s32.totalorder %s12, 3
    %p215 = pnand %p213, %p214
    %p216 = pneg %p215
    // Predicated region
    $region41: #{_lambda_.13} parent=5 // pred_check
      _
    $region42: #{_lambda_.13} parent=5 // pred_check_branch
      %218 = sbr.rel (%p215) target = $region44
    $region43: #{_lambda_.13} parent=5 // pred_region
      %s219 = ssub.s32 %s12, 1
      %s220 = smul.u32 2, %s17
      %p221 = scmp.lt.s32.totalorder %s220, 3
      %s222 = scalar_select %p221, %s220, 3
      %s223 = smul.addr %s222, 3
      %s224 = smul.addr %s223, 4
      %s225 = scalar_lea.vmem %s0, %s224
      %p226 = pneg %p38
      %p227 = pneg %p35
      %p228 = pneg %p59
      %p229 = pneg %p56
      %p230 = pneg %p80
      %p231 = pneg %p77
      %p232 = pneg %p101
      %p233 = pneg %p98
      %p234 = pneg %p122
      %p235 = pneg %p119
      %p236 = pneg %p143
      %p237 = pneg %p140
      %p238 = pneg %p169
      %p239 = pneg %p166
      %s240 = smul.u32 2, %s17
      %p241 = scmp.lt.s32.totalorder %s240, 3
      %s242 = scalar_select %p241, %s240, 3
      %s243 = smul.addr %s242, 8
      %s244 = scalar_lea.vmem %s6, %s243
      %s245 = smul.u32 2, %s17
      %p246 = scmp.lt.s32.totalorder %s245, 3
      %s247 = scalar_select %p246, %s245, 3
      %s248 = smul.addr %s247, 3
      %s249 = smul.addr %s248, 4
      %s250 = scalar_lea.vmem %s0, %s249
      %s251 = smul.u32 2, %s17
      %s252 = smul.u32 2, %s17
      %p253 = scmp.lt.s32.totalorder %s252, 3
      %s254 = scalar_select %p253, %s252, 3
      %s255 = smul.addr %s254, 8
      %s256 = scalar_lea.vmem %s6, %s255
      %s257 = smul.u32 2, %s17
      %v258 = vld [vmem:[%s250] sm:$0xff]
      %v259 = vld [vmem:[%s250 + $0x8] sm:$0xf]
      %v260 = vld [vmem:[%s250 + $0xc] sm:$0xff]
      %v261 = vld [vmem:[%s250 + $0x14] sm:$0xf]
      %v262 = vld [vmem:[%s1] sm:$0xff]
      %v263 = vld [vmem:[%s1 + $0x8] sm:$0xff]
      %v264 = vld [vmem:[%s1 + $0x10] sm:$0xff]
      %v265 = vld [vmem:[%s1 + $0x18] sm:$0xff]
      %v266 = vld [vmem:[%s1 + $0x20] sm:$0xff]
      %v267 = vld [vmem:[%s1 + $0x28] sm:$0xff]
      %v268 = vld [vmem:[%s1 + $0x30] sm:$0xff]
      %v269 = vld [vmem:[%s1 + $0x38] sm:$0xff]
      %v270 = vld [vmem:[%s1 + $0x40] sm:$0xff]
      %v271 = vld [vmem:[%s1 + $0x48] sm:$0xff]
      %v272 = vld [vmem:[%s1 + $0x50] sm:$0xff]
      %v273 = vld [vmem:[%s1 + $0x58] sm:$0xff]
      %v274 = vld [vmem:[%s1 + $0x60] sm:$0xff]
      %v275 = vld [vmem:[%s1 + $0x68] sm:$0xff]
      %v276 = vld [vmem:[%s1 + $0x70] sm:$0xff]
      %v277 = vld [vmem:[%s1 + $0x78] sm:$0xff]
      %v278 = vld [vmem:[%s1 + $0x80] sm:$0xff]
      %v279 = vld [vmem:[%s1 + $0x88] sm:$0xff]
      %v280 = vld [vmem:[%s1 + $0x90] sm:$0xff]
      %v281 = vld [vmem:[%s1 + $0x98] sm:$0xff]
      %v282 = vld [vmem:[%s1 + $0xa0] sm:$0xff]
      %v283 = vld [vmem:[%s1 + $0xa8] sm:$0xff]
      %v284 = vld [vmem:[%s1 + $0xb0] sm:$0xff]
      %v285 = vld [vmem:[%s1 + $0xb8] sm:$0xff]
      %v286 = vld [vmem:[%s1 + $0xc0] sm:$0xff]
      %v287 = vld [vmem:[%s1 + $0xc8] sm:$0xff]
      %v288 = vld [vmem:[%s1 + $0xd0] sm:$0xff]
      %v289 = vld [vmem:[%s1 + $0xd8] sm:$0xff]
      %v290 = vld [vmem:[%s1 + $0xe0] sm:$0xff]
      %v291 = vld [vmem:[%s1 + $0xe8] sm:$0xff]
      %v292 = vld [vmem:[%s1 + $0xf0] sm:$0xff]
      %v293 = vld [vmem:[%s1 + $0xf8] sm:$0xff]
      %v294 = vld [vmem:[%s1 + $0x100] sm:$0xff]
      %v295 = vld [vmem:[%s1 + $0x108] sm:$0xff]
      %v296 = vld [vmem:[%s1 + $0x110] sm:$0xff]
      %v297 = vld [vmem:[%s1 + $0x118] sm:$0xff]
      %v298 = vld [vmem:[%s1 + $0x120] sm:$0xff]
      %v299 = vld [vmem:[%s1 + $0x128] sm:$0xff]
      %v300 = vld [vmem:[%s1 + $0x130] sm:$0xff]
      %v301 = vld [vmem:[%s1 + $0x138] sm:$0xff]
      %v302 = vld [vmem:[%s1 + $0x140] sm:$0xff]
      %v303 = vld [vmem:[%s1 + $0x148] sm:$0xff]
      %v304 = vld [vmem:[%s1 + $0x150] sm:$0xff]
      %v305 = vld [vmem:[%s1 + $0x158] sm:$0xff]
      %v306 = vld [vmem:[%s1 + $0x160] sm:$0xff]
      %v307 = vld [vmem:[%s1 + $0x168] sm:$0xff]
      %v308 = vld [vmem:[%s1 + $0x170] sm:$0xff]
      %v309 = vld [vmem:[%s1 + $0x178] sm:$0xff]
      %v310 = vld [vmem:[%s3] sm:$0x3]
      %v312 = vperm.slane %v310, 0
      %v313 = vperm.slane %v310, 1
      %v320 = vunpack.c.l.b16 %v258
      %v321 = vunpack.c.h.b16 %v258
      %v322 = vunpack.c.l.b16 %v259
      %v323 = vunpack.c.l.b16 %v260
      %v324 = vunpack.c.h.b16 %v260
      %v325 = vunpack.c.l.b16 %v261
      %v326 = vpack.c.b16 %v323, %v320
      %v327 = vpack.c.b16 %v324, %v321
      %v328 = vpack.c.b16 %v325, %v322
      %v380 = vunpack.c.l.b16 %v262
      %v381 = vunpack.c.h.b16 %v262
      %v382 = vunpack.c.l.b16 %v263
      %v383 = vunpack.c.h.b16 %v263
      %v384 = vunpack.c.l.b16 %v264
      %v385 = vunpack.c.h.b16 %v264
      %v386 = vunpack.c.l.b16 %v265
      %v387 = vunpack.c.h.b16 %v265
      %v388 = vunpack.c.l.b16 %v266
      %v389 = vunpack.c.h.b16 %v266
      %v390 = vunpack.c.l.b16 %v267
      %v391 = vunpack.c.h.b16 %v267
      %v392 = vunpack.c.l.b16 %v268
      %v393 = vunpack.c.h.b16 %v268
      %v394 = vunpack.c.l.b16 %v269
      %v395 = vunpack.c.h.b16 %v269
      %v396 = vunpack.c.l.b16 %v270
      %v397 = vunpack.c.h.b16 %v270
      %v398 = vunpack.c.l.b16 %v271
      %v399 = vunpack.c.h.b16 %v271
      %v400 = vunpack.c.l.b16 %v272
      %v401 = vunpack.c.h.b16 %v272
      %v402 = vunpack.c.l.b16 %v273
      %v403 = vunpack.c.h.b16 %v273
      %v404 = vunpack.c.l.b16 %v274
      %v405 = vunpack.c.h.b16 %v274
      %v406 = vunpack.c.l.b16 %v275
      %v407 = vunpack.c.h.b16 %v275
      %v408 = vunpack.c.l.b16 %v276
      %v409 = vunpack.c.h.b16 %v276
      %v410 = vunpack.c.l.b16 %v277
      %v411 = vunpack.c.h.b16 %v277
      %v412 = vunpack.c.l.b16 %v278
      %v413 = vunpack.c.h.b16 %v278
      %v414 = vunpack.c.l.b16 %v279
      %v415 = vunpack.c.h.b16 %v279
      %v416 = vunpack.c.l.b16 %v280
      %v417 = vunpack.c.h.b16 %v280
      %v418 = vunpack.c.l.b16 %v281
      %v419 = vunpack.c.h.b16 %v281
      %v420 = vunpack.c.l.b16 %v282
      %v421 = vunpack.c.h.b16 %v282
      %v422 = vunpack.c.l.b16 %v283
      %v423 = vunpack.c.h.b16 %v283
      %v424 = vunpack.c.l.b16 %v284
      %v425 = vunpack.c.h.b16 %v284
      %v426 = vunpack.c.l.b16 %v285
      %v427 = vunpack.c.h.b16 %v285
      %v428 = vunpack.c.l.b16 %v286
      %v429 = vunpack.c.h.b16 %v286
      %v430 = vunpack.c.l.b16 %v287
      %v431 = vunpack.c.h.b16 %v287
      %v432 = vunpack.c.l.b16 %v288
      %v433 = vunpack.c.h.b16 %v288
      %v434 = vunpack.c.l.b16 %v289
      %v435 = vunpack.c.h.b16 %v289
      %v436 = vunpack.c.l.b16 %v290
      %v437 = vunpack.c.h.b16 %v290
      %v438 = vunpack.c.l.b16 %v291
      %v439 = vunpack.c.h.b16 %v291
      %v440 = vunpack.c.l.b16 %v292
      %v441 = vunpack.c.h.b16 %v292
      %v442 = vunpack.c.l.b16 %v293
      %v443 = vunpack.c.h.b16 %v293
      %v444 = vunpack.c.l.b16 %v294
      %v445 = vunpack.c.h.b16 %v294
      %v446 = vunpack.c.l.b16 %v295
      %v447 = vunpack.c.h.b16 %v295
      %v448 = vunpack.c.l.b16 %v296
      %v449 = vunpack.c.h.b16 %v296
      %v450 = vunpack.c.l.b16 %v297
      %v451 = vunpack.c.h.b16 %v297
      %v452 = vunpack.c.l.b16 %v298
      %v453 = vunpack.c.h.b16 %v298
      %v454 = vunpack.c.l.b16 %v299
      %v455 = vunpack.c.h.b16 %v299
      %v456 = vunpack.c.l.b16 %v300
      %v457 = vunpack.c.h.b16 %v300
      %v458 = vunpack.c.l.b16 %v301
      %v459 = vunpack.c.h.b16 %v301
      %v460 = vunpack.c.l.b16 %v302
      %v461 = vunpack.c.h.b16 %v302
      %v462 = vunpack.c.l.b16 %v303
      %v463 = vunpack.c.h.b16 %v303
      %v464 = vunpack.c.l.b16 %v304
      %v465 = vunpack.c.h.b16 %v304
      %v466 = vunpack.c.l.b16 %v305
      %v467 = vunpack.c.h.b16 %v305
      %v468 = vunpack.c.l.b16 %v306
      %v469 = vunpack.c.h.b16 %v306
      %v470 = vunpack.c.l.b16 %v307
      %v471 = vunpack.c.h.b16 %v307
      %v472 = vunpack.c.l.b16 %v308
      %v473 = vunpack.c.h.b16 %v308
      %v474 = vunpack.c.l.b16 %v309
      %v475 = vunpack.c.h.b16 %v309
      %v476 = vpack.c.b16 %v382, %v380
      %v477 = vpack.c.b16 %v383, %v381
      %v478 = vpack.c.b16 %v386, %v384
      %v479 = vpack.c.b16 %v387, %v385
      %v480 = vpack.c.b16 %v390, %v388
      %v481 = vpack.c.b16 %v391, %v389
      %v482 = vpack.c.b16 %v394, %v392
      %v483 = vpack.c.b16 %v395, %v393
      %v484 = vpack.c.b16 %v398, %v396
      %v485 = vpack.c.b16 %v399, %v397
      %v486 = vpack.c.b16 %v402, %v400
      %v487 = vpack.c.b16 %v403, %v401
      %v488 = vpack.c.b16 %v406, %v404
      %v489 = vpack.c.b16 %v407, %v405
      %v490 = vpack.c.b16 %v410, %v408
      %v491 = vpack.c.b16 %v411, %v409
      %v492 = vpack.c.b16 %v414, %v412
      %v493 = vpack.c.b16 %v415, %v413
      %v494 = vpack.c.b16 %v418, %v416
      %v495 = vpack.c.b16 %v419, %v417
      %v496 = vpack.c.b16 %v422, %v420
      %v497 = vpack.c.b16 %v423, %v421
      %v498 = vpack.c.b16 %v426, %v424
      %v499 = vpack.c.b16 %v427, %v425
      %v500 = vpack.c.b16 %v430, %v428
      %v501 = vpack.c.b16 %v431, %v429
      %v502 = vpack.c.b16 %v434, %v432
      %v503 = vpack.c.b16 %v435, %v433
      %v504 = vpack.c.b16 %v438, %v436
      %v505 = vpack.c.b16 %v439, %v437
      %v506 = vpack.c.b16 %v442, %v440
      %v507 = vpack.c.b16 %v443, %v441
      %v508 = vpack.c.b16 %v446, %v444
      %v509 = vpack.c.b16 %v447, %v445
      %v510 = vpack.c.b16 %v450, %v448
      %v511 = vpack.c.b16 %v451, %v449
      %v512 = vpack.c.b16 %v454, %v452
      %v513 = vpack.c.b16 %v455, %v453
      %v514 = vpack.c.b16 %v458, %v456
      %v515 = vpack.c.b16 %v459, %v457
      %v516 = vpack.c.b16 %v462, %v460
      %v517 = vpack.c.b16 %v463, %v461
      %v518 = vpack.c.b16 %v466, %v464
      %v519 = vpack.c.b16 %v467, %v465
      %v520 = vpack.c.b16 %v470, %v468
      %v521 = vpack.c.b16 %v471, %v469
      %v522 = vpack.c.b16 %v474, %v472
      %v523 = vpack.c.b16 %v475, %v473
      %572 = vmatpush.bf16.msra.mxu0 %v490
      %573 = vmatpush.bf16.msra.mxu0 %v488
      %574 = vmatpush.bf16.msra.mxu0 %v486
      %575 = vmatpush.bf16.msra.mxu0 %v484
      %576 = vmatpush.bf16.msra.mxu0 %v482
      %577 = vmatpush.bf16.msra.mxu0 %v480
      %578 = vmatpush.bf16.msra.mxu0 %v478
      %579 = vmatpush.bf16.msra.mxu0 %v476
      %580 = vmatmul.bf16.gmra.mxu0 %v326
      %v581 = vpop.f32.mrf.mxu0
      %v582 = vadd.f32 %v312, %v581
      %v583 = vpop.f32.mrf.mxu0
      %v584 = vadd.f32 %v312, %v583
      %585 = vdwg.mxu0
      %586 = vmatpush.bf16.msra.mxu0 %v506
      %587 = vmatpush.bf16.msra.mxu0 %v504
      %588 = vmatpush.bf16.msra.mxu0 %v502
      %589 = vmatpush.bf16.msra.mxu0 %v500
      %590 = vmatpush.bf16.msra.mxu0 %v498
      %591 = vmatpush.bf16.msra.mxu0 %v496
      %592 = vmatpush.bf16.msra.mxu0 %v494
      %593 = vmatpush.bf16.msra.mxu0 %v492
      %594 = vmatmul.bf16.gmra.mxu0 %v327
      %v595 = vpop.f32.mrf.mxu0
      %v596 = vadd.f32 %v582, %v595
      %v597 = vpop.f32.mrf.mxu0
      %v598 = vadd.f32 %v584, %v597
      %599 = vdwg.mxu0
      %600 = vmatpush.bf16.msra.mxu0 %v522
      %601 = vmatpush.bf16.msra.mxu0 %v520
      %602 = vmatpush.bf16.msra.mxu0 %v518
      %603 = vmatpush.bf16.msra.mxu0 %v516
      %604 = vmatpush.bf16.msra.mxu0 %v514
      %605 = vmatpush.bf16.msra.mxu0 %v512
      %606 = vmatpush.bf16.msra.mxu0 %v510
      %607 = vmatpush.bf16.msra.mxu0 %v508
      %608 = vmatmul.bf16.gmra.mxu0 %v328
      %v609 = vpop.f32.mrf.mxu0
      %v610 = vadd.f32 %v596, %v609
      %v611 = vpop.f32.mrf.mxu0
      %v612 = vadd.f32 %v598, %v611
      %613 = vdwg.mxu0
      %614 = vmatpush.bf16.msra.mxu0 %v491
      %615 = vmatpush.bf16.msra.mxu0 %v489
      %616 = vmatpush.bf16.msra.mxu0 %v487
      %617 = vmatpush.bf16.msra.mxu0 %v485
      %618 = vmatpush.bf16.msra.mxu0 %v483
      %619 = vmatpush.bf16.msra.mxu0 %v481
      %620 = vmatpush.bf16.msra.mxu0 %v479
      %621 = vmatpush.bf16.msra.mxu0 %v477
      %622 = vmatmul.bf16.gmra.mxu0 %v326
      %v623 = vpop.f32.mrf.mxu0
      %v624 = vadd.f32 %v313, %v623
      %v625 = vpop.f32.mrf.mxu0
      %v626 = vadd.f32 %v313, %v625
      %627 = vdwg.mxu0
      %628 = vmatpush.bf16.msra.mxu0 %v507
      %629 = vmatpush.bf16.msra.mxu0 %v505
      %630 = vmatpush.bf16.msra.mxu0 %v503
      %631 = vmatpush.bf16.msra.mxu0 %v501
      %632 = vmatpush.bf16.msra.mxu0 %v499
      %633 = vmatpush.bf16.msra.mxu0 %v497
      %634 = vmatpush.bf16.msra.mxu0 %v495
      %635 = vmatpush.bf16.msra.mxu0 %v493
      %636 = vmatmul.bf16.gmra.mxu0 %v327
      %v637 = vpop.f32.mrf.mxu0
      %v638 = vadd.f32 %v624, %v637
      %v639 = vpop.f32.mrf.mxu0
      %v640 = vadd.f32 %v626, %v639
      %641 = vdwg.mxu0
      %642 = vmatpush.bf16.msra.mxu0 %v523
      %643 = vmatpush.bf16.msra.mxu0 %v521
      %644 = vmatpush.bf16.msra.mxu0 %v519
      %645 = vmatpush.bf16.msra.mxu0 %v517
      %646 = vmatpush.bf16.msra.mxu0 %v515
      %647 = vmatpush.bf16.msra.mxu0 %v513
      %648 = vmatpush.bf16.msra.mxu0 %v511
      %649 = vmatpush.bf16.msra.mxu0 %v509
      %650 = vmatmul.bf16.gmra.mxu0 %v328
      %v651 = vpop.f32.mrf.mxu0
      %v652 = vadd.f32 %v638, %v651
      %v653 = vpop.f32.mrf.mxu0
      %v654 = vadd.f32 %v640, %v653
      %655 = vdwg.mxu0
      %v656 = vunpack.c.l.bf16 %v258
      %v657 = vunpack.c.h.bf16 %v258
      %v658 = vunpack.c.l.bf16 %v259
      %v659 = vunpack.c.l.bf16 %v260
      %v660 = vunpack.c.h.bf16 %v260
      %v661 = vunpack.c.l.bf16 %v261
      %v662 = vmul.f32 %v656, %v656
      %v663 = vmul.f32 %v657, %v657
      %v664 = vmul.f32 %v658, %v658
      %v665 = vmul.f32 %v659, %v659
      %v666 = vmul.f32 %v660, %v660
      %v667 = vmul.f32 %v661, %v661
      %v668 = vpack.c.bf16 %v665, %v662
      %v669 = vpack.c.bf16 %v666, %v663
      %v670 = vpack.c.bf16 %v667, %v664
      %v671 = vld [vmem:[%s2] sm:$0xf]
      %v672 = vld [vmem:[%s2 + $0x4] sm:$0xf]
      %v673 = vld [vmem:[%s2 + $0x8] sm:$0xf]
      %v674 = vld [vmem:[%s2 + $0xc] sm:$0xf]
      %v675 = vld [vmem:[%s2 + $0x10] sm:$0xf]
      %v676 = vld [vmem:[%s2 + $0x14] sm:$0xf]
      %v677 = vld [vmem:[%s2 + $0x18] sm:$0xf]
      %v678 = vld [vmem:[%s2 + $0x1c] sm:$0xf]
      %v679 = vld [vmem:[%s2 + $0x20] sm:$0xf]
      %v680 = vld [vmem:[%s2 + $0x24] sm:$0xf]
      %v681 = vld [vmem:[%s2 + $0x28] sm:$0xf]
      %v682 = vld [vmem:[%s2 + $0x2c] sm:$0xf]
      %v683 = vld [vmem:[%s2 + $0x30] sm:$0xf]
      %v684 = vld [vmem:[%s2 + $0x34] sm:$0xf]
      %v685 = vld [vmem:[%s2 + $0x38] sm:$0xf]
      %v686 = vld [vmem:[%s2 + $0x3c] sm:$0xf]
      %v687 = vld [vmem:[%s2 + $0x40] sm:$0xf]
      %v688 = vld [vmem:[%s2 + $0x44] sm:$0xf]
      %v689 = vld [vmem:[%s2 + $0x48] sm:$0xf]
      %v690 = vld [vmem:[%s2 + $0x4c] sm:$0xf]
      %v691 = vld [vmem:[%s2 + $0x50] sm:$0xf]
      %v692 = vld [vmem:[%s2 + $0x54] sm:$0xf]
      %v693 = vld [vmem:[%s2 + $0x58] sm:$0xf]
      %v694 = vld [vmem:[%s2 + $0x5c] sm:$0xf]
      %v695 = vld [vmem:[%s2 + $0x60] sm:$0xf]
      %v696 = vld [vmem:[%s2 + $0x64] sm:$0xf]
      %v697 = vld [vmem:[%s2 + $0x68] sm:$0xf]
      %v698 = vld [vmem:[%s2 + $0x6c] sm:$0xf]
      %v699 = vld [vmem:[%s2 + $0x70] sm:$0xf]
      %v700 = vld [vmem:[%s2 + $0x74] sm:$0xf]
      %v701 = vld [vmem:[%s2 + $0x78] sm:$0xf]
      %v702 = vld [vmem:[%s2 + $0x7c] sm:$0xf]
      %v703 = vld [vmem:[%s2 + $0x80] sm:$0xf]
      %v704 = vld [vmem:[%s2 + $0x84] sm:$0xf]
      %v705 = vld [vmem:[%s2 + $0x88] sm:$0xf]
      %v706 = vld [vmem:[%s2 + $0x8c] sm:$0xf]
      %v707 = vld [vmem:[%s2 + $0x90] sm:$0xf]
      %v708 = vld [vmem:[%s2 + $0x94] sm:$0xf]
      %v709 = vld [vmem:[%s2 + $0x98] sm:$0xf]
      %v710 = vld [vmem:[%s2 + $0x9c] sm:$0xf]
      %v711 = vld [vmem:[%s2 + $0xa0] sm:$0xf]
      %v712 = vld [vmem:[%s2 + $0xa4] sm:$0xf]
      %v713 = vld [vmem:[%s2 + $0xa8] sm:$0xf]
      %v714 = vld [vmem:[%s2 + $0xac] sm:$0xf]
      %v715 = vld [vmem:[%s2 + $0xb0] sm:$0xf]
      %v716 = vld [vmem:[%s2 + $0xb4] sm:$0xf]
      %v717 = vld [vmem:[%s2 + $0xb8] sm:$0xf]
      %v718 = vld [vmem:[%s2 + $0xbc] sm:$0xf]
      %v767 = vunpack.c.l.b16 %v671
      %v768 = vunpack.c.l.b16 %v672
      %v769 = vunpack.c.l.b16 %v673
      %v770 = vunpack.c.l.b16 %v674
      %v771 = vunpack.c.l.b16 %v675
      %v772 = vunpack.c.l.b16 %v676
      %v773 = vunpack.c.l.b16 %v677
      %v774 = vunpack.c.l.b16 %v678
      %v775 = vunpack.c.l.b16 %v679
      %v776 = vunpack.c.l.b16 %v680
      %v777 = vunpack.c.l.b16 %v681
      %v778 = vunpack.c.l.b16 %v682
      %v779 = vunpack.c.l.b16 %v683
      %v780 = vunpack.c.l.b16 %v684
      %v781 = vunpack.c.l.b16 %v685
      %v782 = vunpack.c.l.b16 %v686
      %v783 = vunpack.c.l.b16 %v687
      %v784 = vunpack.c.l.b16 %v688
      %v785 = vunpack.c.l.b16 %v689
      %v786 = vunpack.c.l.b16 %v690
      %v787 = vunpack.c.l.b16 %v691
      %v788 = vunpack.c.l.b16 %v692
      %v789 = vunpack.c.l.b16 %v693
      %v790 = vunpack.c.l.b16 %v694
      %v791 = vunpack.c.l.b16 %v695
      %v792 = vunpack.c.l.b16 %v696
      %v793 = vunpack.c.l.b16 %v697
      %v794 = vunpack.c.l.b16 %v698
      %v795 = vunpack.c.l.b16 %v699
      %v796 = vunpack.c.l.b16 %v700
      %v797 = vunpack.c.l.b16 %v701
      %v798 = vunpack.c.l.b16 %v702
      %v799 = vunpack.c.l.b16 %v703
      %v800 = vunpack.c.l.b16 %v704
      %v801 = vunpack.c.l.b16 %v705
      %v802 = vunpack.c.l.b16 %v706
      %v803 = vunpack.c.l.b16 %v707
      %v804 = vunpack.c.l.b16 %v708
      %v805 = vunpack.c.l.b16 %v709
      %v806 = vunpack.c.l.b16 %v710
      %v807 = vunpack.c.l.b16 %v711
      %v808 = vunpack.c.l.b16 %v712
      %v809 = vunpack.c.l.b16 %v713
      %v810 = vunpack.c.l.b16 %v714
      %v811 = vunpack.c.l.b16 %v715
      %v812 = vunpack.c.l.b16 %v716
      %v813 = vunpack.c.l.b16 %v717
      %v814 = vunpack.c.l.b16 %v718
      %v815 = vpack.c.b16 %v768, %v767
      %v816 = vpack.c.b16 %v770, %v769
      %v817 = vpack.c.b16 %v772, %v771
      %v818 = vpack.c.b16 %v774, %v773
      %v819 = vpack.c.b16 %v776, %v775
      %v820 = vpack.c.b16 %v778, %v777
      %v821 = vpack.c.b16 %v780, %v779
      %v822 = vpack.c.b16 %v782, %v781
      %v823 = vpack.c.b16 %v784, %v783
      %v824 = vpack.c.b16 %v786, %v785
      %v825 = vpack.c.b16 %v788, %v787
      %v826 = vpack.c.b16 %v790, %v789
      %v827 = vpack.c.b16 %v792, %v791
      %v828 = vpack.c.b16 %v794, %v793
      %v829 = vpack.c.b16 %v796, %v795
      %v830 = vpack.c.b16 %v798, %v797
      %v831 = vpack.c.b16 %v800, %v799
      %v832 = vpack.c.b16 %v802, %v801
      %v833 = vpack.c.b16 %v804, %v803
      %v834 = vpack.c.b16 %v806, %v805
      %v835 = vpack.c.b16 %v808, %v807
      %v836 = vpack.c.b16 %v810, %v809
      %v837 = vpack.c.b16 %v812, %v811
      %v838 = vpack.c.b16 %v814, %v813
      %863 = vmatpush.bf16.msra.mxu0 %v822
      %864 = vmatpush.bf16.msra.mxu0 %v821
      %865 = vmatpush.bf16.msra.mxu0 %v820
      %866 = vmatpush.bf16.msra.mxu0 %v819
      %867 = vmatpush.bf16.msra.mxu0 %v818
      %868 = vmatpush.bf16.msra.mxu0 %v817
      %869 = vmatpush.bf16.msra.mxu0 %v816
      %870 = vmatpush.bf16.msra.mxu0 %v815
      %871 = vmatmul.bf16.gmra.mxu0 %v668
      %v872 = vpop.f32.mrf.mxu0
      %v873 = vadd.f32 0.0, %v872
      %v874 = vpop.f32.mrf.mxu0
      %v875 = vadd.f32 0.0, %v874
      %876 = vdwg.mxu0
      %877 = vmatpush.bf16.msra.mxu0 %v830
      %878 = vmatpush.bf16.msra.mxu0 %v829
      %879 = vmatpush.bf16.msra.mxu0 %v828
      %880 = vmatpush.bf16.msra.mxu0 %v827
      %881 = vmatpush.bf16.msra.mxu0 %v826
      %882 = vmatpush.bf16.msra.mxu0 %v825
      %883 = vmatpush.bf16.msra.mxu0 %v824
      %884 = vmatpush.bf16.msra.mxu0 %v823
      %885 = vmatmul.bf16.gmra.mxu0 %v669
      %v886 = vpop.f32.mrf.mxu0
      %v887 = vadd.f32 %v873, %v886
      %v888 = vpop.f32.mrf.mxu0
      %v889 = vadd.f32 %v875, %v888
      %890 = vdwg.mxu0
      %891 = vmatpush.bf16.msra.mxu0 %v838
      %892 = vmatpush.bf16.msra.mxu0 %v837
      %893 = vmatpush.bf16.msra.mxu0 %v836
      %894 = vmatpush.bf16.msra.mxu0 %v835
      %895 = vmatpush.bf16.msra.mxu0 %v834
      %896 = vmatpush.bf16.msra.mxu0 %v833
      %897 = vmatpush.bf16.msra.mxu0 %v832
      %898 = vmatpush.bf16.msra.mxu0 %v831
      %899 = vmatmul.bf16.gmra.mxu0 %v670
      %v900 = vpop.f32.mrf.mxu0
      %v901 = vadd.f32 %v887, %v900
      %v902 = vpop.f32.mrf.mxu0
      %v903 = vadd.f32 %v889, %v902
      %904 = vdwg.mxu0
      %v905 = vmul.f32 %v610, %v652
      %v906 = vmul.f32 %v612, %v654
      %v907 = vadd.f32 %v905, %v901
      %v908 = vadd.f32 %v906, %v903
      %v909 = vld [vmem:[%s4] sm:$0x1]
      %v911 = vperm.slane %v909, 0
      %v913 = vmul.f32 %v907, %v911
      %v914 = vmul.f32 %v908, %v911
      %v915 = vld [vmem:[%s5] sm:$0x1]
      %v917 = vperm.slane %v915, 0
      %v919 = vadd.f32 %v913, %v917
      %v920 = vadd.f32 %v914, %v917
      %v921 = vmax.f32 %v919, 0.0
      %v922 = vmax.f32 %v920, 0.0
      %vm923 = vcmask 523264
      %924 = vst.msk [vmem:[%s256] sm:$0xff] %vm923, %v921
      %925 = vst.msk [vmem:[%s256 + $0x8] sm:$0xff] %vm923, %v922
      %s926 = smul.u32 2, %s17
      %p927 = scmp.lt.s32.totalorder %s926, 3
      %s928 = scalar_select %p927, %s926, 3
      %s929 = smul.addr %s928, 8
      %s930 = scalar_lea.vmem %s6, %s929
      // Predicated region
      $region45: #{_lambda_.13} parent=43 // pred_check
        %p931 = pneg %p166
      $region46: #{_lambda_.13} parent=43 // pred_check_branch
        %933 = sbr.rel (%p931) target = $region48
      $region47: #{_lambda_.13} parent=43 // pred_region
        %s934 = smul.u32 2, %s17
      $region48: #{_lambda_.13} parent=43 // pred_fallthru
        _
    $region44: #{_lambda_.13} parent=5 // pred_fallthru
      _
    %p935 = scmp.le.s32.totalorder 2, %s12
    // Predicated region
    $region49: #{_lambda_.13} parent=5 // pred_check
      %p936 = pneg %p935
    $region50: #{_lambda_.13} parent=5 // pred_check_branch
      %938 = sbr.rel (%p936) target = $region52
    $region51: #{_lambda_.13} parent=5 // pred_region
      %s939 = ssub.s32 %s12, 2
      // Predicated region
      $region53: #{_lambda_.13} parent=51 // pred_check
        %p940 = pneg %p172
      $region54: #{_lambda_.13} parent=51 // pred_check_branch
        %942 = sbr.rel (%p940) target = $region56
      $region55: #{_lambda_.13} parent=51 // pred_region
        %s943 = smul.u32 2, %s18
        %p944 = scmp.lt.s32.totalorder %s943, 3
        %s945 = scalar_select %p944, %s943, 3
        %s946 = smul.addr %s945, 8
        %s947 = scalar_lea.vmem %s6, %s946
      $region56: #{_lambda_.13} parent=51 // pred_fallthru
        _
    $region52: #{_lambda_.13} parent=5 // pred_fallthru
      _
  $region6: #{_lambda_.13} parent=0 // loop_footer
    %s16 = sadd.s32 1, %s12
  $region7: #{_lambda_.13} parent=0 // loop_footer_branch
    %11 = sbr.rel target = $region3
  $region8: #{_lambda_.13} parent=0 // loop_exit
    _

// kernel: _lambda_.14
$region0: #{_lambda_.14}
  #allocation0 [shape = 'u32[]', space=smem, size = 0x4, offset = 0x4, fixed_abs, tag = 'smem constant byte address 0x4 - core index']
  #allocation1 [shape = 'u32[72,128]{1,0:T(1,128)}', space=vmem, size = 0x9000, scoped, tag = 'internal scratch']
  %s0 = inlined_call_operand.vmem [shape: bf16[32,640], index: 0, kind: input, shape index: {}]
  %s1 = inlined_call_operand.vmem [shape: bf16[640,256], index: 1, kind: input, shape index: {}]
  %s2 = inlined_call_operand.vmem [shape: bf16[640,128], index: 2, kind: input, shape index: {}]
  %s3 = inlined_call_operand.vmem [shape: f32[1,256], index: 3, kind: input, shape index: {}]
  %s4 = inlined_call_operand.vmem [shape: f32[1,128], index: 4, kind: input, shape index: {}]
  %s5 = inlined_call_operand.vmem [shape: f32[1,128], index: 5, kind: input, shape index: {}]
  %s6 = inlined_call_operand.vmem [shape: f32[32,64], index: 6, kind: input, shape index: {}]
  %s7 = inlined_call_operand.vmem [shape: f32[32,64], index: 7, kind: output, shape index: {}]
  %s8 = sld [smem:[#allocation0]]
  $region61: #{_lambda_.14} parent=0
    _
  %s10 = ssub.s32 1, %s8
  %s11 = scalar_select 0, %s10, %s8
  loop: start=0, step=1, limit=4
  $region2: #{_lambda_.14} parent=0 // loop_pre_header
    _
  $region3: #{_lambda_.14} parent=0 // loop_header
    %s13 = sphi 0, %s17
    %p14 = scmp.ge.s32.totalorder %s13, 4
    %s23 = sphi 0, %s25
    %s26 = sphi 0, %s23
    %s27 = sphi 0, %s26
    %s43 = sphi 0, %s27
    %s47 = sphi 0, %s47
    %s49 = sphi 0, %s47
    %s50 = sphi 0, %s49
    %s64 = sphi 0, %s50
    %s68 = sphi 0, %s68
    %s70 = sphi 0, %s68
    %s71 = sphi 0, %s70
    %s85 = sphi 0, %s71
    %s89 = sphi 0, %s89
    %s91 = sphi 0, %s89
    %s92 = sphi 0, %s91
    %s106 = sphi 0, %s92
    %s110 = sphi 0, %s110
    %s112 = sphi 0, %s110
    %s113 = sphi 0, %s112
    %s127 = sphi 0, %s113
    %s131 = sphi 0, %s131
    %s133 = sphi 0, %s131
    %s134 = sphi 0, %s133
    %s148 = sphi 0, %s134
    %s154 = sphi 0, %s156
    %s157 = sphi 0, %s154
    %s158 = sphi 0, %s157
    %s174 = sphi 0, %s158
    %s180 = sphi 0, %s182
    %s183 = sphi 0, %s180
    %s184 = sphi 0, %s183
    %s200 = sphi 0, %s184
  $region4: #{_lambda_.14} parent=0 // loop_header_branch
    %16 = sbr.rel (%p14) target = $region8
  $region5: #{_lambda_.14} parent=0 // loop_body
    %s18 = ssub.s32 %s13, 1
    %s19 = ssub.s32 %s13, 2
    %s20 = sadd.s32 %s13, 1
    %s21 = ssub.s32 %s13, %s20
    %p22 = scmp.eq.s32.totalorder %s21, 0
    %s24 = sadd.s32 %s23, 1
    %s25 = scalar_select %p22, %s23, %s24
    %p28 = pneg %p22
    %p29 = scmp.eq.s32.totalorder %s13, 1
    %p30 = por %p28, %p29
    %p31 = scmp.ne.s32.totalorder %s23, %s26
    %p32 = scmp.eq.s32.totalorder %s13, 0
    %p33 = por %p31, %p32
    %p34 = scmp.ne.s32.totalorder %s23, %s26
    %p35 = scmp.eq.s32.totalorder %s18, 1
    %p36 = por %p34, %p35
    %p37 = scmp.ne.s32.totalorder %s26, %s27
    %p38 = scmp.eq.s32.totalorder %s18, 0
    %p39 = por %p37, %p38
    %p40 = scmp.ne.s32.totalorder %s26, %s27
    %p41 = scmp.eq.s32.totalorder %s19, 1
    %p42 = por %p40, %p41
    %p44 = scmp.ne.s32.totalorder %s27, %s43
    %p45 = scmp.eq.s32.totalorder %s19, 0
    %p46 = por %p44, %p45
    %s48 = sadd.s32 %s47, 1
    %p51 = scmp.eq.s32.totalorder %s13, 1
    %p52 = scmp.ne.s32.totalorder %s47, %s49
    %p53 = scmp.eq.s32.totalorder %s13, 0
    %p54 = por %p52, %p53
    %p55 = scmp.ne.s32.totalorder %s47, %s49
    %p56 = scmp.eq.s32.totalorder %s18, 1
    %p57 = por %p55, %p56
    %p58 = scmp.ne.s32.totalorder %s49, %s50
    %p59 = scmp.eq.s32.totalorder %s18, 0
    %p60 = por %p58, %p59
    %p61 = scmp.ne.s32.totalorder %s49, %s50
    %p62 = scmp.eq.s32.totalorder %s19, 1
    %p63 = por %p61, %p62
    %p65 = scmp.ne.s32.totalorder %s50, %s64
    %p66 = scmp.eq.s32.totalorder %s19, 0
    %p67 = por %p65, %p66
    %s69 = sadd.s32 %s68, 1
    %p72 = scmp.eq.s32.totalorder %s13, 1
    %p73 = scmp.ne.s32.totalorder %s68, %s70
    %p74 = scmp.eq.s32.totalorder %s13, 0
    %p75 = por %p73, %p74
    %p76 = scmp.ne.s32.totalorder %s68, %s70
    %p77 = scmp.eq.s32.totalorder %s18, 1
    %p78 = por %p76, %p77
    %p79 = scmp.ne.s32.totalorder %s70, %s71
    %p80 = scmp.eq.s32.totalorder %s18, 0
    %p81 = por %p79, %p80
    %p82 = scmp.ne.s32.totalorder %s70, %s71
    %p83 = scmp.eq.s32.totalorder %s19, 1
    %p84 = por %p82, %p83
    %p86 = scmp.ne.s32.totalorder %s71, %s85
    %p87 = scmp.eq.s32.totalorder %s19, 0
    %p88 = por %p86, %p87
    %s90 = sadd.s32 %s89, 1
    %p93 = scmp.eq.s32.totalorder %s13, 1
    %p94 = scmp.ne.s32.totalorder %s89, %s91
    %p95 = scmp.eq.s32.totalorder %s13, 0
    %p96 = por %p94, %p95
    %p97 = scmp.ne.s32.totalorder %s89, %s91
    %p98 = scmp.eq.s32.totalorder %s18, 1
    %p99 = por %p97, %p98
    %p100 = scmp.ne.s32.totalorder %s91, %s92
    %p101 = scmp.eq.s32.totalorder %s18, 0
    %p102 = por %p100, %p101
    %p103 = scmp.ne.s32.totalorder %s91, %s92
    %p104 = scmp.eq.s32.totalorder %s19, 1
    %p105 = por %p103, %p104
    %p107 = scmp.ne.s32.totalorder %s92, %s106
    %p108 = scmp.eq.s32.totalorder %s19, 0
    %p109 = por %p107, %p108
    %s111 = sadd.s32 %s110, 1
    %p114 = scmp.eq.s32.totalorder %s13, 1
    %p115 = scmp.ne.s32.totalorder %s110, %s112
    %p116 = scmp.eq.s32.totalorder %s13, 0
    %p117 = por %p115, %p116
    %p118 = scmp.ne.s32.totalorder %s110, %s112
    %p119 = scmp.eq.s32.totalorder %s18, 1
    %p120 = por %p118, %p119
    %p121 = scmp.ne.s32.totalorder %s112, %s113
    %p122 = scmp.eq.s32.totalorder %s18, 0
    %p123 = por %p121, %p122
    %p124 = scmp.ne.s32.totalorder %s112, %s113
    %p125 = scmp.eq.s32.totalorder %s19, 1
    %p126 = por %p124, %p125
    %p128 = scmp.ne.s32.totalorder %s113, %s127
    %p129 = scmp.eq.s32.totalorder %s19, 0
    %p130 = por %p128, %p129
    %s132 = sadd.s32 %s131, 1
    %p135 = scmp.eq.s32.totalorder %s13, 1
    %p136 = scmp.ne.s32.totalorder %s131, %s133
    %p137 = scmp.eq.s32.totalorder %s13, 0
    %p138 = por %p136, %p137
    %p139 = scmp.ne.s32.totalorder %s131, %s133
    %p140 = scmp.eq.s32.totalorder %s18, 1
    %p141 = por %p139, %p140
    %p142 = scmp.ne.s32.totalorder %s133, %s134
    %p143 = scmp.eq.s32.totalorder %s18, 0
    %p144 = por %p142, %p143
    %p145 = scmp.ne.s32.totalorder %s133, %s134
    %p146 = scmp.eq.s32.totalorder %s19, 1
    %p147 = por %p145, %p146
    %p149 = scmp.ne.s32.totalorder %s134, %s148
    %p150 = scmp.eq.s32.totalorder %s19, 0
    %p151 = por %p149, %p150
    %s152 = ssub.s32 %s13, %s20
    %p153 = scmp.eq.s32.totalorder %s152, 0
    %s155 = sadd.s32 %s154, 1
    %s156 = scalar_select %p153, %s154, %s155
    %p159 = pneg %p153
    %p160 = scmp.eq.s32.totalorder %s13, 1
    %p161 = por %p159, %p160
    %p162 = scmp.ne.s32.totalorder %s154, %s157
    %p163 = scmp.eq.s32.totalorder %s13, 0
    %p164 = por %p162, %p163
    %p165 = scmp.ne.s32.totalorder %s154, %s157
    %p166 = scmp.eq.s32.totalorder %s18, 1
    %p167 = por %p165, %p166
    %p168 = scmp.ne.s32.totalorder %s157, %s158
    %p169 = scmp.eq.s32.totalorder %s18, 0
    %p170 = por %p168, %p169
    %p171 = scmp.ne.s32.totalorder %s157, %s158
    %p172 = scmp.eq.s32.totalorder %s19, 1
    %p173 = por %p171, %p172
    %p175 = scmp.ne.s32.totalorder %s158, %s174
    %p176 = scmp.eq.s32.totalorder %s19, 0
    %p177 = por %p175, %p176
    %s178 = ssub.s32 %s13, %s20
    %p179 = scmp.eq.s32.totalorder %s178, 0
    %s181 = sadd.s32 %s180, 1
    %s182 = scalar_select %p179, %s180, %s181
    %p185 = pneg %p179
    %p186 = scmp.eq.s32.totalorder %s13, 1
    %p187 = por %p185, %p186
    %p188 = scmp.ne.s32.totalorder %s180, %s183
    %p189 = scmp.eq.s32.totalorder %s13, 0
    %p190 = por %p188, %p189
    %p191 = scmp.ne.s32.totalorder %s180, %s183
    %p192 = scmp.eq.s32.totalorder %s18, 1
    %p193 = por %p191, %p192
    %p194 = scmp.ne.s32.totalorder %s183, %s184
    %p195 = scmp.eq.s32.totalorder %s18, 0
    %p196 = por %p194, %p195
    %p197 = scmp.ne.s32.totalorder %s183, %s184
    %p198 = scmp.eq.s32.totalorder %s19, 1
    %p199 = por %p197, %p198
    %p201 = scmp.ne.s32.totalorder %s184, %s200
    %p202 = scmp.eq.s32.totalorder %s19, 0
    %p203 = por %p201, %p202
    %p204 = scmp.le.s32.totalorder 1, %s13
    %p205 = scmp.lt.s32.totalorder %s13, 3
    %p206 = pnand %p204, %p205
    %p207 = pneg %p206
    // Predicated region
    $region9: #{_lambda_.14} parent=5 // pred_check
      _
    $region10: #{_lambda_.14} parent=5 // pred_check_branch
      %209 = sbr.rel (%p206) target = $region12
    $region11: #{_lambda_.14} parent=5 // pred_region
      %s210 = ssub.s32 %s13, 1
      // Predicated region
      $region13: #{_lambda_.14} parent=11 // pred_check
        %p211 = pneg %p60
      $region14: #{_lambda_.14} parent=11 // pred_check_branch
        %213 = sbr.rel (%p211) target = $region16
      $region15: #{_lambda_.14} parent=11 // pred_region
        _
      $region16: #{_lambda_.14} parent=11 // pred_fallthru
        _
      // Predicated region
      $region17: #{_lambda_.14} parent=11 // pred_check
        %p214 = pneg %p81
      $region18: #{_lambda_.14} parent=11 // pred_check_branch
        %216 = sbr.rel (%p214) target = $region20
      $region19: #{_lambda_.14} parent=11 // pred_region
        _
      $region20: #{_lambda_.14} parent=11 // pred_fallthru
        _
      // Predicated region
      $region21: #{_lambda_.14} parent=11 // pred_check
        %p217 = pneg %p102
      $region22: #{_lambda_.14} parent=11 // pred_check_branch
        %219 = sbr.rel (%p217) target = $region24
      $region23: #{_lambda_.14} parent=11 // pred_region
        _
      $region24: #{_lambda_.14} parent=11 // pred_fallthru
        _
      // Predicated region
      $region25: #{_lambda_.14} parent=11 // pred_check
        %p220 = pneg %p123
      $region26: #{_lambda_.14} parent=11 // pred_check_branch
        %222 = sbr.rel (%p220) target = $region28
      $region27: #{_lambda_.14} parent=11 // pred_region
        _
      $region28: #{_lambda_.14} parent=11 // pred_fallthru
        _
      // Predicated region
      $region29: #{_lambda_.14} parent=11 // pred_check
        %p223 = pneg %p144
      $region30: #{_lambda_.14} parent=11 // pred_check_branch
        %225 = sbr.rel (%p223) target = $region32
      $region31: #{_lambda_.14} parent=11 // pred_region
        _
      $region32: #{_lambda_.14} parent=11 // pred_fallthru
        _
    $region12: #{_lambda_.14} parent=5 // pred_fallthru
      _
    %p226 = scmp.lt.s32.totalorder %s13, 2
    // Predicated region
    $region33: #{_lambda_.14} parent=5 // pred_check
      %p227 = pneg %p226
    $region34: #{_lambda_.14} parent=5 // pred_check_branch
      %229 = sbr.rel (%p227) target = $region36
    $region35: #{_lambda_.14} parent=5 // pred_region
      // Predicated region
      $region37: #{_lambda_.14} parent=35 // pred_check
        %p230 = pneg %p33
      $region38: #{_lambda_.14} parent=35 // pred_check_branch
        %232 = sbr.rel (%p230) target = $region40
      $region39: #{_lambda_.14} parent=35 // pred_region
        %s233 = smul.u32 2, %s13
        %p234 = scmp.lt.s32.totalorder %s233, 3
        %s235 = scalar_select %p234, %s233, 3
        %s236 = smul.addr %s235, 5
        %s237 = smul.addr %s236, 4
        %s238 = scalar_lea.vmem %s0, %s237
        %s239 = smul.u32 2, %s13
      $region40: #{_lambda_.14} parent=35 // pred_fallthru
        _
      // Predicated region
      $region41: #{_lambda_.14} parent=35 // pred_check
        %p240 = pneg %p164
      $region42: #{_lambda_.14} parent=35 // pred_check_branch
        %242 = sbr.rel (%p240) target = $region44
      $region43: #{_lambda_.14} parent=35 // pred_region
        %s243 = smul.u32 2, %s13
        %p244 = scmp.lt.s32.totalorder %s243, 3
        %s245 = scalar_select %p244, %s243, 3
        %s246 = smul.addr %s245, 8
        %s247 = scalar_lea.vmem %s6, %s246
        %s248 = smul.u32 2, %s13
      $region44: #{_lambda_.14} parent=35 // pred_fallthru
        _
    $region36: #{_lambda_.14} parent=5 // pred_fallthru
      _
    %p249 = scmp.le.s32.totalorder 1, %s13
    %p250 = scmp.lt.s32.totalorder %s13, 3
    %p251 = pnand %p249, %p250
    %p252 = pneg %p251
    // Predicated region
    $region45: #{_lambda_.14} parent=5 // pred_check
      _
    $region46: #{_lambda_.14} parent=5 // pred_check_branch
      %254 = sbr.rel (%p251) target = $region48
    $region47: #{_lambda_.14} parent=5 // pred_region
      %s255 = ssub.s32 %s13, 1
      %s256 = smul.u32 2, %s18
      %p257 = scmp.lt.s32.totalorder %s256, 3
      %s258 = scalar_select %p257, %s256, 3
      %s259 = smul.addr %s258, 5
      %s260 = smul.addr %s259, 4
      %s261 = scalar_lea.vmem %s0, %s260
      %p262 = pneg %p39
      %p263 = pneg %p36
      %p264 = pneg %p60
      %p265 = pneg %p57
      %p266 = pneg %p81
      %p267 = pneg %p78
      %p268 = pneg %p102
      %p269 = pneg %p99
      %p270 = pneg %p123
      %p271 = pneg %p120
      %p272 = pneg %p144
      %p273 = pneg %p141
      %s274 = smul.u32 2, %s18
      %p275 = scmp.lt.s32.totalorder %s274, 3
      %s276 = scalar_select %p275, %s274, 3
      %s277 = smul.addr %s276, 8
      %s278 = scalar_lea.vmem %s6, %s277
      %p279 = pneg %p170
      %p280 = pneg %p167
      %p281 = pneg %p196
      %p282 = pneg %p193
      %s283 = smul.u32 2, %s18
      %p284 = scmp.lt.s32.totalorder %s283, 3
      %s285 = scalar_select %p284, %s283, 3
      %s286 = smul.addr %s285, 8
      %s287 = scalar_lea.vmem %s7, %s286
      %s288 = smul.u32 2, %s18
      %p289 = scmp.lt.s32.totalorder %s288, 3
      %s290 = scalar_select %p289, %s288, 3
      %s291 = smul.addr %s290, 5
      %s292 = smul.addr %s291, 4
      %s293 = scalar_lea.vmem %s0, %s292
      %s294 = smul.u32 2, %s18
      %s295 = smul.u32 2, %s18
      %p296 = scmp.lt.s32.totalorder %s295, 3
      %s297 = scalar_select %p296, %s295, 3
      %s298 = smul.addr %s297, 8
      %s299 = scalar_lea.vmem %s6, %s298
      %s300 = smul.u32 2, %s18
      %s301 = smul.u32 2, %s18
      %p302 = scmp.lt.s32.totalorder %s301, 3
      %s303 = scalar_select %p302, %s301, 3
      %s304 = smul.addr %s303, 8
      %s305 = scalar_lea.vmem %s7, %s304
      %s306 = smul.u32 2, %s18
      %v307 = vld [vmem:[%s293] sm:$0xff]
      %v308 = vld [vmem:[%s293 + $0x8] sm:$0xff]
      %v309 = vld [vmem:[%s293 + $0x10] sm:$0xf]
      %v310 = vld [vmem:[%s293 + $0x14] sm:$0xff]
      %v311 = vld [vmem:[%s293 + $0x1c] sm:$0xff]
      %v312 = vld [vmem:[%s293 + $0x24] sm:$0xf]
      %v313 = vld [vmem:[%s1] sm:$0xff]
      %v314 = vld [vmem:[%s1 + $0x8] sm:$0xff]
      %v315 = vld [vmem:[%s1 + $0x10] sm:$0xff]
      %v316 = vld [vmem:[%s1 + $0x18] sm:$0xff]
      %v317 = vld [vmem:[%s1 + $0x20] sm:$0xff]
      %v318 = vld [vmem:[%s1 + $0x28] sm:$0xff]
      %v319 = vld [vmem:[%s1 + $0x30] sm:$0xff]
      %v320 = vld [vmem:[%s1 + $0x38] sm:$0xff]
      %v321 = vld [vmem:[%s1 + $0x40] sm:$0xff]
      %v322 = vld [vmem:[%s1 + $0x48] sm:$0xff]
      %v323 = vld [vmem:[%s1 + $0x50] sm:$0xff]
      %v324 = vld [vmem:[%s1 + $0x58] sm:$0xff]
      %v325 = vld [vmem:[%s1 + $0x60] sm:$0xff]
      %v326 = vld [vmem:[%s1 + $0x68] sm:$0xff]
      %v327 = vld [vmem:[%s1 + $0x70] sm:$0xff]
      %v328 = vld [vmem:[%s1 + $0x78] sm:$0xff]
      %v329 = vld [vmem:[%s1 + $0x80] sm:$0xff]
      %v330 = vld [vmem:[%s1 + $0x88] sm:$0xff]
      %v331 = vld [vmem:[%s1 + $0x90] sm:$0xff]
      %v332 = vld [vmem:[%s1 + $0x98] sm:$0xff]
      %v333 = vld [vmem:[%s1 + $0xa0] sm:$0xff]
      %v334 = vld [vmem:[%s1 + $0xa8] sm:$0xff]
      %v335 = vld [vmem:[%s1 + $0xb0] sm:$0xff]
      %v336 = vld [vmem:[%s1 + $0xb8] sm:$0xff]
      %v337 = vld [vmem:[%s1 + $0xc0] sm:$0xff]
      %v338 = vld [vmem:[%s1 + $0xc8] sm:$0xff]
      %v339 = vld [vmem:[%s1 + $0xd0] sm:$0xff]
      %v340 = vld [vmem:[%s1 + $0xd8] sm:$0xff]
      %v341 = vld [vmem:[%s1 + $0xe0] sm:$0xff]
      %v342 = vld [vmem:[%s1 + $0xe8] sm:$0xff]
      %v343 = vld [vmem:[%s1 + $0xf0] sm:$0xff]
      %v344 = vld [vmem:[%s1 + $0xf8] sm:$0xff]
      %v345 = vld [vmem:[%s1 + $0x100] sm:$0xff]
      %v346 = vld [vmem:[%s1 + $0x108] sm:$0xff]
      %v347 = vld [vmem:[%s1 + $0x110] sm:$0xff]
      %v348 = vld [vmem:[%s1 + $0x118] sm:$0xff]
      %v349 = vld [vmem:[%s1 + $0x120] sm:$0xff]
      %v350 = vld [vmem:[%s1 + $0x128] sm:$0xff]
      %v351 = vld [vmem:[%s1 + $0x130] sm:$0xff]
      %v352 = vld [vmem:[%s1 + $0x138] sm:$0xff]
      %v353 = vld [vmem:[%s1 + $0x140] sm:$0xff]
      %v354 = vld [vmem:[%s1 + $0x148] sm:$0xff]
      %v355 = vld [vmem:[%s1 + $0x150] sm:$0xff]
      %v356 = vld [vmem:[%s1 + $0x158] sm:$0xff]
      %v357 = vld [vmem:[%s1 + $0x160] sm:$0xff]
      %v358 = vld [vmem:[%s1 + $0x168] sm:$0xff]
      %v359 = vld [vmem:[%s1 + $0x170] sm:$0xff]
      %v360 = vld [vmem:[%s1 + $0x178] sm:$0xff]
      %v361 = vld [vmem:[%s1 + $0x180] sm:$0xff]
      %v362 = vld [vmem:[%s1 + $0x188] sm:$0xff]
      %v363 = vld [vmem:[%s1 + $0x190] sm:$0xff]
      %v364 = vld [vmem:[%s1 + $0x198] sm:$0xff]
      %v365 = vld [vmem:[%s1 + $0x1a0] sm:$0xff]
      %v366 = vld [vmem:[%s1 + $0x1a8] sm:$0xff]
      %v367 = vld [vmem:[%s1 + $0x1b0] sm:$0xff]
      %v368 = vld [vmem:[%s1 + $0x1b8] sm:$0xff]
      %v369 = vld [vmem:[%s1 + $0x1c0] sm:$0xff]
      %v370 = vld [vmem:[%s1 + $0x1c8] sm:$0xff]
      %v371 = vld [vmem:[%s1 + $0x1d0] sm:$0xff]
      %v372 = vld [vmem:[%s1 + $0x1d8] sm:$0xff]
      %v373 = vld [vmem:[%s1 + $0x1e0] sm:$0xff]
      %v374 = vld [vmem:[%s1 + $0x1e8] sm:$0xff]
      %v375 = vld [vmem:[%s1 + $0x1f0] sm:$0xff]
      %v376 = vld [vmem:[%s1 + $0x1f8] sm:$0xff]
      %v377 = vld [vmem:[%s1 + $0x200] sm:$0xff]
      %v378 = vld [vmem:[%s1 + $0x208] sm:$0xff]
      %v379 = vld [vmem:[%s1 + $0x210] sm:$0xff]
      %v380 = vld [vmem:[%s1 + $0x218] sm:$0xff]
      %v381 = vld [vmem:[%s1 + $0x220] sm:$0xff]
      %v382 = vld [vmem:[%s1 + $0x228] sm:$0xff]
      %v383 = vld [vmem:[%s1 + $0x230] sm:$0xff]
      %v384 = vld [vmem:[%s1 + $0x238] sm:$0xff]
      %v385 = vld [vmem:[%s1 + $0x240] sm:$0xff]
      %v386 = vld [vmem:[%s1 + $0x248] sm:$0xff]
      %v387 = vld [vmem:[%s1 + $0x250] sm:$0xff]
      %v388 = vld [vmem:[%s1 + $0x258] sm:$0xff]
      %v389 = vld [vmem:[%s1 + $0x260] sm:$0xff]
      %v390 = vld [vmem:[%s1 + $0x268] sm:$0xff]
      %v391 = vld [vmem:[%s1 + $0x270] sm:$0xff]
      %v392 = vld [vmem:[%s1 + $0x278] sm:$0xff]
      %v393 = vld [vmem:[%s3] sm:$0x3]
      %v395 = vperm.slane %v393, 0
      %v396 = vperm.slane %v393, 1
      %v405 = vunpack.c.l.b16 %v307
      %v406 = vunpack.c.h.b16 %v307
      %v407 = vunpack.c.l.b16 %v308
      %v408 = vunpack.c.h.b16 %v308
      %v409 = vunpack.c.l.b16 %v309
      %v410 = vunpack.c.l.b16 %v310
      %v411 = vunpack.c.h.b16 %v310
      %v412 = vunpack.c.l.b16 %v311
      %v413 = vunpack.c.h.b16 %v311
      %v414 = vunpack.c.l.b16 %v312
      %v415 = vpack.c.b16 %v410, %v405
      %v416 = vpack.c.b16 %v411, %v406
      %v417 = vpack.c.b16 %v412, %v407
      %v418 = vpack.c.b16 %v413, %v408
      %v419 = vpack.c.b16 %v414, %v409
      %v505 = vunpack.c.l.b16 %v313
      %v506 = vunpack.c.h.b16 %v313
      %v507 = vunpack.c.l.b16 %v314
      %v508 = vunpack.c.h.b16 %v314
      %v509 = vunpack.c.l.b16 %v315
      %v510 = vunpack.c.h.b16 %v315
      %v511 = vunpack.c.l.b16 %v316
      %v512 = vunpack.c.h.b16 %v316
      %v513 = vunpack.c.l.b16 %v317
      %v514 = vunpack.c.h.b16 %v317
      %v515 = vunpack.c.l.b16 %v318
      %v516 = vunpack.c.h.b16 %v318
      %v517 = vunpack.c.l.b16 %v319
      %v518 = vunpack.c.h.b16 %v319
      %v519 = vunpack.c.l.b16 %v320
      %v520 = vunpack.c.h.b16 %v320
      %v521 = vunpack.c.l.b16 %v321
      %v522 = vunpack.c.h.b16 %v321
      %v523 = vunpack.c.l.b16 %v322
      %v524 = vunpack.c.h.b16 %v322
      %v525 = vunpack.c.l.b16 %v323
      %v526 = vunpack.c.h.b16 %v323
      %v527 = vunpack.c.l.b16 %v324
      %v528 = vunpack.c.h.b16 %v324
      %v529 = vunpack.c.l.b16 %v325
      %v530 = vunpack.c.h.b16 %v325
      %v531 = vunpack.c.l.b16 %v326
      %v532 = vunpack.c.h.b16 %v326
      %v533 = vunpack.c.l.b16 %v327
      %v534 = vunpack.c.h.b16 %v327
      %v535 = vunpack.c.l.b16 %v328
      %v536 = vunpack.c.h.b16 %v328
      %v537 = vunpack.c.l.b16 %v329
      %v538 = vunpack.c.h.b16 %v329
      %v539 = vunpack.c.l.b16 %v330
      %v540 = vunpack.c.h.b16 %v330
      %v541 = vunpack.c.l.b16 %v331
      %v542 = vunpack.c.h.b16 %v331
      %v543 = vunpack.c.l.b16 %v332
      %v544 = vunpack.c.h.b16 %v332
      %v545 = vunpack.c.l.b16 %v333
      %v546 = vunpack.c.h.b16 %v333
      %v547 = vunpack.c.l.b16 %v334
      %v548 = vunpack.c.h.b16 %v334
      %v549 = vunpack.c.l.b16 %v335
      %v550 = vunpack.c.h.b16 %v335
      %v551 = vunpack.c.l.b16 %v336
      %v552 = vunpack.c.h.b16 %v336
      %v553 = vunpack.c.l.b16 %v337
      %v554 = vunpack.c.h.b16 %v337
      %v555 = vunpack.c.l.b16 %v338
      %v556 = vunpack.c.h.b16 %v338
      %v557 = vunpack.c.l.b16 %v339
      %v558 = vunpack.c.h.b16 %v339
      %v559 = vunpack.c.l.b16 %v340
      %v560 = vunpack.c.h.b16 %v340
      %v561 = vunpack.c.l.b16 %v341
      %v562 = vunpack.c.h.b16 %v341
      %v563 = vunpack.c.l.b16 %v342
      %v564 = vunpack.c.h.b16 %v342
      %v565 = vunpack.c.l.b16 %v343
      %v566 = vunpack.c.h.b16 %v343
      %v567 = vunpack.c.l.b16 %v344
      %v568 = vunpack.c.h.b16 %v344
      %v569 = vunpack.c.l.b16 %v345
      %v570 = vunpack.c.h.b16 %v345
      %v571 = vunpack.c.l.b16 %v346
      %v572 = vunpack.c.h.b16 %v346
      %v573 = vunpack.c.l.b16 %v347
      %v574 = vunpack.c.h.b16 %v347
      %v575 = vunpack.c.l.b16 %v348
      %v576 = vunpack.c.h.b16 %v348
      %v577 = vunpack.c.l.b16 %v349
      %v578 = vunpack.c.h.b16 %v349
      %v579 = vunpack.c.l.b16 %v350
      %v580 = vunpack.c.h.b16 %v350
      %v581 = vunpack.c.l.b16 %v351
      %v582 = vunpack.c.h.b16 %v351
      %v583 = vunpack.c.l.b16 %v352
      %v584 = vunpack.c.h.b16 %v352
      %v585 = vunpack.c.l.b16 %v353
      %v586 = vunpack.c.h.b16 %v353
      %v587 = vunpack.c.l.b16 %v354
      %v588 = vunpack.c.h.b16 %v354
      %v589 = vunpack.c.l.b16 %v355
      %v590 = vunpack.c.h.b16 %v355
      %v591 = vunpack.c.l.b16 %v356
      %v592 = vunpack.c.h.b16 %v356
      %v593 = vunpack.c.l.b16 %v357
      %v594 = vunpack.c.h.b16 %v357
      %v595 = vunpack.c.l.b16 %v358
      %v596 = vunpack.c.h.b16 %v358
      %v597 = vunpack.c.l.b16 %v359
      %v598 = vunpack.c.h.b16 %v359
      %v599 = vunpack.c.l.b16 %v360
      %v600 = vunpack.c.h.b16 %v360
      %v601 = vunpack.c.l.b16 %v361
      %v602 = vunpack.c.h.b16 %v361
      %v603 = vunpack.c.l.b16 %v362
      %v604 = vunpack.c.h.b16 %v362
      %v605 = vunpack.c.l.b16 %v363
      %v606 = vunpack.c.h.b16 %v363
      %v607 = vunpack.c.l.b16 %v364
      %v608 = vunpack.c.h.b16 %v364
      %v609 = vunpack.c.l.b16 %v365
      %v610 = vunpack.c.h.b16 %v365
      %v611 = vunpack.c.l.b16 %v366
      %v612 = vunpack.c.h.b16 %v366
      %v613 = vunpack.c.l.b16 %v367
      %v614 = vunpack.c.h.b16 %v367
      %v615 = vunpack.c.l.b16 %v368
      %v616 = vunpack.c.h.b16 %v368
      %v617 = vunpack.c.l.b16 %v369
      %v618 = vunpack.c.h.b16 %v369
      %v619 = vunpack.c.l.b16 %v370
      %v620 = vunpack.c.h.b16 %v370
      %v621 = vunpack.c.l.b16 %v371
      %v622 = vunpack.c.h.b16 %v371
      %v623 = vunpack.c.l.b16 %v372
      %v624 = vunpack.c.h.b16 %v372
      %v625 = vunpack.c.l.b16 %v373
      %v626 = vunpack.c.h.b16 %v373
      %v627 = vunpack.c.l.b16 %v374
      %v628 = vunpack.c.h.b16 %v374
      %v629 = vunpack.c.l.b16 %v375
      %v630 = vunpack.c.h.b16 %v375
      %v631 = vunpack.c.l.b16 %v376
      %v632 = vunpack.c.h.b16 %v376
      %v633 = vunpack.c.l.b16 %v377
      %v634 = vunpack.c.h.b16 %v377
      %v635 = vunpack.c.l.b16 %v378
      %v636 = vunpack.c.h.b16 %v378
      %v637 = vunpack.c.l.b16 %v379
      %v638 = vunpack.c.h.b16 %v379
      %v639 = vunpack.c.l.b16 %v380
      %v640 = vunpack.c.h.b16 %v380
      %v641 = vunpack.c.l.b16 %v381
      %v642 = vunpack.c.h.b16 %v381
      %v643 = vunpack.c.l.b16 %v382
      %v644 = vunpack.c.h.b16 %v382
      %v645 = vunpack.c.l.b16 %v383
      %v646 = vunpack.c.h.b16 %v383
      %v647 = vunpack.c.l.b16 %v384
      %v648 = vunpack.c.h.b16 %v384
      %v649 = vunpack.c.l.b16 %v385
      %v650 = vunpack.c.h.b16 %v385
      %v651 = vunpack.c.l.b16 %v386
      %v652 = vunpack.c.h.b16 %v386
      %v653 = vunpack.c.l.b16 %v387
      %v654 = vunpack.c.h.b16 %v387
      %v655 = vunpack.c.l.b16 %v388
      %v656 = vunpack.c.h.b16 %v388
      %v657 = vunpack.c.l.b16 %v389
      %v658 = vunpack.c.h.b16 %v389
      %v659 = vunpack.c.l.b16 %v390
      %v660 = vunpack.c.h.b16 %v390
      %v661 = vunpack.c.l.b16 %v391
      %v662 = vunpack.c.h.b16 %v391
      %v663 = vunpack.c.l.b16 %v392
      %v664 = vunpack.c.h.b16 %v392
      %v665 = vpack.c.b16 %v507, %v505
      %v666 = vpack.c.b16 %v508, %v506
      %v667 = vpack.c.b16 %v511, %v509
      %v668 = vpack.c.b16 %v512, %v510
      %v669 = vpack.c.b16 %v515, %v513
      %v670 = vpack.c.b16 %v516, %v514
      %v671 = vpack.c.b16 %v519, %v517
      %v672 = vpack.c.b16 %v520, %v518
      %v673 = vpack.c.b16 %v523, %v521
      %v674 = vpack.c.b16 %v524, %v522
      %v675 = vpack.c.b16 %v527, %v525
      %v676 = vpack.c.b16 %v528, %v526
      %v677 = vpack.c.b16 %v531, %v529
      %v678 = vpack.c.b16 %v532, %v530
      %v679 = vpack.c.b16 %v535, %v533
      %v680 = vpack.c.b16 %v536, %v534
      %v681 = vpack.c.b16 %v539, %v537
      %v682 = vpack.c.b16 %v540, %v538
      %v683 = vpack.c.b16 %v543, %v541
      %v684 = vpack.c.b16 %v544, %v542
      %v685 = vpack.c.b16 %v547, %v545
      %v686 = vpack.c.b16 %v548, %v546
      %v687 = vpack.c.b16 %v551, %v549
      %v688 = vpack.c.b16 %v552, %v550
      %v689 = vpack.c.b16 %v555, %v553
      %v690 = vpack.c.b16 %v556, %v554
      %v691 = vpack.c.b16 %v559, %v557
      %v692 = vpack.c.b16 %v560, %v558
      %v693 = vpack.c.b16 %v563, %v561
      %v694 = vpack.c.b16 %v564, %v562
      %v695 = vpack.c.b16 %v567, %v565
      %v696 = vpack.c.b16 %v568, %v566
      %v697 = vpack.c.b16 %v571, %v569
      %v698 = vpack.c.b16 %v572, %v570
      %v699 = vpack.c.b16 %v575, %v573
      %v700 = vpack.c.b16 %v576, %v574
      %v701 = vpack.c.b16 %v579, %v577
      %v702 = vpack.c.b16 %v580, %v578
      %v703 = vpack.c.b16 %v583, %v581
      %v704 = vpack.c.b16 %v584, %v582
      %v705 = vpack.c.b16 %v587, %v585
      %v706 = vpack.c.b16 %v588, %v586
      %v707 = vpack.c.b16 %v591, %v589
      %v708 = vpack.c.b16 %v592, %v590
      %v709 = vpack.c.b16 %v595, %v593
      %v710 = vpack.c.b16 %v596, %v594
      %v711 = vpack.c.b16 %v599, %v597
      %v712 = vpack.c.b16 %v600, %v598
      %v713 = vpack.c.b16 %v603, %v601
      %v714 = vpack.c.b16 %v604, %v602
      %v715 = vpack.c.b16 %v607, %v605
      %v716 = vpack.c.b16 %v608, %v606
      %v717 = vpack.c.b16 %v611, %v609
      %v718 = vpack.c.b16 %v612, %v610
      %v719 = vpack.c.b16 %v615, %v613
      %v720 = vpack.c.b16 %v616, %v614
      %v721 = vpack.c.b16 %v619, %v617
      %v722 = vpack.c.b16 %v620, %v618
      %v723 = vpack.c.b16 %v623, %v621
      %v724 = vpack.c.b16 %v624, %v622
      %v725 = vpack.c.b16 %v627, %v625
      %v726 = vpack.c.b16 %v628, %v626
      %v727 = vpack.c.b16 %v631, %v629
      %v728 = vpack.c.b16 %v632, %v630
      %v729 = vpack.c.b16 %v635, %v633
      %v730 = vpack.c.b16 %v636, %v634
      %v731 = vpack.c.b16 %v639, %v637
      %v732 = vpack.c.b16 %v640, %v638
      %v733 = vpack.c.b16 %v643, %v641
      %v734 = vpack.c.b16 %v644, %v642
      %v735 = vpack.c.b16 %v647, %v645
      %v736 = vpack.c.b16 %v648, %v646
      %v737 = vpack.c.b16 %v651, %v649
      %v738 = vpack.c.b16 %v652, %v650
      %v739 = vpack.c.b16 %v655, %v653
      %v740 = vpack.c.b16 %v656, %v654
      %v741 = vpack.c.b16 %v659, %v657
      %v742 = vpack.c.b16 %v660, %v658
      %v743 = vpack.c.b16 %v663, %v661
      %v744 = vpack.c.b16 %v664, %v662
      %825 = vmatpush.bf16.msra.mxu0 %v679
      %826 = vmatpush.bf16.msra.mxu0 %v677
      %827 = vmatpush.bf16.msra.mxu0 %v675
      %828 = vmatpush.bf16.msra.mxu0 %v673
      %829 = vmatpush.bf16.msra.mxu0 %v671
      %830 = vmatpush.bf16.msra.mxu0 %v669
      %831 = vmatpush.bf16.msra.mxu0 %v667
      %832 = vmatpush.bf16.msra.mxu0 %v665
      %833 = vmatmul.bf16.gmra.mxu0 %v415
      %v834 = vpop.f32.mrf.mxu0
      %v835 = vadd.f32 %v395, %v834
      %v836 = vpop.f32.mrf.mxu0
      %v837 = vadd.f32 %v395, %v836
      %838 = vdwg.mxu0
      %839 = vmatpush.bf16.msra.mxu0 %v695
      %840 = vmatpush.bf16.msra.mxu0 %v693
      %841 = vmatpush.bf16.msra.mxu0 %v691
      %842 = vmatpush.bf16.msra.mxu0 %v689
      %843 = vmatpush.bf16.msra.mxu0 %v687
      %844 = vmatpush.bf16.msra.mxu0 %v685
      %845 = vmatpush.bf16.msra.mxu0 %v683
      %846 = vmatpush.bf16.msra.mxu0 %v681
      %847 = vmatmul.bf16.gmra.mxu0 %v416
      %v848 = vpop.f32.mrf.mxu0
      %v849 = vadd.f32 %v835, %v848
      %v850 = vpop.f32.mrf.mxu0
      %v851 = vadd.f32 %v837, %v850
      %852 = vdwg.mxu0
      %853 = vmatpush.bf16.msra.mxu0 %v711
      %854 = vmatpush.bf16.msra.mxu0 %v709
      %855 = vmatpush.bf16.msra.mxu0 %v707
      %856 = vmatpush.bf16.msra.mxu0 %v705
      %857 = vmatpush.bf16.msra.mxu0 %v703
      %858 = vmatpush.bf16.msra.mxu0 %v701
      %859 = vmatpush.bf16.msra.mxu0 %v699
      %860 = vmatpush.bf16.msra.mxu0 %v697
      %861 = vmatmul.bf16.gmra.mxu0 %v417
      %v862 = vpop.f32.mrf.mxu0
      %v863 = vadd.f32 %v849, %v862
      %v864 = vpop.f32.mrf.mxu0
      %v865 = vadd.f32 %v851, %v864
      %866 = vdwg.mxu0
      %867 = vmatpush.bf16.msra.mxu0 %v727
      %868 = vmatpush.bf16.msra.mxu0 %v725
      %869 = vmatpush.bf16.msra.mxu0 %v723
      %870 = vmatpush.bf16.msra.mxu0 %v721
      %871 = vmatpush.bf16.msra.mxu0 %v719
      %872 = vmatpush.bf16.msra.mxu0 %v717
      %873 = vmatpush.bf16.msra.mxu0 %v715
      %874 = vmatpush.bf16.msra.mxu0 %v713
      %875 = vmatmul.bf16.gmra.mxu0 %v418
      %v876 = vpop.f32.mrf.mxu0
      %v877 = vadd.f32 %v863, %v876
      %v878 = vpop.f32.mrf.mxu0
      %v879 = vadd.f32 %v865, %v878
      %880 = vdwg.mxu0
      %881 = vmatpush.bf16.msra.mxu0 %v743
      %882 = vmatpush.bf16.msra.mxu0 %v741
      %883 = vmatpush.bf16.msra.mxu0 %v739
      %884 = vmatpush.bf16.msra.mxu0 %v737
      %885 = vmatpush.bf16.msra.mxu0 %v735
      %886 = vmatpush.bf16.msra.mxu0 %v733
      %887 = vmatpush.bf16.msra.mxu0 %v731
      %888 = vmatpush.bf16.msra.mxu0 %v729
      %889 = vmatmul.bf16.gmra.mxu0 %v419
      %v890 = vpop.f32.mrf.mxu0
      %v891 = vadd.f32 %v877, %v890
      %v892 = vpop.f32.mrf.mxu0
      %v893 = vadd.f32 %v879, %v892
      %894 = vdwg.mxu0
      %895 = vmatpush.bf16.msra.mxu0 %v680
      %896 = vmatpush.bf16.msra.mxu0 %v678
      %897 = vmatpush.bf16.msra.mxu0 %v676
      %898 = vmatpush.bf16.msra.mxu0 %v674
      %899 = vmatpush.bf16.msra.mxu0 %v672
      %900 = vmatpush.bf16.msra.mxu0 %v670
      %901 = vmatpush.bf16.msra.mxu0 %v668
      %902 = vmatpush.bf16.msra.mxu0 %v666
      %903 = vmatmul.bf16.gmra.mxu0 %v415
      %v904 = vpop.f32.mrf.mxu0
      %v905 = vadd.f32 %v396, %v904
      %v906 = vpop.f32.mrf.mxu0
      %v907 = vadd.f32 %v396, %v906
      %908 = vdwg.mxu0
      %909 = vmatpush.bf16.msra.mxu0 %v696
      %910 = vmatpush.bf16.msra.mxu0 %v694
      %911 = vmatpush.bf16.msra.mxu0 %v692
      %912 = vmatpush.bf16.msra.mxu0 %v690
      %913 = vmatpush.bf16.msra.mxu0 %v688
      %914 = vmatpush.bf16.msra.mxu0 %v686
      %915 = vmatpush.bf16.msra.mxu0 %v684
      %916 = vmatpush.bf16.msra.mxu0 %v682
      %917 = vmatmul.bf16.gmra.mxu0 %v416
      %v918 = vpop.f32.mrf.mxu0
      %v919 = vadd.f32 %v905, %v918
      %v920 = vpop.f32.mrf.mxu0
      %v921 = vadd.f32 %v907, %v920
      %922 = vdwg.mxu0
      %923 = vmatpush.bf16.msra.mxu0 %v712
      %924 = vmatpush.bf16.msra.mxu0 %v710
      %925 = vmatpush.bf16.msra.mxu0 %v708
      %926 = vmatpush.bf16.msra.mxu0 %v706
      %927 = vmatpush.bf16.msra.mxu0 %v704
      %928 = vmatpush.bf16.msra.mxu0 %v702
      %929 = vmatpush.bf16.msra.mxu0 %v700
      %930 = vmatpush.bf16.msra.mxu0 %v698
      %931 = vmatmul.bf16.gmra.mxu0 %v417
      %v932 = vpop.f32.mrf.mxu0
      %v933 = vadd.f32 %v919, %v932
      %v934 = vpop.f32.mrf.mxu0
      %v935 = vadd.f32 %v921, %v934
      %936 = vdwg.mxu0
      %937 = vmatpush.bf16.msra.mxu0 %v728
      %938 = vmatpush.bf16.msra.mxu0 %v726
      %939 = vmatpush.bf16.msra.mxu0 %v724
      %940 = vmatpush.bf16.msra.mxu0 %v722
      %941 = vmatpush.bf16.msra.mxu0 %v720
      %942 = vmatpush.bf16.msra.mxu0 %v718
      %943 = vmatpush.bf16.msra.mxu0 %v716
      %944 = vmatpush.bf16.msra.mxu0 %v714
      %945 = vmatmul.bf16.gmra.mxu0 %v418
      %v946 = vpop.f32.mrf.mxu0
      %v947 = vadd.f32 %v933, %v946
      %v948 = vpop.f32.mrf.mxu0
      %v949 = vadd.f32 %v935, %v948
      %950 = vdwg.mxu0
      %951 = vmatpush.bf16.msra.mxu0 %v744
      %952 = vmatpush.bf16.msra.mxu0 %v742
      %953 = vmatpush.bf16.msra.mxu0 %v740
      %954 = vmatpush.bf16.msra.mxu0 %v738
      %955 = vmatpush.bf16.msra.mxu0 %v736
      %956 = vmatpush.bf16.msra.mxu0 %v734
      %957 = vmatpush.bf16.msra.mxu0 %v732
      %958 = vmatpush.bf16.msra.mxu0 %v730
      %959 = vmatmul.bf16.gmra.mxu0 %v419
      %v960 = vpop.f32.mrf.mxu0
      %v961 = vadd.f32 %v947, %v960
      %v962 = vpop.f32.mrf.mxu0
      %v963 = vadd.f32 %v949, %v962
      %964 = vdwg.mxu0
      %v965 = vunpack.c.l.bf16 %v307
      %v966 = vunpack.c.h.bf16 %v307
      %v967 = vunpack.c.l.bf16 %v308
      %v968 = vunpack.c.h.bf16 %v308
      %v969 = vunpack.c.l.bf16 %v309
      %v970 = vunpack.c.l.bf16 %v310
      %v971 = vunpack.c.h.bf16 %v310
      %v972 = vunpack.c.l.bf16 %v311
      %v973 = vunpack.c.h.bf16 %v311
      %v974 = vunpack.c.l.bf16 %v312
      %v975 = vmul.f32 %v965, %v965
      %v976 = vmul.f32 %v966, %v966
      %v977 = vmul.f32 %v967, %v967
      %v978 = vmul.f32 %v968, %v968
      %v979 = vmul.f32 %v969, %v969
      %v980 = vmul.f32 %v970, %v970
      %v981 = vmul.f32 %v971, %v971
      %v982 = vmul.f32 %v972, %v972
      %v983 = vmul.f32 %v973, %v973
      %v984 = vmul.f32 %v974, %v974
      %v985 = vpack.c.bf16 %v980, %v975
      %v986 = vpack.c.bf16 %v981, %v976
      %v987 = vpack.c.bf16 %v982, %v977
      %v988 = vpack.c.bf16 %v983, %v978
      %v989 = vpack.c.bf16 %v984, %v979
      %v990 = vld [vmem:[%s2] sm:$0xf]
      %v991 = vld [vmem:[%s2 + $0x4] sm:$0xf]
      %v992 = vld [vmem:[%s2 + $0x8] sm:$0xf]
      %v993 = vld [vmem:[%s2 + $0xc] sm:$0xf]
      %v994 = vld [vmem:[%s2 + $0x10] sm:$0xf]
      %v995 = vld [vmem:[%s2 + $0x14] sm:$0xf]
      %v996 = vld [vmem:[%s2 + $0x18] sm:$0xf]
      %v997 = vld [vmem:[%s2 + $0x1c] sm:$0xf]
      %v998 = vld [vmem:[%s2 + $0x20] sm:$0xf]
      %v999 = vld [vmem:[%s2 + $0x24] sm:$0xf]
      %v1000 = vld [vmem:[%s2 + $0x28] sm:$0xf]
      %v1001 = vld [vmem:[%s2 + $0x2c] sm:$0xf]
      %v1002 = vld [vmem:[%s2 + $0x30] sm:$0xf]
      %v1003 = vld [vmem:[%s2 + $0x34] sm:$0xf]
      %v1004 = vld [vmem:[%s2 + $0x38] sm:$0xf]
      %v1005 = vld [vmem:[%s2 + $0x3c] sm:$0xf]
      %v1006 = vld [vmem:[%s2 + $0x40] sm:$0xf]
      %v1007 = vld [vmem:[%s2 + $0x44] sm:$0xf]
      %v1008 = vld [vmem:[%s2 + $0x48] sm:$0xf]
      %v1009 = vld [vmem:[%s2 + $0x4c] sm:$0xf]
      %v1010 = vld [vmem:[%s2 + $0x50] sm:$0xf]
      %v1011 = vld [vmem:[%s2 + $0x54] sm:$0xf]
      %v1012 = vld [vmem:[%s2 + $0x58] sm:$0xf]
      %v1013 = vld [vmem:[%s2 + $0x5c] sm:$0xf]
      %v1014 = vld [vmem:[%s2 + $0x60] sm:$0xf]
      %v1015 = vld [vmem:[%s2 + $0x64] sm:$0xf]
      %v1016 = vld [vmem:[%s2 + $0x68] sm:$0xf]
      %v1017 = vld [vmem:[%s2 + $0x6c] sm:$0xf]
      %v1018 = vld [vmem:[%s2 + $0x70] sm:$0xf]
      %v1019 = vld [vmem:[%s2 + $0x74] sm:$0xf]
      %v1020 = vld [vmem:[%s2 + $0x78] sm:$0xf]
      %v1021 = vld [vmem:[%s2 + $0x7c] sm:$0xf]
      %v1022 = vld [vmem:[%s2 + $0x80] sm:$0xf]
      %v1023 = vld [vmem:[%s2 + $0x84] sm:$0xf]
      %v1024 = vld [vmem:[%s2 + $0x88] sm:$0xf]
      %v1025 = vld [vmem:[%s2 + $0x8c] sm:$0xf]
      %v1026 = vld [vmem:[%s2 + $0x90] sm:$0xf]
      %v1027 = vld [vmem:[%s2 + $0x94] sm:$0xf]
      %v1028 = vld [vmem:[%s2 + $0x98] sm:$0xf]
      %v1029 = vld [vmem:[%s2 + $0x9c] sm:$0xf]
      %v1030 = vld [vmem:[%s2 + $0xa0] sm:$0xf]
      %v1031 = vld [vmem:[%s2 + $0xa4] sm:$0xf]
      %v1032 = vld [vmem:[%s2 + $0xa8] sm:$0xf]
      %v1033 = vld [vmem:[%s2 + $0xac] sm:$0xf]
      %v1034 = vld [vmem:[%s2 + $0xb0] sm:$0xf]
      %v1035 = vld [vmem:[%s2 + $0xb4] sm:$0xf]
      %v1036 = vld [vmem:[%s2 + $0xb8] sm:$0xf]
      %v1037 = vld [vmem:[%s2 + $0xbc] sm:$0xf]
      %v1038 = vld [vmem:[%s2 + $0xc0] sm:$0xf]
      %v1039 = vld [vmem:[%s2 + $0xc4] sm:$0xf]
      %v1040 = vld [vmem:[%s2 + $0xc8] sm:$0xf]
      %v1041 = vld [vmem:[%s2 + $0xcc] sm:$0xf]
      %v1042 = vld [vmem:[%s2 + $0xd0] sm:$0xf]
      %v1043 = vld [vmem:[%s2 + $0xd4] sm:$0xf]
      %v1044 = vld [vmem:[%s2 + $0xd8] sm:$0xf]
      %v1045 = vld [vmem:[%s2 + $0xdc] sm:$0xf]
      %v1046 = vld [vmem:[%s2 + $0xe0] sm:$0xf]
      %v1047 = vld [vmem:[%s2 + $0xe4] sm:$0xf]
      %v1048 = vld [vmem:[%s2 + $0xe8] sm:$0xf]
      %v1049 = vld [vmem:[%s2 + $0xec] sm:$0xf]
      %v1050 = vld [vmem:[%s2 + $0xf0] sm:$0xf]
      %v1051 = vld [vmem:[%s2 + $0xf4] sm:$0xf]
      %v1052 = vld [vmem:[%s2 + $0xf8] sm:$0xf]
      %v1053 = vld [vmem:[%s2 + $0xfc] sm:$0xf]
      %v1054 = vld [vmem:[%s2 + $0x100] sm:$0xf]
      %v1055 = vld [vmem:[%s2 + $0x104] sm:$0xf]
      %v1056 = vld [vmem:[%s2 + $0x108] sm:$0xf]
      %v1057 = vld [vmem:[%s2 + $0x10c] sm:$0xf]
      %v1058 = vld [vmem:[%s2 + $0x110] sm:$0xf]
      %v1059 = vld [vmem:[%s2 + $0x114] sm:$0xf]
      %v1060 = vld [vmem:[%s2 + $0x118] sm:$0xf]
      %v1061 = vld [vmem:[%s2 + $0x11c] sm:$0xf]
      %v1062 = vld [vmem:[%s2 + $0x120] sm:$0xf]
      %v1063 = vld [vmem:[%s2 + $0x124] sm:$0xf]
      %v1064 = vld [vmem:[%s2 + $0x128] sm:$0xf]
      %v1065 = vld [vmem:[%s2 + $0x12c] sm:$0xf]
      %v1066 = vld [vmem:[%s2 + $0x130] sm:$0xf]
      %v1067 = vld [vmem:[%s2 + $0x134] sm:$0xf]
      %v1068 = vld [vmem:[%s2 + $0x138] sm:$0xf]
      %v1069 = vld [vmem:[%s2 + $0x13c] sm:$0xf]
      %v1150 = vunpack.c.l.b16 %v990
      %v1151 = vunpack.c.l.b16 %v991
      %v1152 = vunpack.c.l.b16 %v992
      %v1153 = vunpack.c.l.b16 %v993
      %v1154 = vunpack.c.l.b16 %v994
      %v1155 = vunpack.c.l.b16 %v995
      %v1156 = vunpack.c.l.b16 %v996
      %v1157 = vunpack.c.l.b16 %v997
      %v1158 = vunpack.c.l.b16 %v998
      %v1159 = vunpack.c.l.b16 %v999
      %v1160 = vunpack.c.l.b16 %v1000
      %v1161 = vunpack.c.l.b16 %v1001
      %v1162 = vunpack.c.l.b16 %v1002
      %v1163 = vunpack.c.l.b16 %v1003
      %v1164 = vunpack.c.l.b16 %v1004
      %v1165 = vunpack.c.l.b16 %v1005
      %v1166 = vunpack.c.l.b16 %v1006
      %v1167 = vunpack.c.l.b16 %v1007
      %v1168 = vunpack.c.l.b16 %v1008
      %v1169 = vunpack.c.l.b16 %v1009
      %v1170 = vunpack.c.l.b16 %v1010
      %v1171 = vunpack.c.l.b16 %v1011
      %v1172 = vunpack.c.l.b16 %v1012
      %v1173 = vunpack.c.l.b16 %v1013
      %v1174 = vunpack.c.l.b16 %v1014
      %v1175 = vunpack.c.l.b16 %v1015
      %v1176 = vunpack.c.l.b16 %v1016
      %v1177 = vunpack.c.l.b16 %v1017
      %v1178 = vunpack.c.l.b16 %v1018
      %v1179 = vunpack.c.l.b16 %v1019
      %v1180 = vunpack.c.l.b16 %v1020
      %v1181 = vunpack.c.l.b16 %v1021
      %v1182 = vunpack.c.l.b16 %v1022
      %v1183 = vunpack.c.l.b16 %v1023
      %v1184 = vunpack.c.l.b16 %v1024
      %v1185 = vunpack.c.l.b16 %v1025
      %v1186 = vunpack.c.l.b16 %v1026
      %v1187 = vunpack.c.l.b16 %v1027
      %v1188 = vunpack.c.l.b16 %v1028
      %v1189 = vunpack.c.l.b16 %v1029
      %v1190 = vunpack.c.l.b16 %v1030
      %v1191 = vunpack.c.l.b16 %v1031
      %v1192 = vunpack.c.l.b16 %v1032
      %v1193 = vunpack.c.l.b16 %v1033
      %v1194 = vunpack.c.l.b16 %v1034
      %v1195 = vunpack.c.l.b16 %v1035
      %v1196 = vunpack.c.l.b16 %v1036
      %v1197 = vunpack.c.l.b16 %v1037
      %v1198 = vunpack.c.l.b16 %v1038
      %v1199 = vunpack.c.l.b16 %v1039
      %v1200 = vunpack.c.l.b16 %v1040
      %v1201 = vunpack.c.l.b16 %v1041
      %v1202 = vunpack.c.l.b16 %v1042
      %v1203 = vunpack.c.l.b16 %v1043
      %v1204 = vunpack.c.l.b16 %v1044
      %v1205 = vunpack.c.l.b16 %v1045
      %v1206 = vunpack.c.l.b16 %v1046
      %v1207 = vunpack.c.l.b16 %v1047
      %v1208 = vunpack.c.l.b16 %v1048
      %v1209 = vunpack.c.l.b16 %v1049
      %v1210 = vunpack.c.l.b16 %v1050
      %v1211 = vunpack.c.l.b16 %v1051
      %v1212 = vunpack.c.l.b16 %v1052
      %v1213 = vunpack.c.l.b16 %v1053
      %v1214 = vunpack.c.l.b16 %v1054
      %v1215 = vunpack.c.l.b16 %v1055
      %v1216 = vunpack.c.l.b16 %v1056
      %v1217 = vunpack.c.l.b16 %v1057
      %v1218 = vunpack.c.l.b16 %v1058
      %v1219 = vunpack.c.l.b16 %v1059
      %v1220 = vunpack.c.l.b16 %v1060
      %v1221 = vunpack.c.l.b16 %v1061
      %v1222 = vunpack.c.l.b16 %v1062
      %v1223 = vunpack.c.l.b16 %v1063
      %v1224 = vunpack.c.l.b16 %v1064
      %v1225 = vunpack.c.l.b16 %v1065
      %v1226 = vunpack.c.l.b16 %v1066
      %v1227 = vunpack.c.l.b16 %v1067
      %v1228 = vunpack.c.l.b16 %v1068
      %v1229 = vunpack.c.l.b16 %v1069
      %v1230 = vpack.c.b16 %v1151, %v1150
      %v1231 = vpack.c.b16 %v1153, %v1152
      %v1232 = vpack.c.b16 %v1155, %v1154
      %v1233 = vpack.c.b16 %v1157, %v1156
      %v1234 = vpack.c.b16 %v1159, %v1158
      %v1235 = vpack.c.b16 %v1161, %v1160
      %v1236 = vpack.c.b16 %v1163, %v1162
      %v1237 = vpack.c.b16 %v1165, %v1164
      %v1238 = vpack.c.b16 %v1167, %v1166
      %v1239 = vpack.c.b16 %v1169, %v1168
      %v1240 = vpack.c.b16 %v1171, %v1170
      %v1241 = vpack.c.b16 %v1173, %v1172
      %v1242 = vpack.c.b16 %v1175, %v1174
      %v1243 = vpack.c.b16 %v1177, %v1176
      %v1244 = vpack.c.b16 %v1179, %v1178
      %v1245 = vpack.c.b16 %v1181, %v1180
      %v1246 = vpack.c.b16 %v1183, %v1182
      %v1247 = vpack.c.b16 %v1185, %v1184
      %v1248 = vpack.c.b16 %v1187, %v1186
      %v1249 = vpack.c.b16 %v1189, %v1188
      %v1250 = vpack.c.b16 %v1191, %v1190
      %v1251 = vpack.c.b16 %v1193, %v1192
      %v1252 = vpack.c.b16 %v1195, %v1194
      %v1253 = vpack.c.b16 %v1197, %v1196
      %v1254 = vpack.c.b16 %v1199, %v1198
      %v1255 = vpack.c.b16 %v1201, %v1200
      %v1256 = vpack.c.b16 %v1203, %v1202
      %v1257 = vpack.c.b16 %v1205, %v1204
      %v1258 = vpack.c.b16 %v1207, %v1206
      %v1259 = vpack.c.b16 %v1209, %v1208
      %v1260 = vpack.c.b16 %v1211, %v1210
      %v1261 = vpack.c.b16 %v1213, %v1212
      %v1262 = vpack.c.b16 %v1215, %v1214
      %v1263 = vpack.c.b16 %v1217, %v1216
      %v1264 = vpack.c.b16 %v1219, %v1218
      %v1265 = vpack.c.b16 %v1221, %v1220
      %v1266 = vpack.c.b16 %v1223, %v1222
      %v1267 = vpack.c.b16 %v1225, %v1224
      %v1268 = vpack.c.b16 %v1227, %v1226
      %v1269 = vpack.c.b16 %v1229, %v1228
      %1310 = vmatpush.bf16.msra.mxu0 %v1237
      %1311 = vmatpush.bf16.msra.mxu0 %v1236
      %1312 = vmatpush.bf16.msra.mxu0 %v1235
      %1313 = vmatpush.bf16.msra.mxu0 %v1234
      %1314 = vmatpush.bf16.msra.mxu0 %v1233
      %1315 = vmatpush.bf16.msra.mxu0 %v1232
      %1316 = vmatpush.bf16.msra.mxu0 %v1231
      %1317 = vmatpush.bf16.msra.mxu0 %v1230
      %1318 = vmatmul.bf16.gmra.mxu0 %v985
      %v1319 = vpop.f32.mrf.mxu0
      %v1320 = vadd.f32 0.0, %v1319
      %v1321 = vpop.f32.mrf.mxu0
      %v1322 = vadd.f32 0.0, %v1321
      %1323 = vdwg.mxu0
      %1324 = vmatpush.bf16.msra.mxu0 %v1245
      %1325 = vmatpush.bf16.msra.mxu0 %v1244
      %1326 = vmatpush.bf16.msra.mxu0 %v1243
      %1327 = vmatpush.bf16.msra.mxu0 %v1242
      %1328 = vmatpush.bf16.msra.mxu0 %v1241
      %1329 = vmatpush.bf16.msra.mxu0 %v1240
      %1330 = vmatpush.bf16.msra.mxu0 %v1239
      %1331 = vmatpush.bf16.msra.mxu0 %v1238
      %1332 = vmatmul.bf16.gmra.mxu0 %v986
      %v1333 = vpop.f32.mrf.mxu0
      %v1334 = vadd.f32 %v1320, %v1333
      %v1335 = vpop.f32.mrf.mxu0
      %v1336 = vadd.f32 %v1322, %v1335
      %1337 = vdwg.mxu0
      %1338 = vmatpush.bf16.msra.mxu0 %v1253
      %1339 = vmatpush.bf16.msra.mxu0 %v1252
      %1340 = vmatpush.bf16.msra.mxu0 %v1251
      %1341 = vmatpush.bf16.msra.mxu0 %v1250
      %1342 = vmatpush.bf16.msra.mxu0 %v1249
      %1343 = vmatpush.bf16.msra.mxu0 %v1248
      %1344 = vmatpush.bf16.msra.mxu0 %v1247
      %1345 = vmatpush.bf16.msra.mxu0 %v1246
      %1346 = vmatmul.bf16.gmra.mxu0 %v987
      %v1347 = vpop.f32.mrf.mxu0
      %v1348 = vadd.f32 %v1334, %v1347
      %v1349 = vpop.f32.mrf.mxu0
      %v1350 = vadd.f32 %v1336, %v1349
      %1351 = vdwg.mxu0
      %1352 = vmatpush.bf16.msra.mxu0 %v1261
      %1353 = vmatpush.bf16.msra.mxu0 %v1260
      %1354 = vmatpush.bf16.msra.mxu0 %v1259
      %1355 = vmatpush.bf16.msra.mxu0 %v1258
      %1356 = vmatpush.bf16.msra.mxu0 %v1257
      %1357 = vmatpush.bf16.msra.mxu0 %v1256
      %1358 = vmatpush.bf16.msra.mxu0 %v1255
      %1359 = vmatpush.bf16.msra.mxu0 %v1254
      %1360 = vmatmul.bf16.gmra.mxu0 %v988
      %v1361 = vpop.f32.mrf.mxu0
      %v1362 = vadd.f32 %v1348, %v1361
      %v1363 = vpop.f32.mrf.mxu0
      %v1364 = vadd.f32 %v1350, %v1363
      %1365 = vdwg.mxu0
      %1366 = vmatpush.bf16.msra.mxu0 %v1269
      %1367 = vmatpush.bf16.msra.mxu0 %v1268
      %1368 = vmatpush.bf16.msra.mxu0 %v1267
      %1369 = vmatpush.bf16.msra.mxu0 %v1266
      %1370 = vmatpush.bf16.msra.mxu0 %v1265
      %1371 = vmatpush.bf16.msra.mxu0 %v1264
      %1372 = vmatpush.bf16.msra.mxu0 %v1263
      %1373 = vmatpush.bf16.msra.mxu0 %v1262
      %1374 = vmatmul.bf16.gmra.mxu0 %v989
      %v1375 = vpop.f32.mrf.mxu0
      %v1376 = vadd.f32 %v1362, %v1375
      %v1377 = vpop.f32.mrf.mxu0
      %v1378 = vadd.f32 %v1364, %v1377
      %1379 = vdwg.mxu0
      %v1380 = vmul.f32 %v891, %v961
      %v1381 = vmul.f32 %v893, %v963
      %v1382 = vadd.f32 %v1380, %v1376
      %v1383 = vadd.f32 %v1381, %v1378
      %v1384 = vld [vmem:[%s4] sm:$0x1]
      %v1386 = vperm.slane %v1384, 0
      %v1388 = vmul.f32 %v1382, %v1386
      %v1389 = vmul.f32 %v1383, %v1386
      %v1390 = vld [vmem:[%s5] sm:$0x1]
      %v1392 = vperm.slane %v1390, 0
      %v1394 = vadd.f32 %v1388, %v1392
      %v1395 = vadd.f32 %v1389, %v1392
      %v1396 = vld [vmem:[%s299] sm:$0xff]
      %v1397 = vld [vmem:[%s299 + $0x8] sm:$0xff]
      %v1398 = vadd.f32 %v1394, %v1396
      %v1399 = vadd.f32 %v1395, %v1397
      %v1400 = vmax.f32 %v1398, 0.0
      %v1401 = vmax.f32 %v1399, 0.0
      %vm1402 = vcmask 523264
      %1403 = vst.msk [vmem:[%s305] sm:$0xff] %vm1402, %v1400
      %1404 = vst.msk [vmem:[%s305 + $0x8] sm:$0xff] %vm1402, %v1401
      %s1405 = smul.u32 2, %s18
      %p1406 = scmp.lt.s32.totalorder %s1405, 3
      %s1407 = scalar_select %p1406, %s1405, 3
      %s1408 = smul.addr %s1407, 8
      %s1409 = scalar_lea.vmem %s7, %s1408
      // Predicated region
      $region49: #{_lambda_.14} parent=47 // pred_check
        %p1410 = pneg %p193
      $region50: #{_lambda_.14} parent=47 // pred_check_branch
        %1412 = sbr.rel (%p1410) target = $region52
      $region51: #{_lambda_.14} parent=47 // pred_region
        %s1413 = smul.u32 2, %s18
      $region52: #{_lambda_.14} parent=47 // pred_fallthru
        _
    $region48: #{_lambda_.14} parent=5 // pred_fallthru
      _
    %p1414 = scmp.le.s32.totalorder 2, %s13
    // Predicated region
    $region53: #{_lambda_.14} parent=5 // pred_check
      %p1415 = pneg %p1414
    $region54: #{_lambda_.14} parent=5 // pred_check_branch
      %1417 = sbr.rel (%p1415) target = $region56
    $region55: #{_lambda_.14} parent=5 // pred_region
      %s1418 = ssub.s32 %s13, 2
      // Predicated region
      $region57: #{_lambda_.14} parent=55 // pred_check
        %p1419 = pneg %p199
      $region58: #{_lambda_.14} parent=55 // pred_check_branch
        %1421 = sbr.rel (%p1419) target = $region60
      $region59: #{_lambda_.14} parent=55 // pred_region
        %s1422 = smul.u32 2, %s19
        %p1423 = scmp.lt.s32.totalorder %s1422, 3
        %s1424 = scalar_select %p1423, %s1422, 3
        %s1425 = smul.addr %s1424, 8
        %s1426 = scalar_lea.vmem %s7, %s1425
      $region60: #{_lambda_.14} parent=55 // pred_fallthru
        _
    $region56: #{_lambda_.14} parent=5 // pred_fallthru
      _
  $region6: #{_lambda_.14} parent=0 // loop_footer
    %s17 = sadd.s32 1, %s13
  $region7: #{_lambda_.14} parent=0 // loop_footer_branch
    %12 = sbr.rel target = $region3
  $region8: #{_lambda_.14} parent=0 // loop_exit
    _

</llo_original>
